<compile_context>
chip_gen: v6e
topology: v6e:2x2x1
jax: 0.10.0
libtpu: 0.0.40
codegen_flags: <defaults>
</compile_context>

<pallas_src>
import functools
import math

import jax
import jax.numpy as jnp
from jax.experimental import pallas as pl
from jax.experimental.pallas import tpu as pltpu


# ----------------------------------------------------------------------------
# Pallas kernel: grid = (batch, q-tiles, key-chunks); online softmax over ki.
# ----------------------------------------------------------------------------
def _enhanced_attention_kernel(
    # inputs ------------------------------------------------------------------
    x_ref,      # [1, TQ, D]    hidden states for this q tile
    wq_ref,     # [D, D]        Wq^T (lane-dense)
    bq_ref,     # [1, D]
    wo_ref,     # [D, D]        Wo^T
    bo_ref,     # [1, D]
    kt_ref,     # [1, D, TK]    K^T chunk (pre-projected outside, S lane-dense)
    v_ref,      # [1, TK, D]    V chunk (pre-projected outside)
    posq_ref,   # [TQ, 2]       (row, col) of each query position in this q tile
    posk_ref,   # [2, TK]       (row; col) of the keys in this chunk
    mask_ref,   # [1, 1, 1, TK] additive attention-mask chunk
    # outputs -----------------------------------------------------------------
    o_ref,      # [1, TQ, D]
    # scratch -----------------------------------------------------------------
    q_scr,      # [TQ, D]       scaled Q for this q tile (compute dtype)
    acc_scr,    # [TQ, D]  f32  unnormalized context accumulator
    m_scr,      # [H, TQ, 1] f32 running max
    l_scr,      # [H, TQ, 1] f32 running denominator
    aux_scr,    # [2, TQ, TK] f32 combined bias planes A/B (shared by all heads)
    *,
    num_heads,
):
    ki = pl.program_id(2)
    n_k = pl.num_programs(2)
    tq, d_model = q_scr.shape
    head_dim = d_model // num_heads
    half = num_heads // 2
    scale = 1.0 / math.sqrt(head_dim)
    cdtype = q_scr.dtype

    # --- q-tile prologue (first key chunk only): Q projection + state init ---
    @pl.when(ki == 0)
    def _():
        q = jnp.dot(x_ref[0], wq_ref[...], preferred_element_type=jnp.float32)
        q_scr[...] = ((q + bq_ref[...].astype(jnp.float32)) * scale).astype(cdtype)
        # finite "-inf": avoids NaN from (-inf) - (-inf) on fully masked chunks
        m_scr[...] = jnp.full_like(m_scr, -1e30)
        l_scr[...] = jnp.zeros_like(l_scr)
        acc_scr[...] = jnp.zeros_like(acc_scr)

    # --- 2-D relative-position planes for this (q-tile, k-chunk), shared -----
    pq = posq_ref[...].astype(jnp.float32)            # [TQ, 2]
    pk = posk_ref[...].astype(jnp.float32)            # [2, TK]
    dr = jnp.abs(pq[:, 0:1] - pk[0:1, :])             # [TQ, TK]
    dc = jnp.abs(pq[:, 1:2] - pk[1:2, :])
    aux_scr[0] = dr + 0.5 * dc                        # plane for "row-major" heads
    aux_scr[1] = 0.5 * dr + dc                        # plane for "col-major" heads
    mask_row = mask_ref[0, 0].astype(jnp.float32)     # [1, TK], broadcast at use

    # --- per-head online softmax over this key chunk --------------------------
    for h in range(num_heads):
        sl = slice(h * head_dim, (h + 1) * head_dim)
        slope = 2.0 ** (-8.0 * (h + 1) / num_heads)
        plane = aux_scr[0] if h < half else aux_scr[1]

        s = jnp.dot(q_scr[:, sl], kt_ref[0, sl, :],
                    preferred_element_type=jnp.float32)           # [TQ, TK]
        s = s - slope * plane + mask_row

        m_prev = m_scr[h]                                         # [TQ, 1]
        m_new = jnp.maximum(m_prev, jnp.max(s, axis=-1, keepdims=True))
        alpha = jnp.exp(m_prev - m_new)
        # TODO(synk): cast (s - m_new) to bf16 before exp on v6e/v7x (2x EUP).
        p = jnp.exp(s - m_new)                                    # unnormalized
        l_scr[h] = alpha * l_scr[h] + jnp.sum(p, axis=-1, keepdims=True)
        m_scr[h] = m_new
        pv = jnp.dot(p.astype(cdtype), v_ref[0, :, sl],
                     preferred_element_type=jnp.float32)          # [TQ, hd]
        acc_scr[:, sl] = alpha * acc_scr[:, sl] + pv

    # --- epilogue: deferred normalization + fused out projection --------------
    @pl.when(ki == n_k - 1)
    def _():
        for h in range(num_heads):
            sl = slice(h * head_dim, (h + 1) * head_dim)
            denom = l_scr[h]                        # >= 1 (running max subtracted)
            r = pl.reciprocal(denom, approx=True)   # EUP slot
            r = r * (2.0 - denom * r)               # one Newton step (~f32 exact)
            acc_scr[:, sl] = acc_scr[:, sl] * r
        out = jnp.dot(acc_scr[...].astype(cdtype), wo_ref[...],
                      preferred_element_type=jnp.float32)
        o_ref[0] = (out + bo_ref[...].astype(jnp.float32)).astype(o_ref.dtype)


# ----------------------------------------------------------------------------
# Wrapper
# ----------------------------------------------------------------------------
def _pick_tile(seq_len, requested, cap, multiple):
    """Largest divisor of seq_len that is a multiple of `multiple` and <= cap."""
    if requested is not None:
        assert seq_len % requested == 0, "tile must divide seq_len"
        return requested
    best = None
    cand = multiple
    while cand <= min(cap, seq_len):
        if seq_len % cand == 0:
            best = cand
        cand += multiple
    return best if best is not None else seq_len


def enhanced_attention(hidden_states, params, attention_mask=None, *,
                       num_heads, rows, cols, q_tile=None, k_tile=None,
                       compute_dtype=None, vmem_limit_bytes=None):
    """hidden_states: [B, S, D]; attention_mask: additive [B, 1, 1, S] (or None)."""
    B, S, D = hidden_states.shape
    assert rows * cols == S, "seq_len must equal rows * cols"
    assert D % num_heads == 0
    cdtype = jnp.dtype(compute_dtype) if compute_dtype is not None else hidden_states.dtype

    tq = _pick_tile(S, q_tile, 256, 8)     # q tile (review: allow up to 256)
    tk = _pick_tile(S, k_tile, 512, 128)   # key chunk for online softmax
    n_q, n_k = S // tq, S // tk

    if attention_mask is None:
        attention_mask = jnp.zeros((B, 1, 1, S), hidden_states.dtype)

    # Torch nn.Linear is x @ W.T + b (W: [out, in]); pass W^T so the in-kernel
    # projections are lane-dense [.,D] @ [D,D] matmuls.
    wq_t = params["wq"].T
    wo_t = params["wo"].T
    bq = params["bq"].reshape(1, D)
    bo = params["bo"].reshape(1, D)

    # K / V projections as plain XLA GEMMs (review: frees 2xSxD of VMEM residency
    # and the qi==0 pipeline bubble).  K is pre-transposed to [B, D, S] so the
    # in-kernel QK matmul contracts head_dim with no per-head transpose.
    k = jnp.dot(hidden_states, params["wk"].T) + params["bk"]
    v = jnp.dot(hidden_states, params["wv"].T) + params["bv"]
    kt = jnp.swapaxes(k, 1, 2).astype(cdtype)   # [B, D, S]
    v = v.astype(cdtype)                        # [B, S, D]

    # Tiny per-position (row, col) coordinate tables: the kernel rebuilds the
    # Two-slope-ALiBi bias per chunk instead of streaming an [H,S,S] array.
    idx = jnp.arange(S, dtype=jnp.int32)
    r = (idx // cols).astype(jnp.float32)
    c = (idx % cols).astype(jnp.float32)
    pos_q = jnp.stack([r, c], axis=1)    # [S, 2]
    pos_k = jnp.stack([r, c], axis=0)    # [2, S]

    kernel = functools.partial(_enhanced_attention_kernel, num_heads=num_heads)
    out_shape = jax.ShapeDtypeStruct((B, S, D), hidden_states.dtype)

    def _const_spec(shape, single_buffer):
        imap = lambda b, qi, ki: (0,) * len(shape)
        if single_buffer and hasattr(pl, "Buffered"):
            try:
                # block index never changes -> single buffering halves residency
                return pl.BlockSpec(shape, imap, pipeline_mode=pl.Buffered(1))
            except TypeError:
                pass
        return pl.BlockSpec(shape, imap)

    def _call(single_buffer_consts):
        const = lambda shape: _const_spec(shape, single_buffer_consts)
        grid_spec = pltpu.PrefetchScalarGridSpec(
            num_scalar_prefetch=0,
            grid=(B, n_q, n_k),
            in_specs=[
                pl.BlockSpec((1, tq, D), lambda b, qi, ki: (b, qi, 0)),        # x q-tile
                const((D, D)), const((1, D)),                                  # Wq^T, bq
                const((D, D)), const((1, D)),                                  # Wo^T, bo
                pl.BlockSpec((1, D, tk), lambda b, qi, ki: (b, 0, ki)),        # K^T chunk
                pl.BlockSpec((1, tk, D), lambda b, qi, ki: (b, ki, 0)),        # V chunk
                pl.BlockSpec((tq, 2), lambda b, qi, ki: (qi, 0)),              # pos_q tile
                pl.BlockSpec((2, tk), lambda b, qi, ki: (0, ki)),              # pos_k chunk
                pl.BlockSpec((1, 1, 1, tk), lambda b, qi, ki: (b, 0, 0, ki)),  # mask chunk
            ],
            out_specs=pl.BlockSpec((1, tq, D), lambda b, qi, ki: (b, qi, 0)),
            scratch_shapes=[
                pltpu.VMEM((tq, D), cdtype),                  # Q tile (scaled)
                pltpu.VMEM((tq, D), jnp.float32),             # context accumulator
                pltpu.VMEM((num_heads, tq, 1), jnp.float32),  # running max
                pltpu.VMEM((num_heads, tq, 1), jnp.float32),  # running denominator
                pltpu.VMEM((2, tq, tk), jnp.float32),         # combined bias planes A/B
            ],
        )
        return pl.pallas_call(
            kernel,
            out_shape=out_shape,
            grid_spec=grid_spec,
            compiler_params=pltpu.CompilerParams(
                # K/V are streamed, so q tiles carry no state -> both the batch
                # and q-tile axes are megacore-parallel (keeps both v7x TCs busy).
                dimension_semantics=("parallel", "parallel", "arbitrary"),
                vmem_limit_bytes=vmem_limit_bytes,
            ),
        )(hidden_states, wq_t, bq, wo_t, bo, kt, v, pos_q, pos_k, attention_mask)

    try:
        return _call(True)
    except Exception:
        # Fallback for environments where BlockSpec(pipeline_mode=...) is unsupported.
        return _call(False)


# ----------------------------------------------------------------------------
# Two-slope-ALiBi bias over a 2-D grid (same formula the kernel rebuilds).
# ----------------------------------------------------------------------------
def two_slope_alibi_bias(num_heads, rows, cols):
    seq = rows * cols
    idx = jnp.arange(seq)
    r = idx // cols
    c = idx % cols
    dr = jnp.abs(r[:, None] - r[None, :]).astype(jnp.float32)
    dc = jnp.abs(c[:, None] - c[None, :]).astype(jnp.float32)
    slopes = 2.0 ** (-8.0 * (jnp.arange(1, num_heads + 1, dtype=jnp.float32) / num_heads))
    half = num_heads // 2
    head_is_row = (jnp.arange(num_heads) < half)[:, None, None]
    bias_row = -slopes[:, None, None] * (dr[None] + 0.5 * dc[None])
    bias_col = -slopes[:, None, None] * (0.5 * dr[None] + dc[None])
    return jnp.where(head_is_row, bias_row, bias_col)            # [H, S, S]


# ----------------------------------------------------------------------------
# Pure-JAX reference (mirrors the PyTorch forward) for correctness check.
# ----------------------------------------------------------------------------
def reference(hidden_states, params, position_bias, attention_mask, num_heads):
    B, S, D = hidden_states.shape
    hd = D // num_heads
    x = hidden_states.astype(jnp.float32)

    def lin(x, w, b):
        return x @ w.T + b

    q = lin(x, params["wq"], params["bq"]).reshape(B, S, num_heads, hd).transpose(0, 2, 1, 3)
    k = lin(x, params["wk"], params["bk"]).reshape(B, S, num_heads, hd).transpose(0, 2, 1, 3)
    v = lin(x, params["wv"], params["bv"]).reshape(B, S, num_heads, hd).transpose(0, 2, 1, 3)
    scores = jnp.einsum("bhqd,bhkd->bhqk", q, k) / math.sqrt(hd)
    scores = scores + position_bias[None]
    scores = scores + attention_mask
    probs = jax.nn.softmax(scores, axis=-1)
    ctx = jnp.einsum("bhqk,bhkd->bhqd", probs, v).transpose(0, 2, 1, 3).reshape(B, S, D)
    return lin(ctx, params["wo"], params["bo"])


if __name__ == "__main__":
    # Small deterministic problem: 16x16 grid -> seq=256, d_model=32, 4 heads.
    # q_tile=64, k_tile=128 -> 4 q-tiles x 2 key chunks (online softmax exercised).
    B, rows, cols = 2, 16, 16
    S = rows * cols
    D, H = 32, 4

    key = jax.random.PRNGKey(0)
    ks = jax.random.split(key, 10)
    w = 0.1
    params = {
        "wq": w * jax.random.normal(ks[0], (D, D), jnp.float32),
        "bq": w * jax.random.normal(ks[1], (D,), jnp.float32),
        "wk": w * jax.random.normal(ks[2], (D, D), jnp.float32),
        "bk": w * jax.random.normal(ks[3], (D,), jnp.float32),
        "wv": w * jax.random.normal(ks[4], (D, D), jnp.float32),
        "bv": w * jax.random.normal(ks[5], (D,), jnp.float32),
        "wo": w * jax.random.normal(ks[6], (D, D), jnp.float32),
        "bo": w * jax.random.normal(ks[7], (D,), jnp.float32),
    }
    hidden_states = jax.random.normal(ks[8], (B, S, D), jnp.float32)

    # Additive attention mask [B, 1, 1, S]: batch 0 fully valid, batch 1 masks
    # out one key in the first chunk and the last three keys (second chunk).
    valid = jnp.ones((B, S), bool).at[1, -3:].set(False).at[1, 5].set(False)
    attention_mask = jnp.where(valid, 0.0, -1e9).astype(jnp.float32)[:, None, None, :]

    out = enhanced_attention(hidden_states, params, attention_mask,
                             num_heads=H, rows=rows, cols=cols,
                             q_tile=64, k_tile=128)
    out = jax.block_until_ready(out)

    position_bias = two_slope_alibi_bias(H, rows, cols)
    ref = reference(hidden_states, params, position_bias, attention_mask, H)
    assert out.shape == (B, S, D)
    err = float(jnp.max(jnp.abs(out - ref)))
    # tolerance allows approx-reciprocal(+Newton), online-softmax reassociation
    assert jnp.allclose(out, ref, atol=1e-3, rtol=1e-3), err
    print("KERNEL_OK")
</pallas_src>

<mosaic_0001>
module attributes {stable_mosaic.version = 11 : i64} {
  func.func @_enhanced_attention_kernel(%arg0: i32, %arg1: i32, %arg2: i32, %arg3: memref<1x64x32xf32, #tpu.memory_space<vmem>>, %arg4: memref<32x32xf32, #tpu.memory_space<vmem>>, %arg5: memref<1x32xf32, #tpu.memory_space<vmem>>, %arg6: memref<32x32xf32, #tpu.memory_space<vmem>>, %arg7: memref<1x32xf32, #tpu.memory_space<vmem>>, %arg8: memref<1x32x128xf32, #tpu.memory_space<vmem>>, %arg9: memref<1x128x32xf32, #tpu.memory_space<vmem>>, %arg10: memref<64x2xf32, #tpu.memory_space<vmem>>, %arg11: memref<2x128xf32, #tpu.memory_space<vmem>>, %arg12: memref<1x1x1x128xf32, #tpu.memory_space<vmem>>, %arg13: memref<1x64x32xf32, #tpu.memory_space<vmem>>, %arg14: memref<64x32xf32, #tpu.memory_space<vmem>>, %arg15: memref<64x32xf32, #tpu.memory_space<vmem>>, %arg16: memref<4x64x1xf32, #tpu.memory_space<vmem>>, %arg17: memref<4x64x1xf32, #tpu.memory_space<vmem>>, %arg18: memref<2x64x128xf32, #tpu.memory_space<vmem>>) attributes {dimension_semantics = [#tpu.dimension_semantics<parallel>, #tpu.dimension_semantics<parallel>, #tpu.dimension_semantics<arbitrary>], iteration_bounds = array<i64: 2, 4, 2>, scalar_prefetch = 0 : i64, scratch_operands = 5 : i64, tpu.core_type = #tpu.core_type<tc>, window_params = [{transform_indices = @transform_0, window_bounds = array<i64: 1, 64, 32>}, {pipeline_mode = #tpu.pipeline_mode<synchronous>, transform_indices = @transform_1, window_bounds = array<i64: 32, 32>}, {pipeline_mode = #tpu.pipeline_mode<synchronous>, transform_indices = @transform_2, window_bounds = array<i64: 1, 32>}, {pipeline_mode = #tpu.pipeline_mode<synchronous>, transform_indices = @transform_3, window_bounds = array<i64: 32, 32>}, {pipeline_mode = #tpu.pipeline_mode<synchronous>, transform_indices = @transform_4, window_bounds = array<i64: 1, 32>}, {transform_indices = @transform_5, window_bounds = array<i64: 1, 32, 128>}, {transform_indices = @transform_6, window_bounds = array<i64: 1, 128, 32>}, {transform_indices = @transform_7, window_bounds = array<i64: 64, 2>}, {transform_indices = @transform_8, window_bounds = array<i64: 2, 128>}, {transform_indices = @transform_9, window_bounds = array<i64: 1, 1, 1, 128>}, {transform_indices = @transform_10, window_bounds = array<i64: 1, 64, 32>}]} {
    %c0_i32 = arith.constant 0 : i32
    %0 = arith.cmpi eq, %arg2, %c0_i32 : i32
    %1 = arith.extui %0 : i1 to i32
    %c0_i32_0 = arith.constant 0 : i32
    %2 = arith.cmpi ne, %1, %c0_i32_0 : i32
    scf.if %2 {
      %c0_138 = arith.constant 0 : index
      %c0_139 = arith.constant 0 : index
      %c0_140 = arith.constant 0 : index
      %198 = vector.load %arg3[%c0_138, %c0_139, %c0_140] : memref<1x64x32xf32, #tpu.memory_space<vmem>>, vector<1x64x32xf32>
      %199 = vector.shape_cast %198 : vector<1x64x32xf32> to vector<64x32xf32>
      %c0_141 = arith.constant 0 : index
      %c0_142 = arith.constant 0 : index
      %200 = vector.load %arg4[%c0_141, %c0_142] : memref<32x32xf32, #tpu.memory_space<vmem>>, vector<32x32xf32>
      %cst_143 = arith.constant dense<0.000000e+00> : vector<64x32xf32>
      %201 = tpu.matmul %199, %200, %cst_143 {dimension_numbers = #tpu.dot_dimension_numbers<[1], [0], [0], [1], [0, 0, 1, 1], [], []>} : vector<64x32xf32>, vector<32x32xf32>, vector<64x32xf32> -> vector<64x32xf32>
      %c0_144 = arith.constant 0 : index
      %c0_145 = arith.constant 0 : index
      %202 = vector.load %arg5[%c0_144, %c0_145] : memref<1x32xf32, #tpu.memory_space<vmem>>, vector<1x32xf32>
      %203 = vector.broadcast %202 : vector<1x32xf32> to vector<64x32xf32>
      %204 = arith.addf %201, %203 : vector<64x32xf32>
      %cst_146 = arith.constant 0.353553385 : f32
      %205 = vector.broadcast %cst_146 : f32 to vector<64x32xf32>
      %206 = arith.mulf %204, %205 : vector<64x32xf32>
      %c0_147 = arith.constant 0 : index
      %c0_148 = arith.constant 0 : index
      %207 = vector.load %arg14[%c0_147, %c0_148] : memref<64x32xf32, #tpu.memory_space<vmem>>, vector<64x32xf32>
      tpu.vector_store %arg14[%c0_147, %c0_148], %206 {strides = array<i32>} : memref<64x32xf32, #tpu.memory_space<vmem>>, vector<64x32xf32>,
      %cst_149 = arith.constant -1.000000e+30 : f32
      %208 = vector.broadcast %cst_149 : f32 to vector<4x64x1xf32>
      %c0_150 = arith.constant 0 : index
      %c0_151 = arith.constant 0 : index
      %c0_152 = arith.constant 0 : index
      %209 = vector.load %arg16[%c0_150, %c0_151, %c0_152] : memref<4x64x1xf32, #tpu.memory_space<vmem>>, vector<4x64x1xf32>
      tpu.vector_store %arg16[%c0_150, %c0_151, %c0_152], %208 {strides = array<i32>} : memref<4x64x1xf32, #tpu.memory_space<vmem>>, vector<4x64x1xf32>,
      %cst_153 = arith.constant 0.000000e+00 : f32
      %210 = vector.broadcast %cst_153 : f32 to vector<4x64x1xf32>
      %c0_154 = arith.constant 0 : index
      %c0_155 = arith.constant 0 : index
      %c0_156 = arith.constant 0 : index
      %211 = vector.load %arg17[%c0_154, %c0_155, %c0_156] : memref<4x64x1xf32, #tpu.memory_space<vmem>>, vector<4x64x1xf32>
      tpu.vector_store %arg17[%c0_154, %c0_155, %c0_156], %210 {strides = array<i32>} : memref<4x64x1xf32, #tpu.memory_space<vmem>>, vector<4x64x1xf32>,
      %cst_157 = arith.constant 0.000000e+00 : f32
      %212 = vector.broadcast %cst_157 : f32 to vector<64x32xf32>
      %c0_158 = arith.constant 0 : index
      %c0_159 = arith.constant 0 : index
      %213 = vector.load %arg15[%c0_158, %c0_159] : memref<64x32xf32, #tpu.memory_space<vmem>>, vector<64x32xf32>
      tpu.vector_store %arg15[%c0_158, %c0_159], %212 {strides = array<i32>} : memref<64x32xf32, #tpu.memory_space<vmem>>, vector<64x32xf32>,
    } else {
    }
    %c0 = arith.constant 0 : index
    %c0_1 = arith.constant 0 : index
    %3 = vector.load %arg10[%c0, %c0_1] : memref<64x2xf32, #tpu.memory_space<vmem>>, vector<64x2xf32>
    %c0_2 = arith.constant 0 : index
    %c0_3 = arith.constant 0 : index
    %4 = vector.load %arg11[%c0_2, %c0_3] : memref<2x128xf32, #tpu.memory_space<vmem>>, vector<2x128xf32>
    %5 = vector.extract_strided_slice %3 {offsets = [0, 0], sizes = [64, 1], strides = [1, 1]} : vector<64x2xf32> to vector<64x1xf32>
    %6 = vector.extract_strided_slice %4 {offsets = [0, 0], sizes = [1, 128], strides = [1, 1]} : vector<2x128xf32> to vector<1x128xf32>
    %7 = vector.broadcast %5 : vector<64x1xf32> to vector<64x128xf32>
    %8 = vector.broadcast %6 : vector<1x128xf32> to vector<64x128xf32>
    %9 = arith.subf %7, %8 : vector<64x128xf32>
    %10 = math.absf %9 : vector<64x128xf32>
    %11 = vector.extract_strided_slice %3 {offsets = [0, 1], sizes = [64, 1], strides = [1, 1]} : vector<64x2xf32> to vector<64x1xf32>
    %12 = vector.extract_strided_slice %4 {offsets = [1, 0], sizes = [1, 128], strides = [1, 1]} : vector<2x128xf32> to vector<1x128xf32>
    %13 = vector.broadcast %11 : vector<64x1xf32> to vector<64x128xf32>
    %14 = vector.broadcast %12 : vector<1x128xf32> to vector<64x128xf32>
    %15 = arith.subf %13, %14 : vector<64x128xf32>
    %16 = math.absf %15 : vector<64x128xf32>
    %cst = arith.constant 5.000000e-01 : f32
    %17 = vector.broadcast %cst : f32 to vector<64x128xf32>
    %18 = arith.mulf %17, %16 : vector<64x128xf32>
    %19 = arith.addf %10, %18 : vector<64x128xf32>
    %c0_4 = arith.constant 0 : index
    %c0_5 = arith.constant 0 : index
    %c0_6 = arith.constant 0 : index
    %20 = vector.load %arg18[%c0_4, %c0_5, %c0_6] : memref<2x64x128xf32, #tpu.memory_space<vmem>>, vector<1x64x128xf32>
    %21 = vector.shape_cast %20 : vector<1x64x128xf32> to vector<64x128xf32>
    %22 = vector.shape_cast %19 : vector<64x128xf32> to vector<1x64x128xf32>
    tpu.vector_store %arg18[%c0_4, %c0_5, %c0_6], %22 {strides = array<i32>} : memref<2x64x128xf32, #tpu.memory_space<vmem>>, vector<1x64x128xf32>,
    %cst_7 = arith.constant 5.000000e-01 : f32
    %23 = vector.broadcast %cst_7 : f32 to vector<64x128xf32>
    %24 = arith.mulf %23, %10 : vector<64x128xf32>
    %25 = arith.addf %24, %16 : vector<64x128xf32>
    %c1 = arith.constant 1 : index
    %c0_8 = arith.constant 0 : index
    %c0_9 = arith.constant 0 : index
    %26 = vector.load %arg18[%c1, %c0_8, %c0_9] : memref<2x64x128xf32, #tpu.memory_space<vmem>>, vector<1x64x128xf32>
    %27 = vector.shape_cast %26 : vector<1x64x128xf32> to vector<64x128xf32>
    %28 = vector.shape_cast %25 : vector<64x128xf32> to vector<1x64x128xf32>
    tpu.vector_store %arg18[%c1, %c0_8, %c0_9], %28 {strides = array<i32>} : memref<2x64x128xf32, #tpu.memory_space<vmem>>, vector<1x64x128xf32>,
    %c0_10 = arith.constant 0 : index
    %c0_11 = arith.constant 0 : index
    %c0_12 = arith.constant 0 : index
    %c0_13 = arith.constant 0 : index
    %29 = vector.load %arg12[%c0_10, %c0_11, %c0_12, %c0_13] : memref<1x1x1x128xf32, #tpu.memory_space<vmem>>, vector<1x1x1x128xf32>
    %30 = vector.shape_cast %29 : vector<1x1x1x128xf32> to vector<1x128xf32>
    %c0_14 = arith.constant 0 : index
    %c0_15 = arith.constant 0 : index
    %c0_16 = arith.constant 0 : index
    %31 = vector.load %arg18[%c0_14, %c0_15, %c0_16] : memref<2x64x128xf32, #tpu.memory_space<vmem>>, vector<1x64x128xf32>
    %32 = vector.shape_cast %31 : vector<1x64x128xf32> to vector<64x128xf32>
    %c0_17 = arith.constant 0 : index
    %c0_18 = arith.constant 0 : index
    %33 = vector.load %arg14[%c0_17, %c0_18] : memref<64x32xf32, #tpu.memory_space<vmem>>, vector<64x8xf32>
    %c0_19 = arith.constant 0 : index
    %c0_20 = arith.constant 0 : index
    %c0_21 = arith.constant 0 : index
    %34 = vector.load %arg8[%c0_19, %c0_20, %c0_21] : memref<1x32x128xf32, #tpu.memory_space<vmem>>, vector<1x8x128xf32>
    %35 = vector.shape_cast %34 : vector<1x8x128xf32> to vector<8x128xf32>
    %cst_22 = arith.constant dense<0.000000e+00> : vector<64x128xf32>
    %36 = tpu.matmul %33, %35, %cst_22 {dimension_numbers = #tpu.dot_dimension_numbers<[1], [0], [0], [1], [0, 0, 1, 1], [], []>} : vector<64x8xf32>, vector<8x128xf32>, vector<64x128xf32> -> vector<64x128xf32>
    %cst_23 = arith.constant 2.500000e-01 : f32
    %37 = vector.broadcast %cst_23 : f32 to vector<64x128xf32>
    %38 = arith.mulf %37, %32 : vector<64x128xf32>
    %39 = arith.subf %36, %38 : vector<64x128xf32>
    %40 = vector.broadcast %30 : vector<1x128xf32> to vector<64x128xf32>
    %41 = arith.addf %39, %40 : vector<64x128xf32>
    %c0_24 = arith.constant 0 : index
    %c0_25 = arith.constant 0 : index
    %c0_26 = arith.constant 0 : index
    %42 = vector.load %arg16[%c0_24, %c0_25, %c0_26] : memref<4x64x1xf32, #tpu.memory_space<vmem>>, vector<1x64x1xf32>
    %43 = vector.shape_cast %42 : vector<1x64x1xf32> to vector<64x1xf32>
    %cst_27 = arith.constant dense<0xFF800000> : vector<64xf32>
    %44 = vector.multi_reduction <maximumf>, %41, %cst_27 [1] : vector<64x128xf32> to vector<64xf32>
    %45 = vector.shape_cast %44 : vector<64xf32> to vector<64x1xf32>
    %46 = arith.maximumf %43, %45 : vector<64x1xf32>
    %47 = arith.subf %43, %46 : vector<64x1xf32>
    %48 = math.exp %47 : vector<64x1xf32>
    %49 = vector.broadcast %46 : vector<64x1xf32> to vector<64x128xf32>
    %50 = arith.subf %41, %49 : vector<64x128xf32>
    %51 = math.exp %50 : vector<64x128xf32>
    %c0_28 = arith.constant 0 : index
    %c0_29 = arith.constant 0 : index
    %c0_30 = arith.constant 0 : index
    %52 = vector.load %arg17[%c0_28, %c0_29, %c0_30] : memref<4x64x1xf32, #tpu.memory_space<vmem>>, vector<1x64x1xf32>
    %53 = vector.shape_cast %52 : vector<1x64x1xf32> to vector<64x1xf32>
    %54 = arith.mulf %48, %53 : vector<64x1xf32>
    %cst_31 = arith.constant dense<0.000000e+00> : vector<64xf32>
    %55 = vector.multi_reduction <add>, %51, %cst_31 [1] : vector<64x128xf32> to vector<64xf32>
    %56 = vector.shape_cast %55 : vector<64xf32> to vector<64x1xf32>
    %57 = arith.addf %54, %56 : vector<64x1xf32>
    %c0_32 = arith.constant 0 : index
    %c0_33 = arith.constant 0 : index
    %c0_34 = arith.constant 0 : index
    %58 = vector.load %arg17[%c0_32, %c0_33, %c0_34] : memref<4x64x1xf32, #tpu.memory_space<vmem>>, vector<1x64x1xf32>
    %59 = vector.shape_cast %58 : vector<1x64x1xf32> to vector<64x1xf32>
    %60 = vector.shape_cast %57 : vector<64x1xf32> to vector<1x64x1xf32>
    tpu.vector_store %arg17[%c0_32, %c0_33, %c0_34], %60 {strides = array<i32>} : memref<4x64x1xf32, #tpu.memory_space<vmem>>, vector<1x64x1xf32>,
    %c0_35 = arith.constant 0 : index
    %c0_36 = arith.constant 0 : index
    %c0_37 = arith.constant 0 : index
    %61 = vector.load %arg16[%c0_35, %c0_36, %c0_37] : memref<4x64x1xf32, #tpu.memory_space<vmem>>, vector<1x64x1xf32>
    %62 = vector.shape_cast %61 : vector<1x64x1xf32> to vector<64x1xf32>
    %63 = vector.shape_cast %46 : vector<64x1xf32> to vector<1x64x1xf32>
    tpu.vector_store %arg16[%c0_35, %c0_36, %c0_37], %63 {strides = array<i32>} : memref<4x64x1xf32, #tpu.memory_space<vmem>>, vector<1x64x1xf32>,
    %c0_38 = arith.constant 0 : index
    %c0_39 = arith.constant 0 : index
    %c0_40 = arith.constant 0 : index
    %64 = vector.load %arg9[%c0_38, %c0_39, %c0_40] : memref<1x128x32xf32, #tpu.memory_space<vmem>>, vector<1x128x8xf32>
    %65 = vector.shape_cast %64 : vector<1x128x8xf32> to vector<128x8xf32>
    %cst_41 = arith.constant dense<0.000000e+00> : vector<64x8xf32>
    %66 = tpu.matmul %51, %65, %cst_41 {dimension_numbers = #tpu.dot_dimension_numbers<[1], [0], [0], [1], [0, 0, 1, 1], [], []>} : vector<64x128xf32>, vector<128x8xf32>, vector<64x8xf32> -> vector<64x8xf32>
    %c0_42 = arith.constant 0 : index
    %c0_43 = arith.constant 0 : index
    %67 = vector.load %arg15[%c0_42, %c0_43] : memref<64x32xf32, #tpu.memory_space<vmem>>, vector<64x8xf32>
    %68 = vector.broadcast %48 : vector<64x1xf32> to vector<64x8xf32>
    %69 = arith.mulf %68, %67 : vector<64x8xf32>
    %70 = arith.addf %69, %66 : vector<64x8xf32>
    %c0_44 = arith.constant 0 : index
    %c0_45 = arith.constant 0 : index
    %71 = vector.load %arg15[%c0_44, %c0_45] : memref<64x32xf32, #tpu.memory_space<vmem>>, vector<64x8xf32>
    tpu.vector_store %arg15[%c0_44, %c0_45], %70 {strides = array<i32>} : memref<64x32xf32, #tpu.memory_space<vmem>>, vector<64x8xf32>,
    %c0_46 = arith.constant 0 : index
    %c0_47 = arith.constant 0 : index
    %c0_48 = arith.constant 0 : index
    %72 = vector.load %arg18[%c0_46, %c0_47, %c0_48] : memref<2x64x128xf32, #tpu.memory_space<vmem>>, vector<1x64x128xf32>
    %73 = vector.shape_cast %72 : vector<1x64x128xf32> to vector<64x128xf32>
    %c0_49 = arith.constant 0 : index
    %c8 = arith.constant 8 : index
    %74 = vector.load %arg14[%c0_49, %c8] : memref<64x32xf32, #tpu.memory_space<vmem>>, vector<64x8xf32>
    %c0_50 = arith.constant 0 : index
    %c8_51 = arith.constant 8 : index
    %c0_52 = arith.constant 0 : index
    %75 = vector.load %arg8[%c0_50, %c8_51, %c0_52] : memref<1x32x128xf32, #tpu.memory_space<vmem>>, vector<1x8x128xf32>
    %76 = vector.shape_cast %75 : vector<1x8x128xf32> to vector<8x128xf32>
    %cst_53 = arith.constant dense<0.000000e+00> : vector<64x128xf32>
    %77 = tpu.matmul %74, %76, %cst_53 {dimension_numbers = #tpu.dot_dimension_numbers<[1], [0], [0], [1], [0, 0, 1, 1], [], []>} : vector<64x8xf32>, vector<8x128xf32>, vector<64x128xf32> -> vector<64x128xf32>
    %cst_54 = arith.constant 6.250000e-02 : f32
    %78 = vector.broadcast %cst_54 : f32 to vector<64x128xf32>
    %79 = arith.mulf %78, %73 : vector<64x128xf32>
    %80 = arith.subf %77, %79 : vector<64x128xf32>
    %81 = vector.broadcast %30 : vector<1x128xf32> to vector<64x128xf32>
    %82 = arith.addf %80, %81 : vector<64x128xf32>
    %c1_55 = arith.constant 1 : index
    %c0_56 = arith.constant 0 : index
    %c0_57 = arith.constant 0 : index
    %83 = vector.load %arg16[%c1_55, %c0_56, %c0_57] : memref<4x64x1xf32, #tpu.memory_space<vmem>>, vector<1x64x1xf32>
    %84 = vector.shape_cast %83 : vector<1x64x1xf32> to vector<64x1xf32>
    %cst_58 = arith.constant dense<0xFF800000> : vector<64xf32>
    %85 = vector.multi_reduction <maximumf>, %82, %cst_58 [1] : vector<64x128xf32> to vector<64xf32>
    %86 = vector.shape_cast %85 : vector<64xf32> to vector<64x1xf32>
    %87 = arith.maximumf %84, %86 : vector<64x1xf32>
    %88 = arith.subf %84, %87 : vector<64x1xf32>
    %89 = math.exp %88 : vector<64x1xf32>
    %90 = vector.broadcast %87 : vector<64x1xf32> to vector<64x128xf32>
    %91 = arith.subf %82, %90 : vector<64x128xf32>
    %92 = math.exp %91 : vector<64x128xf32>
    %c1_59 = arith.constant 1 : index
    %c0_60 = arith.constant 0 : index
    %c0_61 = arith.constant 0 : index
    %93 = vector.load %arg17[%c1_59, %c0_60, %c0_61] : memref<4x64x1xf32, #tpu.memory_space<vmem>>, vector<1x64x1xf32>
    %94 = vector.shape_cast %93 : vector<1x64x1xf32> to vector<64x1xf32>
    %95 = arith.mulf %89, %94 : vector<64x1xf32>
    %cst_62 = arith.constant dense<0.000000e+00> : vector<64xf32>
    %96 = vector.multi_reduction <add>, %92, %cst_62 [1] : vector<64x128xf32> to vector<64xf32>
    %97 = vector.shape_cast %96 : vector<64xf32> to vector<64x1xf32>
    %98 = arith.addf %95, %97 : vector<64x1xf32>
    %c1_63 = arith.constant 1 : index
    %c0_64 = arith.constant 0 : index
    %c0_65 = arith.constant 0 : index
    %99 = vector.load %arg17[%c1_63, %c0_64, %c0_65] : memref<4x64x1xf32, #tpu.memory_space<vmem>>, vector<1x64x1xf32>
    %100 = vector.shape_cast %99 : vector<1x64x1xf32> to vector<64x1xf32>
    %101 = vector.shape_cast %98 : vector<64x1xf32> to vector<1x64x1xf32>
    tpu.vector_store %arg17[%c1_63, %c0_64, %c0_65], %101 {strides = array<i32>} : memref<4x64x1xf32, #tpu.memory_space<vmem>>, vector<1x64x1xf32>,
    %c1_66 = arith.constant 1 : index
    %c0_67 = arith.constant 0 : index
    %c0_68 = arith.constant 0 : index
    %102 = vector.load %arg16[%c1_66, %c0_67, %c0_68] : memref<4x64x1xf32, #tpu.memory_space<vmem>>, vector<1x64x1xf32>
    %103 = vector.shape_cast %102 : vector<1x64x1xf32> to vector<64x1xf32>
    %104 = vector.shape_cast %87 : vector<64x1xf32> to vector<1x64x1xf32>
    tpu.vector_store %arg16[%c1_66, %c0_67, %c0_68], %104 {strides = array<i32>} : memref<4x64x1xf32, #tpu.memory_space<vmem>>, vector<1x64x1xf32>,
    %c0_69 = arith.constant 0 : index
    %c0_70 = arith.constant 0 : index
    %c8_71 = arith.constant 8 : index
    %105 = vector.load %arg9[%c0_69, %c0_70, %c8_71] : memref<1x128x32xf32, #tpu.memory_space<vmem>>, vector<1x128x8xf32>
    %106 = vector.shape_cast %105 : vector<1x128x8xf32> to vector<128x8xf32>
    %cst_72 = arith.constant dense<0.000000e+00> : vector<64x8xf32>
    %107 = tpu.matmul %92, %106, %cst_72 {dimension_numbers = #tpu.dot_dimension_numbers<[1], [0], [0], [1], [0, 0, 1, 1], [], []>} : vector<64x128xf32>, vector<128x8xf32>, vector<64x8xf32> -> vector<64x8xf32>
    %c0_73 = arith.constant 0 : index
    %c8_74 = arith.constant 8 : index
    %108 = vector.load %arg15[%c0_73, %c8_74] : memref<64x32xf32, #tpu.memory_space<vmem>>, vector<64x8xf32>
    %109 = vector.broadcast %89 : vector<64x1xf32> to vector<64x8xf32>
    %110 = arith.mulf %109, %108 : vector<64x8xf32>
    %111 = arith.addf %110, %107 : vector<64x8xf32>
    %c0_75 = arith.constant 0 : index
    %c8_76 = arith.constant 8 : index
    %112 = vector.load %arg15[%c0_75, %c8_76] : memref<64x32xf32, #tpu.memory_space<vmem>>, vector<64x8xf32>
    tpu.vector_store %arg15[%c0_75, %c8_76], %111 {strides = array<i32>} : memref<64x32xf32, #tpu.memory_space<vmem>>, vector<64x8xf32>,
    %c1_77 = arith.constant 1 : index
    %c0_78 = arith.constant 0 : index
    %c0_79 = arith.constant 0 : index
    %113 = vector.load %arg18[%c1_77, %c0_78, %c0_79] : memref<2x64x128xf32, #tpu.memory_space<vmem>>, vector<1x64x128xf32>
    %114 = vector.shape_cast %113 : vector<1x64x128xf32> to vector<64x128xf32>
    %c0_80 = arith.constant 0 : index
    %c16 = arith.constant 16 : index
    %115 = vector.load %arg14[%c0_80, %c16] : memref<64x32xf32, #tpu.memory_space<vmem>>, vector<64x8xf32>
    %c0_81 = arith.constant 0 : index
    %c16_82 = arith.constant 16 : index
    %c0_83 = arith.constant 0 : index
    %116 = vector.load %arg8[%c0_81, %c16_82, %c0_83] : memref<1x32x128xf32, #tpu.memory_space<vmem>>, vector<1x8x128xf32>
    %117 = vector.shape_cast %116 : vector<1x8x128xf32> to vector<8x128xf32>
    %cst_84 = arith.constant dense<0.000000e+00> : vector<64x128xf32>
    %118 = tpu.matmul %115, %117, %cst_84 {dimension_numbers = #tpu.dot_dimension_numbers<[1], [0], [0], [1], [0, 0, 1, 1], [], []>} : vector<64x8xf32>, vector<8x128xf32>, vector<64x128xf32> -> vector<64x128xf32>
    %cst_85 = arith.constant 1.562500e-02 : f32
    %119 = vector.broadcast %cst_85 : f32 to vector<64x128xf32>
    %120 = arith.mulf %119, %114 : vector<64x128xf32>
    %121 = arith.subf %118, %120 : vector<64x128xf32>
    %122 = vector.broadcast %30 : vector<1x128xf32> to vector<64x128xf32>
    %123 = arith.addf %121, %122 : vector<64x128xf32>
    %c2 = arith.constant 2 : index
    %c0_86 = arith.constant 0 : index
    %c0_87 = arith.constant 0 : index
    %124 = vector.load %arg16[%c2, %c0_86, %c0_87] : memref<4x64x1xf32, #tpu.memory_space<vmem>>, vector<1x64x1xf32>
    %125 = vector.shape_cast %124 : vector<1x64x1xf32> to vector<64x1xf32>
    %cst_88 = arith.constant dense<0xFF800000> : vector<64xf32>
    %126 = vector.multi_reduction <maximumf>, %123, %cst_88 [1] : vector<64x128xf32> to vector<64xf32>
    %127 = vector.shape_cast %126 : vector<64xf32> to vector<64x1xf32>
    %128 = arith.maximumf %125, %127 : vector<64x1xf32>
    %129 = arith.subf %125, %128 : vector<64x1xf32>
    %130 = math.exp %129 : vector<64x1xf32>
    %131 = vector.broadcast %128 : vector<64x1xf32> to vector<64x128xf32>
    %132 = arith.subf %123, %131 : vector<64x128xf32>
    %133 = math.exp %132 : vector<64x128xf32>
    %c2_89 = arith.constant 2 : index
    %c0_90 = arith.constant 0 : index
    %c0_91 = arith.constant 0 : index
    %134 = vector.load %arg17[%c2_89, %c0_90, %c0_91] : memref<4x64x1xf32, #tpu.memory_space<vmem>>, vector<1x64x1xf32>
    %135 = vector.shape_cast %134 : vector<1x64x1xf32> to vector<64x1xf32>
    %136 = arith.mulf %130, %135 : vector<64x1xf32>
    %cst_92 = arith.constant dense<0.000000e+00> : vector<64xf32>
    %137 = vector.multi_reduction <add>, %133, %cst_92 [1] : vector<64x128xf32> to vector<64xf32>
    %138 = vector.shape_cast %137 : vector<64xf32> to vector<64x1xf32>
    %139 = arith.addf %136, %138 : vector<64x1xf32>
    %c2_93 = arith.constant 2 : index
    %c0_94 = arith.constant 0 : index
    %c0_95 = arith.constant 0 : index
    %140 = vector.load %arg17[%c2_93, %c0_94, %c0_95] : memref<4x64x1xf32, #tpu.memory_space<vmem>>, vector<1x64x1xf32>
    %141 = vector.shape_cast %140 : vector<1x64x1xf32> to vector<64x1xf32>
    %142 = vector.shape_cast %139 : vector<64x1xf32> to vector<1x64x1xf32>
    tpu.vector_store %arg17[%c2_93, %c0_94, %c0_95], %142 {strides = array<i32>} : memref<4x64x1xf32, #tpu.memory_space<vmem>>, vector<1x64x1xf32>,
    %c2_96 = arith.constant 2 : index
    %c0_97 = arith.constant 0 : index
    %c0_98 = arith.constant 0 : index
    %143 = vector.load %arg16[%c2_96, %c0_97, %c0_98] : memref<4x64x1xf32, #tpu.memory_space<vmem>>, vector<1x64x1xf32>
    %144 = vector.shape_cast %143 : vector<1x64x1xf32> to vector<64x1xf32>
    %145 = vector.shape_cast %128 : vector<64x1xf32> to vector<1x64x1xf32>
    tpu.vector_store %arg16[%c2_96, %c0_97, %c0_98], %145 {strides = array<i32>} : memref<4x64x1xf32, #tpu.memory_space<vmem>>, vector<1x64x1xf32>,
    %c0_99 = arith.constant 0 : index
    %c0_100 = arith.constant 0 : index
    %c16_101 = arith.constant 16 : index
    %146 = vector.load %arg9[%c0_99, %c0_100, %c16_101] : memref<1x128x32xf32, #tpu.memory_space<vmem>>, vector<1x128x8xf32>
    %147 = vector.shape_cast %146 : vector<1x128x8xf32> to vector<128x8xf32>
    %cst_102 = arith.constant dense<0.000000e+00> : vector<64x8xf32>
    %148 = tpu.matmul %133, %147, %cst_102 {dimension_numbers = #tpu.dot_dimension_numbers<[1], [0], [0], [1], [0, 0, 1, 1], [], []>} : vector<64x128xf32>, vector<128x8xf32>, vector<64x8xf32> -> vector<64x8xf32>
    %c0_103 = arith.constant 0 : index
    %c16_104 = arith.constant 16 : index
    %149 = vector.load %arg15[%c0_103, %c16_104] : memref<64x32xf32, #tpu.memory_space<vmem>>, vector<64x8xf32>
    %150 = vector.broadcast %130 : vector<64x1xf32> to vector<64x8xf32>
    %151 = arith.mulf %150, %149 : vector<64x8xf32>
    %152 = arith.addf %151, %148 : vector<64x8xf32>
    %c0_105 = arith.constant 0 : index
    %c16_106 = arith.constant 16 : index
    %153 = vector.load %arg15[%c0_105, %c16_106] : memref<64x32xf32, #tpu.memory_space<vmem>>, vector<64x8xf32>
    tpu.vector_store %arg15[%c0_105, %c16_106], %152 {strides = array<i32>} : memref<64x32xf32, #tpu.memory_space<vmem>>, vector<64x8xf32>,
    %c1_107 = arith.constant 1 : index
    %c0_108 = arith.constant 0 : index
    %c0_109 = arith.constant 0 : index
    %154 = vector.load %arg18[%c1_107, %c0_108, %c0_109] : memref<2x64x128xf32, #tpu.memory_space<vmem>>, vector<1x64x128xf32>
    %155 = vector.shape_cast %154 : vector<1x64x128xf32> to vector<64x128xf32>
    %c0_110 = arith.constant 0 : index
    %c24 = arith.constant 24 : index
    %156 = vector.load %arg14[%c0_110, %c24] : memref<64x32xf32, #tpu.memory_space<vmem>>, vector<64x8xf32>
    %c0_111 = arith.constant 0 : index
    %c24_112 = arith.constant 24 : index
    %c0_113 = arith.constant 0 : index
    %157 = vector.load %arg8[%c0_111, %c24_112, %c0_113] : memref<1x32x128xf32, #tpu.memory_space<vmem>>, vector<1x8x128xf32>
    %158 = vector.shape_cast %157 : vector<1x8x128xf32> to vector<8x128xf32>
    %cst_114 = arith.constant dense<0.000000e+00> : vector<64x128xf32>
    %159 = tpu.matmul %156, %158, %cst_114 {dimension_numbers = #tpu.dot_dimension_numbers<[1], [0], [0], [1], [0, 0, 1, 1], [], []>} : vector<64x8xf32>, vector<8x128xf32>, vector<64x128xf32> -> vector<64x128xf32>
    %cst_115 = arith.constant 3.906250e-03 : f32
    %160 = vector.broadcast %cst_115 : f32 to vector<64x128xf32>
    %161 = arith.mulf %160, %155 : vector<64x128xf32>
    %162 = arith.subf %159, %161 : vector<64x128xf32>
    %163 = vector.broadcast %30 : vector<1x128xf32> to vector<64x128xf32>
    %164 = arith.addf %162, %163 : vector<64x128xf32>
    %c3 = arith.constant 3 : index
    %c0_116 = arith.constant 0 : index
    %c0_117 = arith.constant 0 : index
    %165 = vector.load %arg16[%c3, %c0_116, %c0_117] : memref<4x64x1xf32, #tpu.memory_space<vmem>>, vector<1x64x1xf32>
    %166 = vector.shape_cast %165 : vector<1x64x1xf32> to vector<64x1xf32>
    %cst_118 = arith.constant dense<0xFF800000> : vector<64xf32>
    %167 = vector.multi_reduction <maximumf>, %164, %cst_118 [1] : vector<64x128xf32> to vector<64xf32>
    %168 = vector.shape_cast %167 : vector<64xf32> to vector<64x1xf32>
    %169 = arith.maximumf %166, %168 : vector<64x1xf32>
    %170 = arith.subf %166, %169 : vector<64x1xf32>
    %171 = math.exp %170 : vector<64x1xf32>
    %172 = vector.broadcast %169 : vector<64x1xf32> to vector<64x128xf32>
    %173 = arith.subf %164, %172 : vector<64x128xf32>
    %174 = math.exp %173 : vector<64x128xf32>
    %c3_119 = arith.constant 3 : index
    %c0_120 = arith.constant 0 : index
    %c0_121 = arith.constant 0 : index
    %175 = vector.load %arg17[%c3_119, %c0_120, %c0_121] : memref<4x64x1xf32, #tpu.memory_space<vmem>>, vector<1x64x1xf32>
    %176 = vector.shape_cast %175 : vector<1x64x1xf32> to vector<64x1xf32>
    %177 = arith.mulf %171, %176 : vector<64x1xf32>
    %cst_122 = arith.constant dense<0.000000e+00> : vector<64xf32>
    %178 = vector.multi_reduction <add>, %174, %cst_122 [1] : vector<64x128xf32> to vector<64xf32>
    %179 = vector.shape_cast %178 : vector<64xf32> to vector<64x1xf32>
    %180 = arith.addf %177, %179 : vector<64x1xf32>
    %c3_123 = arith.constant 3 : index
    %c0_124 = arith.constant 0 : index
    %c0_125 = arith.constant 0 : index
    %181 = vector.load %arg17[%c3_123, %c0_124, %c0_125] : memref<4x64x1xf32, #tpu.memory_space<vmem>>, vector<1x64x1xf32>
    %182 = vector.shape_cast %181 : vector<1x64x1xf32> to vector<64x1xf32>
    %183 = vector.shape_cast %180 : vector<64x1xf32> to vector<1x64x1xf32>
    tpu.vector_store %arg17[%c3_123, %c0_124, %c0_125], %183 {strides = array<i32>} : memref<4x64x1xf32, #tpu.memory_space<vmem>>, vector<1x64x1xf32>,
    %c3_126 = arith.constant 3 : index
    %c0_127 = arith.constant 0 : index
    %c0_128 = arith.constant 0 : index
    %184 = vector.load %arg16[%c3_126, %c0_127, %c0_128] : memref<4x64x1xf32, #tpu.memory_space<vmem>>, vector<1x64x1xf32>
    %185 = vector.shape_cast %184 : vector<1x64x1xf32> to vector<64x1xf32>
    %186 = vector.shape_cast %169 : vector<64x1xf32> to vector<1x64x1xf32>
    tpu.vector_store %arg16[%c3_126, %c0_127, %c0_128], %186 {strides = array<i32>} : memref<4x64x1xf32, #tpu.memory_space<vmem>>, vector<1x64x1xf32>,
    %c0_129 = arith.constant 0 : index
    %c0_130 = arith.constant 0 : index
    %c24_131 = arith.constant 24 : index
    %187 = vector.load %arg9[%c0_129, %c0_130, %c24_131] : memref<1x128x32xf32, #tpu.memory_space<vmem>>, vector<1x128x8xf32>
    %188 = vector.shape_cast %187 : vector<1x128x8xf32> to vector<128x8xf32>
    %cst_132 = arith.constant dense<0.000000e+00> : vector<64x8xf32>
    %189 = tpu.matmul %174, %188, %cst_132 {dimension_numbers = #tpu.dot_dimension_numbers<[1], [0], [0], [1], [0, 0, 1, 1], [], []>} : vector<64x128xf32>, vector<128x8xf32>, vector<64x8xf32> -> vector<64x8xf32>
    %c0_133 = arith.constant 0 : index
    %c24_134 = arith.constant 24 : index
    %190 = vector.load %arg15[%c0_133, %c24_134] : memref<64x32xf32, #tpu.memory_space<vmem>>, vector<64x8xf32>
    %191 = vector.broadcast %171 : vector<64x1xf32> to vector<64x8xf32>
    %192 = arith.mulf %191, %190 : vector<64x8xf32>
    %193 = arith.addf %192, %189 : vector<64x8xf32>
    %c0_135 = arith.constant 0 : index
    %c24_136 = arith.constant 24 : index
    %194 = vector.load %arg15[%c0_135, %c24_136] : memref<64x32xf32, #tpu.memory_space<vmem>>, vector<64x8xf32>
    tpu.vector_store %arg15[%c0_135, %c24_136], %193 {strides = array<i32>} : memref<64x32xf32, #tpu.memory_space<vmem>>, vector<64x8xf32>,
    %c1_i32 = arith.constant 1 : i32
    %195 = arith.cmpi eq, %arg2, %c1_i32 : i32
    %196 = arith.extui %195 : i1 to i32
    %c0_i32_137 = arith.constant 0 : i32
    %197 = arith.cmpi ne, %196, %c0_i32_137 : i32
    scf.if %197 {
      %c0_138 = arith.constant 0 : index
      %c0_139 = arith.constant 0 : index
      %c0_140 = arith.constant 0 : index
      %198 = vector.load %arg17[%c0_138, %c0_139, %c0_140] : memref<4x64x1xf32, #tpu.memory_space<vmem>>, vector<1x64x1xf32>
      %199 = vector.shape_cast %198 : vector<1x64x1xf32> to vector<64x1xf32>
      %200 = tpu.reciprocal %199 {approx = true} : vector<64x1xf32> -> vector<64x1xf32>
      %201 = arith.mulf %199, %200 : vector<64x1xf32>
      %cst_141 = arith.constant 2.000000e+00 : f32
      %202 = vector.broadcast %cst_141 : f32 to vector<64x1xf32>
      %203 = arith.subf %202, %201 : vector<64x1xf32>
      %204 = arith.mulf %200, %203 : vector<64x1xf32>
      %c0_142 = arith.constant 0 : index
      %c0_143 = arith.constant 0 : index
      %205 = vector.load %arg15[%c0_142, %c0_143] : memref<64x32xf32, #tpu.memory_space<vmem>>, vector<64x8xf32>
      %206 = vector.broadcast %204 : vector<64x1xf32> to vector<64x8xf32>
      %207 = arith.mulf %205, %206 : vector<64x8xf32>
      %c0_144 = arith.constant 0 : index
      %c0_145 = arith.constant 0 : index
      %208 = vector.load %arg15[%c0_144, %c0_145] : memref<64x32xf32, #tpu.memory_space<vmem>>, vector<64x8xf32>
      tpu.vector_store %arg15[%c0_144, %c0_145], %207 {strides = array<i32>} : memref<64x32xf32, #tpu.memory_space<vmem>>, vector<64x8xf32>,
      %c1_146 = arith.constant 1 : index
      %c0_147 = arith.constant 0 : index
      %c0_148 = arith.constant 0 : index
      %209 = vector.load %arg17[%c1_146, %c0_147, %c0_148] : memref<4x64x1xf32, #tpu.memory_space<vmem>>, vector<1x64x1xf32>
      %210 = vector.shape_cast %209 : vector<1x64x1xf32> to vector<64x1xf32>
      %211 = tpu.reciprocal %210 {approx = true} : vector<64x1xf32> -> vector<64x1xf32>
      %212 = arith.mulf %210, %211 : vector<64x1xf32>
      %cst_149 = arith.constant 2.000000e+00 : f32
      %213 = vector.broadcast %cst_149 : f32 to vector<64x1xf32>
      %214 = arith.subf %213, %212 : vector<64x1xf32>
      %215 = arith.mulf %211, %214 : vector<64x1xf32>
      %c0_150 = arith.constant 0 : index
      %c8_151 = arith.constant 8 : index
      %216 = vector.load %arg15[%c0_150, %c8_151] : memref<64x32xf32, #tpu.memory_space<vmem>>, vector<64x8xf32>
      %217 = vector.broadcast %215 : vector<64x1xf32> to vector<64x8xf32>
      %218 = arith.mulf %216, %217 : vector<64x8xf32>
      %c0_152 = arith.constant 0 : index
      %c8_153 = arith.constant 8 : index
      %219 = vector.load %arg15[%c0_152, %c8_153] : memref<64x32xf32, #tpu.memory_space<vmem>>, vector<64x8xf32>
      tpu.vector_store %arg15[%c0_152, %c8_153], %218 {strides = array<i32>} : memref<64x32xf32, #tpu.memory_space<vmem>>, vector<64x8xf32>,
      %c2_154 = arith.constant 2 : index
      %c0_155 = arith.constant 0 : index
      %c0_156 = arith.constant 0 : index
      %220 = vector.load %arg17[%c2_154, %c0_155, %c0_156] : memref<4x64x1xf32, #tpu.memory_space<vmem>>, vector<1x64x1xf32>
      %221 = vector.shape_cast %220 : vector<1x64x1xf32> to vector<64x1xf32>
      %222 = tpu.reciprocal %221 {approx = true} : vector<64x1xf32> -> vector<64x1xf32>
      %223 = arith.mulf %221, %222 : vector<64x1xf32>
      %cst_157 = arith.constant 2.000000e+00 : f32
      %224 = vector.broadcast %cst_157 : f32 to vector<64x1xf32>
      %225 = arith.subf %224, %223 : vector<64x1xf32>
      %226 = arith.mulf %222, %225 : vector<64x1xf32>
      %c0_158 = arith.constant 0 : index
      %c16_159 = arith.constant 16 : index
      %227 = vector.load %arg15[%c0_158, %c16_159] : memref<64x32xf32, #tpu.memory_space<vmem>>, vector<64x8xf32>
      %228 = vector.broadcast %226 : vector<64x1xf32> to vector<64x8xf32>
      %229 = arith.mulf %227, %228 : vector<64x8xf32>
      %c0_160 = arith.constant 0 : index
      %c16_161 = arith.constant 16 : index
      %230 = vector.load %arg15[%c0_160, %c16_161] : memref<64x32xf32, #tpu.memory_space<vmem>>, vector<64x8xf32>
      tpu.vector_store %arg15[%c0_160, %c16_161], %229 {strides = array<i32>} : memref<64x32xf32, #tpu.memory_space<vmem>>, vector<64x8xf32>,
      %c3_162 = arith.constant 3 : index
      %c0_163 = arith.constant 0 : index
      %c0_164 = arith.constant 0 : index
      %231 = vector.load %arg17[%c3_162, %c0_163, %c0_164] : memref<4x64x1xf32, #tpu.memory_space<vmem>>, vector<1x64x1xf32>
      %232 = vector.shape_cast %231 : vector<1x64x1xf32> to vector<64x1xf32>
      %233 = tpu.reciprocal %232 {approx = true} : vector<64x1xf32> -> vector<64x1xf32>
      %234 = arith.mulf %232, %233 : vector<64x1xf32>
      %cst_165 = arith.constant 2.000000e+00 : f32
      %235 = vector.broadcast %cst_165 : f32 to vector<64x1xf32>
      %236 = arith.subf %235, %234 : vector<64x1xf32>
      %237 = arith.mulf %233, %236 : vector<64x1xf32>
      %c0_166 = arith.constant 0 : index
      %c24_167 = arith.constant 24 : index
      %238 = vector.load %arg15[%c0_166, %c24_167] : memref<64x32xf32, #tpu.memory_space<vmem>>, vector<64x8xf32>
      %239 = vector.broadcast %237 : vector<64x1xf32> to vector<64x8xf32>
      %240 = arith.mulf %238, %239 : vector<64x8xf32>
      %c0_168 = arith.constant 0 : index
      %c24_169 = arith.constant 24 : index
      %241 = vector.load %arg15[%c0_168, %c24_169] : memref<64x32xf32, #tpu.memory_space<vmem>>, vector<64x8xf32>
      tpu.vector_store %arg15[%c0_168, %c24_169], %240 {strides = array<i32>} : memref<64x32xf32, #tpu.memory_space<vmem>>, vector<64x8xf32>,
      %c0_170 = arith.constant 0 : index
      %c0_171 = arith.constant 0 : index
      %242 = vector.load %arg15[%c0_170, %c0_171] : memref<64x32xf32, #tpu.memory_space<vmem>>, vector<64x32xf32>
      %c0_172 = arith.constant 0 : index
      %c0_173 = arith.constant 0 : index
      %243 = vector.load %arg6[%c0_172, %c0_173] : memref<32x32xf32, #tpu.memory_space<vmem>>, vector<32x32xf32>
      %cst_174 = arith.constant dense<0.000000e+00> : vector<64x32xf32>
      %244 = tpu.matmul %242, %243, %cst_174 {dimension_numbers = #tpu.dot_dimension_numbers<[1], [0], [0], [1], [0, 0, 1, 1], [], []>} : vector<64x32xf32>, vector<32x32xf32>, vector<64x32xf32> -> vector<64x32xf32>
      %c0_175 = arith.constant 0 : index
      %c0_176 = arith.constant 0 : index
      %245 = vector.load %arg7[%c0_175, %c0_176] : memref<1x32xf32, #tpu.memory_space<vmem>>, vector<1x32xf32>
      %246 = vector.broadcast %245 : vector<1x32xf32> to vector<64x32xf32>
      %247 = arith.addf %244, %246 : vector<64x32xf32>
      %c0_177 = arith.constant 0 : index
      %c0_178 = arith.constant 0 : index
      %c0_179 = arith.constant 0 : index
      %248 = vector.load %arg13[%c0_177, %c0_178, %c0_179] : memref<1x64x32xf32, #tpu.memory_space<vmem>>, vector<1x64x32xf32>
      %249 = vector.shape_cast %248 : vector<1x64x32xf32> to vector<64x32xf32>
      %250 = vector.shape_cast %247 : vector<64x32xf32> to vector<1x64x32xf32>
      tpu.vector_store %arg13[%c0_177, %c0_178, %c0_179], %250 {strides = array<i32>} : memref<1x64x32xf32, #tpu.memory_space<vmem>>, vector<1x64x32xf32>,
    } else {
    }
    return
  }
  func.func @transform_0(%arg0: i32, %arg1: i32, %arg2: i32) -> (i32, i32, i32) {
    %c0_i32 = arith.constant 0 : i32
    %c0_i32_0 = arith.constant 0 : i32
    return %arg0, %arg1, %c0_i32 : i32, i32, i32
  }
  func.func @transform_1(%arg0: i32, %arg1: i32, %arg2: i32) -> (i32, i32) {
    %c0_i32 = arith.constant 0 : i32
    %c0_i32_0 = arith.constant 0 : i32
    %c0_i32_1 = arith.constant 0 : i32
    return %c0_i32, %c0_i32_0 : i32, i32
  }
  func.func @transform_2(%arg0: i32, %arg1: i32, %arg2: i32) -> (i32, i32) {
    %c0_i32 = arith.constant 0 : i32
    %c0_i32_0 = arith.constant 0 : i32
    %c0_i32_1 = arith.constant 0 : i32
    return %c0_i32, %c0_i32_0 : i32, i32
  }
  func.func @transform_3(%arg0: i32, %arg1: i32, %arg2: i32) -> (i32, i32) {
    %c0_i32 = arith.constant 0 : i32
    %c0_i32_0 = arith.constant 0 : i32
    %c0_i32_1 = arith.constant 0 : i32
    return %c0_i32, %c0_i32_0 : i32, i32
  }
  func.func @transform_4(%arg0: i32, %arg1: i32, %arg2: i32) -> (i32, i32) {
    %c0_i32 = arith.constant 0 : i32
    %c0_i32_0 = arith.constant 0 : i32
    %c0_i32_1 = arith.constant 0 : i32
    return %c0_i32, %c0_i32_0 : i32, i32
  }
  func.func @transform_5(%arg0: i32, %arg1: i32, %arg2: i32) -> (i32, i32, i32) {
    %c0_i32 = arith.constant 0 : i32
    %c0_i32_0 = arith.constant 0 : i32
    return %arg0, %c0_i32, %arg2 : i32, i32, i32
  }
  func.func @transform_6(%arg0: i32, %arg1: i32, %arg2: i32) -> (i32, i32, i32) {
    %c0_i32 = arith.constant 0 : i32
    %c0_i32_0 = arith.constant 0 : i32
    return %arg0, %arg2, %c0_i32 : i32, i32, i32
  }
  func.func @transform_7(%arg0: i32, %arg1: i32, %arg2: i32) -> (i32, i32) {
    %c0_i32 = arith.constant 0 : i32
    %c0_i32_0 = arith.constant 0 : i32
    return %arg1, %c0_i32 : i32, i32
  }
  func.func @transform_8(%arg0: i32, %arg1: i32, %arg2: i32) -> (i32, i32) {
    %c0_i32 = arith.constant 0 : i32
    %c0_i32_0 = arith.constant 0 : i32
    return %c0_i32, %arg2 : i32, i32
  }
  func.func @transform_9(%arg0: i32, %arg1: i32, %arg2: i32) -> (i32, i32, i32, i32) {
    %c0_i32 = arith.constant 0 : i32
    %c0_i32_0 = arith.constant 0 : i32
    %c0_i32_1 = arith.constant 0 : i32
    return %arg0, %c0_i32, %c0_i32_0, %arg2 : i32, i32, i32, i32
  }
  func.func @transform_10(%arg0: i32, %arg1: i32, %arg2: i32) -> (i32, i32, i32) {
    %c0_i32 = arith.constant 0 : i32
    %c0_i32_0 = arith.constant 0 : i32
    return %arg0, %arg1, %c0_i32 : i32, i32, i32
  }
}

module attributes {stable_mosaic.version = 11 : i64} {
  func.func @_enhanced_attention_kernel(%arg0: i32, %arg1: i32, %arg2: i32, %arg3: memref<1x64x32xf32, #tpu.memory_space<vmem>>, %arg4: memref<32x32xf32, #tpu.memory_space<vmem>>, %arg5: memref<1x32xf32, #tpu.memory_space<vmem>>, %arg6: memref<32x32xf32, #tpu.memory_space<vmem>>, %arg7: memref<1x32xf32, #tpu.memory_space<vmem>>, %arg8: memref<1x32x128xf32, #tpu.memory_space<vmem>>, %arg9: memref<1x128x32xf32, #tpu.memory_space<vmem>>, %arg10: memref<64x2xf32, #tpu.memory_space<vmem>>, %arg11: memref<2x128xf32, #tpu.memory_space<vmem>>, %arg12: memref<1x1x1x128xf32, #tpu.memory_space<vmem>>, %arg13: memref<1x64x32xf32, #tpu.memory_space<vmem>>, %arg14: memref<64x32xf32, #tpu.memory_space<vmem>>, %arg15: memref<64x32xf32, #tpu.memory_space<vmem>>, %arg16: memref<4x64x1xf32, #tpu.memory_space<vmem>>, %arg17: memref<4x64x1xf32, #tpu.memory_space<vmem>>, %arg18: memref<2x64x128xf32, #tpu.memory_space<vmem>>) attributes {dimension_semantics = [#tpu.dimension_semantics<parallel>, #tpu.dimension_semantics<parallel>, #tpu.dimension_semantics<arbitrary>], iteration_bounds = array<i64: 2, 4, 2>, scalar_prefetch = 0 : i64, scratch_operands = 5 : i64, tpu.core_type = #tpu.core_type<tc>, window_params = [{transform_indices = @transform_0, window_bounds = array<i64: 1, 64, 32>}, {pipeline_mode = #tpu.pipeline_mode<synchronous>, transform_indices = @transform_1, window_bounds = array<i64: 32, 32>}, {pipeline_mode = #tpu.pipeline_mode<synchronous>, transform_indices = @transform_2, window_bounds = array<i64: 1, 32>}, {pipeline_mode = #tpu.pipeline_mode<synchronous>, transform_indices = @transform_3, window_bounds = array<i64: 32, 32>}, {pipeline_mode = #tpu.pipeline_mode<synchronous>, transform_indices = @transform_4, window_bounds = array<i64: 1, 32>}, {transform_indices = @transform_5, window_bounds = array<i64: 1, 32, 128>}, {transform_indices = @transform_6, window_bounds = array<i64: 1, 128, 32>}, {transform_indices = @transform_7, window_bounds = array<i64: 64, 2>}, {transform_indices = @transform_8, window_bounds = array<i64: 2, 128>}, {transform_indices = @transform_9, window_bounds = array<i64: 1, 1, 1, 128>}, {transform_indices = @transform_10, window_bounds = array<i64: 1, 64, 32>}]} {
    %c0_i32 = arith.constant 0 : i32
    %0 = arith.cmpi eq, %arg2, %c0_i32 : i32
    %1 = arith.extui %0 : i1 to i32
    %c0_i32_0 = arith.constant 0 : i32
    %2 = arith.cmpi ne, %1, %c0_i32_0 : i32
    scf.if %2 {
      %c0_138 = arith.constant 0 : index
      %c0_139 = arith.constant 0 : index
      %c0_140 = arith.constant 0 : index
      %198 = vector.load %arg3[%c0_138, %c0_139, %c0_140] : memref<1x64x32xf32, #tpu.memory_space<vmem>>, vector<1x64x32xf32>
      %199 = vector.shape_cast %198 : vector<1x64x32xf32> to vector<64x32xf32>
      %c0_141 = arith.constant 0 : index
      %c0_142 = arith.constant 0 : index
      %200 = vector.load %arg4[%c0_141, %c0_142] : memref<32x32xf32, #tpu.memory_space<vmem>>, vector<32x32xf32>
      %cst_143 = arith.constant dense<0.000000e+00> : vector<64x32xf32>
      %201 = tpu.matmul %199, %200, %cst_143 {dimension_numbers = #tpu.dot_dimension_numbers<[1], [0], [0], [1], [0, 0, 1, 1], [], []>} : vector<64x32xf32>, vector<32x32xf32>, vector<64x32xf32> -> vector<64x32xf32>
      %c0_144 = arith.constant 0 : index
      %c0_145 = arith.constant 0 : index
      %202 = vector.load %arg5[%c0_144, %c0_145] : memref<1x32xf32, #tpu.memory_space<vmem>>, vector<1x32xf32>
      %203 = vector.broadcast %202 : vector<1x32xf32> to vector<64x32xf32>
      %204 = arith.addf %201, %203 : vector<64x32xf32>
      %cst_146 = arith.constant 0.353553385 : f32
      %205 = vector.broadcast %cst_146 : f32 to vector<64x32xf32>
      %206 = arith.mulf %204, %205 : vector<64x32xf32>
      %c0_147 = arith.constant 0 : index
      %c0_148 = arith.constant 0 : index
      %207 = vector.load %arg14[%c0_147, %c0_148] : memref<64x32xf32, #tpu.memory_space<vmem>>, vector<64x32xf32>
      tpu.vector_store %arg14[%c0_147, %c0_148], %206 {strides = array<i32>} : memref<64x32xf32, #tpu.memory_space<vmem>>, vector<64x32xf32>,
      %cst_149 = arith.constant -1.000000e+30 : f32
      %208 = vector.broadcast %cst_149 : f32 to vector<4x64x1xf32>
      %c0_150 = arith.constant 0 : index
      %c0_151 = arith.constant 0 : index
      %c0_152 = arith.constant 0 : index
      %209 = vector.load %arg16[%c0_150, %c0_151, %c0_152] : memref<4x64x1xf32, #tpu.memory_space<vmem>>, vector<4x64x1xf32>
      tpu.vector_store %arg16[%c0_150, %c0_151, %c0_152], %208 {strides = array<i32>} : memref<4x64x1xf32, #tpu.memory_space<vmem>>, vector<4x64x1xf32>,
      %cst_153 = arith.constant 0.000000e+00 : f32
      %210 = vector.broadcast %cst_153 : f32 to vector<4x64x1xf32>
      %c0_154 = arith.constant 0 : index
      %c0_155 = arith.constant 0 : index
      %c0_156 = arith.constant 0 : index
      %211 = vector.load %arg17[%c0_154, %c0_155, %c0_156] : memref<4x64x1xf32, #tpu.memory_space<vmem>>, vector<4x64x1xf32>
      tpu.vector_store %arg17[%c0_154, %c0_155, %c0_156], %210 {strides = array<i32>} : memref<4x64x1xf32, #tpu.memory_space<vmem>>, vector<4x64x1xf32>,
      %cst_157 = arith.constant 0.000000e+00 : f32
      %212 = vector.broadcast %cst_157 : f32 to vector<64x32xf32>
      %c0_158 = arith.constant 0 : index
      %c0_159 = arith.constant 0 : index
      %213 = vector.load %arg15[%c0_158, %c0_159] : memref<64x32xf32, #tpu.memory_space<vmem>>, vector<64x32xf32>
      tpu.vector_store %arg15[%c0_158, %c0_159], %212 {strides = array<i32>} : memref<64x32xf32, #tpu.memory_space<vmem>>, vector<64x32xf32>,
    } else {
    }
    %c0 = arith.constant 0 : index
    %c0_1 = arith.constant 0 : index
    %3 = vector.load %arg10[%c0, %c0_1] : memref<64x2xf32, #tpu.memory_space<vmem>>, vector<64x2xf32>
    %c0_2 = arith.constant 0 : index
    %c0_3 = arith.constant 0 : index
    %4 = vector.load %arg11[%c0_2, %c0_3] : memref<2x128xf32, #tpu.memory_space<vmem>>, vector<2x128xf32>
    %5 = vector.extract_strided_slice %3 {offsets = [0, 0], sizes = [64, 1], strides = [1, 1]} : vector<64x2xf32> to vector<64x1xf32>
    %6 = vector.extract_strided_slice %4 {offsets = [0, 0], sizes = [1, 128], strides = [1, 1]} : vector<2x128xf32> to vector<1x128xf32>
    %7 = vector.broadcast %5 : vector<64x1xf32> to vector<64x128xf32>
    %8 = vector.broadcast %6 : vector<1x128xf32> to vector<64x128xf32>
    %9 = arith.subf %7, %8 : vector<64x128xf32>
    %10 = math.absf %9 : vector<64x128xf32>
    %11 = vector.extract_strided_slice %3 {offsets = [0, 1], sizes = [64, 1], strides = [1, 1]} : vector<64x2xf32> to vector<64x1xf32>
    %12 = vector.extract_strided_slice %4 {offsets = [1, 0], sizes = [1, 128], strides = [1, 1]} : vector<2x128xf32> to vector<1x128xf32>
    %13 = vector.broadcast %11 : vector<64x1xf32> to vector<64x128xf32>
    %14 = vector.broadcast %12 : vector<1x128xf32> to vector<64x128xf32>
    %15 = arith.subf %13, %14 : vector<64x128xf32>
    %16 = math.absf %15 : vector<64x128xf32>
    %cst = arith.constant 5.000000e-01 : f32
    %17 = vector.broadcast %cst : f32 to vector<64x128xf32>
    %18 = arith.mulf %17, %16 : vector<64x128xf32>
    %19 = arith.addf %10, %18 : vector<64x128xf32>
    %c0_4 = arith.constant 0 : index
    %c0_5 = arith.constant 0 : index
    %c0_6 = arith.constant 0 : index
    %20 = vector.load %arg18[%c0_4, %c0_5, %c0_6] : memref<2x64x128xf32, #tpu.memory_space<vmem>>, vector<1x64x128xf32>
    %21 = vector.shape_cast %20 : vector<1x64x128xf32> to vector<64x128xf32>
    %22 = vector.shape_cast %19 : vector<64x128xf32> to vector<1x64x128xf32>
    tpu.vector_store %arg18[%c0_4, %c0_5, %c0_6], %22 {strides = array<i32>} : memref<2x64x128xf32, #tpu.memory_space<vmem>>, vector<1x64x128xf32>,
    %cst_7 = arith.constant 5.000000e-01 : f32
    %23 = vector.broadcast %cst_7 : f32 to vector<64x128xf32>
    %24 = arith.mulf %23, %10 : vector<64x128xf32>
    %25 = arith.addf %24, %16 : vector<64x128xf32>
    %c1 = arith.constant 1 : index
    %c0_8 = arith.constant 0 : index
    %c0_9 = arith.constant 0 : index
    %26 = vector.load %arg18[%c1, %c0_8, %c0_9] : memref<2x64x128xf32, #tpu.memory_space<vmem>>, vector<1x64x128xf32>
    %27 = vector.shape_cast %26 : vector<1x64x128xf32> to vector<64x128xf32>
    %28 = vector.shape_cast %25 : vector<64x128xf32> to vector<1x64x128xf32>
    tpu.vector_store %arg18[%c1, %c0_8, %c0_9], %28 {strides = array<i32>} : memref<2x64x128xf32, #tpu.memory_space<vmem>>, vector<1x64x128xf32>,
    %c0_10 = arith.constant 0 : index
    %c0_11 = arith.constant 0 : index
    %c0_12 = arith.constant 0 : index
    %c0_13 = arith.constant 0 : index
    %29 = vector.load %arg12[%c0_10, %c0_11, %c0_12, %c0_13] : memref<1x1x1x128xf32, #tpu.memory_space<vmem>>, vector<1x1x1x128xf32>
    %30 = vector.shape_cast %29 : vector<1x1x1x128xf32> to vector<1x128xf32>
    %c0_14 = arith.constant 0 : index
    %c0_15 = arith.constant 0 : index
    %c0_16 = arith.constant 0 : index
    %31 = vector.load %arg18[%c0_14, %c0_15, %c0_16] : memref<2x64x128xf32, #tpu.memory_space<vmem>>, vector<1x64x128xf32>
    %32 = vector.shape_cast %31 : vector<1x64x128xf32> to vector<64x128xf32>
    %c0_17 = arith.constant 0 : index
    %c0_18 = arith.constant 0 : index
    %33 = vector.load %arg14[%c0_17, %c0_18] : memref<64x32xf32, #tpu.memory_space<vmem>>, vector<64x8xf32>
    %c0_19 = arith.constant 0 : index
    %c0_20 = arith.constant 0 : index
    %c0_21 = arith.constant 0 : index
    %34 = vector.load %arg8[%c0_19, %c0_20, %c0_21] : memref<1x32x128xf32, #tpu.memory_space<vmem>>, vector<1x8x128xf32>
    %35 = vector.shape_cast %34 : vector<1x8x128xf32> to vector<8x128xf32>
    %cst_22 = arith.constant dense<0.000000e+00> : vector<64x128xf32>
    %36 = tpu.matmul %33, %35, %cst_22 {dimension_numbers = #tpu.dot_dimension_numbers<[1], [0], [0], [1], [0, 0, 1, 1], [], []>} : vector<64x8xf32>, vector<8x128xf32>, vector<64x128xf32> -> vector<64x128xf32>
    %cst_23 = arith.constant 2.500000e-01 : f32
    %37 = vector.broadcast %cst_23 : f32 to vector<64x128xf32>
    %38 = arith.mulf %37, %32 : vector<64x128xf32>
    %39 = arith.subf %36, %38 : vector<64x128xf32>
    %40 = vector.broadcast %30 : vector<1x128xf32> to vector<64x128xf32>
    %41 = arith.addf %39, %40 : vector<64x128xf32>
    %c0_24 = arith.constant 0 : index
    %c0_25 = arith.constant 0 : index
    %c0_26 = arith.constant 0 : index
    %42 = vector.load %arg16[%c0_24, %c0_25, %c0_26] : memref<4x64x1xf32, #tpu.memory_space<vmem>>, vector<1x64x1xf32>
    %43 = vector.shape_cast %42 : vector<1x64x1xf32> to vector<64x1xf32>
    %cst_27 = arith.constant dense<0xFF800000> : vector<64xf32>
    %44 = vector.multi_reduction <maximumf>, %41, %cst_27 [1] : vector<64x128xf32> to vector<64xf32>
    %45 = vector.shape_cast %44 : vector<64xf32> to vector<64x1xf32>
    %46 = arith.maximumf %43, %45 : vector<64x1xf32>
    %47 = arith.subf %43, %46 : vector<64x1xf32>
    %48 = math.exp %47 : vector<64x1xf32>
    %49 = vector.broadcast %46 : vector<64x1xf32> to vector<64x128xf32>
    %50 = arith.subf %41, %49 : vector<64x128xf32>
    %51 = math.exp %50 : vector<64x128xf32>
    %c0_28 = arith.constant 0 : index
    %c0_29 = arith.constant 0 : index
    %c0_30 = arith.constant 0 : index
    %52 = vector.load %arg17[%c0_28, %c0_29, %c0_30] : memref<4x64x1xf32, #tpu.memory_space<vmem>>, vector<1x64x1xf32>
    %53 = vector.shape_cast %52 : vector<1x64x1xf32> to vector<64x1xf32>
    %54 = arith.mulf %48, %53 : vector<64x1xf32>
    %cst_31 = arith.constant dense<0.000000e+00> : vector<64xf32>
    %55 = vector.multi_reduction <add>, %51, %cst_31 [1] : vector<64x128xf32> to vector<64xf32>
    %56 = vector.shape_cast %55 : vector<64xf32> to vector<64x1xf32>
    %57 = arith.addf %54, %56 : vector<64x1xf32>
    %c0_32 = arith.constant 0 : index
    %c0_33 = arith.constant 0 : index
    %c0_34 = arith.constant 0 : index
    %58 = vector.load %arg17[%c0_32, %c0_33, %c0_34] : memref<4x64x1xf32, #tpu.memory_space<vmem>>, vector<1x64x1xf32>
    %59 = vector.shape_cast %58 : vector<1x64x1xf32> to vector<64x1xf32>
    %60 = vector.shape_cast %57 : vector<64x1xf32> to vector<1x64x1xf32>
    tpu.vector_store %arg17[%c0_32, %c0_33, %c0_34], %60 {strides = array<i32>} : memref<4x64x1xf32, #tpu.memory_space<vmem>>, vector<1x64x1xf32>,
    %c0_35 = arith.constant 0 : index
    %c0_36 = arith.constant 0 : index
    %c0_37 = arith.constant 0 : index
    %61 = vector.load %arg16[%c0_35, %c0_36, %c0_37] : memref<4x64x1xf32, #tpu.memory_space<vmem>>, vector<1x64x1xf32>
    %62 = vector.shape_cast %61 : vector<1x64x1xf32> to vector<64x1xf32>
    %63 = vector.shape_cast %46 : vector<64x1xf32> to vector<1x64x1xf32>
    tpu.vector_store %arg16[%c0_35, %c0_36, %c0_37], %63 {strides = array<i32>} : memref<4x64x1xf32, #tpu.memory_space<vmem>>, vector<1x64x1xf32>,
    %c0_38 = arith.constant 0 : index
    %c0_39 = arith.constant 0 : index
    %c0_40 = arith.constant 0 : index
    %64 = vector.load %arg9[%c0_38, %c0_39, %c0_40] : memref<1x128x32xf32, #tpu.memory_space<vmem>>, vector<1x128x8xf32>
    %65 = vector.shape_cast %64 : vector<1x128x8xf32> to vector<128x8xf32>
    %cst_41 = arith.constant dense<0.000000e+00> : vector<64x8xf32>
    %66 = tpu.matmul %51, %65, %cst_41 {dimension_numbers = #tpu.dot_dimension_numbers<[1], [0], [0], [1], [0, 0, 1, 1], [], []>} : vector<64x128xf32>, vector<128x8xf32>, vector<64x8xf32> -> vector<64x8xf32>
    %c0_42 = arith.constant 0 : index
    %c0_43 = arith.constant 0 : index
    %67 = vector.load %arg15[%c0_42, %c0_43] : memref<64x32xf32, #tpu.memory_space<vmem>>, vector<64x8xf32>
    %68 = vector.broadcast %48 : vector<64x1xf32> to vector<64x8xf32>
    %69 = arith.mulf %68, %67 : vector<64x8xf32>
    %70 = arith.addf %69, %66 : vector<64x8xf32>
    %c0_44 = arith.constant 0 : index
    %c0_45 = arith.constant 0 : index
    %71 = vector.load %arg15[%c0_44, %c0_45] : memref<64x32xf32, #tpu.memory_space<vmem>>, vector<64x8xf32>
    tpu.vector_store %arg15[%c0_44, %c0_45], %70 {strides = array<i32>} : memref<64x32xf32, #tpu.memory_space<vmem>>, vector<64x8xf32>,
    %c0_46 = arith.constant 0 : index
    %c0_47 = arith.constant 0 : index
    %c0_48 = arith.constant 0 : index
    %72 = vector.load %arg18[%c0_46, %c0_47, %c0_48] : memref<2x64x128xf32, #tpu.memory_space<vmem>>, vector<1x64x128xf32>
    %73 = vector.shape_cast %72 : vector<1x64x128xf32> to vector<64x128xf32>
    %c0_49 = arith.constant 0 : index
    %c8 = arith.constant 8 : index
    %74 = vector.load %arg14[%c0_49, %c8] : memref<64x32xf32, #tpu.memory_space<vmem>>, vector<64x8xf32>
    %c0_50 = arith.constant 0 : index
    %c8_51 = arith.constant 8 : index
    %c0_52 = arith.constant 0 : index
    %75 = vector.load %arg8[%c0_50, %c8_51, %c0_52] : memref<1x32x128xf32, #tpu.memory_space<vmem>>, vector<1x8x128xf32>
    %76 = vector.shape_cast %75 : vector<1x8x128xf32> to vector<8x128xf32>
    %cst_53 = arith.constant dense<0.000000e+00> : vector<64x128xf32>
    %77 = tpu.matmul %74, %76, %cst_53 {dimension_numbers = #tpu.dot_dimension_numbers<[1], [0], [0], [1], [0, 0, 1, 1], [], []>} : vector<64x8xf32>, vector<8x128xf32>, vector<64x128xf32> -> vector<64x128xf32>
    %cst_54 = arith.constant 6.250000e-02 : f32
    %78 = vector.broadcast %cst_54 : f32 to vector<64x128xf32>
    %79 = arith.mulf %78, %73 : vector<64x128xf32>
    %80 = arith.subf %77, %79 : vector<64x128xf32>
    %81 = vector.broadcast %30 : vector<1x128xf32> to vector<64x128xf32>
    %82 = arith.addf %80, %81 : vector<64x128xf32>
    %c1_55 = arith.constant 1 : index
    %c0_56 = arith.constant 0 : index
    %c0_57 = arith.constant 0 : index
    %83 = vector.load %arg16[%c1_55, %c0_56, %c0_57] : memref<4x64x1xf32, #tpu.memory_space<vmem>>, vector<1x64x1xf32>
    %84 = vector.shape_cast %83 : vector<1x64x1xf32> to vector<64x1xf32>
    %cst_58 = arith.constant dense<0xFF800000> : vector<64xf32>
    %85 = vector.multi_reduction <maximumf>, %82, %cst_58 [1] : vector<64x128xf32> to vector<64xf32>
    %86 = vector.shape_cast %85 : vector<64xf32> to vector<64x1xf32>
    %87 = arith.maximumf %84, %86 : vector<64x1xf32>
    %88 = arith.subf %84, %87 : vector<64x1xf32>
    %89 = math.exp %88 : vector<64x1xf32>
    %90 = vector.broadcast %87 : vector<64x1xf32> to vector<64x128xf32>
    %91 = arith.subf %82, %90 : vector<64x128xf32>
    %92 = math.exp %91 : vector<64x128xf32>
    %c1_59 = arith.constant 1 : index
    %c0_60 = arith.constant 0 : index
    %c0_61 = arith.constant 0 : index
    %93 = vector.load %arg17[%c1_59, %c0_60, %c0_61] : memref<4x64x1xf32, #tpu.memory_space<vmem>>, vector<1x64x1xf32>
    %94 = vector.shape_cast %93 : vector<1x64x1xf32> to vector<64x1xf32>
    %95 = arith.mulf %89, %94 : vector<64x1xf32>
    %cst_62 = arith.constant dense<0.000000e+00> : vector<64xf32>
    %96 = vector.multi_reduction <add>, %92, %cst_62 [1] : vector<64x128xf32> to vector<64xf32>
    %97 = vector.shape_cast %96 : vector<64xf32> to vector<64x1xf32>
    %98 = arith.addf %95, %97 : vector<64x1xf32>
    %c1_63 = arith.constant 1 : index
    %c0_64 = arith.constant 0 : index
    %c0_65 = arith.constant 0 : index
    %99 = vector.load %arg17[%c1_63, %c0_64, %c0_65] : memref<4x64x1xf32, #tpu.memory_space<vmem>>, vector<1x64x1xf32>
    %100 = vector.shape_cast %99 : vector<1x64x1xf32> to vector<64x1xf32>
    %101 = vector.shape_cast %98 : vector<64x1xf32> to vector<1x64x1xf32>
    tpu.vector_store %arg17[%c1_63, %c0_64, %c0_65], %101 {strides = array<i32>} : memref<4x64x1xf32, #tpu.memory_space<vmem>>, vector<1x64x1xf32>,
    %c1_66 = arith.constant 1 : index
    %c0_67 = arith.constant 0 : index
    %c0_68 = arith.constant 0 : index
    %102 = vector.load %arg16[%c1_66, %c0_67, %c0_68] : memref<4x64x1xf32, #tpu.memory_space<vmem>>, vector<1x64x1xf32>
    %103 = vector.shape_cast %102 : vector<1x64x1xf32> to vector<64x1xf32>
    %104 = vector.shape_cast %87 : vector<64x1xf32> to vector<1x64x1xf32>
    tpu.vector_store %arg16[%c1_66, %c0_67, %c0_68], %104 {strides = array<i32>} : memref<4x64x1xf32, #tpu.memory_space<vmem>>, vector<1x64x1xf32>,
    %c0_69 = arith.constant 0 : index
    %c0_70 = arith.constant 0 : index
    %c8_71 = arith.constant 8 : index
    %105 = vector.load %arg9[%c0_69, %c0_70, %c8_71] : memref<1x128x32xf32, #tpu.memory_space<vmem>>, vector<1x128x8xf32>
    %106 = vector.shape_cast %105 : vector<1x128x8xf32> to vector<128x8xf32>
    %cst_72 = arith.constant dense<0.000000e+00> : vector<64x8xf32>
    %107 = tpu.matmul %92, %106, %cst_72 {dimension_numbers = #tpu.dot_dimension_numbers<[1], [0], [0], [1], [0, 0, 1, 1], [], []>} : vector<64x128xf32>, vector<128x8xf32>, vector<64x8xf32> -> vector<64x8xf32>
    %c0_73 = arith.constant 0 : index
    %c8_74 = arith.constant 8 : index
    %108 = vector.load %arg15[%c0_73, %c8_74] : memref<64x32xf32, #tpu.memory_space<vmem>>, vector<64x8xf32>
    %109 = vector.broadcast %89 : vector<64x1xf32> to vector<64x8xf32>
    %110 = arith.mulf %109, %108 : vector<64x8xf32>
    %111 = arith.addf %110, %107 : vector<64x8xf32>
    %c0_75 = arith.constant 0 : index
    %c8_76 = arith.constant 8 : index
    %112 = vector.load %arg15[%c0_75, %c8_76] : memref<64x32xf32, #tpu.memory_space<vmem>>, vector<64x8xf32>
    tpu.vector_store %arg15[%c0_75, %c8_76], %111 {strides = array<i32>} : memref<64x32xf32, #tpu.memory_space<vmem>>, vector<64x8xf32>,
    %c1_77 = arith.constant 1 : index
    %c0_78 = arith.constant 0 : index
    %c0_79 = arith.constant 0 : index
    %113 = vector.load %arg18[%c1_77, %c0_78, %c0_79] : memref<2x64x128xf32, #tpu.memory_space<vmem>>, vector<1x64x128xf32>
    %114 = vector.shape_cast %113 : vector<1x64x128xf32> to vector<64x128xf32>
    %c0_80 = arith.constant 0 : index
    %c16 = arith.constant 16 : index
    %115 = vector.load %arg14[%c0_80, %c16] : memref<64x32xf32, #tpu.memory_space<vmem>>, vector<64x8xf32>
    %c0_81 = arith.constant 0 : index
    %c16_82 = arith.constant 16 : index
    %c0_83 = arith.constant 0 : index
    %116 = vector.load %arg8[%c0_81, %c16_82, %c0_83] : memref<1x32x128xf32, #tpu.memory_space<vmem>>, vector<1x8x128xf32>
    %117 = vector.shape_cast %116 : vector<1x8x128xf32> to vector<8x128xf32>
    %cst_84 = arith.constant dense<0.000000e+00> : vector<64x128xf32>
    %118 = tpu.matmul %115, %117, %cst_84 {dimension_numbers = #tpu.dot_dimension_numbers<[1], [0], [0], [1], [0, 0, 1, 1], [], []>} : vector<64x8xf32>, vector<8x128xf32>, vector<64x128xf32> -> vector<64x128xf32>
    %cst_85 = arith.constant 1.562500e-02 : f32
    %119 = vector.broadcast %cst_85 : f32 to vector<64x128xf32>
    %120 = arith.mulf %119, %114 : vector<64x128xf32>
    %121 = arith.subf %118, %120 : vector<64x128xf32>
    %122 = vector.broadcast %30 : vector<1x128xf32> to vector<64x128xf32>
    %123 = arith.addf %121, %122 : vector<64x128xf32>
    %c2 = arith.constant 2 : index
    %c0_86 = arith.constant 0 : index
    %c0_87 = arith.constant 0 : index
    %124 = vector.load %arg16[%c2, %c0_86, %c0_87] : memref<4x64x1xf32, #tpu.memory_space<vmem>>, vector<1x64x1xf32>
    %125 = vector.shape_cast %124 : vector<1x64x1xf32> to vector<64x1xf32>
    %cst_88 = arith.constant dense<0xFF800000> : vector<64xf32>
    %126 = vector.multi_reduction <maximumf>, %123, %cst_88 [1] : vector<64x128xf32> to vector<64xf32>
    %127 = vector.shape_cast %126 : vector<64xf32> to vector<64x1xf32>
    %128 = arith.maximumf %125, %127 : vector<64x1xf32>
    %129 = arith.subf %125, %128 : vector<64x1xf32>
    %130 = math.exp %129 : vector<64x1xf32>
    %131 = vector.broadcast %128 : vector<64x1xf32> to vector<64x128xf32>
    %132 = arith.subf %123, %131 : vector<64x128xf32>
    %133 = math.exp %132 : vector<64x128xf32>
    %c2_89 = arith.constant 2 : index
    %c0_90 = arith.constant 0 : index
    %c0_91 = arith.constant 0 : index
    %134 = vector.load %arg17[%c2_89, %c0_90, %c0_91] : memref<4x64x1xf32, #tpu.memory_space<vmem>>, vector<1x64x1xf32>
    %135 = vector.shape_cast %134 : vector<1x64x1xf32> to vector<64x1xf32>
    %136 = arith.mulf %130, %135 : vector<64x1xf32>
    %cst_92 = arith.constant dense<0.000000e+00> : vector<64xf32>
    %137 = vector.multi_reduction <add>, %133, %cst_92 [1] : vector<64x128xf32> to vector<64xf32>
    %138 = vector.shape_cast %137 : vector<64xf32> to vector<64x1xf32>
    %139 = arith.addf %136, %138 : vector<64x1xf32>
    %c2_93 = arith.constant 2 : index
    %c0_94 = arith.constant 0 : index
    %c0_95 = arith.constant 0 : index
    %140 = vector.load %arg17[%c2_93, %c0_94, %c0_95] : memref<4x64x1xf32, #tpu.memory_space<vmem>>, vector<1x64x1xf32>
    %141 = vector.shape_cast %140 : vector<1x64x1xf32> to vector<64x1xf32>
    %142 = vector.shape_cast %139 : vector<64x1xf32> to vector<1x64x1xf32>
    tpu.vector_store %arg17[%c2_93, %c0_94, %c0_95], %142 {strides = array<i32>} : memref<4x64x1xf32, #tpu.memory_space<vmem>>, vector<1x64x1xf32>,
    %c2_96 = arith.constant 2 : index
    %c0_97 = arith.constant 0 : index
    %c0_98 = arith.constant 0 : index
    %143 = vector.load %arg16[%c2_96, %c0_97, %c0_98] : memref<4x64x1xf32, #tpu.memory_space<vmem>>, vector<1x64x1xf32>
    %144 = vector.shape_cast %143 : vector<1x64x1xf32> to vector<64x1xf32>
    %145 = vector.shape_cast %128 : vector<64x1xf32> to vector<1x64x1xf32>
    tpu.vector_store %arg16[%c2_96, %c0_97, %c0_98], %145 {strides = array<i32>} : memref<4x64x1xf32, #tpu.memory_space<vmem>>, vector<1x64x1xf32>,
    %c0_99 = arith.constant 0 : index
    %c0_100 = arith.constant 0 : index
    %c16_101 = arith.constant 16 : index
    %146 = vector.load %arg9[%c0_99, %c0_100, %c16_101] : memref<1x128x32xf32, #tpu.memory_space<vmem>>, vector<1x128x8xf32>
    %147 = vector.shape_cast %146 : vector<1x128x8xf32> to vector<128x8xf32>
    %cst_102 = arith.constant dense<0.000000e+00> : vector<64x8xf32>
    %148 = tpu.matmul %133, %147, %cst_102 {dimension_numbers = #tpu.dot_dimension_numbers<[1], [0], [0], [1], [0, 0, 1, 1], [], []>} : vector<64x128xf32>, vector<128x8xf32>, vector<64x8xf32> -> vector<64x8xf32>
    %c0_103 = arith.constant 0 : index
    %c16_104 = arith.constant 16 : index
    %149 = vector.load %arg15[%c0_103, %c16_104] : memref<64x32xf32, #tpu.memory_space<vmem>>, vector<64x8xf32>
    %150 = vector.broadcast %130 : vector<64x1xf32> to vector<64x8xf32>
    %151 = arith.mulf %150, %149 : vector<64x8xf32>
    %152 = arith.addf %151, %148 : vector<64x8xf32>
    %c0_105 = arith.constant 0 : index
    %c16_106 = arith.constant 16 : index
    %153 = vector.load %arg15[%c0_105, %c16_106] : memref<64x32xf32, #tpu.memory_space<vmem>>, vector<64x8xf32>
    tpu.vector_store %arg15[%c0_105, %c16_106], %152 {strides = array<i32>} : memref<64x32xf32, #tpu.memory_space<vmem>>, vector<64x8xf32>,
    %c1_107 = arith.constant 1 : index
    %c0_108 = arith.constant 0 : index
    %c0_109 = arith.constant 0 : index
    %154 = vector.load %arg18[%c1_107, %c0_108, %c0_109] : memref<2x64x128xf32, #tpu.memory_space<vmem>>, vector<1x64x128xf32>
    %155 = vector.shape_cast %154 : vector<1x64x128xf32> to vector<64x128xf32>
    %c0_110 = arith.constant 0 : index
    %c24 = arith.constant 24 : index
    %156 = vector.load %arg14[%c0_110, %c24] : memref<64x32xf32, #tpu.memory_space<vmem>>, vector<64x8xf32>
    %c0_111 = arith.constant 0 : index
    %c24_112 = arith.constant 24 : index
    %c0_113 = arith.constant 0 : index
    %157 = vector.load %arg8[%c0_111, %c24_112, %c0_113] : memref<1x32x128xf32, #tpu.memory_space<vmem>>, vector<1x8x128xf32>
    %158 = vector.shape_cast %157 : vector<1x8x128xf32> to vector<8x128xf32>
    %cst_114 = arith.constant dense<0.000000e+00> : vector<64x128xf32>
    %159 = tpu.matmul %156, %158, %cst_114 {dimension_numbers = #tpu.dot_dimension_numbers<[1], [0], [0], [1], [0, 0, 1, 1], [], []>} : vector<64x8xf32>, vector<8x128xf32>, vector<64x128xf32> -> vector<64x128xf32>
    %cst_115 = arith.constant 3.906250e-03 : f32
    %160 = vector.broadcast %cst_115 : f32 to vector<64x128xf32>
    %161 = arith.mulf %160, %155 : vector<64x128xf32>
    %162 = arith.subf %159, %161 : vector<64x128xf32>
    %163 = vector.broadcast %30 : vector<1x128xf32> to vector<64x128xf32>
    %164 = arith.addf %162, %163 : vector<64x128xf32>
    %c3 = arith.constant 3 : index
    %c0_116 = arith.constant 0 : index
    %c0_117 = arith.constant 0 : index
    %165 = vector.load %arg16[%c3, %c0_116, %c0_117] : memref<4x64x1xf32, #tpu.memory_space<vmem>>, vector<1x64x1xf32>
    %166 = vector.shape_cast %165 : vector<1x64x1xf32> to vector<64x1xf32>
    %cst_118 = arith.constant dense<0xFF800000> : vector<64xf32>
    %167 = vector.multi_reduction <maximumf>, %164, %cst_118 [1] : vector<64x128xf32> to vector<64xf32>
    %168 = vector.shape_cast %167 : vector<64xf32> to vector<64x1xf32>
    %169 = arith.maximumf %166, %168 : vector<64x1xf32>
    %170 = arith.subf %166, %169 : vector<64x1xf32>
    %171 = math.exp %170 : vector<64x1xf32>
    %172 = vector.broadcast %169 : vector<64x1xf32> to vector<64x128xf32>
    %173 = arith.subf %164, %172 : vector<64x128xf32>
    %174 = math.exp %173 : vector<64x128xf32>
    %c3_119 = arith.constant 3 : index
    %c0_120 = arith.constant 0 : index
    %c0_121 = arith.constant 0 : index
    %175 = vector.load %arg17[%c3_119, %c0_120, %c0_121] : memref<4x64x1xf32, #tpu.memory_space<vmem>>, vector<1x64x1xf32>
    %176 = vector.shape_cast %175 : vector<1x64x1xf32> to vector<64x1xf32>
    %177 = arith.mulf %171, %176 : vector<64x1xf32>
    %cst_122 = arith.constant dense<0.000000e+00> : vector<64xf32>
    %178 = vector.multi_reduction <add>, %174, %cst_122 [1] : vector<64x128xf32> to vector<64xf32>
    %179 = vector.shape_cast %178 : vector<64xf32> to vector<64x1xf32>
    %180 = arith.addf %177, %179 : vector<64x1xf32>
    %c3_123 = arith.constant 3 : index
    %c0_124 = arith.constant 0 : index
    %c0_125 = arith.constant 0 : index
    %181 = vector.load %arg17[%c3_123, %c0_124, %c0_125] : memref<4x64x1xf32, #tpu.memory_space<vmem>>, vector<1x64x1xf32>
    %182 = vector.shape_cast %181 : vector<1x64x1xf32> to vector<64x1xf32>
    %183 = vector.shape_cast %180 : vector<64x1xf32> to vector<1x64x1xf32>
    tpu.vector_store %arg17[%c3_123, %c0_124, %c0_125], %183 {strides = array<i32>} : memref<4x64x1xf32, #tpu.memory_space<vmem>>, vector<1x64x1xf32>,
    %c3_126 = arith.constant 3 : index
    %c0_127 = arith.constant 0 : index
    %c0_128 = arith.constant 0 : index
    %184 = vector.load %arg16[%c3_126, %c0_127, %c0_128] : memref<4x64x1xf32, #tpu.memory_space<vmem>>, vector<1x64x1xf32>
    %185 = vector.shape_cast %184 : vector<1x64x1xf32> to vector<64x1xf32>
    %186 = vector.shape_cast %169 : vector<64x1xf32> to vector<1x64x1xf32>
    tpu.vector_store %arg16[%c3_126, %c0_127, %c0_128], %186 {strides = array<i32>} : memref<4x64x1xf32, #tpu.memory_space<vmem>>, vector<1x64x1xf32>,
    %c0_129 = arith.constant 0 : index
    %c0_130 = arith.constant 0 : index
    %c24_131 = arith.constant 24 : index
    %187 = vector.load %arg9[%c0_129, %c0_130, %c24_131] : memref<1x128x32xf32, #tpu.memory_space<vmem>>, vector<1x128x8xf32>
    %188 = vector.shape_cast %187 : vector<1x128x8xf32> to vector<128x8xf32>
    %cst_132 = arith.constant dense<0.000000e+00> : vector<64x8xf32>
    %189 = tpu.matmul %174, %188, %cst_132 {dimension_numbers = #tpu.dot_dimension_numbers<[1], [0], [0], [1], [0, 0, 1, 1], [], []>} : vector<64x128xf32>, vector<128x8xf32>, vector<64x8xf32> -> vector<64x8xf32>
    %c0_133 = arith.constant 0 : index
    %c24_134 = arith.constant 24 : index
    %190 = vector.load %arg15[%c0_133, %c24_134] : memref<64x32xf32, #tpu.memory_space<vmem>>, vector<64x8xf32>
    %191 = vector.broadcast %171 : vector<64x1xf32> to vector<64x8xf32>
    %192 = arith.mulf %191, %190 : vector<64x8xf32>
    %193 = arith.addf %192, %189 : vector<64x8xf32>
    %c0_135 = arith.constant 0 : index
    %c24_136 = arith.constant 24 : index
    %194 = vector.load %arg15[%c0_135, %c24_136] : memref<64x32xf32, #tpu.memory_space<vmem>>, vector<64x8xf32>
    tpu.vector_store %arg15[%c0_135, %c24_136], %193 {strides = array<i32>} : memref<64x32xf32, #tpu.memory_space<vmem>>, vector<64x8xf32>,
    %c1_i32 = arith.constant 1 : i32
    %195 = arith.cmpi eq, %arg2, %c1_i32 : i32
    %196 = arith.extui %195 : i1 to i32
    %c0_i32_137 = arith.constant 0 : i32
    %197 = arith.cmpi ne, %196, %c0_i32_137 : i32
    scf.if %197 {
      %c0_138 = arith.constant 0 : index
      %c0_139 = arith.constant 0 : index
      %c0_140 = arith.constant 0 : index
      %198 = vector.load %arg17[%c0_138, %c0_139, %c0_140] : memref<4x64x1xf32, #tpu.memory_space<vmem>>, vector<1x64x1xf32>
      %199 = vector.shape_cast %198 : vector<1x64x1xf32> to vector<64x1xf32>
      %200 = tpu.reciprocal %199 {approx = true} : vector<64x1xf32> -> vector<64x1xf32>
      %201 = arith.mulf %199, %200 : vector<64x1xf32>
      %cst_141 = arith.constant 2.000000e+00 : f32
      %202 = vector.broadcast %cst_141 : f32 to vector<64x1xf32>
      %203 = arith.subf %202, %201 : vector<64x1xf32>
      %204 = arith.mulf %200, %203 : vector<64x1xf32>
      %c0_142 = arith.constant 0 : index
      %c0_143 = arith.constant 0 : index
      %205 = vector.load %arg15[%c0_142, %c0_143] : memref<64x32xf32, #tpu.memory_space<vmem>>, vector<64x8xf32>
      %206 = vector.broadcast %204 : vector<64x1xf32> to vector<64x8xf32>
      %207 = arith.mulf %205, %206 : vector<64x8xf32>
      %c0_144 = arith.constant 0 : index
      %c0_145 = arith.constant 0 : index
      %208 = vector.load %arg15[%c0_144, %c0_145] : memref<64x32xf32, #tpu.memory_space<vmem>>, vector<64x8xf32>
      tpu.vector_store %arg15[%c0_144, %c0_145], %207 {strides = array<i32>} : memref<64x32xf32, #tpu.memory_space<vmem>>, vector<64x8xf32>,
      %c1_146 = arith.constant 1 : index
      %c0_147 = arith.constant 0 : index
      %c0_148 = arith.constant 0 : index
      %209 = vector.load %arg17[%c1_146, %c0_147, %c0_148] : memref<4x64x1xf32, #tpu.memory_space<vmem>>, vector<1x64x1xf32>
      %210 = vector.shape_cast %209 : vector<1x64x1xf32> to vector<64x1xf32>
      %211 = tpu.reciprocal %210 {approx = true} : vector<64x1xf32> -> vector<64x1xf32>
      %212 = arith.mulf %210, %211 : vector<64x1xf32>
      %cst_149 = arith.constant 2.000000e+00 : f32
      %213 = vector.broadcast %cst_149 : f32 to vector<64x1xf32>
      %214 = arith.subf %213, %212 : vector<64x1xf32>
      %215 = arith.mulf %211, %214 : vector<64x1xf32>
      %c0_150 = arith.constant 0 : index
      %c8_151 = arith.constant 8 : index
      %216 = vector.load %arg15[%c0_150, %c8_151] : memref<64x32xf32, #tpu.memory_space<vmem>>, vector<64x8xf32>
      %217 = vector.broadcast %215 : vector<64x1xf32> to vector<64x8xf32>
      %218 = arith.mulf %216, %217 : vector<64x8xf32>
      %c0_152 = arith.constant 0 : index
      %c8_153 = arith.constant 8 : index
      %219 = vector.load %arg15[%c0_152, %c8_153] : memref<64x32xf32, #tpu.memory_space<vmem>>, vector<64x8xf32>
      tpu.vector_store %arg15[%c0_152, %c8_153], %218 {strides = array<i32>} : memref<64x32xf32, #tpu.memory_space<vmem>>, vector<64x8xf32>,
      %c2_154 = arith.constant 2 : index
      %c0_155 = arith.constant 0 : index
      %c0_156 = arith.constant 0 : index
      %220 = vector.load %arg17[%c2_154, %c0_155, %c0_156] : memref<4x64x1xf32, #tpu.memory_space<vmem>>, vector<1x64x1xf32>
      %221 = vector.shape_cast %220 : vector<1x64x1xf32> to vector<64x1xf32>
      %222 = tpu.reciprocal %221 {approx = true} : vector<64x1xf32> -> vector<64x1xf32>
      %223 = arith.mulf %221, %222 : vector<64x1xf32>
      %cst_157 = arith.constant 2.000000e+00 : f32
      %224 = vector.broadcast %cst_157 : f32 to vector<64x1xf32>
      %225 = arith.subf %224, %223 : vector<64x1xf32>
      %226 = arith.mulf %222, %225 : vector<64x1xf32>
      %c0_158 = arith.constant 0 : index
      %c16_159 = arith.constant 16 : index
      %227 = vector.load %arg15[%c0_158, %c16_159] : memref<64x32xf32, #tpu.memory_space<vmem>>, vector<64x8xf32>
      %228 = vector.broadcast %226 : vector<64x1xf32> to vector<64x8xf32>
      %229 = arith.mulf %227, %228 : vector<64x8xf32>
      %c0_160 = arith.constant 0 : index
      %c16_161 = arith.constant 16 : index
      %230 = vector.load %arg15[%c0_160, %c16_161] : memref<64x32xf32, #tpu.memory_space<vmem>>, vector<64x8xf32>
      tpu.vector_store %arg15[%c0_160, %c16_161], %229 {strides = array<i32>} : memref<64x32xf32, #tpu.memory_space<vmem>>, vector<64x8xf32>,
      %c3_162 = arith.constant 3 : index
      %c0_163 = arith.constant 0 : index
      %c0_164 = arith.constant 0 : index
      %231 = vector.load %arg17[%c3_162, %c0_163, %c0_164] : memref<4x64x1xf32, #tpu.memory_space<vmem>>, vector<1x64x1xf32>
      %232 = vector.shape_cast %231 : vector<1x64x1xf32> to vector<64x1xf32>
      %233 = tpu.reciprocal %232 {approx = true} : vector<64x1xf32> -> vector<64x1xf32>
      %234 = arith.mulf %232, %233 : vector<64x1xf32>
      %cst_165 = arith.constant 2.000000e+00 : f32
      %235 = vector.broadcast %cst_165 : f32 to vector<64x1xf32>
      %236 = arith.subf %235, %234 : vector<64x1xf32>
      %237 = arith.mulf %233, %236 : vector<64x1xf32>
      %c0_166 = arith.constant 0 : index
      %c24_167 = arith.constant 24 : index
      %238 = vector.load %arg15[%c0_166, %c24_167] : memref<64x32xf32, #tpu.memory_space<vmem>>, vector<64x8xf32>
      %239 = vector.broadcast %237 : vector<64x1xf32> to vector<64x8xf32>
      %240 = arith.mulf %238, %239 : vector<64x8xf32>
      %c0_168 = arith.constant 0 : index
      %c24_169 = arith.constant 24 : index
      %241 = vector.load %arg15[%c0_168, %c24_169] : memref<64x32xf32, #tpu.memory_space<vmem>>, vector<64x8xf32>
      tpu.vector_store %arg15[%c0_168, %c24_169], %240 {strides = array<i32>} : memref<64x32xf32, #tpu.memory_space<vmem>>, vector<64x8xf32>,
      %c0_170 = arith.constant 0 : index
      %c0_171 = arith.constant 0 : index
      %242 = vector.load %arg15[%c0_170, %c0_171] : memref<64x32xf32, #tpu.memory_space<vmem>>, vector<64x32xf32>
      %c0_172 = arith.constant 0 : index
      %c0_173 = arith.constant 0 : index
      %243 = vector.load %arg6[%c0_172, %c0_173] : memref<32x32xf32, #tpu.memory_space<vmem>>, vector<32x32xf32>
      %cst_174 = arith.constant dense<0.000000e+00> : vector<64x32xf32>
      %244 = tpu.matmul %242, %243, %cst_174 {dimension_numbers = #tpu.dot_dimension_numbers<[1], [0], [0], [1], [0, 0, 1, 1], [], []>} : vector<64x32xf32>, vector<32x32xf32>, vector<64x32xf32> -> vector<64x32xf32>
      %c0_175 = arith.constant 0 : index
      %c0_176 = arith.constant 0 : index
      %245 = vector.load %arg7[%c0_175, %c0_176] : memref<1x32xf32, #tpu.memory_space<vmem>>, vector<1x32xf32>
      %246 = vector.broadcast %245 : vector<1x32xf32> to vector<64x32xf32>
      %247 = arith.addf %244, %246 : vector<64x32xf32>
      %c0_177 = arith.constant 0 : index
      %c0_178 = arith.constant 0 : index
      %c0_179 = arith.constant 0 : index
      %248 = vector.load %arg13[%c0_177, %c0_178, %c0_179] : memref<1x64x32xf32, #tpu.memory_space<vmem>>, vector<1x64x32xf32>
      %249 = vector.shape_cast %248 : vector<1x64x32xf32> to vector<64x32xf32>
      %250 = vector.shape_cast %247 : vector<64x32xf32> to vector<1x64x32xf32>
      tpu.vector_store %arg13[%c0_177, %c0_178, %c0_179], %250 {strides = array<i32>} : memref<1x64x32xf32, #tpu.memory_space<vmem>>, vector<1x64x32xf32>,
    } else {
    }
    return
  }
  func.func @transform_0(%arg0: i32, %arg1: i32, %arg2: i32) -> (i32, i32, i32) {
    %c0_i32 = arith.constant 0 : i32
    %c0_i32_0 = arith.constant 0 : i32
    return %arg0, %arg1, %c0_i32 : i32, i32, i32
  }
  func.func @transform_1(%arg0: i32, %arg1: i32, %arg2: i32) -> (i32, i32) {
    %c0_i32 = arith.constant 0 : i32
    %c0_i32_0 = arith.constant 0 : i32
    %c0_i32_1 = arith.constant 0 : i32
    return %c0_i32, %c0_i32_0 : i32, i32
  }
  func.func @transform_2(%arg0: i32, %arg1: i32, %arg2: i32) -> (i32, i32) {
    %c0_i32 = arith.constant 0 : i32
    %c0_i32_0 = arith.constant 0 : i32
    %c0_i32_1 = arith.constant 0 : i32
    return %c0_i32, %c0_i32_0 : i32, i32
  }
  func.func @transform_3(%arg0: i32, %arg1: i32, %arg2: i32) -> (i32, i32) {
    %c0_i32 = arith.constant 0 : i32
    %c0_i32_0 = arith.constant 0 : i32
    %c0_i32_1 = arith.constant 0 : i32
    return %c0_i32, %c0_i32_0 : i32, i32
  }
  func.func @transform_4(%arg0: i32, %arg1: i32, %arg2: i32) -> (i32, i32) {
    %c0_i32 = arith.constant 0 : i32
    %c0_i32_0 = arith.constant 0 : i32
    %c0_i32_1 = arith.constant 0 : i32
    return %c0_i32, %c0_i32_0 : i32, i32
  }
  func.func @transform_5(%arg0: i32, %arg1: i32, %arg2: i32) -> (i32, i32, i32) {
    %c0_i32 = arith.constant 0 : i32
    %c0_i32_0 = arith.constant 0 : i32
    return %arg0, %c0_i32, %arg2 : i32, i32, i32
  }
  func.func @transform_6(%arg0: i32, %arg1: i32, %arg2: i32) -> (i32, i32, i32) {
    %c0_i32 = arith.constant 0 : i32
    %c0_i32_0 = arith.constant 0 : i32
    return %arg0, %arg2, %c0_i32 : i32, i32, i32
  }
  func.func @transform_7(%arg0: i32, %arg1: i32, %arg2: i32) -> (i32, i32) {
    %c0_i32 = arith.constant 0 : i32
    %c0_i32_0 = arith.constant 0 : i32
    return %arg1, %c0_i32 : i32, i32
  }
  func.func @transform_8(%arg0: i32, %arg1: i32, %arg2: i32) -> (i32, i32) {
    %c0_i32 = arith.constant 0 : i32
    %c0_i32_0 = arith.constant 0 : i32
    return %c0_i32, %arg2 : i32, i32
  }
  func.func @transform_9(%arg0: i32, %arg1: i32, %arg2: i32) -> (i32, i32, i32, i32) {
    %c0_i32 = arith.constant 0 : i32
    %c0_i32_0 = arith.constant 0 : i32
    %c0_i32_1 = arith.constant 0 : i32
    return %arg0, %c0_i32, %c0_i32_0, %arg2 : i32, i32, i32, i32
  }
  func.func @transform_10(%arg0: i32, %arg1: i32, %arg2: i32) -> (i32, i32, i32) {
    %c0_i32 = arith.constant 0 : i32
    %c0_i32_0 = arith.constant 0 : i32
    return %arg0, %arg1, %c0_i32 : i32, i32, i32
  }
}

</mosaic_0001>

<llo_original>
// kernel: tpu_custom_call.1
$region0: #{tpu_custom_call.1}
  #allocation0 [shape = 'u32[]', space=smem, size = 0x4, offset = 0x4, fixed_abs, tag = 'smem constant byte address 0x4 - core index']
  #allocation1 [shape = 'u32[144,128]{1,0:T(1,128)}', space=vmem, size = 0x12000, scoped, tag = 'internal scratch']
  #allocation2 [shape = 'f32[64,32]{1,0:T(8,128)}', space=vmem, size = 0x8000, scoped, tag = 'scratch operand']
  #allocation3 [shape = 'f32[64,32]{1,0:T(8,128)}', space=vmem, size = 0x8000, scoped, tag = 'scratch operand']
  #allocation4 [shape = 'f32[4,64,1]{2,1,0:T(8,128)}', space=vmem, size = 0x20000, scoped, tag = 'scratch operand']
  #allocation5 [shape = 'f32[4,64,1]{2,1,0:T(8,128)}', space=vmem, size = 0x20000, scoped, tag = 'scratch operand']
  #allocation6 [shape = 'f32[2,64,128]{2,1,0:T(8,128)}', space=vmem, size = 0x10000, scoped, tag = 'scratch operand']
  %s0 = inlined_call_operand.vmem [shape: f32[2,256,32], index: 0, kind: input, shape index: {}]
  %s1 = inlined_call_operand.vmem [shape: f32[32,32], index: 1, kind: input, shape index: {}]
  %s2 = inlined_call_operand.vmem [shape: f32[1,32], index: 2, kind: input, shape index: {}]
  %s3 = inlined_call_operand.vmem [shape: f32[32,32], index: 3, kind: input, shape index: {}]
  %s4 = inlined_call_operand.vmem [shape: f32[1,32], index: 4, kind: input, shape index: {}]
  %s5 = inlined_call_operand.vmem [shape: f32[2,32,256], index: 5, kind: input, shape index: {}]
  %s6 = inlined_call_operand.vmem [shape: f32[2,256,32], index: 6, kind: input, shape index: {}]
  %s7 = inlined_call_operand.vmem [shape: f32[256,2], index: 7, kind: input, shape index: {}]
  %s8 = inlined_call_operand.vmem [shape: f32[2,256], index: 8, kind: input, shape index: {}]
  %s9 = inlined_call_operand.vmem [shape: f32[2,1,1,256], index: 9, kind: input, shape index: {}]
  %s10 = inlined_call_operand.vmem [shape: f32[2,256,32], index: 10, kind: output, shape index: {}]
  %s11 = sld [smem:[#allocation0]]
  $region119: #{tpu_custom_call.1} parent=0
    _
  %s13 = ssub.s32 1, %s11
  %s14 = scalar_select 0, %s13, %s11
  $region1: #{tpu_custom_call.1} parent=0
    #allocation7 [shape = 'u8[32768]{0}', space=vmem, size = 0x8000, scoped, tag = 'input window, operand 5']
    loop: start=0, step=1, limit=18
    $region2: #{tpu_custom_call.1} parent=1 // loop_pre_header
      _
    $region3: #{tpu_custom_call.1} parent=1 // loop_header
      %s16 = sphi 0, %s20
      %p17 = scmp.ge.s32.totalorder %s16, 18
      %s23 = sphi 0, %s42
      %s24 = sphi 0, %s38
      %s25 = sphi 0, %s34
      %s26 = sphi 0, %s23
      %s27 = sphi 0, %s24
      %s28 = sphi 0, %s25
      %s29 = sphi 0, %s26
      %s30 = sphi 0, %s27
      %s31 = sphi 0, %s28
      %s47 = sphi 0, %s49
      %s50 = sphi 0, %s47
      %s51 = sphi 0, %s50
      %s67 = sphi 0, %s51
      %s71 = sphi 0, %s71
      %s73 = sphi 0, %s71
      %s74 = sphi 0, %s73
      %s88 = sphi 0, %s74
      %s92 = sphi 0, %s92
      %s94 = sphi 0, %s92
      %s95 = sphi 0, %s94
      %s109 = sphi 0, %s95
      %s113 = sphi 0, %s113
      %s115 = sphi 0, %s113
      %s116 = sphi 0, %s115
      %s130 = sphi 0, %s116
      %s134 = sphi 0, %s134
      %s136 = sphi 0, %s134
      %s137 = sphi 0, %s136
      %s151 = sphi 0, %s137
      %s159 = sphi 0, %s161
      %s162 = sphi 0, %s159
      %s163 = sphi 0, %s162
      %s179 = sphi 0, %s163
      %s187 = sphi 0, %s189
      %s190 = sphi 0, %s187
      %s191 = sphi 0, %s190
      %s207 = sphi 0, %s191
      %s213 = sphi 0, %s215
      %s216 = sphi 0, %s213
      %s217 = sphi 0, %s216
      %s233 = sphi 0, %s217
      %s239 = sphi 0, %s241
      %s242 = sphi 0, %s239
      %s243 = sphi 0, %s242
      %s259 = sphi 0, %s243
      %s267 = sphi 0, %s269
      %s270 = sphi 0, %s267
      %s271 = sphi 0, %s270
      %s287 = sphi 0, %s271
      %s295 = sphi 0, %s297
      %s298 = sphi 0, %s295
      %s299 = sphi 0, %s298
      %s315 = sphi 0, %s299
    $region4: #{tpu_custom_call.1} parent=1 // loop_header_branch
      %19 = sbr.rel (%p17) target = $region8
    $region5: #{tpu_custom_call.1} parent=1 // loop_body
      %s21 = ssub.s32 %s16, 1
      %s22 = ssub.s32 %s16, 2
      %s32 = sadd.s32 1, %s25
      %p33 = scmp.ge.s32.totalorder %s32, 2
      %s34 = scalar_select %p33, 0, %s32
      %s35 = sadd.s32 1, %s24
      %s36 = scalar_select %p33, %s35, %s24
      %p37 = scmp.ge.s32.totalorder %s36, 4
      %s38 = scalar_select %p37, 0, %s36
      %s39 = sadd.s32 1, %s23
      %s40 = scalar_select %p37, %s39, %s23
      %p41 = scmp.ge.s32.totalorder %s40, 2
      %s42 = scalar_select %p41, 0, %s40
      %s43 = ssub.s32 %s23, %s42
      %s44 = ssub.s32 %s24, %s38
      %s45 = sor.u32 %s43, %s44
      %p46 = scmp.eq.s32.totalorder %s45, 0
      %s48 = sadd.s32 %s47, 1
      %s49 = scalar_select %p46, %s47, %s48
      %p52 = pneg %p46
      %p53 = scmp.eq.s32.totalorder %s16, 15
      %p54 = por %p52, %p53
      %p55 = scmp.ne.s32.totalorder %s47, %s50
      %p56 = scmp.eq.s32.totalorder %s16, 0
      %p57 = por %p55, %p56
      %p58 = scmp.ne.s32.totalorder %s47, %s50
      %p59 = scmp.eq.s32.totalorder %s21, 15
      %p60 = por %p58, %p59
      %p61 = scmp.ne.s32.totalorder %s50, %s51
      %p62 = scmp.eq.s32.totalorder %s21, 0
      %p63 = por %p61, %p62
      %p64 = scmp.ne.s32.totalorder %s50, %s51
      %p65 = scmp.eq.s32.totalorder %s22, 15
      %p66 = por %p64, %p65
      %p68 = scmp.ne.s32.totalorder %s51, %s67
      %p69 = scmp.eq.s32.totalorder %s22, 0
      %p70 = por %p68, %p69
      %s72 = sadd.s32 %s71, 1
      %p75 = scmp.eq.s32.totalorder %s16, 15
      %p76 = scmp.ne.s32.totalorder %s71, %s73
      %p77 = scmp.eq.s32.totalorder %s16, 0
      %p78 = por %p76, %p77
      %p79 = scmp.ne.s32.totalorder %s71, %s73
      %p80 = scmp.eq.s32.totalorder %s21, 15
      %p81 = por %p79, %p80
      %p82 = scmp.ne.s32.totalorder %s73, %s74
      %p83 = scmp.eq.s32.totalorder %s21, 0
      %p84 = por %p82, %p83
      %p85 = scmp.ne.s32.totalorder %s73, %s74
      %p86 = scmp.eq.s32.totalorder %s22, 15
      %p87 = por %p85, %p86
      %p89 = scmp.ne.s32.totalorder %s74, %s88
      %p90 = scmp.eq.s32.totalorder %s22, 0
      %p91 = por %p89, %p90
      %s93 = sadd.s32 %s92, 1
      %p96 = scmp.eq.s32.totalorder %s16, 15
      %p97 = scmp.ne.s32.totalorder %s92, %s94
      %p98 = scmp.eq.s32.totalorder %s16, 0
      %p99 = por %p97, %p98
      %p100 = scmp.ne.s32.totalorder %s92, %s94
      %p101 = scmp.eq.s32.totalorder %s21, 15
      %p102 = por %p100, %p101
      %p103 = scmp.ne.s32.totalorder %s94, %s95
      %p104 = scmp.eq.s32.totalorder %s21, 0
      %p105 = por %p103, %p104
      %p106 = scmp.ne.s32.totalorder %s94, %s95
      %p107 = scmp.eq.s32.totalorder %s22, 15
      %p108 = por %p106, %p107
      %p110 = scmp.ne.s32.totalorder %s95, %s109
      %p111 = scmp.eq.s32.totalorder %s22, 0
      %p112 = por %p110, %p111
      %s114 = sadd.s32 %s113, 1
      %p117 = scmp.eq.s32.totalorder %s16, 15
      %p118 = scmp.ne.s32.totalorder %s113, %s115
      %p119 = scmp.eq.s32.totalorder %s16, 0
      %p120 = por %p118, %p119
      %p121 = scmp.ne.s32.totalorder %s113, %s115
      %p122 = scmp.eq.s32.totalorder %s21, 15
      %p123 = por %p121, %p122
      %p124 = scmp.ne.s32.totalorder %s115, %s116
      %p125 = scmp.eq.s32.totalorder %s21, 0
      %p126 = por %p124, %p125
      %p127 = scmp.ne.s32.totalorder %s115, %s116
      %p128 = scmp.eq.s32.totalorder %s22, 15
      %p129 = por %p127, %p128
      %p131 = scmp.ne.s32.totalorder %s116, %s130
      %p132 = scmp.eq.s32.totalorder %s22, 0
      %p133 = por %p131, %p132
      %s135 = sadd.s32 %s134, 1
      %p138 = scmp.eq.s32.totalorder %s16, 15
      %p139 = scmp.ne.s32.totalorder %s134, %s136
      %p140 = scmp.eq.s32.totalorder %s16, 0
      %p141 = por %p139, %p140
      %p142 = scmp.ne.s32.totalorder %s134, %s136
      %p143 = scmp.eq.s32.totalorder %s21, 15
      %p144 = por %p142, %p143
      %p145 = scmp.ne.s32.totalorder %s136, %s137
      %p146 = scmp.eq.s32.totalorder %s21, 0
      %p147 = por %p145, %p146
      %p148 = scmp.ne.s32.totalorder %s136, %s137
      %p149 = scmp.eq.s32.totalorder %s22, 15
      %p150 = por %p148, %p149
      %p152 = scmp.ne.s32.totalorder %s137, %s151
      %p153 = scmp.eq.s32.totalorder %s22, 0
      %p154 = por %p152, %p153
      %s155 = ssub.s32 %s23, %s42
      %s156 = ssub.s32 %s25, %s34
      %s157 = sor.u32 %s155, %s156
      %p158 = scmp.eq.s32.totalorder %s157, 0
      %s160 = sadd.s32 %s159, 1
      %s161 = scalar_select %p158, %s159, %s160
      %p164 = pneg %p158
      %p165 = scmp.eq.s32.totalorder %s16, 15
      %p166 = por %p164, %p165
      %p167 = scmp.ne.s32.totalorder %s159, %s162
      %p168 = scmp.eq.s32.totalorder %s16, 0
      %p169 = por %p167, %p168
      %p170 = scmp.ne.s32.totalorder %s159, %s162
      %p171 = scmp.eq.s32.totalorder %s21, 15
      %p172 = por %p170, %p171
      %p173 = scmp.ne.s32.totalorder %s162, %s163
      %p174 = scmp.eq.s32.totalorder %s21, 0
      %p175 = por %p173, %p174
      %p176 = scmp.ne.s32.totalorder %s162, %s163
      %p177 = scmp.eq.s32.totalorder %s22, 15
      %p178 = por %p176, %p177
      %p180 = scmp.ne.s32.totalorder %s163, %s179
      %p181 = scmp.eq.s32.totalorder %s22, 0
      %p182 = por %p180, %p181
      %s183 = ssub.s32 %s23, %s42
      %s184 = ssub.s32 %s25, %s34
      %s185 = sor.u32 %s183, %s184
      %p186 = scmp.eq.s32.totalorder %s185, 0
      %s188 = sadd.s32 %s187, 1
      %s189 = scalar_select %p186, %s187, %s188
      %p192 = pneg %p186
      %p193 = scmp.eq.s32.totalorder %s16, 15
      %p194 = por %p192, %p193
      %p195 = scmp.ne.s32.totalorder %s187, %s190
      %p196 = scmp.eq.s32.totalorder %s16, 0
      %p197 = por %p195, %p196
      %p198 = scmp.ne.s32.totalorder %s187, %s190
      %p199 = scmp.eq.s32.totalorder %s21, 15
      %p200 = por %p198, %p199
      %p201 = scmp.ne.s32.totalorder %s190, %s191
      %p202 = scmp.eq.s32.totalorder %s21, 0
      %p203 = por %p201, %p202
      %p204 = scmp.ne.s32.totalorder %s190, %s191
      %p205 = scmp.eq.s32.totalorder %s22, 15
      %p206 = por %p204, %p205
      %p208 = scmp.ne.s32.totalorder %s191, %s207
      %p209 = scmp.eq.s32.totalorder %s22, 0
      %p210 = por %p208, %p209
      %s211 = ssub.s32 %s24, %s38
      %p212 = scmp.eq.s32.totalorder %s211, 0
      %s214 = sadd.s32 %s213, 1
      %s215 = scalar_select %p212, %s213, %s214
      %p218 = pneg %p212
      %p219 = scmp.eq.s32.totalorder %s16, 15
      %p220 = por %p218, %p219
      %p221 = scmp.ne.s32.totalorder %s213, %s216
      %p222 = scmp.eq.s32.totalorder %s16, 0
      %p223 = por %p221, %p222
      %p224 = scmp.ne.s32.totalorder %s213, %s216
      %p225 = scmp.eq.s32.totalorder %s21, 15
      %p226 = por %p224, %p225
      %p227 = scmp.ne.s32.totalorder %s216, %s217
      %p228 = scmp.eq.s32.totalorder %s21, 0
      %p229 = por %p227, %p228
      %p230 = scmp.ne.s32.totalorder %s216, %s217
      %p231 = scmp.eq.s32.totalorder %s22, 15
      %p232 = por %p230, %p231
      %p234 = scmp.ne.s32.totalorder %s217, %s233
      %p235 = scmp.eq.s32.totalorder %s22, 0
      %p236 = por %p234, %p235
      %s237 = ssub.s32 %s25, %s34
      %p238 = scmp.eq.s32.totalorder %s237, 0
      %s240 = sadd.s32 %s239, 1
      %s241 = scalar_select %p238, %s239, %s240
      %p244 = pneg %p238
      %p245 = scmp.eq.s32.totalorder %s16, 15
      %p246 = por %p244, %p245
      %p247 = scmp.ne.s32.totalorder %s239, %s242
      %p248 = scmp.eq.s32.totalorder %s16, 0
      %p249 = por %p247, %p248
      %p250 = scmp.ne.s32.totalorder %s239, %s242
      %p251 = scmp.eq.s32.totalorder %s21, 15
      %p252 = por %p250, %p251
      %p253 = scmp.ne.s32.totalorder %s242, %s243
      %p254 = scmp.eq.s32.totalorder %s21, 0
      %p255 = por %p253, %p254
      %p256 = scmp.ne.s32.totalorder %s242, %s243
      %p257 = scmp.eq.s32.totalorder %s22, 15
      %p258 = por %p256, %p257
      %p260 = scmp.ne.s32.totalorder %s243, %s259
      %p261 = scmp.eq.s32.totalorder %s22, 0
      %p262 = por %p260, %p261
      %s263 = ssub.s32 %s23, %s42
      %s264 = ssub.s32 %s25, %s34
      %s265 = sor.u32 %s263, %s264
      %p266 = scmp.eq.s32.totalorder %s265, 0
      %s268 = sadd.s32 %s267, 1
      %s269 = scalar_select %p266, %s267, %s268
      %p272 = pneg %p266
      %p273 = scmp.eq.s32.totalorder %s16, 15
      %p274 = por %p272, %p273
      %p275 = scmp.ne.s32.totalorder %s267, %s270
      %p276 = scmp.eq.s32.totalorder %s16, 0
      %p277 = por %p275, %p276
      %p278 = scmp.ne.s32.totalorder %s267, %s270
      %p279 = scmp.eq.s32.totalorder %s21, 15
      %p280 = por %p278, %p279
      %p281 = scmp.ne.s32.totalorder %s270, %s271
      %p282 = scmp.eq.s32.totalorder %s21, 0
      %p283 = por %p281, %p282
      %p284 = scmp.ne.s32.totalorder %s270, %s271
      %p285 = scmp.eq.s32.totalorder %s22, 15
      %p286 = por %p284, %p285
      %p288 = scmp.ne.s32.totalorder %s271, %s287
      %p289 = scmp.eq.s32.totalorder %s22, 0
      %p290 = por %p288, %p289
      %s291 = ssub.s32 %s23, %s42
      %s292 = ssub.s32 %s24, %s38
      %s293 = sor.u32 %s291, %s292
      %p294 = scmp.eq.s32.totalorder %s293, 0
      %s296 = sadd.s32 %s295, 1
      %s297 = scalar_select %p294, %s295, %s296
      %p300 = pneg %p294
      %p301 = scmp.eq.s32.totalorder %s16, 15
      %p302 = por %p300, %p301
      %p303 = scmp.ne.s32.totalorder %s295, %s298
      %p304 = scmp.eq.s32.totalorder %s16, 0
      %p305 = por %p303, %p304
      %p306 = scmp.ne.s32.totalorder %s295, %s298
      %p307 = scmp.eq.s32.totalorder %s21, 15
      %p308 = por %p306, %p307
      %p309 = scmp.ne.s32.totalorder %s298, %s299
      %p310 = scmp.eq.s32.totalorder %s21, 0
      %p311 = por %p309, %p310
      %p312 = scmp.ne.s32.totalorder %s298, %s299
      %p313 = scmp.eq.s32.totalorder %s22, 15
      %p314 = por %p312, %p313
      %p316 = scmp.ne.s32.totalorder %s299, %s315
      %p317 = scmp.eq.s32.totalorder %s22, 0
      %p318 = por %p316, %p317
      %p319 = scmp.le.s32.totalorder 1, %s16
      %p320 = scmp.lt.s32.totalorder %s16, 17
      %p321 = pnand %p319, %p320
      %p322 = pneg %p321
      // Predicated region
      $region9: #{tpu_custom_call.1} parent=5 // pred_check
        _
      $region10: #{tpu_custom_call.1} parent=5 // pred_check_branch
        %324 = sbr.rel (%p321) target = $region12
      $region11: #{tpu_custom_call.1} parent=5 // pred_region
        %s325 = ssub.s32 %s16, 1
        // Predicated region
        $region13: #{tpu_custom_call.1} parent=11 // pred_check
          %p326 = pneg %p84
        $region14: #{tpu_custom_call.1} parent=11 // pred_check_branch
          %328 = sbr.rel (%p326) target = $region16
        $region15: #{tpu_custom_call.1} parent=11 // pred_region
          _
        $region16: #{tpu_custom_call.1} parent=11 // pred_fallthru
          _
        // Predicated region
        $region17: #{tpu_custom_call.1} parent=11 // pred_check
          %p329 = pneg %p105
        $region18: #{tpu_custom_call.1} parent=11 // pred_check_branch
          %331 = sbr.rel (%p329) target = $region20
        $region19: #{tpu_custom_call.1} parent=11 // pred_region
          _
        $region20: #{tpu_custom_call.1} parent=11 // pred_fallthru
          _
        // Predicated region
        $region21: #{tpu_custom_call.1} parent=11 // pred_check
          %p332 = pneg %p126
        $region22: #{tpu_custom_call.1} parent=11 // pred_check_branch
          %334 = sbr.rel (%p332) target = $region24
        $region23: #{tpu_custom_call.1} parent=11 // pred_region
          _
        $region24: #{tpu_custom_call.1} parent=11 // pred_fallthru
          _
        // Predicated region
        $region25: #{tpu_custom_call.1} parent=11 // pred_check
          %p335 = pneg %p147
        $region26: #{tpu_custom_call.1} parent=11 // pred_check_branch
          %337 = sbr.rel (%p335) target = $region28
        $region27: #{tpu_custom_call.1} parent=11 // pred_region
          _
        $region28: #{tpu_custom_call.1} parent=11 // pred_fallthru
          _
      $region12: #{tpu_custom_call.1} parent=5 // pred_fallthru
        _
      %p338 = scmp.lt.s32.totalorder %s16, 16
      // Predicated region
      $region29: #{tpu_custom_call.1} parent=5 // pred_check
        %p339 = pneg %p338
      $region30: #{tpu_custom_call.1} parent=5 // pred_check_branch
        %341 = sbr.rel (%p339) target = $region32
      $region31: #{tpu_custom_call.1} parent=5 // pred_region
        // Predicated region
        $region33: #{tpu_custom_call.1} parent=31 // pred_check
          %p342 = pneg %p57
        $region34: #{tpu_custom_call.1} parent=31 // pred_check_branch
          %344 = sbr.rel (%p342) target = $region36
        $region35: #{tpu_custom_call.1} parent=31 // pred_region
          %s345 = smul.u32 8, %s24
          %p346 = scmp.lt.s32.totalorder %s23, 1
          %s347 = scalar_select %p346, %s23, 1
          %p348 = scmp.lt.s32.totalorder %s345, 31
          %s349 = scalar_select %p348, %s345, 31
          %s350 = smul.addr %s347, 32
          %s351 = sadd.s32 %s349, %s350
          %s352 = smul.addr %s351, 8
          %s353 = scalar_lea.vmem %s0, %s352
          %s354 = smul.u32 8, %s24
        $region36: #{tpu_custom_call.1} parent=31 // pred_fallthru
          _
        // Predicated region
        $region37: #{tpu_custom_call.1} parent=31 // pred_check
          %p355 = pneg %p169
        $region38: #{tpu_custom_call.1} parent=31 // pred_check_branch
          %357 = sbr.rel (%p355) target = $region40
        $region39: #{tpu_custom_call.1} parent=31 // pred_region
          %s358 = sand.u32 %s159, 1
          %s359 = sand.u32 %s159, 1
          %s360 = smul.addr %s359, 32
          %s361 = scalar_lea.vmem [#allocation7], %s360
          %s362 = smul.addr %s23, 8
          %s363 = sadd.s32 %s25, %s362
          %s364 = smul.addr %s363, 8
          %s365 = scalar_lea.vmem %s5, %s364
          // Predicated region
          $region41: #{tpu_custom_call.1} parent=39 // pred_check
            _
          $region42: #{tpu_custom_call.1} parent=39 // pred_check_branch
            %367 = sbr.rel (0) target = $region44
          $region43: #{tpu_custom_call.1} parent=39 // pred_region
            // Predicated region
            $region45: #{tpu_custom_call.1} parent=43 // pred_check
              _
            $region46: #{tpu_custom_call.1} parent=43 // pred_check_branch
              %369 = sbr.rel (0) target = $region48
            $region47: #{tpu_custom_call.1} parent=43 // pred_region
              // Predicated region
              $region60: #{tpu_custom_call.1} parent=47 // pred_check
                _
              $region61: #{tpu_custom_call.1} parent=47 // pred_check_branch
                %391 = sbr.rel (0) target = $region63
              $region62: #{tpu_custom_call.1} parent=47 // pred_region
                loop: start=0, step=1, limit=1
                $region64: #{tpu_custom_call.1} parent=62 // loop_pre_header
                  _
                $region65: #{tpu_custom_call.1} parent=62 // loop_header
                  %s393 = sphi 0, %s397
                  %p394 = scmp.ge.s32.totalorder %s393, 1
                  %s398 = sphi %s365, %s365
                  %s399 = sphi %s361, %s361
                $region66: #{tpu_custom_call.1} parent=62 // loop_header_branch
                  %396 = sbr.rel (%p394) target = $region70
                $region67: #{tpu_custom_call.1} parent=62 // loop_body
                  %v400 = vld [vmem:[%s398] sm:$0xff]
                  %401 = vst [vmem:[%s399] sm:$0xff] %v400
                  %v402 = vld [vmem:[%s398 + $0x10] sm:$0xff]
                  %403 = vst [vmem:[%s399 + $0x8] sm:$0xff] %v402
                  %v404 = vld [vmem:[%s398 + $0x20] sm:$0xff]
                  %405 = vst [vmem:[%s399 + $0x10] sm:$0xff] %v404
                  %v406 = vld [vmem:[%s398 + $0x30] sm:$0xff]
                  %407 = vst [vmem:[%s399 + $0x18] sm:$0xff] %v406
                $region68: #{tpu_custom_call.1} parent=62 // loop_footer
                  %s397 = sadd.s32 1, %s393
                $region69: #{tpu_custom_call.1} parent=62 // loop_footer_branch
                  %392 = sbr.rel target = $region65
                $region70: #{tpu_custom_call.1} parent=62 // loop_exit
                  _
              $region63: #{tpu_custom_call.1} parent=47 // pred_fallthru
                _
              // Predicated region
              $region71: #{tpu_custom_call.1} parent=47 // pred_check
                _
              $region72: #{tpu_custom_call.1} parent=47 // pred_check_branch
                %409 = sbr.rel target = $region74
              $region73: #{tpu_custom_call.1} parent=47 // pred_region
                _
              $region74: #{tpu_custom_call.1} parent=47 // pred_fallthru
                _
            $region48: #{tpu_custom_call.1} parent=43 // pred_fallthru
              _
            // Predicated region
            $region49: #{tpu_custom_call.1} parent=43 // pred_check
              _
            $region50: #{tpu_custom_call.1} parent=43 // pred_check_branch
              %371 = sbr.rel target = $region52
            $region51: #{tpu_custom_call.1} parent=43 // pred_region
              %s373 = ssub.s32 256, 1
              loop: start=0, step=1, limit=1
              $region53: #{tpu_custom_call.1} parent=51 // loop_pre_header
                _
              $region54: #{tpu_custom_call.1} parent=51 // loop_header
                %s375 = sphi 0, %s379
                %p376 = scmp.ge.s32.totalorder %s375, 1
                %s380 = sphi %s365, %s365
                %s381 = sphi %s361, %s361
              $region55: #{tpu_custom_call.1} parent=51 // loop_header_branch
                %378 = sbr.rel (%p376) target = $region59
              $region56: #{tpu_custom_call.1} parent=51 // loop_body
                %v382 = vld [vmem:[%s380] sm:%s373]
                %383 = vst [vmem:[%s381] sm:%s373] %v382
                %v384 = vld [vmem:[%s380 + $0x10] sm:%s373]
                %385 = vst [vmem:[%s381 + $0x8] sm:%s373] %v384
                %v386 = vld [vmem:[%s380 + $0x20] sm:%s373]
                %387 = vst [vmem:[%s381 + $0x10] sm:%s373] %v386
                %v388 = vld [vmem:[%s380 + $0x30] sm:%s373]
                %389 = vst [vmem:[%s381 + $0x18] sm:%s373] %v388
              $region57: #{tpu_custom_call.1} parent=51 // loop_footer
                %s379 = sadd.s32 1, %s375
              $region58: #{tpu_custom_call.1} parent=51 // loop_footer_branch
                %374 = sbr.rel target = $region54
              $region59: #{tpu_custom_call.1} parent=51 // loop_exit
                _
            $region52: #{tpu_custom_call.1} parent=43 // pred_fallthru
              _
          $region44: #{tpu_custom_call.1} parent=39 // pred_fallthru
            _
          %410 = vnop
        $region40: #{tpu_custom_call.1} parent=31 // pred_fallthru
          _
        // Predicated region
        $region75: #{tpu_custom_call.1} parent=31 // pred_check
          %p411 = pneg %p197
        $region76: #{tpu_custom_call.1} parent=31 // pred_check_branch
          %413 = sbr.rel (%p411) target = $region78
        $region77: #{tpu_custom_call.1} parent=31 // pred_region
          %s414 = smul.u32 16, %s25
          %p415 = scmp.lt.s32.totalorder %s23, 1
          %s416 = scalar_select %p415, %s23, 1
          %p417 = scmp.lt.s32.totalorder %s414, 31
          %s418 = scalar_select %p417, %s414, 31
          %s419 = smul.addr %s416, 32
          %s420 = sadd.s32 %s418, %s419
          %s421 = smul.addr %s420, 8
          %s422 = scalar_lea.vmem %s6, %s421
          %s423 = smul.u32 16, %s25
        $region78: #{tpu_custom_call.1} parent=31 // pred_fallthru
          _
        // Predicated region
        $region79: #{tpu_custom_call.1} parent=31 // pred_check
          %p424 = pneg %p223
        $region80: #{tpu_custom_call.1} parent=31 // pred_check_branch
          %426 = sbr.rel (%p424) target = $region82
        $region81: #{tpu_custom_call.1} parent=31 // pred_region
          %s427 = smul.u32 8, %s24
          %p428 = scmp.lt.s32.totalorder %s427, 31
          %s429 = scalar_select %p428, %s427, 31
          %s430 = smul.addr %s429, 8
          %s431 = scalar_lea.vmem %s7, %s430
          %s432 = smul.u32 8, %s24
        $region82: #{tpu_custom_call.1} parent=31 // pred_fallthru
          _
        // Predicated region
        $region83: #{tpu_custom_call.1} parent=31 // pred_check
          %p433 = pneg %p249
        $region84: #{tpu_custom_call.1} parent=31 // pred_check_branch
          %435 = sbr.rel (%p433) target = $region86
        $region85: #{tpu_custom_call.1} parent=31 // pred_region
          %p436 = scmp.lt.s32.totalorder %s25, 1
          %s437 = scalar_select %p436, %s25, 1
          %s438 = smul.addr %s437, 2
          %s439 = scalar_lea.vmem %s8, %s438
        $region86: #{tpu_custom_call.1} parent=31 // pred_fallthru
          _
        // Predicated region
        $region87: #{tpu_custom_call.1} parent=31 // pred_check
          %p440 = pneg %p277
        $region88: #{tpu_custom_call.1} parent=31 // pred_check_branch
          %442 = sbr.rel (%p440) target = $region90
        $region89: #{tpu_custom_call.1} parent=31 // pred_region
          %p443 = scmp.lt.s32.totalorder %s23, 1
          %s444 = scalar_select %p443, %s23, 1
          %p445 = scmp.lt.s32.totalorder %s25, 1
          %s446 = scalar_select %p445, %s25, 1
          %s447 = smul.addr %s444, 2
          %s448 = sadd.s32 %s446, %s447
          %s449 = scalar_lea.vmem %s9, %s448
        $region90: #{tpu_custom_call.1} parent=31 // pred_fallthru
          _
      $region32: #{tpu_custom_call.1} parent=5 // pred_fallthru
        _
      %p450 = scmp.le.s32.totalorder 1, %s16
      %p451 = scmp.lt.s32.totalorder %s16, 17
      %p452 = pnand %p450, %p451
      %p453 = pneg %p452
      // Predicated region
      $region91: #{tpu_custom_call.1} parent=5 // pred_check
        _
      $region92: #{tpu_custom_call.1} parent=5 // pred_check_branch
        %455 = sbr.rel (%p452) target = $region94
      $region93: #{tpu_custom_call.1} parent=5 // pred_region
        %s456 = ssub.s32 %s16, 1
        %s457 = sand.u32 %s162, 1
        %s458 = sand.u32 %s162, 1
        %s459 = smul.addr %s458, 32
        %s460 = scalar_lea.vmem [#allocation7], %s459
        // Predicated region
        $region95: #{tpu_custom_call.1} parent=93 // pred_check
          %p461 = pneg %p175
        $region96: #{tpu_custom_call.1} parent=93 // pred_check_branch
          %463 = sbr.rel (%p461) target = $region98
        $region97: #{tpu_custom_call.1} parent=93 // pred_region
          _
        $region98: #{tpu_custom_call.1} parent=93 // pred_fallthru
          _
        %s464 = smul.u32 8, %s27
        %p465 = scmp.lt.s32.totalorder %s26, 1
        %s466 = scalar_select %p465, %s26, 1
        %p467 = scmp.lt.s32.totalorder %s464, 31
        %s468 = scalar_select %p467, %s464, 31
        %s469 = smul.addr %s466, 32
        %s470 = sadd.s32 %s468, %s469
        %s471 = smul.addr %s470, 8
        %s472 = scalar_lea.vmem %s0, %s471
        %p473 = pneg %p63
        %p474 = pneg %p60
        %p475 = pneg %p84
        %p476 = pneg %p81
        %p477 = pneg %p105
        %p478 = pneg %p102
        %p479 = pneg %p126
        %p480 = pneg %p123
        %p481 = pneg %p147
        %p482 = pneg %p144
        %s483 = sand.u32 %s162, 1
        %s484 = sand.u32 %s162, 1
        %s485 = smul.addr %s484, 32
        %s486 = scalar_lea.vmem [#allocation7], %s485
        %p487 = pneg %p175
        %p488 = pneg %p172
        %s489 = smul.u32 16, %s28
        %p490 = scmp.lt.s32.totalorder %s26, 1
        %s491 = scalar_select %p490, %s26, 1
        %p492 = scmp.lt.s32.totalorder %s489, 31
        %s493 = scalar_select %p492, %s489, 31
        %s494 = smul.addr %s491, 32
        %s495 = sadd.s32 %s493, %s494
        %s496 = smul.addr %s495, 8
        %s497 = scalar_lea.vmem %s6, %s496
        %p498 = pneg %p203
        %p499 = pneg %p200
        %s500 = smul.u32 8, %s27
        %p501 = scmp.lt.s32.totalorder %s500, 31
        %s502 = scalar_select %p501, %s500, 31
        %s503 = smul.addr %s502, 8
        %s504 = scalar_lea.vmem %s7, %s503
        %p505 = pneg %p229
        %p506 = pneg %p226
        %p507 = scmp.lt.s32.totalorder %s28, 1
        %s508 = scalar_select %p507, %s28, 1
        %s509 = smul.addr %s508, 2
        %s510 = scalar_lea.vmem %s8, %s509
        %p511 = pneg %p255
        %p512 = pneg %p252
        %p513 = scmp.lt.s32.totalorder %s26, 1
        %s514 = scalar_select %p513, %s26, 1
        %p515 = scmp.lt.s32.totalorder %s28, 1
        %s516 = scalar_select %p515, %s28, 1
        %s517 = smul.addr %s514, 2
        %s518 = sadd.s32 %s516, %s517
        %s519 = scalar_lea.vmem %s9, %s518
        %p520 = pneg %p283
        %p521 = pneg %p280
        %p522 = pneg %p311
        %p523 = pneg %p308
        %s524 = smul.u32 8, %s27
        %p525 = scmp.lt.s32.totalorder %s26, 1
        %s526 = scalar_select %p525, %s26, 1
        %p527 = scmp.lt.s32.totalorder %s524, 31
        %s528 = scalar_select %p527, %s524, 31
        %s529 = smul.addr %s526, 32
        %s530 = sadd.s32 %s528, %s529
        %s531 = smul.addr %s530, 8
        %s532 = scalar_lea.vmem %s10, %s531
        %s533 = smul.u32 8, %s27
        %p534 = scmp.lt.s32.totalorder %s26, 1
        %s535 = scalar_select %p534, %s26, 1
        %p536 = scmp.lt.s32.totalorder %s533, 31
        %s537 = scalar_select %p536, %s533, 31
        %s538 = smul.addr %s535, 32
        %s539 = sadd.s32 %s537, %s538
        %s540 = smul.addr %s539, 8
        %s541 = scalar_lea.vmem %s0, %s540
        %s542 = smul.u32 8, %s27
        %s543 = smul.u32 16, %s28
        %p544 = scmp.lt.s32.totalorder %s26, 1
        %s545 = scalar_select %p544, %s26, 1
        %p546 = scmp.lt.s32.totalorder %s543, 31
        %s547 = scalar_select %p546, %s543, 31
        %s548 = smul.addr %s545, 32
        %s549 = sadd.s32 %s547, %s548
        %s550 = smul.addr %s549, 8
        %s551 = scalar_lea.vmem %s6, %s550
        %s552 = smul.u32 16, %s28
        %s553 = smul.u32 8, %s27
        %p554 = scmp.lt.s32.totalorder %s553, 31
        %s555 = scalar_select %p554, %s553, 31
        %s556 = smul.addr %s555, 8
        %s557 = scalar_lea.vmem %s7, %s556
        %s558 = smul.u32 8, %s27
        %p559 = scmp.lt.s32.totalorder %s28, 1
        %s560 = scalar_select %p559, %s28, 1
        %s561 = smul.addr %s560, 2
        %s562 = scalar_lea.vmem %s8, %s561
        %p563 = scmp.lt.s32.totalorder %s26, 1
        %s564 = scalar_select %p563, %s26, 1
        %p565 = scmp.lt.s32.totalorder %s28, 1
        %s566 = scalar_select %p565, %s28, 1
        %s567 = smul.addr %s564, 2
        %s568 = sadd.s32 %s566, %s567
        %s569 = scalar_lea.vmem %s9, %s568
        %s570 = smul.u32 8, %s27
        %p571 = scmp.lt.s32.totalorder %s26, 1
        %s572 = scalar_select %p571, %s26, 1
        %p573 = scmp.lt.s32.totalorder %s570, 31
        %s574 = scalar_select %p573, %s570, 31
        %s575 = smul.addr %s572, 32
        %s576 = sadd.s32 %s574, %s575
        %s577 = smul.addr %s576, 8
        %s578 = scalar_lea.vmem %s10, %s577
        %s579 = smul.u32 8, %s27
        %p580 = scmp.eq.s32.totalorder %s28, 0
        // Predicated region
        $region99: #{tpu_custom_call.1} parent=93 // pred_check
          %p581 = pneg %p580
        $region100: #{tpu_custom_call.1} parent=93 // pred_check_branch
          %583 = sbr.rel (%p581) target = $region102
        $region101: #{tpu_custom_call.1} parent=93 // pred_region
          %v584 = vld [vmem:[%s541] sm:$0xff]
          %v585 = vld [vmem:[%s541 + $0x8] sm:$0xff]
          %v586 = vld [vmem:[%s541 + $0x10] sm:$0xff]
          %v587 = vld [vmem:[%s541 + $0x18] sm:$0xff]
          %v588 = vld [vmem:[%s541 + $0x20] sm:$0xff]
          %v589 = vld [vmem:[%s541 + $0x28] sm:$0xff]
          %v590 = vld [vmem:[%s541 + $0x30] sm:$0xff]
          %v591 = vld [vmem:[%s541 + $0x38] sm:$0xff]
          %v592 = vld [vmem:[%s1] sm:$0xff]
          %v593 = vld [vmem:[%s1 + $0x8] sm:$0xff]
          %v594 = vld [vmem:[%s1 + $0x10] sm:$0xff]
          %v595 = vld [vmem:[%s1 + $0x18] sm:$0xff]
          %v596 = vld [vmem:[%s2] sm:$0x1]
          %v598 = vlaneseq
          %v599 = vshrl.u32 %v598, 7
          %v600 = vsub.s32 0, %v599
          %v601 = vrot.slane %v596, %v600
          %vm603 = vcmask 261120
          %v605 = vsel %vm603, %v584, 0
          %v608 = vsel %vm603, %v585, 0
          %v611 = vsel %vm603, %v586, 0
          %v614 = vsel %vm603, %v587, 0
          %v617 = vsel %vm603, %v588, 0
          %v620 = vsel %vm603, %v589, 0
          %v623 = vsel %vm603, %v590, 0
          %v626 = vsel %vm603, %v591, 0
          %628 = vmatprep.subr.mxu0 0.0
          %629 = vmatpush1.msra.mxu0 0.0
          %630 = vmatprep.subr.mxu0 0.0
          %631 = vmatpush1.msra.mxu0 0.0
          %632 = vmatprep.subr.mxu0 0.0
          %633 = vmatpush1.msra.mxu0 0.0
          %634 = vmatprep.subr.mxu0 0.0
          %635 = vmatpush1.msra.mxu0 0.0
          %636 = vmatprep.subr.mxu0 0.0
          %637 = vmatpush1.msra.mxu0 0.0
          %638 = vmatprep.subr.mxu0 0.0
          %639 = vmatpush1.msra.mxu0 0.0
          %640 = vmatprep.subr.mxu0 0.0
          %641 = vmatpush1.msra.mxu0 0.0
          %642 = vmatprep.subr.mxu0 0.0
          %643 = vmatpush1.msra.mxu0 0.0
          %644 = vmatprep.subr.mxu0 0.0
          %645 = vmatpush1.msra.mxu0 0.0
          %646 = vmatprep.subr.mxu0 0.0
          %647 = vmatpush1.msra.mxu0 0.0
          %648 = vmatprep.subr.mxu0 0.0
          %649 = vmatpush1.msra.mxu0 0.0
          %650 = vmatprep.subr.mxu0 0.0
          %651 = vmatpush1.msra.mxu0 0.0
          %652 = vmatprep.subr.mxu0 0.0
          %653 = vmatpush1.msra.mxu0 %v595
          %654 = vmatprep.subr.mxu0 0.0
          %655 = vmatpush1.msra.mxu0 %v594
          %656 = vmatprep.subr.mxu0 0.0
          %657 = vmatpush1.msra.mxu0 %v593
          %658 = vmatprep.subr.mxu0 0.0
          %659 = vmatpush1.msra.mxu0 %v592
          %660 = vmatprep.subr.mxu0 0.0
          %661 = vmatpush2.msra.mxu0 0.0
          %662 = vmatprep.subr.mxu0 0.0
          %663 = vmatpush2.msra.mxu0 0.0
          %664 = vmatprep.subr.mxu0 0.0
          %665 = vmatpush2.msra.mxu0 0.0
          %666 = vmatprep.subr.mxu0 0.0
          %667 = vmatpush2.msra.mxu0 0.0
          %668 = vmatprep.subr.mxu0 0.0
          %669 = vmatpush2.msra.mxu0 0.0
          %670 = vmatprep.subr.mxu0 0.0
          %671 = vmatpush2.msra.mxu0 0.0
          %672 = vmatprep.subr.mxu0 0.0
          %673 = vmatpush2.msra.mxu0 0.0
          %674 = vmatprep.subr.mxu0 0.0
          %675 = vmatpush2.msra.mxu0 0.0
          %676 = vmatprep.subr.mxu0 0.0
          %677 = vmatpush2.msra.mxu0 0.0
          %678 = vmatprep.subr.mxu0 0.0
          %679 = vmatpush2.msra.mxu0 0.0
          %680 = vmatprep.subr.mxu0 0.0
          %681 = vmatpush2.msra.mxu0 0.0
          %682 = vmatprep.subr.mxu0 0.0
          %683 = vmatpush2.msra.mxu0 0.0
          %684 = vmatprep.subr.mxu0 0.0
          %685 = vmatpush2.msra.mxu0 0.0
          %686 = vmatprep.subr.mxu0 0.0
          %687 = vmatpush2.msra.mxu0 0.0
          %688 = vmatprep.subr.mxu0 0.0
          %689 = vmatpush2.msra.mxu0 0.0
          %690 = vmatprep.subr.mxu0 0.0
          %691 = vmatpush2.msra.mxu0 0.0
          %692 = vmatprep.mubr.f32.mxu0 0.0
          %693 = vmatmul.mubr.f32.gmra.mxu0 %v605
          %v694 = vpop.f32.mrf.mxu0
          %v695 = vadd.f32 %v601, %v694
          %v696 = vpop.f32.mrf.mxu0
          %697 = vmatprep.mubr.f32.mxu0 0.0
          %698 = vmatmul.mubr.f32.gmra.mxu0 %v608
          %v699 = vpop.f32.mrf.mxu0
          %v700 = vadd.f32 %v601, %v699
          %v701 = vpop.f32.mrf.mxu0
          %702 = vmatprep.mubr.f32.mxu0 0.0
          %703 = vmatmul.mubr.f32.gmra.mxu0 %v611
          %v704 = vpop.f32.mrf.mxu0
          %v705 = vadd.f32 %v601, %v704
          %v706 = vpop.f32.mrf.mxu0
          %707 = vmatprep.mubr.f32.mxu0 0.0
          %708 = vmatmul.mubr.f32.gmra.mxu0 %v614
          %v709 = vpop.f32.mrf.mxu0
          %v710 = vadd.f32 %v601, %v709
          %v711 = vpop.f32.mrf.mxu0
          %712 = vmatprep.mubr.f32.mxu0 0.0
          %713 = vmatmul.mubr.f32.gmra.mxu0 %v617
          %v714 = vpop.f32.mrf.mxu0
          %v715 = vadd.f32 %v601, %v714
          %v716 = vpop.f32.mrf.mxu0
          %717 = vmatprep.mubr.f32.mxu0 0.0
          %718 = vmatmul.mubr.f32.gmra.mxu0 %v620
          %v719 = vpop.f32.mrf.mxu0
          %v720 = vadd.f32 %v601, %v719
          %v721 = vpop.f32.mrf.mxu0
          %722 = vmatprep.mubr.f32.mxu0 0.0
          %723 = vmatmul.mubr.f32.gmra.mxu0 %v623
          %v724 = vpop.f32.mrf.mxu0
          %v725 = vadd.f32 %v601, %v724
          %v726 = vpop.f32.mrf.mxu0
          %727 = vmatprep.mubr.f32.mxu0 0.0
          %728 = vmatmul.mubr.f32.gmra.mxu0 %v626
          %v729 = vpop.f32.mrf.mxu0
          %v730 = vadd.f32 %v601, %v729
          %v731 = vpop.f32.mrf.mxu0
          %732 = vdwg.mxu0
          %v733 = vmul.f32 %v695, 0.35355338
          %v734 = vmul.f32 %v700, 0.35355338
          %v735 = vmul.f32 %v705, 0.35355338
          %v736 = vmul.f32 %v710, 0.35355338
          %v737 = vmul.f32 %v715, 0.35355338
          %v738 = vmul.f32 %v720, 0.35355338
          %v739 = vmul.f32 %v725, 0.35355338
          %v740 = vmul.f32 %v730, 0.35355338
          %741 = vst.msk [vmem:[#allocation2] sm:$0xff] %vm603, %v733
          %742 = vst.msk [vmem:[#allocation2 + $0x8] sm:$0xff] %vm603, %v734
          %743 = vst.msk [vmem:[#allocation2 + $0x10] sm:$0xff] %vm603, %v735
          %744 = vst.msk [vmem:[#allocation2 + $0x18] sm:$0xff] %vm603, %v736
          %745 = vst.msk [vmem:[#allocation2 + $0x20] sm:$0xff] %vm603, %v737
          %746 = vst.msk [vmem:[#allocation2 + $0x28] sm:$0xff] %vm603, %v738
          %747 = vst.msk [vmem:[#allocation2 + $0x30] sm:$0xff] %vm603, %v739
          %748 = vst.msk [vmem:[#allocation2 + $0x38] sm:$0xff] %vm603, %v740
          %vm749 = vcmask 7168
          %750 = vst.msk [vmem:[#allocation4] sm:$0xff] %vm749, -1e+30
          %751 = vst.msk [vmem:[#allocation4 + $0x8] sm:$0xff] %vm749, -1e+30
          %752 = vst.msk [vmem:[#allocation4 + $0x10] sm:$0xff] %vm749, -1e+30
          %753 = vst.msk [vmem:[#allocation4 + $0x18] sm:$0xff] %vm749, -1e+30
          %754 = vst.msk [vmem:[#allocation4 + $0x20] sm:$0xff] %vm749, -1e+30
          %755 = vst.msk [vmem:[#allocation4 + $0x28] sm:$0xff] %vm749, -1e+30
          %756 = vst.msk [vmem:[#allocation4 + $0x30] sm:$0xff] %vm749, -1e+30
          %757 = vst.msk [vmem:[#allocation4 + $0x38] sm:$0xff] %vm749, -1e+30
          %758 = vst.msk [vmem:[#allocation4 + $0x40] sm:$0xff] %vm749, -1e+30
          %759 = vst.msk [vmem:[#allocation4 + $0x48] sm:$0xff] %vm749, -1e+30
          %760 = vst.msk [vmem:[#allocation4 + $0x50] sm:$0xff] %vm749, -1e+30
          %761 = vst.msk [vmem:[#allocation4 + $0x58] sm:$0xff] %vm749, -1e+30
          %762 = vst.msk [vmem:[#allocation4 + $0x60] sm:$0xff] %vm749, -1e+30
          %763 = vst.msk [vmem:[#allocation4 + $0x68] sm:$0xff] %vm749, -1e+30
          %764 = vst.msk [vmem:[#allocation4 + $0x70] sm:$0xff] %vm749, -1e+30
          %765 = vst.msk [vmem:[#allocation4 + $0x78] sm:$0xff] %vm749, -1e+30
          %766 = vst.msk [vmem:[#allocation4 + $0x80] sm:$0xff] %vm749, -1e+30
          %767 = vst.msk [vmem:[#allocation4 + $0x88] sm:$0xff] %vm749, -1e+30
          %768 = vst.msk [vmem:[#allocation4 + $0x90] sm:$0xff] %vm749, -1e+30
          %769 = vst.msk [vmem:[#allocation4 + $0x98] sm:$0xff] %vm749, -1e+30
          %770 = vst.msk [vmem:[#allocation4 + $0xa0] sm:$0xff] %vm749, -1e+30
          %771 = vst.msk [vmem:[#allocation4 + $0xa8] sm:$0xff] %vm749, -1e+30
          %772 = vst.msk [vmem:[#allocation4 + $0xb0] sm:$0xff] %vm749, -1e+30
          %773 = vst.msk [vmem:[#allocation4 + $0xb8] sm:$0xff] %vm749, -1e+30
          %774 = vst.msk [vmem:[#allocation4 + $0xc0] sm:$0xff] %vm749, -1e+30
          %775 = vst.msk [vmem:[#allocation4 + $0xc8] sm:$0xff] %vm749, -1e+30
          %776 = vst.msk [vmem:[#allocation4 + $0xd0] sm:$0xff] %vm749, -1e+30
          %777 = vst.msk [vmem:[#allocation4 + $0xd8] sm:$0xff] %vm749, -1e+30
          %778 = vst.msk [vmem:[#allocation4 + $0xe0] sm:$0xff] %vm749, -1e+30
          %779 = vst.msk [vmem:[#allocation4 + $0xe8] sm:$0xff] %vm749, -1e+30
          %780 = vst.msk [vmem:[#allocation4 + $0xf0] sm:$0xff] %vm749, -1e+30
          %781 = vst.msk [vmem:[#allocation4 + $0xf8] sm:$0xff] %vm749, -1e+30
          %782 = vst.msk [vmem:[#allocation5] sm:$0xff] %vm749, 0.0
          %783 = vst.msk [vmem:[#allocation5 + $0x8] sm:$0xff] %vm749, 0.0
          %784 = vst.msk [vmem:[#allocation5 + $0x10] sm:$0xff] %vm749, 0.0
          %785 = vst.msk [vmem:[#allocation5 + $0x18] sm:$0xff] %vm749, 0.0
          %786 = vst.msk [vmem:[#allocation5 + $0x20] sm:$0xff] %vm749, 0.0
          %787 = vst.msk [vmem:[#allocation5 + $0x28] sm:$0xff] %vm749, 0.0
          %788 = vst.msk [vmem:[#allocation5 + $0x30] sm:$0xff] %vm749, 0.0
          %789 = vst.msk [vmem:[#allocation5 + $0x38] sm:$0xff] %vm749, 0.0
          %790 = vst.msk [vmem:[#allocation5 + $0x40] sm:$0xff] %vm749, 0.0
          %791 = vst.msk [vmem:[#allocation5 + $0x48] sm:$0xff] %vm749, 0.0
          %792 = vst.msk [vmem:[#allocation5 + $0x50] sm:$0xff] %vm749, 0.0
          %793 = vst.msk [vmem:[#allocation5 + $0x58] sm:$0xff] %vm749, 0.0
          %794 = vst.msk [vmem:[#allocation5 + $0x60] sm:$0xff] %vm749, 0.0
          %795 = vst.msk [vmem:[#allocation5 + $0x68] sm:$0xff] %vm749, 0.0
          %796 = vst.msk [vmem:[#allocation5 + $0x70] sm:$0xff] %vm749, 0.0
          %797 = vst.msk [vmem:[#allocation5 + $0x78] sm:$0xff] %vm749, 0.0
          %798 = vst.msk [vmem:[#allocation5 + $0x80] sm:$0xff] %vm749, 0.0
          %799 = vst.msk [vmem:[#allocation5 + $0x88] sm:$0xff] %vm749, 0.0
          %800 = vst.msk [vmem:[#allocation5 + $0x90] sm:$0xff] %vm749, 0.0
          %801 = vst.msk [vmem:[#allocation5 + $0x98] sm:$0xff] %vm749, 0.0
          %802 = vst.msk [vmem:[#allocation5 + $0xa0] sm:$0xff] %vm749, 0.0
          %803 = vst.msk [vmem:[#allocation5 + $0xa8] sm:$0xff] %vm749, 0.0
          %804 = vst.msk [vmem:[#allocation5 + $0xb0] sm:$0xff] %vm749, 0.0
          %805 = vst.msk [vmem:[#allocation5 + $0xb8] sm:$0xff] %vm749, 0.0
          %806 = vst.msk [vmem:[#allocation5 + $0xc0] sm:$0xff] %vm749, 0.0
          %807 = vst.msk [vmem:[#allocation5 + $0xc8] sm:$0xff] %vm749, 0.0
          %808 = vst.msk [vmem:[#allocation5 + $0xd0] sm:$0xff] %vm749, 0.0
          %809 = vst.msk [vmem:[#allocation5 + $0xd8] sm:$0xff] %vm749, 0.0
          %810 = vst.msk [vmem:[#allocation5 + $0xe0] sm:$0xff] %vm749, 0.0
          %811 = vst.msk [vmem:[#allocation5 + $0xe8] sm:$0xff] %vm749, 0.0
          %812 = vst.msk [vmem:[#allocation5 + $0xf0] sm:$0xff] %vm749, 0.0
          %813 = vst.msk [vmem:[#allocation5 + $0xf8] sm:$0xff] %vm749, 0.0
          %814 = vst.msk [vmem:[#allocation3] sm:$0xff] %vm603, 0.0
          %815 = vst.msk [vmem:[#allocation3 + $0x8] sm:$0xff] %vm603, 0.0
          %816 = vst.msk [vmem:[#allocation3 + $0x10] sm:$0xff] %vm603, 0.0
          %817 = vst.msk [vmem:[#allocation3 + $0x18] sm:$0xff] %vm603, 0.0
          %818 = vst.msk [vmem:[#allocation3 + $0x20] sm:$0xff] %vm603, 0.0
          %819 = vst.msk [vmem:[#allocation3 + $0x28] sm:$0xff] %vm603, 0.0
          %820 = vst.msk [vmem:[#allocation3 + $0x30] sm:$0xff] %vm603, 0.0
          %821 = vst.msk [vmem:[#allocation3 + $0x38] sm:$0xff] %vm603, 0.0
        $region102: #{tpu_custom_call.1} parent=93 // pred_fallthru
          _
        %v822 = vld [vmem:[%s557] sm:$0xff]
        %v823 = vld [vmem:[%s557 + $0x8] sm:$0xff]
        %v824 = vld [vmem:[%s557 + $0x10] sm:$0xff]
        %v825 = vld [vmem:[%s557 + $0x18] sm:$0xff]
        %v826 = vld [vmem:[%s557 + $0x20] sm:$0xff]
        %v827 = vld [vmem:[%s557 + $0x28] sm:$0xff]
        %v828 = vld [vmem:[%s557 + $0x30] sm:$0xff]
        %v829 = vld [vmem:[%s557 + $0x38] sm:$0xff]
        %v830 = vld [vmem:[%s562] sm:$0x3]
        %832 = vset.pattern.permute.xlu0 0
        %833 = vperm.xlu0 %832, %v822
        %v834 = vpop.permute.xlu0 %833
        %837 = vset.pattern.permute.xlu0 0
        %838 = vperm.xlu0 %837, %v823
        %v839 = vpop.permute.xlu0 %838
        %842 = vset.pattern.permute.xlu0 0
        %843 = vperm.xlu0 %842, %v824
        %v844 = vpop.permute.xlu0 %843
        %847 = vset.pattern.permute.xlu0 0
        %848 = vperm.xlu0 %847, %v825
        %v849 = vpop.permute.xlu0 %848
        %852 = vset.pattern.permute.xlu0 0
        %853 = vperm.xlu0 %852, %v826
        %v854 = vpop.permute.xlu0 %853
        %857 = vset.pattern.permute.xlu0 0
        %858 = vperm.xlu0 %857, %v827
        %v859 = vpop.permute.xlu0 %858
        %862 = vset.pattern.permute.xlu0 0
        %863 = vperm.xlu0 %862, %v828
        %v864 = vpop.permute.xlu0 %863
        %867 = vset.pattern.permute.xlu0 0
        %868 = vperm.xlu0 %867, %v829
        %v869 = vpop.permute.xlu0 %868
        %v871 = vlaneseq
        %v872 = vshrl.u32 %v871, 7
        %v873 = vsub.s32 0, %v872
        %v874 = vrot.slane %v830, %v873
        %v875 = vsub.f32 %v834, %v874
        %v876 = vsub.f32 %v839, %v874
        %v877 = vsub.f32 %v844, %v874
        %v878 = vsub.f32 %v849, %v874
        %v879 = vsub.f32 %v854, %v874
        %v880 = vsub.f32 %v859, %v874
        %v881 = vsub.f32 %v864, %v874
        %v882 = vsub.f32 %v869, %v874
        %v883 = vand.u32 2147483647, %v875
        %v884 = vand.u32 2147483647, %v876
        %v885 = vand.u32 2147483647, %v877
        %v886 = vand.u32 2147483647, %v878
        %v887 = vand.u32 2147483647, %v879
        %v888 = vand.u32 2147483647, %v880
        %v889 = vand.u32 2147483647, %v881
        %v890 = vand.u32 2147483647, %v882
        %891 = vset.pattern.permute.xlu0 1
        %892 = vperm.xlu0 %891, %v822
        %v893 = vpop.permute.xlu0 %892
        %895 = vset.pattern.permute.xlu0 1
        %896 = vperm.xlu0 %895, %v823
        %v897 = vpop.permute.xlu0 %896
        %899 = vset.pattern.permute.xlu0 1
        %900 = vperm.xlu0 %899, %v824
        %v901 = vpop.permute.xlu0 %900
        %903 = vset.pattern.permute.xlu0 1
        %904 = vperm.xlu0 %903, %v825
        %v905 = vpop.permute.xlu0 %904
        %907 = vset.pattern.permute.xlu0 1
        %908 = vperm.xlu0 %907, %v826
        %v909 = vpop.permute.xlu0 %908
        %911 = vset.pattern.permute.xlu0 1
        %912 = vperm.xlu0 %911, %v827
        %v913 = vpop.permute.xlu0 %912
        %915 = vset.pattern.permute.xlu0 1
        %916 = vperm.xlu0 %915, %v828
        %v917 = vpop.permute.xlu0 %916
        %919 = vset.pattern.permute.xlu0 1
        %920 = vperm.xlu0 %919, %v829
        %v921 = vpop.permute.xlu0 %920
        %v923 = vlaneseq
        %v924 = vshrl.u32 %v923, 7
        %v925 = vsub.s32 1, %v924
        %v926 = vrot.slane %v830, %v925
        %v927 = vsub.f32 %v893, %v926
        %v928 = vsub.f32 %v897, %v926
        %v929 = vsub.f32 %v901, %v926
        %v930 = vsub.f32 %v905, %v926
        %v931 = vsub.f32 %v909, %v926
        %v932 = vsub.f32 %v913, %v926
        %v933 = vsub.f32 %v917, %v926
        %v934 = vsub.f32 %v921, %v926
        %v935 = vand.u32 2147483647, %v927
        %v936 = vand.u32 2147483647, %v928
        %v937 = vand.u32 2147483647, %v929
        %v938 = vand.u32 2147483647, %v930
        %v939 = vand.u32 2147483647, %v931
        %v940 = vand.u32 2147483647, %v932
        %v941 = vand.u32 2147483647, %v933
        %v942 = vand.u32 2147483647, %v934
        %v943 = vmul.f32 %v935, 0.5
        %v944 = vmul.f32 %v936, 0.5
        %v945 = vmul.f32 %v937, 0.5
        %v946 = vmul.f32 %v938, 0.5
        %v947 = vmul.f32 %v939, 0.5
        %v948 = vmul.f32 %v940, 0.5
        %v949 = vmul.f32 %v941, 0.5
        %v950 = vmul.f32 %v942, 0.5
        %v951 = vadd.f32 %v883, %v943
        %v952 = vadd.f32 %v884, %v944
        %v953 = vadd.f32 %v885, %v945
        %v954 = vadd.f32 %v886, %v946
        %v955 = vadd.f32 %v887, %v947
        %v956 = vadd.f32 %v888, %v948
        %v957 = vadd.f32 %v889, %v949
        %v958 = vadd.f32 %v890, %v950
        %959 = vst [vmem:[#allocation6] sm:$0xff] %v951
        %960 = vst [vmem:[#allocation6 + $0x8] sm:$0xff] %v952
        %961 = vst [vmem:[#allocation6 + $0x10] sm:$0xff] %v953
        %962 = vst [vmem:[#allocation6 + $0x18] sm:$0xff] %v954
        %963 = vst [vmem:[#allocation6 + $0x20] sm:$0xff] %v955
        %964 = vst [vmem:[#allocation6 + $0x28] sm:$0xff] %v956
        %965 = vst [vmem:[#allocation6 + $0x30] sm:$0xff] %v957
        %966 = vst [vmem:[#allocation6 + $0x38] sm:$0xff] %v958
        %v967 = vmul.f32 %v883, 0.5
        %v968 = vmul.f32 %v884, 0.5
        %v969 = vmul.f32 %v885, 0.5
        %v970 = vmul.f32 %v886, 0.5
        %v971 = vmul.f32 %v887, 0.5
        %v972 = vmul.f32 %v888, 0.5
        %v973 = vmul.f32 %v889, 0.5
        %v974 = vmul.f32 %v890, 0.5
        %v975 = vadd.f32 %v967, %v935
        %v976 = vadd.f32 %v968, %v936
        %v977 = vadd.f32 %v969, %v937
        %v978 = vadd.f32 %v970, %v938
        %v979 = vadd.f32 %v971, %v939
        %v980 = vadd.f32 %v972, %v940
        %v981 = vadd.f32 %v973, %v941
        %v982 = vadd.f32 %v974, %v942
        %s983 = scalar_lea.vmem [#allocation6], 64
        %984 = vst [vmem:[%s983] sm:$0xff] %v975
        %985 = vst [vmem:[%s983 + $0x8] sm:$0xff] %v976
        %986 = vst [vmem:[%s983 + $0x10] sm:$0xff] %v977
        %987 = vst [vmem:[%s983 + $0x18] sm:$0xff] %v978
        %988 = vst [vmem:[%s983 + $0x20] sm:$0xff] %v979
        %989 = vst [vmem:[%s983 + $0x28] sm:$0xff] %v980
        %990 = vst [vmem:[%s983 + $0x30] sm:$0xff] %v981
        %991 = vst [vmem:[%s983 + $0x38] sm:$0xff] %v982
        %v992 = vld [vmem:[%s569] sm:$0x1]
        %v993 = vld [vmem:[#allocation6] sm:$0xff]
        %v994 = vld [vmem:[#allocation6 + $0x8] sm:$0xff]
        %v995 = vld [vmem:[#allocation6 + $0x10] sm:$0xff]
        %v996 = vld [vmem:[#allocation6 + $0x18] sm:$0xff]
        %v997 = vld [vmem:[#allocation6 + $0x20] sm:$0xff]
        %v998 = vld [vmem:[#allocation6 + $0x28] sm:$0xff]
        %v999 = vld [vmem:[#allocation6 + $0x30] sm:$0xff]
        %v1000 = vld [vmem:[#allocation6 + $0x38] sm:$0xff]
        %v1001 = vld [vmem:[#allocation2] sm:$0xff]
        %v1002 = vld [vmem:[#allocation2 + $0x8] sm:$0xff]
        %v1003 = vld [vmem:[#allocation2 + $0x10] sm:$0xff]
        %v1004 = vld [vmem:[#allocation2 + $0x18] sm:$0xff]
        %v1005 = vld [vmem:[#allocation2 + $0x20] sm:$0xff]
        %v1006 = vld [vmem:[#allocation2 + $0x28] sm:$0xff]
        %v1007 = vld [vmem:[#allocation2 + $0x30] sm:$0xff]
        %v1008 = vld [vmem:[#allocation2 + $0x38] sm:$0xff]
        %v1009 = vld [vmem:[%s460] sm:$0xff]
        %vm1010 = vcmask 64512
        %v1012 = vsel %vm1010, %v1001, 0
        %v1015 = vsel %vm1010, %v1002, 0
        %v1018 = vsel %vm1010, %v1003, 0
        %v1021 = vsel %vm1010, %v1004, 0
        %v1024 = vsel %vm1010, %v1005, 0
        %v1027 = vsel %vm1010, %v1006, 0
        %v1030 = vsel %vm1010, %v1007, 0
        %v1033 = vsel %vm1010, %v1008, 0
        %1035 = vmatprep.subr.mxu0 0.0
        %1036 = vmatpush1.msra.mxu0 0.0
        %1037 = vmatprep.subr.mxu0 0.0
        %1038 = vmatpush1.msra.mxu0 0.0
        %1039 = vmatprep.subr.mxu0 0.0
        %1040 = vmatpush1.msra.mxu0 0.0
        %1041 = vmatprep.subr.mxu0 0.0
        %1042 = vmatpush1.msra.mxu0 0.0
        %1043 = vmatprep.subr.mxu0 0.0
        %1044 = vmatpush1.msra.mxu0 0.0
        %1045 = vmatprep.subr.mxu0 0.0
        %1046 = vmatpush1.msra.mxu0 0.0
        %1047 = vmatprep.subr.mxu0 0.0
        %1048 = vmatpush1.msra.mxu0 0.0
        %1049 = vmatprep.subr.mxu0 0.0
        %1050 = vmatpush1.msra.mxu0 0.0
        %1051 = vmatprep.subr.mxu0 0.0
        %1052 = vmatpush1.msra.mxu0 0.0
        %1053 = vmatprep.subr.mxu0 0.0
        %1054 = vmatpush1.msra.mxu0 0.0
        %1055 = vmatprep.subr.mxu0 0.0
        %1056 = vmatpush1.msra.mxu0 0.0
        %1057 = vmatprep.subr.mxu0 0.0
        %1058 = vmatpush1.msra.mxu0 0.0
        %1059 = vmatprep.subr.mxu0 0.0
        %1060 = vmatpush1.msra.mxu0 0.0
        %1061 = vmatprep.subr.mxu0 0.0
        %1062 = vmatpush1.msra.mxu0 0.0
        %1063 = vmatprep.subr.mxu0 0.0
        %1064 = vmatpush1.msra.mxu0 0.0
        %1065 = vmatprep.subr.mxu0 0.0
        %1066 = vmatpush1.msra.mxu0 %v1009
        %1067 = vmatprep.subr.mxu0 0.0
        %1068 = vmatpush2.msra.mxu0 0.0
        %1069 = vmatprep.subr.mxu0 0.0
        %1070 = vmatpush2.msra.mxu0 0.0
        %1071 = vmatprep.subr.mxu0 0.0
        %1072 = vmatpush2.msra.mxu0 0.0
        %1073 = vmatprep.subr.mxu0 0.0
        %1074 = vmatpush2.msra.mxu0 0.0
        %1075 = vmatprep.subr.mxu0 0.0
        %1076 = vmatpush2.msra.mxu0 0.0
        %1077 = vmatprep.subr.mxu0 0.0
        %1078 = vmatpush2.msra.mxu0 0.0
        %1079 = vmatprep.subr.mxu0 0.0
        %1080 = vmatpush2.msra.mxu0 0.0
        %1081 = vmatprep.subr.mxu0 0.0
        %1082 = vmatpush2.msra.mxu0 0.0
        %1083 = vmatprep.subr.mxu0 0.0
        %1084 = vmatpush2.msra.mxu0 0.0
        %1085 = vmatprep.subr.mxu0 0.0
        %1086 = vmatpush2.msra.mxu0 0.0
        %1087 = vmatprep.subr.mxu0 0.0
        %1088 = vmatpush2.msra.mxu0 0.0
        %1089 = vmatprep.subr.mxu0 0.0
        %1090 = vmatpush2.msra.mxu0 0.0
        %1091 = vmatprep.subr.mxu0 0.0
        %1092 = vmatpush2.msra.mxu0 0.0
        %1093 = vmatprep.subr.mxu0 0.0
        %1094 = vmatpush2.msra.mxu0 0.0
        %1095 = vmatprep.subr.mxu0 0.0
        %1096 = vmatpush2.msra.mxu0 0.0
        %1097 = vmatprep.subr.mxu0 0.0
        %1098 = vmatpush2.msra.mxu0 0.0
        %1099 = vmatprep.mubr.f32.mxu0 0.0
        %1100 = vmatmul.mubr.f32.gmra.mxu0 %v1012
        %v1101 = vpop.f32.mrf.mxu0
        %v1102 = vadd.f32 0.0, %v1101
        %v1103 = vpop.f32.mrf.mxu0
        %1104 = vmatprep.mubr.f32.mxu0 0.0
        %1105 = vmatmul.mubr.f32.gmra.mxu0 %v1015
        %v1106 = vpop.f32.mrf.mxu0
        %v1107 = vadd.f32 0.0, %v1106
        %v1108 = vpop.f32.mrf.mxu0
        %1109 = vmatprep.mubr.f32.mxu0 0.0
        %1110 = vmatmul.mubr.f32.gmra.mxu0 %v1018
        %v1111 = vpop.f32.mrf.mxu0
        %v1112 = vadd.f32 0.0, %v1111
        %v1113 = vpop.f32.mrf.mxu0
        %1114 = vmatprep.mubr.f32.mxu0 0.0
        %1115 = vmatmul.mubr.f32.gmra.mxu0 %v1021
        %v1116 = vpop.f32.mrf.mxu0
        %v1117 = vadd.f32 0.0, %v1116
        %v1118 = vpop.f32.mrf.mxu0
        %1119 = vmatprep.mubr.f32.mxu0 0.0
        %1120 = vmatmul.mubr.f32.gmra.mxu0 %v1024
        %v1121 = vpop.f32.mrf.mxu0
        %v1122 = vadd.f32 0.0, %v1121
        %v1123 = vpop.f32.mrf.mxu0
        %1124 = vmatprep.mubr.f32.mxu0 0.0
        %1125 = vmatmul.mubr.f32.gmra.mxu0 %v1027
        %v1126 = vpop.f32.mrf.mxu0
        %v1127 = vadd.f32 0.0, %v1126
        %v1128 = vpop.f32.mrf.mxu0
        %1129 = vmatprep.mubr.f32.mxu0 0.0
        %1130 = vmatmul.mubr.f32.gmra.mxu0 %v1030
        %v1131 = vpop.f32.mrf.mxu0
        %v1132 = vadd.f32 0.0, %v1131
        %v1133 = vpop.f32.mrf.mxu0
        %1134 = vmatprep.mubr.f32.mxu0 0.0
        %1135 = vmatmul.mubr.f32.gmra.mxu0 %v1033
        %v1136 = vpop.f32.mrf.mxu0
        %v1137 = vadd.f32 0.0, %v1136
        %v1138 = vpop.f32.mrf.mxu0
        %1139 = vdwg.mxu0
        %v1140 = vmul.f32 %v993, 0.25
        %v1141 = vmul.f32 %v994, 0.25
        %v1142 = vmul.f32 %v995, 0.25
        %v1143 = vmul.f32 %v996, 0.25
        %v1144 = vmul.f32 %v997, 0.25
        %v1145 = vmul.f32 %v998, 0.25
        %v1146 = vmul.f32 %v999, 0.25
        %v1147 = vmul.f32 %v1000, 0.25
        %v1148 = vsub.f32 %v1102, %v1140
        %v1149 = vsub.f32 %v1107, %v1141
        %v1150 = vsub.f32 %v1112, %v1142
        %v1151 = vsub.f32 %v1117, %v1143
        %v1152 = vsub.f32 %v1122, %v1144
        %v1153 = vsub.f32 %v1127, %v1145
        %v1154 = vsub.f32 %v1132, %v1146
        %v1155 = vsub.f32 %v1137, %v1147
        %v1157 = vlaneseq
        %v1158 = vshrl.u32 %v1157, 7
        %v1159 = vsub.s32 0, %v1158
        %v1160 = vrot.slane %v992, %v1159
        %v1162 = vadd.f32 %v1148, %v1160
        %v1163 = vadd.f32 %v1149, %v1160
        %v1164 = vadd.f32 %v1150, %v1160
        %v1165 = vadd.f32 %v1151, %v1160
        %v1166 = vadd.f32 %v1152, %v1160
        %v1167 = vadd.f32 %v1153, %v1160
        %v1168 = vadd.f32 %v1154, %v1160
        %v1169 = vadd.f32 %v1155, %v1160
        %v1170 = vld [vmem:[#allocation4] sm:$0xff]
        %v1171 = vld [vmem:[#allocation4 + $0x8] sm:$0xff]
        %v1172 = vld [vmem:[#allocation4 + $0x10] sm:$0xff]
        %v1173 = vld [vmem:[#allocation4 + $0x18] sm:$0xff]
        %v1174 = vld [vmem:[#allocation4 + $0x20] sm:$0xff]
        %v1175 = vld [vmem:[#allocation4 + $0x28] sm:$0xff]
        %v1176 = vld [vmem:[#allocation4 + $0x30] sm:$0xff]
        %v1177 = vld [vmem:[#allocation4 + $0x38] sm:$0xff]
        %1178 = vmax.xlane.f32.xlu0 %v1162
        %v1179 = vpop.xlane.xlu0 %1178
        %1180 = vmax.xlane.f32.xlu0 %v1163
        %v1181 = vpop.xlane.xlu0 %1180
        %1182 = vmax.xlane.f32.xlu0 %v1164
        %v1183 = vpop.xlane.xlu0 %1182
        %1184 = vmax.xlane.f32.xlu0 %v1165
        %v1185 = vpop.xlane.xlu0 %1184
        %1186 = vmax.xlane.f32.xlu0 %v1166
        %v1187 = vpop.xlane.xlu0 %1186
        %1188 = vmax.xlane.f32.xlu0 %v1167
        %v1189 = vpop.xlane.xlu0 %1188
        %1190 = vmax.xlane.f32.xlu0 %v1168
        %v1191 = vpop.xlane.xlu0 %1190
        %1192 = vmax.xlane.f32.xlu0 %v1169
        %v1193 = vpop.xlane.xlu0 %1192
        %v1194 = vmax.f32 %v1170, %v1179
        %v1195 = vmax.f32 %v1171, %v1181
        %v1196 = vmax.f32 %v1172, %v1183
        %v1197 = vmax.f32 %v1173, %v1185
        %v1198 = vmax.f32 %v1174, %v1187
        %v1199 = vmax.f32 %v1175, %v1189
        %v1200 = vmax.f32 %v1176, %v1191
        %v1201 = vmax.f32 %v1177, %v1193
        %v1202 = vsub.f32 %v1170, %v1194
        %v1203 = vsub.f32 %v1171, %v1195
        %v1204 = vsub.f32 %v1172, %v1196
        %v1205 = vsub.f32 %v1173, %v1197
        %v1206 = vsub.f32 %v1174, %v1198
        %v1207 = vsub.f32 %v1175, %v1199
        %v1208 = vsub.f32 %v1176, %v1200
        %v1209 = vsub.f32 %v1177, %v1201
        %v1210 = vmul.f32 %v1202, 1.442695
        %v1211 = vpow.pop %v1210
        %v1212 = vmul.f32 %v1203, 1.442695
        %v1213 = vpow.pop %v1212
        %v1214 = vmul.f32 %v1204, 1.442695
        %v1215 = vpow.pop %v1214
        %v1216 = vmul.f32 %v1205, 1.442695
        %v1217 = vpow.pop %v1216
        %v1218 = vmul.f32 %v1206, 1.442695
        %v1219 = vpow.pop %v1218
        %v1220 = vmul.f32 %v1207, 1.442695
        %v1221 = vpow.pop %v1220
        %v1222 = vmul.f32 %v1208, 1.442695
        %v1223 = vpow.pop %v1222
        %v1224 = vmul.f32 %v1209, 1.442695
        %v1225 = vpow.pop %v1224
        %1227 = vset.pattern.permute.xlu0 0
        %1228 = vperm.xlu0 %1227, %v1194
        %v1229 = vpop.permute.xlu0 %1228
        %1232 = vset.pattern.permute.xlu0 0
        %1233 = vperm.xlu0 %1232, %v1195
        %v1234 = vpop.permute.xlu0 %1233
        %1237 = vset.pattern.permute.xlu0 0
        %1238 = vperm.xlu0 %1237, %v1196
        %v1239 = vpop.permute.xlu0 %1238
        %1242 = vset.pattern.permute.xlu0 0
        %1243 = vperm.xlu0 %1242, %v1197
        %v1244 = vpop.permute.xlu0 %1243
        %1247 = vset.pattern.permute.xlu0 0
        %1248 = vperm.xlu0 %1247, %v1198
        %v1249 = vpop.permute.xlu0 %1248
        %1252 = vset.pattern.permute.xlu0 0
        %1253 = vperm.xlu0 %1252, %v1199
        %v1254 = vpop.permute.xlu0 %1253
        %1257 = vset.pattern.permute.xlu0 0
        %1258 = vperm.xlu0 %1257, %v1200
        %v1259 = vpop.permute.xlu0 %1258
        %1262 = vset.pattern.permute.xlu0 0
        %1263 = vperm.xlu0 %1262, %v1201
        %v1264 = vpop.permute.xlu0 %1263
        %v1266 = vsub.f32 %v1162, %v1229
        %v1267 = vsub.f32 %v1163, %v1234
        %v1268 = vsub.f32 %v1164, %v1239
        %v1269 = vsub.f32 %v1165, %v1244
        %v1270 = vsub.f32 %v1166, %v1249
        %v1271 = vsub.f32 %v1167, %v1254
        %v1272 = vsub.f32 %v1168, %v1259
        %v1273 = vsub.f32 %v1169, %v1264
        %v1274 = vmul.f32 %v1266, 1.442695
        %v1275 = vpow.pop %v1274
        %v1276 = vmul.f32 %v1267, 1.442695
        %v1277 = vpow.pop %v1276
        %v1278 = vmul.f32 %v1268, 1.442695
        %v1279 = vpow.pop %v1278
        %v1280 = vmul.f32 %v1269, 1.442695
        %v1281 = vpow.pop %v1280
        %v1282 = vmul.f32 %v1270, 1.442695
        %v1283 = vpow.pop %v1282
        %v1284 = vmul.f32 %v1271, 1.442695
        %v1285 = vpow.pop %v1284
        %v1286 = vmul.f32 %v1272, 1.442695
        %v1287 = vpow.pop %v1286
        %v1288 = vmul.f32 %v1273, 1.442695
        %v1289 = vpow.pop %v1288
        %v1290 = vld [vmem:[#allocation5] sm:$0xff]
        %v1291 = vld [vmem:[#allocation5 + $0x8] sm:$0xff]
        %v1292 = vld [vmem:[#allocation5 + $0x10] sm:$0xff]
        %v1293 = vld [vmem:[#allocation5 + $0x18] sm:$0xff]
        %v1294 = vld [vmem:[#allocation5 + $0x20] sm:$0xff]
        %v1295 = vld [vmem:[#allocation5 + $0x28] sm:$0xff]
        %v1296 = vld [vmem:[#allocation5 + $0x30] sm:$0xff]
        %v1297 = vld [vmem:[#allocation5 + $0x38] sm:$0xff]
        %v1298 = vmul.f32 %v1211, %v1290
        %v1299 = vmul.f32 %v1213, %v1291
        %v1300 = vmul.f32 %v1215, %v1292
        %v1301 = vmul.f32 %v1217, %v1293
        %v1302 = vmul.f32 %v1219, %v1294
        %v1303 = vmul.f32 %v1221, %v1295
        %v1304 = vmul.f32 %v1223, %v1296
        %v1305 = vmul.f32 %v1225, %v1297
        %1306 = vadd.xlane.f32.xlu0 %v1275
        %v1307 = vpop.xlane.xlu0 %1306
        %1308 = vadd.xlane.f32.xlu0 %v1277
        %v1309 = vpop.xlane.xlu0 %1308
        %1310 = vadd.xlane.f32.xlu0 %v1279
        %v1311 = vpop.xlane.xlu0 %1310
        %1312 = vadd.xlane.f32.xlu0 %v1281
        %v1313 = vpop.xlane.xlu0 %1312
        %1314 = vadd.xlane.f32.xlu0 %v1283
        %v1315 = vpop.xlane.xlu0 %1314
        %1316 = vadd.xlane.f32.xlu0 %v1285
        %v1317 = vpop.xlane.xlu0 %1316
        %1318 = vadd.xlane.f32.xlu0 %v1287
        %v1319 = vpop.xlane.xlu0 %1318
        %1320 = vadd.xlane.f32.xlu0 %v1289
        %v1321 = vpop.xlane.xlu0 %1320
        %v1322 = vadd.f32 %v1298, %v1307
        %v1323 = vadd.f32 %v1299, %v1309
        %v1324 = vadd.f32 %v1300, %v1311
        %v1325 = vadd.f32 %v1301, %v1313
        %v1326 = vadd.f32 %v1302, %v1315
        %v1327 = vadd.f32 %v1303, %v1317
        %v1328 = vadd.f32 %v1304, %v1319
        %v1329 = vadd.f32 %v1305, %v1321
        %vm1330 = vcmask 7168
        %1331 = vst.msk [vmem:[#allocation5] sm:$0xff] %vm1330, %v1322
        %1332 = vst.msk [vmem:[#allocation5 + $0x8] sm:$0xff] %vm1330, %v1323
        %1333 = vst.msk [vmem:[#allocation5 + $0x10] sm:$0xff] %vm1330, %v1324
        %1334 = vst.msk [vmem:[#allocation5 + $0x18] sm:$0xff] %vm1330, %v1325
        %1335 = vst.msk [vmem:[#allocation5 + $0x20] sm:$0xff] %vm1330, %v1326
        %1336 = vst.msk [vmem:[#allocation5 + $0x28] sm:$0xff] %vm1330, %v1327
        %1337 = vst.msk [vmem:[#allocation5 + $0x30] sm:$0xff] %vm1330, %v1328
        %1338 = vst.msk [vmem:[#allocation5 + $0x38] sm:$0xff] %vm1330, %v1329
        %1339 = vst.msk [vmem:[#allocation4] sm:$0xff] %vm1330, %v1194
        %1340 = vst.msk [vmem:[#allocation4 + $0x8] sm:$0xff] %vm1330, %v1195
        %1341 = vst.msk [vmem:[#allocation4 + $0x10] sm:$0xff] %vm1330, %v1196
        %1342 = vst.msk [vmem:[#allocation4 + $0x18] sm:$0xff] %vm1330, %v1197
        %1343 = vst.msk [vmem:[#allocation4 + $0x20] sm:$0xff] %vm1330, %v1198
        %1344 = vst.msk [vmem:[#allocation4 + $0x28] sm:$0xff] %vm1330, %v1199
        %1345 = vst.msk [vmem:[#allocation4 + $0x30] sm:$0xff] %vm1330, %v1200
        %1346 = vst.msk [vmem:[#allocation4 + $0x38] sm:$0xff] %vm1330, %v1201
        %v1347 = vld [vmem:[%s551] sm:$0xff]
        %v1348 = vld [vmem:[%s551 + $0x8] sm:$0xff]
        %v1349 = vld [vmem:[%s551 + $0x10] sm:$0xff]
        %v1350 = vld [vmem:[%s551 + $0x18] sm:$0xff]
        %v1351 = vld [vmem:[%s551 + $0x20] sm:$0xff]
        %v1352 = vld [vmem:[%s551 + $0x28] sm:$0xff]
        %v1353 = vld [vmem:[%s551 + $0x30] sm:$0xff]
        %v1354 = vld [vmem:[%s551 + $0x38] sm:$0xff]
        %v1355 = vld [vmem:[%s551 + $0x40] sm:$0xff]
        %v1356 = vld [vmem:[%s551 + $0x48] sm:$0xff]
        %v1357 = vld [vmem:[%s551 + $0x50] sm:$0xff]
        %v1358 = vld [vmem:[%s551 + $0x58] sm:$0xff]
        %v1359 = vld [vmem:[%s551 + $0x60] sm:$0xff]
        %v1360 = vld [vmem:[%s551 + $0x68] sm:$0xff]
        %v1361 = vld [vmem:[%s551 + $0x70] sm:$0xff]
        %v1362 = vld [vmem:[%s551 + $0x78] sm:$0xff]
        %1363 = vmatprep.subr.mxu0 0.0
        %1364 = vmatpush1.msra.mxu0 %v1362
        %1365 = vmatprep.subr.mxu0 0.0
        %1366 = vmatpush1.msra.mxu0 %v1361
        %1367 = vmatprep.subr.mxu0 0.0
        %1368 = vmatpush1.msra.mxu0 %v1360
        %1369 = vmatprep.subr.mxu0 0.0
        %1370 = vmatpush1.msra.mxu0 %v1359
        %1371 = vmatprep.subr.mxu0 0.0
        %1372 = vmatpush1.msra.mxu0 %v1358
        %1373 = vmatprep.subr.mxu0 0.0
        %1374 = vmatpush1.msra.mxu0 %v1357
        %1375 = vmatprep.subr.mxu0 0.0
        %1376 = vmatpush1.msra.mxu0 %v1356
        %1377 = vmatprep.subr.mxu0 0.0
        %1378 = vmatpush1.msra.mxu0 %v1355
        %1379 = vmatprep.subr.mxu0 0.0
        %1380 = vmatpush1.msra.mxu0 %v1354
        %1381 = vmatprep.subr.mxu0 0.0
        %1382 = vmatpush1.msra.mxu0 %v1353
        %1383 = vmatprep.subr.mxu0 0.0
        %1384 = vmatpush1.msra.mxu0 %v1352
        %1385 = vmatprep.subr.mxu0 0.0
        %1386 = vmatpush1.msra.mxu0 %v1351
        %1387 = vmatprep.subr.mxu0 0.0
        %1388 = vmatpush1.msra.mxu0 %v1350
        %1389 = vmatprep.subr.mxu0 0.0
        %1390 = vmatpush1.msra.mxu0 %v1349
        %1391 = vmatprep.subr.mxu0 0.0
        %1392 = vmatpush1.msra.mxu0 %v1348
        %1393 = vmatprep.subr.mxu0 0.0
        %1394 = vmatpush1.msra.mxu0 %v1347
        %1395 = vmatprep.subr.mxu0 0.0
        %1396 = vmatpush2.msra.mxu0 0.0
        %1397 = vmatprep.subr.mxu0 0.0
        %1398 = vmatpush2.msra.mxu0 0.0
        %1399 = vmatprep.subr.mxu0 0.0
        %1400 = vmatpush2.msra.mxu0 0.0
        %1401 = vmatprep.subr.mxu0 0.0
        %1402 = vmatpush2.msra.mxu0 0.0
        %1403 = vmatprep.subr.mxu0 0.0
        %1404 = vmatpush2.msra.mxu0 0.0
        %1405 = vmatprep.subr.mxu0 0.0
        %1406 = vmatpush2.msra.mxu0 0.0
        %1407 = vmatprep.subr.mxu0 0.0
        %1408 = vmatpush2.msra.mxu0 0.0
        %1409 = vmatprep.subr.mxu0 0.0
        %1410 = vmatpush2.msra.mxu0 0.0
        %1411 = vmatprep.subr.mxu0 0.0
        %1412 = vmatpush2.msra.mxu0 0.0
        %1413 = vmatprep.subr.mxu0 0.0
        %1414 = vmatpush2.msra.mxu0 0.0
        %1415 = vmatprep.subr.mxu0 0.0
        %1416 = vmatpush2.msra.mxu0 0.0
        %1417 = vmatprep.subr.mxu0 0.0
        %1418 = vmatpush2.msra.mxu0 0.0
        %1419 = vmatprep.subr.mxu0 0.0
        %1420 = vmatpush2.msra.mxu0 0.0
        %1421 = vmatprep.subr.mxu0 0.0
        %1422 = vmatpush2.msra.mxu0 0.0
        %1423 = vmatprep.subr.mxu0 0.0
        %1424 = vmatpush2.msra.mxu0 0.0
        %1425 = vmatprep.subr.mxu0 0.0
        %1426 = vmatpush2.msra.mxu0 0.0
        %1427 = vmatprep.mubr.f32.mxu0 0.0
        %1428 = vmatmul.mubr.f32.gmra.mxu0 %v1275
        %v1429 = vpop.f32.mrf.mxu0
        %v1430 = vadd.f32 0.0, %v1429
        %v1431 = vpop.f32.mrf.mxu0
        %1432 = vmatprep.mubr.f32.mxu0 0.0
        %1433 = vmatmul.mubr.f32.gmra.mxu0 %v1277
        %v1434 = vpop.f32.mrf.mxu0
        %v1435 = vadd.f32 0.0, %v1434
        %v1436 = vpop.f32.mrf.mxu0
        %1437 = vmatprep.mubr.f32.mxu0 0.0
        %1438 = vmatmul.mubr.f32.gmra.mxu0 %v1279
        %v1439 = vpop.f32.mrf.mxu0
        %v1440 = vadd.f32 0.0, %v1439
        %v1441 = vpop.f32.mrf.mxu0
        %1442 = vmatprep.mubr.f32.mxu0 0.0
        %1443 = vmatmul.mubr.f32.gmra.mxu0 %v1281
        %v1444 = vpop.f32.mrf.mxu0
        %v1445 = vadd.f32 0.0, %v1444
        %v1446 = vpop.f32.mrf.mxu0
        %1447 = vmatprep.mubr.f32.mxu0 0.0
        %1448 = vmatmul.mubr.f32.gmra.mxu0 %v1283
        %v1449 = vpop.f32.mrf.mxu0
        %v1450 = vadd.f32 0.0, %v1449
        %v1451 = vpop.f32.mrf.mxu0
        %1452 = vmatprep.mubr.f32.mxu0 0.0
        %1453 = vmatmul.mubr.f32.gmra.mxu0 %v1285
        %v1454 = vpop.f32.mrf.mxu0
        %v1455 = vadd.f32 0.0, %v1454
        %v1456 = vpop.f32.mrf.mxu0
        %1457 = vmatprep.mubr.f32.mxu0 0.0
        %1458 = vmatmul.mubr.f32.gmra.mxu0 %v1287
        %v1459 = vpop.f32.mrf.mxu0
        %v1460 = vadd.f32 0.0, %v1459
        %v1461 = vpop.f32.mrf.mxu0
        %1462 = vmatprep.mubr.f32.mxu0 0.0
        %1463 = vmatmul.mubr.f32.gmra.mxu0 %v1289
        %v1464 = vpop.f32.mrf.mxu0
        %v1465 = vadd.f32 0.0, %v1464
        %v1466 = vpop.f32.mrf.mxu0
        %1467 = vdwg.mxu0
        %v1468 = vld [vmem:[#allocation3] sm:$0xff]
        %v1469 = vld [vmem:[#allocation3 + $0x8] sm:$0xff]
        %v1470 = vld [vmem:[#allocation3 + $0x10] sm:$0xff]
        %v1471 = vld [vmem:[#allocation3 + $0x18] sm:$0xff]
        %v1472 = vld [vmem:[#allocation3 + $0x20] sm:$0xff]
        %v1473 = vld [vmem:[#allocation3 + $0x28] sm:$0xff]
        %v1474 = vld [vmem:[#allocation3 + $0x30] sm:$0xff]
        %v1475 = vld [vmem:[#allocation3 + $0x38] sm:$0xff]
        %1477 = vset.pattern.permute.xlu0 0
        %1478 = vperm.xlu0 %1477, %v1211
        %v1479 = vpop.permute.xlu0 %1478
        %1482 = vset.pattern.permute.xlu0 0
        %1483 = vperm.xlu0 %1482, %v1213
        %v1484 = vpop.permute.xlu0 %1483
        %1487 = vset.pattern.permute.xlu0 0
        %1488 = vperm.xlu0 %1487, %v1215
        %v1489 = vpop.permute.xlu0 %1488
        %1492 = vset.pattern.permute.xlu0 0
        %1493 = vperm.xlu0 %1492, %v1217
        %v1494 = vpop.permute.xlu0 %1493
        %1497 = vset.pattern.permute.xlu0 0
        %1498 = vperm.xlu0 %1497, %v1219
        %v1499 = vpop.permute.xlu0 %1498
        %1502 = vset.pattern.permute.xlu0 0
        %1503 = vperm.xlu0 %1502, %v1221
        %v1504 = vpop.permute.xlu0 %1503
        %1507 = vset.pattern.permute.xlu0 0
        %1508 = vperm.xlu0 %1507, %v1223
        %v1509 = vpop.permute.xlu0 %1508
        %1512 = vset.pattern.permute.xlu0 0
        %1513 = vperm.xlu0 %1512, %v1225
        %v1514 = vpop.permute.xlu0 %1513
        %v1516 = vmul.f32 %v1479, %v1468
        %v1517 = vmul.f32 %v1484, %v1469
        %v1518 = vmul.f32 %v1489, %v1470
        %v1519 = vmul.f32 %v1494, %v1471
        %v1520 = vmul.f32 %v1499, %v1472
        %v1521 = vmul.f32 %v1504, %v1473
        %v1522 = vmul.f32 %v1509, %v1474
        %v1523 = vmul.f32 %v1514, %v1475
        %v1524 = vadd.f32 %v1516, %v1430
        %v1525 = vadd.f32 %v1517, %v1435
        %v1526 = vadd.f32 %v1518, %v1440
        %v1527 = vadd.f32 %v1519, %v1445
        %v1528 = vadd.f32 %v1520, %v1450
        %v1529 = vadd.f32 %v1521, %v1455
        %v1530 = vadd.f32 %v1522, %v1460
        %v1531 = vadd.f32 %v1523, %v1465
        %1532 = vst.msk [vmem:[#allocation3] sm:$0xff] %vm1010, %v1524
        %1533 = vst.msk [vmem:[#allocation3 + $0x8] sm:$0xff] %vm1010, %v1525
        %1534 = vst.msk [vmem:[#allocation3 + $0x10] sm:$0xff] %vm1010, %v1526
        %1535 = vst.msk [vmem:[#allocation3 + $0x18] sm:$0xff] %vm1010, %v1527
        %1536 = vst.msk [vmem:[#allocation3 + $0x20] sm:$0xff] %vm1010, %v1528
        %1537 = vst.msk [vmem:[#allocation3 + $0x28] sm:$0xff] %vm1010, %v1529
        %1538 = vst.msk [vmem:[#allocation3 + $0x30] sm:$0xff] %vm1010, %v1530
        %1539 = vst.msk [vmem:[#allocation3 + $0x38] sm:$0xff] %vm1010, %v1531
        %v1540 = vld [vmem:[#allocation6] sm:$0xff]
        %v1541 = vld [vmem:[#allocation6 + $0x8] sm:$0xff]
        %v1542 = vld [vmem:[#allocation6 + $0x10] sm:$0xff]
        %v1543 = vld [vmem:[#allocation6 + $0x18] sm:$0xff]
        %v1544 = vld [vmem:[#allocation6 + $0x20] sm:$0xff]
        %v1545 = vld [vmem:[#allocation6 + $0x28] sm:$0xff]
        %v1546 = vld [vmem:[#allocation6 + $0x30] sm:$0xff]
        %v1547 = vld [vmem:[#allocation6 + $0x38] sm:$0xff]
        %v1548 = vld [vmem:[#allocation2] sm:$0xff]
        %v1549 = vld [vmem:[#allocation2 + $0x8] sm:$0xff]
        %v1550 = vld [vmem:[#allocation2 + $0x10] sm:$0xff]
        %v1551 = vld [vmem:[#allocation2 + $0x18] sm:$0xff]
        %v1552 = vld [vmem:[#allocation2 + $0x20] sm:$0xff]
        %v1553 = vld [vmem:[#allocation2 + $0x28] sm:$0xff]
        %v1554 = vld [vmem:[#allocation2 + $0x30] sm:$0xff]
        %v1555 = vld [vmem:[#allocation2 + $0x38] sm:$0xff]
        %v1556 = vld [vmem:[%s460 + $0x8] sm:$0xff]
        %1565 = vrot.lane.b32.xlu0 %v1548, 120
        %v1566 = vpop.permute.xlu0 %1565
        %1567 = vrot.lane.b32.xlu0 %v1549, 120
        %v1568 = vpop.permute.xlu0 %1567
        %1569 = vrot.lane.b32.xlu0 %v1550, 120
        %v1570 = vpop.permute.xlu0 %1569
        %1571 = vrot.lane.b32.xlu0 %v1551, 120
        %v1572 = vpop.permute.xlu0 %1571
        %1573 = vrot.lane.b32.xlu0 %v1552, 120
        %v1574 = vpop.permute.xlu0 %1573
        %1575 = vrot.lane.b32.xlu0 %v1553, 120
        %v1576 = vpop.permute.xlu0 %1575
        %1577 = vrot.lane.b32.xlu0 %v1554, 120
        %v1578 = vpop.permute.xlu0 %1577
        %1579 = vrot.lane.b32.xlu0 %v1555, 120
        %v1580 = vpop.permute.xlu0 %1579
        %v1581 = vsel %vm1010, %v1566, 0
        %v1583 = vsel %vm1010, %v1568, 0
        %v1585 = vsel %vm1010, %v1570, 0
        %v1587 = vsel %vm1010, %v1572, 0
        %v1589 = vsel %vm1010, %v1574, 0
        %v1591 = vsel %vm1010, %v1576, 0
        %v1593 = vsel %vm1010, %v1578, 0
        %v1595 = vsel %vm1010, %v1580, 0
        %1597 = vmatprep.subr.mxu0 0.0
        %1598 = vmatpush1.msra.mxu0 0.0
        %1599 = vmatprep.subr.mxu0 0.0
        %1600 = vmatpush1.msra.mxu0 0.0
        %1601 = vmatprep.subr.mxu0 0.0
        %1602 = vmatpush1.msra.mxu0 0.0
        %1603 = vmatprep.subr.mxu0 0.0
        %1604 = vmatpush1.msra.mxu0 0.0
        %1605 = vmatprep.subr.mxu0 0.0
        %1606 = vmatpush1.msra.mxu0 0.0
        %1607 = vmatprep.subr.mxu0 0.0
        %1608 = vmatpush1.msra.mxu0 0.0
        %1609 = vmatprep.subr.mxu0 0.0
        %1610 = vmatpush1.msra.mxu0 0.0
        %1611 = vmatprep.subr.mxu0 0.0
        %1612 = vmatpush1.msra.mxu0 0.0
        %1613 = vmatprep.subr.mxu0 0.0
        %1614 = vmatpush1.msra.mxu0 0.0
        %1615 = vmatprep.subr.mxu0 0.0
        %1616 = vmatpush1.msra.mxu0 0.0
        %1617 = vmatprep.subr.mxu0 0.0
        %1618 = vmatpush1.msra.mxu0 0.0
        %1619 = vmatprep.subr.mxu0 0.0
        %1620 = vmatpush1.msra.mxu0 0.0
        %1621 = vmatprep.subr.mxu0 0.0
        %1622 = vmatpush1.msra.mxu0 0.0
        %1623 = vmatprep.subr.mxu0 0.0
        %1624 = vmatpush1.msra.mxu0 0.0
        %1625 = vmatprep.subr.mxu0 0.0
        %1626 = vmatpush1.msra.mxu0 0.0
        %1627 = vmatprep.subr.mxu0 0.0
        %1628 = vmatpush1.msra.mxu0 %v1556
        %1629 = vmatprep.subr.mxu0 0.0
        %1630 = vmatpush2.msra.mxu0 0.0
        %1631 = vmatprep.subr.mxu0 0.0
        %1632 = vmatpush2.msra.mxu0 0.0
        %1633 = vmatprep.subr.mxu0 0.0
        %1634 = vmatpush2.msra.mxu0 0.0
        %1635 = vmatprep.subr.mxu0 0.0
        %1636 = vmatpush2.msra.mxu0 0.0
        %1637 = vmatprep.subr.mxu0 0.0
        %1638 = vmatpush2.msra.mxu0 0.0
        %1639 = vmatprep.subr.mxu0 0.0
        %1640 = vmatpush2.msra.mxu0 0.0
        %1641 = vmatprep.subr.mxu0 0.0
        %1642 = vmatpush2.msra.mxu0 0.0
        %1643 = vmatprep.subr.mxu0 0.0
        %1644 = vmatpush2.msra.mxu0 0.0
        %1645 = vmatprep.subr.mxu0 0.0
        %1646 = vmatpush2.msra.mxu0 0.0
        %1647 = vmatprep.subr.mxu0 0.0
        %1648 = vmatpush2.msra.mxu0 0.0
        %1649 = vmatprep.subr.mxu0 0.0
        %1650 = vmatpush2.msra.mxu0 0.0
        %1651 = vmatprep.subr.mxu0 0.0
        %1652 = vmatpush2.msra.mxu0 0.0
        %1653 = vmatprep.subr.mxu0 0.0
        %1654 = vmatpush2.msra.mxu0 0.0
        %1655 = vmatprep.subr.mxu0 0.0
        %1656 = vmatpush2.msra.mxu0 0.0
        %1657 = vmatprep.subr.mxu0 0.0
        %1658 = vmatpush2.msra.mxu0 0.0
        %1659 = vmatprep.subr.mxu0 0.0
        %1660 = vmatpush2.msra.mxu0 0.0
        %1661 = vmatprep.mubr.f32.mxu0 0.0
        %1662 = vmatmul.mubr.f32.gmra.mxu0 %v1581
        %v1663 = vpop.f32.mrf.mxu0
        %v1664 = vadd.f32 0.0, %v1663
        %v1665 = vpop.f32.mrf.mxu0
        %1666 = vmatprep.mubr.f32.mxu0 0.0
        %1667 = vmatmul.mubr.f32.gmra.mxu0 %v1583
        %v1668 = vpop.f32.mrf.mxu0
        %v1669 = vadd.f32 0.0, %v1668
        %v1670 = vpop.f32.mrf.mxu0
        %1671 = vmatprep.mubr.f32.mxu0 0.0
        %1672 = vmatmul.mubr.f32.gmra.mxu0 %v1585
        %v1673 = vpop.f32.mrf.mxu0
        %v1674 = vadd.f32 0.0, %v1673
        %v1675 = vpop.f32.mrf.mxu0
        %1676 = vmatprep.mubr.f32.mxu0 0.0
        %1677 = vmatmul.mubr.f32.gmra.mxu0 %v1587
        %v1678 = vpop.f32.mrf.mxu0
        %v1679 = vadd.f32 0.0, %v1678
        %v1680 = vpop.f32.mrf.mxu0
        %1681 = vmatprep.mubr.f32.mxu0 0.0
        %1682 = vmatmul.mubr.f32.gmra.mxu0 %v1589
        %v1683 = vpop.f32.mrf.mxu0
        %v1684 = vadd.f32 0.0, %v1683
        %v1685 = vpop.f32.mrf.mxu0
        %1686 = vmatprep.mubr.f32.mxu0 0.0
        %1687 = vmatmul.mubr.f32.gmra.mxu0 %v1591
        %v1688 = vpop.f32.mrf.mxu0
        %v1689 = vadd.f32 0.0, %v1688
        %v1690 = vpop.f32.mrf.mxu0
        %1691 = vmatprep.mubr.f32.mxu0 0.0
        %1692 = vmatmul.mubr.f32.gmra.mxu0 %v1593
        %v1693 = vpop.f32.mrf.mxu0
        %v1694 = vadd.f32 0.0, %v1693
        %v1695 = vpop.f32.mrf.mxu0
        %1696 = vmatprep.mubr.f32.mxu0 0.0
        %1697 = vmatmul.mubr.f32.gmra.mxu0 %v1595
        %v1698 = vpop.f32.mrf.mxu0
        %v1699 = vadd.f32 0.0, %v1698
        %v1700 = vpop.f32.mrf.mxu0
        %1701 = vdwg.mxu0
        %v1702 = vmul.f32 %v1540, 0.0625
        %v1703 = vmul.f32 %v1541, 0.0625
        %v1704 = vmul.f32 %v1542, 0.0625
        %v1705 = vmul.f32 %v1543, 0.0625
        %v1706 = vmul.f32 %v1544, 0.0625
        %v1707 = vmul.f32 %v1545, 0.0625
        %v1708 = vmul.f32 %v1546, 0.0625
        %v1709 = vmul.f32 %v1547, 0.0625
        %v1710 = vsub.f32 %v1664, %v1702
        %v1711 = vsub.f32 %v1669, %v1703
        %v1712 = vsub.f32 %v1674, %v1704
        %v1713 = vsub.f32 %v1679, %v1705
        %v1714 = vsub.f32 %v1684, %v1706
        %v1715 = vsub.f32 %v1689, %v1707
        %v1716 = vsub.f32 %v1694, %v1708
        %v1717 = vsub.f32 %v1699, %v1709
        %v1718 = vadd.f32 %v1710, %v1160
        %v1719 = vadd.f32 %v1711, %v1160
        %v1720 = vadd.f32 %v1712, %v1160
        %v1721 = vadd.f32 %v1713, %v1160
        %v1722 = vadd.f32 %v1714, %v1160
        %v1723 = vadd.f32 %v1715, %v1160
        %v1724 = vadd.f32 %v1716, %v1160
        %v1725 = vadd.f32 %v1717, %v1160
        %s1726 = scalar_lea.vmem [#allocation4], 64
        %v1727 = vld [vmem:[%s1726] sm:$0xff]
        %v1728 = vld [vmem:[%s1726 + $0x8] sm:$0xff]
        %v1729 = vld [vmem:[%s1726 + $0x10] sm:$0xff]
        %v1730 = vld [vmem:[%s1726 + $0x18] sm:$0xff]
        %v1731 = vld [vmem:[%s1726 + $0x20] sm:$0xff]
        %v1732 = vld [vmem:[%s1726 + $0x28] sm:$0xff]
        %v1733 = vld [vmem:[%s1726 + $0x30] sm:$0xff]
        %v1734 = vld [vmem:[%s1726 + $0x38] sm:$0xff]
        %1735 = vmax.xlane.f32.xlu0 %v1718
        %v1736 = vpop.xlane.xlu0 %1735
        %1737 = vmax.xlane.f32.xlu0 %v1719
        %v1738 = vpop.xlane.xlu0 %1737
        %1739 = vmax.xlane.f32.xlu0 %v1720
        %v1740 = vpop.xlane.xlu0 %1739
        %1741 = vmax.xlane.f32.xlu0 %v1721
        %v1742 = vpop.xlane.xlu0 %1741
        %1743 = vmax.xlane.f32.xlu0 %v1722
        %v1744 = vpop.xlane.xlu0 %1743
        %1745 = vmax.xlane.f32.xlu0 %v1723
        %v1746 = vpop.xlane.xlu0 %1745
        %1747 = vmax.xlane.f32.xlu0 %v1724
        %v1748 = vpop.xlane.xlu0 %1747
        %1749 = vmax.xlane.f32.xlu0 %v1725
        %v1750 = vpop.xlane.xlu0 %1749
        %v1751 = vmax.f32 %v1727, %v1736
        %v1752 = vmax.f32 %v1728, %v1738
        %v1753 = vmax.f32 %v1729, %v1740
        %v1754 = vmax.f32 %v1730, %v1742
        %v1755 = vmax.f32 %v1731, %v1744
        %v1756 = vmax.f32 %v1732, %v1746
        %v1757 = vmax.f32 %v1733, %v1748
        %v1758 = vmax.f32 %v1734, %v1750
        %v1759 = vsub.f32 %v1727, %v1751
        %v1760 = vsub.f32 %v1728, %v1752
        %v1761 = vsub.f32 %v1729, %v1753
        %v1762 = vsub.f32 %v1730, %v1754
        %v1763 = vsub.f32 %v1731, %v1755
        %v1764 = vsub.f32 %v1732, %v1756
        %v1765 = vsub.f32 %v1733, %v1757
        %v1766 = vsub.f32 %v1734, %v1758
        %v1767 = vmul.f32 %v1759, 1.442695
        %v1768 = vpow.pop %v1767
        %v1769 = vmul.f32 %v1760, 1.442695
        %v1770 = vpow.pop %v1769
        %v1771 = vmul.f32 %v1761, 1.442695
        %v1772 = vpow.pop %v1771
        %v1773 = vmul.f32 %v1762, 1.442695
        %v1774 = vpow.pop %v1773
        %v1775 = vmul.f32 %v1763, 1.442695
        %v1776 = vpow.pop %v1775
        %v1777 = vmul.f32 %v1764, 1.442695
        %v1778 = vpow.pop %v1777
        %v1779 = vmul.f32 %v1765, 1.442695
        %v1780 = vpow.pop %v1779
        %v1781 = vmul.f32 %v1766, 1.442695
        %v1782 = vpow.pop %v1781
        %1784 = vset.pattern.permute.xlu0 0
        %1785 = vperm.xlu0 %1784, %v1751
        %v1786 = vpop.permute.xlu0 %1785
        %1789 = vset.pattern.permute.xlu0 0
        %1790 = vperm.xlu0 %1789, %v1752
        %v1791 = vpop.permute.xlu0 %1790
        %1794 = vset.pattern.permute.xlu0 0
        %1795 = vperm.xlu0 %1794, %v1753
        %v1796 = vpop.permute.xlu0 %1795
        %1799 = vset.pattern.permute.xlu0 0
        %1800 = vperm.xlu0 %1799, %v1754
        %v1801 = vpop.permute.xlu0 %1800
        %1804 = vset.pattern.permute.xlu0 0
        %1805 = vperm.xlu0 %1804, %v1755
        %v1806 = vpop.permute.xlu0 %1805
        %1809 = vset.pattern.permute.xlu0 0
        %1810 = vperm.xlu0 %1809, %v1756
        %v1811 = vpop.permute.xlu0 %1810
        %1814 = vset.pattern.permute.xlu0 0
        %1815 = vperm.xlu0 %1814, %v1757
        %v1816 = vpop.permute.xlu0 %1815
        %1819 = vset.pattern.permute.xlu0 0
        %1820 = vperm.xlu0 %1819, %v1758
        %v1821 = vpop.permute.xlu0 %1820
        %v1823 = vsub.f32 %v1718, %v1786
        %v1824 = vsub.f32 %v1719, %v1791
        %v1825 = vsub.f32 %v1720, %v1796
        %v1826 = vsub.f32 %v1721, %v1801
        %v1827 = vsub.f32 %v1722, %v1806
        %v1828 = vsub.f32 %v1723, %v1811
        %v1829 = vsub.f32 %v1724, %v1816
        %v1830 = vsub.f32 %v1725, %v1821
        %v1831 = vmul.f32 %v1823, 1.442695
        %v1832 = vpow.pop %v1831
        %v1833 = vmul.f32 %v1824, 1.442695
        %v1834 = vpow.pop %v1833
        %v1835 = vmul.f32 %v1825, 1.442695
        %v1836 = vpow.pop %v1835
        %v1837 = vmul.f32 %v1826, 1.442695
        %v1838 = vpow.pop %v1837
        %v1839 = vmul.f32 %v1827, 1.442695
        %v1840 = vpow.pop %v1839
        %v1841 = vmul.f32 %v1828, 1.442695
        %v1842 = vpow.pop %v1841
        %v1843 = vmul.f32 %v1829, 1.442695
        %v1844 = vpow.pop %v1843
        %v1845 = vmul.f32 %v1830, 1.442695
        %v1846 = vpow.pop %v1845
        %s1847 = scalar_lea.vmem [#allocation5], 64
        %v1848 = vld [vmem:[%s1847] sm:$0xff]
        %v1849 = vld [vmem:[%s1847 + $0x8] sm:$0xff]
        %v1850 = vld [vmem:[%s1847 + $0x10] sm:$0xff]
        %v1851 = vld [vmem:[%s1847 + $0x18] sm:$0xff]
        %v1852 = vld [vmem:[%s1847 + $0x20] sm:$0xff]
        %v1853 = vld [vmem:[%s1847 + $0x28] sm:$0xff]
        %v1854 = vld [vmem:[%s1847 + $0x30] sm:$0xff]
        %v1855 = vld [vmem:[%s1847 + $0x38] sm:$0xff]
        %v1856 = vmul.f32 %v1768, %v1848
        %v1857 = vmul.f32 %v1770, %v1849
        %v1858 = vmul.f32 %v1772, %v1850
        %v1859 = vmul.f32 %v1774, %v1851
        %v1860 = vmul.f32 %v1776, %v1852
        %v1861 = vmul.f32 %v1778, %v1853
        %v1862 = vmul.f32 %v1780, %v1854
        %v1863 = vmul.f32 %v1782, %v1855
        %1864 = vadd.xlane.f32.xlu0 %v1832
        %v1865 = vpop.xlane.xlu0 %1864
        %1866 = vadd.xlane.f32.xlu0 %v1834
        %v1867 = vpop.xlane.xlu0 %1866
        %1868 = vadd.xlane.f32.xlu0 %v1836
        %v1869 = vpop.xlane.xlu0 %1868
        %1870 = vadd.xlane.f32.xlu0 %v1838
        %v1871 = vpop.xlane.xlu0 %1870
        %1872 = vadd.xlane.f32.xlu0 %v1840
        %v1873 = vpop.xlane.xlu0 %1872
        %1874 = vadd.xlane.f32.xlu0 %v1842
        %v1875 = vpop.xlane.xlu0 %1874
        %1876 = vadd.xlane.f32.xlu0 %v1844
        %v1877 = vpop.xlane.xlu0 %1876
        %1878 = vadd.xlane.f32.xlu0 %v1846
        %v1879 = vpop.xlane.xlu0 %1878
        %v1880 = vadd.f32 %v1856, %v1865
        %v1881 = vadd.f32 %v1857, %v1867
        %v1882 = vadd.f32 %v1858, %v1869
        %v1883 = vadd.f32 %v1859, %v1871
        %v1884 = vadd.f32 %v1860, %v1873
        %v1885 = vadd.f32 %v1861, %v1875
        %v1886 = vadd.f32 %v1862, %v1877
        %v1887 = vadd.f32 %v1863, %v1879
        %1888 = vst.msk [vmem:[%s1847] sm:$0xff] %vm1330, %v1880
        %1889 = vst.msk [vmem:[%s1847 + $0x8] sm:$0xff] %vm1330, %v1881
        %1890 = vst.msk [vmem:[%s1847 + $0x10] sm:$0xff] %vm1330, %v1882
        %1891 = vst.msk [vmem:[%s1847 + $0x18] sm:$0xff] %vm1330, %v1883
        %1892 = vst.msk [vmem:[%s1847 + $0x20] sm:$0xff] %vm1330, %v1884
        %1893 = vst.msk [vmem:[%s1847 + $0x28] sm:$0xff] %vm1330, %v1885
        %1894 = vst.msk [vmem:[%s1847 + $0x30] sm:$0xff] %vm1330, %v1886
        %1895 = vst.msk [vmem:[%s1847 + $0x38] sm:$0xff] %vm1330, %v1887
        %1896 = vst.msk [vmem:[%s1726] sm:$0xff] %vm1330, %v1751
        %1897 = vst.msk [vmem:[%s1726 + $0x8] sm:$0xff] %vm1330, %v1752
        %1898 = vst.msk [vmem:[%s1726 + $0x10] sm:$0xff] %vm1330, %v1753
        %1899 = vst.msk [vmem:[%s1726 + $0x18] sm:$0xff] %vm1330, %v1754
        %1900 = vst.msk [vmem:[%s1726 + $0x20] sm:$0xff] %vm1330, %v1755
        %1901 = vst.msk [vmem:[%s1726 + $0x28] sm:$0xff] %vm1330, %v1756
        %1902 = vst.msk [vmem:[%s1726 + $0x30] sm:$0xff] %vm1330, %v1757
        %1903 = vst.msk [vmem:[%s1726 + $0x38] sm:$0xff] %vm1330, %v1758
        %v1904 = vld [vmem:[%s551] sm:$0xff]
        %v1905 = vld [vmem:[%s551 + $0x8] sm:$0xff]
        %v1906 = vld [vmem:[%s551 + $0x10] sm:$0xff]
        %v1907 = vld [vmem:[%s551 + $0x18] sm:$0xff]
        %v1908 = vld [vmem:[%s551 + $0x20] sm:$0xff]
        %v1909 = vld [vmem:[%s551 + $0x28] sm:$0xff]
        %v1910 = vld [vmem:[%s551 + $0x30] sm:$0xff]
        %v1911 = vld [vmem:[%s551 + $0x38] sm:$0xff]
        %v1912 = vld [vmem:[%s551 + $0x40] sm:$0xff]
        %v1913 = vld [vmem:[%s551 + $0x48] sm:$0xff]
        %v1914 = vld [vmem:[%s551 + $0x50] sm:$0xff]
        %v1915 = vld [vmem:[%s551 + $0x58] sm:$0xff]
        %v1916 = vld [vmem:[%s551 + $0x60] sm:$0xff]
        %v1917 = vld [vmem:[%s551 + $0x68] sm:$0xff]
        %v1918 = vld [vmem:[%s551 + $0x70] sm:$0xff]
        %v1919 = vld [vmem:[%s551 + $0x78] sm:$0xff]
        %1936 = vrot.lane.b32.xlu0 %v1904, 120
        %v1937 = vpop.permute.xlu0 %1936
        %1938 = vrot.lane.b32.xlu0 %v1905, 120
        %v1939 = vpop.permute.xlu0 %1938
        %1940 = vrot.lane.b32.xlu0 %v1906, 120
        %v1941 = vpop.permute.xlu0 %1940
        %1942 = vrot.lane.b32.xlu0 %v1907, 120
        %v1943 = vpop.permute.xlu0 %1942
        %1944 = vrot.lane.b32.xlu0 %v1908, 120
        %v1945 = vpop.permute.xlu0 %1944
        %1946 = vrot.lane.b32.xlu0 %v1909, 120
        %v1947 = vpop.permute.xlu0 %1946
        %1948 = vrot.lane.b32.xlu0 %v1910, 120
        %v1949 = vpop.permute.xlu0 %1948
        %1950 = vrot.lane.b32.xlu0 %v1911, 120
        %v1951 = vpop.permute.xlu0 %1950
        %1952 = vrot.lane.b32.xlu0 %v1912, 120
        %v1953 = vpop.permute.xlu0 %1952
        %1954 = vrot.lane.b32.xlu0 %v1913, 120
        %v1955 = vpop.permute.xlu0 %1954
        %1956 = vrot.lane.b32.xlu0 %v1914, 120
        %v1957 = vpop.permute.xlu0 %1956
        %1958 = vrot.lane.b32.xlu0 %v1915, 120
        %v1959 = vpop.permute.xlu0 %1958
        %1960 = vrot.lane.b32.xlu0 %v1916, 120
        %v1961 = vpop.permute.xlu0 %1960
        %1962 = vrot.lane.b32.xlu0 %v1917, 120
        %v1963 = vpop.permute.xlu0 %1962
        %1964 = vrot.lane.b32.xlu0 %v1918, 120
        %v1965 = vpop.permute.xlu0 %1964
        %1966 = vrot.lane.b32.xlu0 %v1919, 120
        %v1967 = vpop.permute.xlu0 %1966
        %1984 = vmatprep.subr.mxu0 0.0
        %1985 = vmatpush1.msra.mxu0 %v1967
        %1986 = vmatprep.subr.mxu0 0.0
        %1987 = vmatpush1.msra.mxu0 %v1965
        %1988 = vmatprep.subr.mxu0 0.0
        %1989 = vmatpush1.msra.mxu0 %v1963
        %1990 = vmatprep.subr.mxu0 0.0
        %1991 = vmatpush1.msra.mxu0 %v1961
        %1992 = vmatprep.subr.mxu0 0.0
        %1993 = vmatpush1.msra.mxu0 %v1959
        %1994 = vmatprep.subr.mxu0 0.0
        %1995 = vmatpush1.msra.mxu0 %v1957
        %1996 = vmatprep.subr.mxu0 0.0
        %1997 = vmatpush1.msra.mxu0 %v1955
        %1998 = vmatprep.subr.mxu0 0.0
        %1999 = vmatpush1.msra.mxu0 %v1953
        %2000 = vmatprep.subr.mxu0 0.0
        %2001 = vmatpush1.msra.mxu0 %v1951
        %2002 = vmatprep.subr.mxu0 0.0
        %2003 = vmatpush1.msra.mxu0 %v1949
        %2004 = vmatprep.subr.mxu0 0.0
        %2005 = vmatpush1.msra.mxu0 %v1947
        %2006 = vmatprep.subr.mxu0 0.0
        %2007 = vmatpush1.msra.mxu0 %v1945
        %2008 = vmatprep.subr.mxu0 0.0
        %2009 = vmatpush1.msra.mxu0 %v1943
        %2010 = vmatprep.subr.mxu0 0.0
        %2011 = vmatpush1.msra.mxu0 %v1941
        %2012 = vmatprep.subr.mxu0 0.0
        %2013 = vmatpush1.msra.mxu0 %v1939
        %2014 = vmatprep.subr.mxu0 0.0
        %2015 = vmatpush1.msra.mxu0 %v1937
        %2016 = vmatprep.subr.mxu0 0.0
        %2017 = vmatpush2.msra.mxu0 0.0
        %2018 = vmatprep.subr.mxu0 0.0
        %2019 = vmatpush2.msra.mxu0 0.0
        %2020 = vmatprep.subr.mxu0 0.0
        %2021 = vmatpush2.msra.mxu0 0.0
        %2022 = vmatprep.subr.mxu0 0.0
        %2023 = vmatpush2.msra.mxu0 0.0
        %2024 = vmatprep.subr.mxu0 0.0
        %2025 = vmatpush2.msra.mxu0 0.0
        %2026 = vmatprep.subr.mxu0 0.0
        %2027 = vmatpush2.msra.mxu0 0.0
        %2028 = vmatprep.subr.mxu0 0.0
        %2029 = vmatpush2.msra.mxu0 0.0
        %2030 = vmatprep.subr.mxu0 0.0
        %2031 = vmatpush2.msra.mxu0 0.0
        %2032 = vmatprep.subr.mxu0 0.0
        %2033 = vmatpush2.msra.mxu0 0.0
        %2034 = vmatprep.subr.mxu0 0.0
        %2035 = vmatpush2.msra.mxu0 0.0
        %2036 = vmatprep.subr.mxu0 0.0
        %2037 = vmatpush2.msra.mxu0 0.0
        %2038 = vmatprep.subr.mxu0 0.0
        %2039 = vmatpush2.msra.mxu0 0.0
        %2040 = vmatprep.subr.mxu0 0.0
        %2041 = vmatpush2.msra.mxu0 0.0
        %2042 = vmatprep.subr.mxu0 0.0
        %2043 = vmatpush2.msra.mxu0 0.0
        %2044 = vmatprep.subr.mxu0 0.0
        %2045 = vmatpush2.msra.mxu0 0.0
        %2046 = vmatprep.subr.mxu0 0.0
        %2047 = vmatpush2.msra.mxu0 0.0
        %2048 = vmatprep.mubr.f32.mxu0 0.0
        %2049 = vmatmul.mubr.f32.gmra.mxu0 %v1832
        %v2050 = vpop.f32.mrf.mxu0
        %v2051 = vadd.f32 0.0, %v2050
        %v2052 = vpop.f32.mrf.mxu0
        %2053 = vmatprep.mubr.f32.mxu0 0.0
        %2054 = vmatmul.mubr.f32.gmra.mxu0 %v1834
        %v2055 = vpop.f32.mrf.mxu0
        %v2056 = vadd.f32 0.0, %v2055
        %v2057 = vpop.f32.mrf.mxu0
        %2058 = vmatprep.mubr.f32.mxu0 0.0
        %2059 = vmatmul.mubr.f32.gmra.mxu0 %v1836
        %v2060 = vpop.f32.mrf.mxu0
        %v2061 = vadd.f32 0.0, %v2060
        %v2062 = vpop.f32.mrf.mxu0
        %2063 = vmatprep.mubr.f32.mxu0 0.0
        %2064 = vmatmul.mubr.f32.gmra.mxu0 %v1838
        %v2065 = vpop.f32.mrf.mxu0
        %v2066 = vadd.f32 0.0, %v2065
        %v2067 = vpop.f32.mrf.mxu0
        %2068 = vmatprep.mubr.f32.mxu0 0.0
        %2069 = vmatmul.mubr.f32.gmra.mxu0 %v1840
        %v2070 = vpop.f32.mrf.mxu0
        %v2071 = vadd.f32 0.0, %v2070
        %v2072 = vpop.f32.mrf.mxu0
        %2073 = vmatprep.mubr.f32.mxu0 0.0
        %2074 = vmatmul.mubr.f32.gmra.mxu0 %v1842
        %v2075 = vpop.f32.mrf.mxu0
        %v2076 = vadd.f32 0.0, %v2075
        %v2077 = vpop.f32.mrf.mxu0
        %2078 = vmatprep.mubr.f32.mxu0 0.0
        %2079 = vmatmul.mubr.f32.gmra.mxu0 %v1844
        %v2080 = vpop.f32.mrf.mxu0
        %v2081 = vadd.f32 0.0, %v2080
        %v2082 = vpop.f32.mrf.mxu0
        %2083 = vmatprep.mubr.f32.mxu0 0.0
        %2084 = vmatmul.mubr.f32.gmra.mxu0 %v1846
        %v2085 = vpop.f32.mrf.mxu0
        %v2086 = vadd.f32 0.0, %v2085
        %v2087 = vpop.f32.mrf.mxu0
        %2088 = vdwg.mxu0
        %v2089 = vld [vmem:[#allocation3] sm:$0xff]
        %v2090 = vld [vmem:[#allocation3 + $0x8] sm:$0xff]
        %v2091 = vld [vmem:[#allocation3 + $0x10] sm:$0xff]
        %v2092 = vld [vmem:[#allocation3 + $0x18] sm:$0xff]
        %v2093 = vld [vmem:[#allocation3 + $0x20] sm:$0xff]
        %v2094 = vld [vmem:[#allocation3 + $0x28] sm:$0xff]
        %v2095 = vld [vmem:[#allocation3 + $0x30] sm:$0xff]
        %v2096 = vld [vmem:[#allocation3 + $0x38] sm:$0xff]
        %2098 = vset.pattern.permute.xlu0 0
        %2099 = vperm.xlu0 %2098, %v1768
        %v2100 = vpop.permute.xlu0 %2099
        %2103 = vset.pattern.permute.xlu0 0
        %2104 = vperm.xlu0 %2103, %v1770
        %v2105 = vpop.permute.xlu0 %2104
        %2108 = vset.pattern.permute.xlu0 0
        %2109 = vperm.xlu0 %2108, %v1772
        %v2110 = vpop.permute.xlu0 %2109
        %2113 = vset.pattern.permute.xlu0 0
        %2114 = vperm.xlu0 %2113, %v1774
        %v2115 = vpop.permute.xlu0 %2114
        %2118 = vset.pattern.permute.xlu0 0
        %2119 = vperm.xlu0 %2118, %v1776
        %v2120 = vpop.permute.xlu0 %2119
        %2123 = vset.pattern.permute.xlu0 0
        %2124 = vperm.xlu0 %2123, %v1778
        %v2125 = vpop.permute.xlu0 %2124
        %2128 = vset.pattern.permute.xlu0 0
        %2129 = vperm.xlu0 %2128, %v1780
        %v2130 = vpop.permute.xlu0 %2129
        %2133 = vset.pattern.permute.xlu0 0
        %2134 = vperm.xlu0 %2133, %v1782
        %v2135 = vpop.permute.xlu0 %2134
        %v2137 = vmul.f32 %v2100, %v2089
        %v2138 = vmul.f32 %v2105, %v2090
        %v2139 = vmul.f32 %v2110, %v2091
        %v2140 = vmul.f32 %v2115, %v2092
        %v2141 = vmul.f32 %v2120, %v2093
        %v2142 = vmul.f32 %v2125, %v2094
        %v2143 = vmul.f32 %v2130, %v2095
        %v2144 = vmul.f32 %v2135, %v2096
        %2153 = vrot.lane.b32.xlu0 %v2051, 8
        %v2154 = vpop.permute.xlu0 %2153
        %2155 = vrot.lane.b32.xlu0 %v2056, 8
        %v2156 = vpop.permute.xlu0 %2155
        %2157 = vrot.lane.b32.xlu0 %v2061, 8
        %v2158 = vpop.permute.xlu0 %2157
        %2159 = vrot.lane.b32.xlu0 %v2066, 8
        %v2160 = vpop.permute.xlu0 %2159
        %2161 = vrot.lane.b32.xlu0 %v2071, 8
        %v2162 = vpop.permute.xlu0 %2161
        %2163 = vrot.lane.b32.xlu0 %v2076, 8
        %v2164 = vpop.permute.xlu0 %2163
        %2165 = vrot.lane.b32.xlu0 %v2081, 8
        %v2166 = vpop.permute.xlu0 %2165
        %2167 = vrot.lane.b32.xlu0 %v2086, 8
        %v2168 = vpop.permute.xlu0 %2167
        %v2177 = vadd.f32 %v2137, %v2154
        %v2178 = vadd.f32 %v2138, %v2156
        %v2179 = vadd.f32 %v2139, %v2158
        %v2180 = vadd.f32 %v2140, %v2160
        %v2181 = vadd.f32 %v2141, %v2162
        %v2182 = vadd.f32 %v2142, %v2164
        %v2183 = vadd.f32 %v2143, %v2166
        %v2184 = vadd.f32 %v2144, %v2168
        %vm2185 = vcmask 130112
        %2186 = vst.msk [vmem:[#allocation3] sm:$0xff] %vm2185, %v2177
        %2187 = vst.msk [vmem:[#allocation3 + $0x8] sm:$0xff] %vm2185, %v2178
        %2188 = vst.msk [vmem:[#allocation3 + $0x10] sm:$0xff] %vm2185, %v2179
        %2189 = vst.msk [vmem:[#allocation3 + $0x18] sm:$0xff] %vm2185, %v2180
        %2190 = vst.msk [vmem:[#allocation3 + $0x20] sm:$0xff] %vm2185, %v2181
        %2191 = vst.msk [vmem:[#allocation3 + $0x28] sm:$0xff] %vm2185, %v2182
        %2192 = vst.msk [vmem:[#allocation3 + $0x30] sm:$0xff] %vm2185, %v2183
        %2193 = vst.msk [vmem:[#allocation3 + $0x38] sm:$0xff] %vm2185, %v2184
        %v2194 = vld [vmem:[%s983] sm:$0xff]
        %v2195 = vld [vmem:[%s983 + $0x8] sm:$0xff]
        %v2196 = vld [vmem:[%s983 + $0x10] sm:$0xff]
        %v2197 = vld [vmem:[%s983 + $0x18] sm:$0xff]
        %v2198 = vld [vmem:[%s983 + $0x20] sm:$0xff]
        %v2199 = vld [vmem:[%s983 + $0x28] sm:$0xff]
        %v2200 = vld [vmem:[%s983 + $0x30] sm:$0xff]
        %v2201 = vld [vmem:[%s983 + $0x38] sm:$0xff]
        %v2202 = vld [vmem:[#allocation2] sm:$0xff]
        %v2203 = vld [vmem:[#allocation2 + $0x8] sm:$0xff]
        %v2204 = vld [vmem:[#allocation2 + $0x10] sm:$0xff]
        %v2205 = vld [vmem:[#allocation2 + $0x18] sm:$0xff]
        %v2206 = vld [vmem:[#allocation2 + $0x20] sm:$0xff]
        %v2207 = vld [vmem:[#allocation2 + $0x28] sm:$0xff]
        %v2208 = vld [vmem:[#allocation2 + $0x30] sm:$0xff]
        %v2209 = vld [vmem:[#allocation2 + $0x38] sm:$0xff]
        %v2210 = vld [vmem:[%s460 + $0x10] sm:$0xff]
        %2219 = vrot.lane.b32.xlu0 %v2202, 112
        %v2220 = vpop.permute.xlu0 %2219
        %2221 = vrot.lane.b32.xlu0 %v2203, 112
        %v2222 = vpop.permute.xlu0 %2221
        %2223 = vrot.lane.b32.xlu0 %v2204, 112
        %v2224 = vpop.permute.xlu0 %2223
        %2225 = vrot.lane.b32.xlu0 %v2205, 112
        %v2226 = vpop.permute.xlu0 %2225
        %2227 = vrot.lane.b32.xlu0 %v2206, 112
        %v2228 = vpop.permute.xlu0 %2227
        %2229 = vrot.lane.b32.xlu0 %v2207, 112
        %v2230 = vpop.permute.xlu0 %2229
        %2231 = vrot.lane.b32.xlu0 %v2208, 112
        %v2232 = vpop.permute.xlu0 %2231
        %2233 = vrot.lane.b32.xlu0 %v2209, 112
        %v2234 = vpop.permute.xlu0 %2233
        %v2235 = vsel %vm1010, %v2220, 0
        %v2237 = vsel %vm1010, %v2222, 0
        %v2239 = vsel %vm1010, %v2224, 0
        %v2241 = vsel %vm1010, %v2226, 0
        %v2243 = vsel %vm1010, %v2228, 0
        %v2245 = vsel %vm1010, %v2230, 0
        %v2247 = vsel %vm1010, %v2232, 0
        %v2249 = vsel %vm1010, %v2234, 0
        %2251 = vmatprep.subr.mxu0 0.0
        %2252 = vmatpush1.msra.mxu0 0.0
        %2253 = vmatprep.subr.mxu0 0.0
        %2254 = vmatpush1.msra.mxu0 0.0
        %2255 = vmatprep.subr.mxu0 0.0
        %2256 = vmatpush1.msra.mxu0 0.0
        %2257 = vmatprep.subr.mxu0 0.0
        %2258 = vmatpush1.msra.mxu0 0.0
        %2259 = vmatprep.subr.mxu0 0.0
        %2260 = vmatpush1.msra.mxu0 0.0
        %2261 = vmatprep.subr.mxu0 0.0
        %2262 = vmatpush1.msra.mxu0 0.0
        %2263 = vmatprep.subr.mxu0 0.0
        %2264 = vmatpush1.msra.mxu0 0.0
        %2265 = vmatprep.subr.mxu0 0.0
        %2266 = vmatpush1.msra.mxu0 0.0
        %2267 = vmatprep.subr.mxu0 0.0
        %2268 = vmatpush1.msra.mxu0 0.0
        %2269 = vmatprep.subr.mxu0 0.0
        %2270 = vmatpush1.msra.mxu0 0.0
        %2271 = vmatprep.subr.mxu0 0.0
        %2272 = vmatpush1.msra.mxu0 0.0
        %2273 = vmatprep.subr.mxu0 0.0
        %2274 = vmatpush1.msra.mxu0 0.0
        %2275 = vmatprep.subr.mxu0 0.0
        %2276 = vmatpush1.msra.mxu0 0.0
        %2277 = vmatprep.subr.mxu0 0.0
        %2278 = vmatpush1.msra.mxu0 0.0
        %2279 = vmatprep.subr.mxu0 0.0
        %2280 = vmatpush1.msra.mxu0 0.0
        %2281 = vmatprep.subr.mxu0 0.0
        %2282 = vmatpush1.msra.mxu0 %v2210
        %2283 = vmatprep.subr.mxu0 0.0
        %2284 = vmatpush2.msra.mxu0 0.0
        %2285 = vmatprep.subr.mxu0 0.0
        %2286 = vmatpush2.msra.mxu0 0.0
        %2287 = vmatprep.subr.mxu0 0.0
        %2288 = vmatpush2.msra.mxu0 0.0
        %2289 = vmatprep.subr.mxu0 0.0
        %2290 = vmatpush2.msra.mxu0 0.0
        %2291 = vmatprep.subr.mxu0 0.0
        %2292 = vmatpush2.msra.mxu0 0.0
        %2293 = vmatprep.subr.mxu0 0.0
        %2294 = vmatpush2.msra.mxu0 0.0
        %2295 = vmatprep.subr.mxu0 0.0
        %2296 = vmatpush2.msra.mxu0 0.0
        %2297 = vmatprep.subr.mxu0 0.0
        %2298 = vmatpush2.msra.mxu0 0.0
        %2299 = vmatprep.subr.mxu0 0.0
        %2300 = vmatpush2.msra.mxu0 0.0
        %2301 = vmatprep.subr.mxu0 0.0
        %2302 = vmatpush2.msra.mxu0 0.0
        %2303 = vmatprep.subr.mxu0 0.0
        %2304 = vmatpush2.msra.mxu0 0.0
        %2305 = vmatprep.subr.mxu0 0.0
        %2306 = vmatpush2.msra.mxu0 0.0
        %2307 = vmatprep.subr.mxu0 0.0
        %2308 = vmatpush2.msra.mxu0 0.0
        %2309 = vmatprep.subr.mxu0 0.0
        %2310 = vmatpush2.msra.mxu0 0.0
        %2311 = vmatprep.subr.mxu0 0.0
        %2312 = vmatpush2.msra.mxu0 0.0
        %2313 = vmatprep.subr.mxu0 0.0
        %2314 = vmatpush2.msra.mxu0 0.0
        %2315 = vmatprep.mubr.f32.mxu0 0.0
        %2316 = vmatmul.mubr.f32.gmra.mxu0 %v2235
        %v2317 = vpop.f32.mrf.mxu0
        %v2318 = vadd.f32 0.0, %v2317
        %v2319 = vpop.f32.mrf.mxu0
        %2320 = vmatprep.mubr.f32.mxu0 0.0
        %2321 = vmatmul.mubr.f32.gmra.mxu0 %v2237
        %v2322 = vpop.f32.mrf.mxu0
        %v2323 = vadd.f32 0.0, %v2322
        %v2324 = vpop.f32.mrf.mxu0
        %2325 = vmatprep.mubr.f32.mxu0 0.0
        %2326 = vmatmul.mubr.f32.gmra.mxu0 %v2239
        %v2327 = vpop.f32.mrf.mxu0
        %v2328 = vadd.f32 0.0, %v2327
        %v2329 = vpop.f32.mrf.mxu0
        %2330 = vmatprep.mubr.f32.mxu0 0.0
        %2331 = vmatmul.mubr.f32.gmra.mxu0 %v2241
        %v2332 = vpop.f32.mrf.mxu0
        %v2333 = vadd.f32 0.0, %v2332
        %v2334 = vpop.f32.mrf.mxu0
        %2335 = vmatprep.mubr.f32.mxu0 0.0
        %2336 = vmatmul.mubr.f32.gmra.mxu0 %v2243
        %v2337 = vpop.f32.mrf.mxu0
        %v2338 = vadd.f32 0.0, %v2337
        %v2339 = vpop.f32.mrf.mxu0
        %2340 = vmatprep.mubr.f32.mxu0 0.0
        %2341 = vmatmul.mubr.f32.gmra.mxu0 %v2245
        %v2342 = vpop.f32.mrf.mxu0
        %v2343 = vadd.f32 0.0, %v2342
        %v2344 = vpop.f32.mrf.mxu0
        %2345 = vmatprep.mubr.f32.mxu0 0.0
        %2346 = vmatmul.mubr.f32.gmra.mxu0 %v2247
        %v2347 = vpop.f32.mrf.mxu0
        %v2348 = vadd.f32 0.0, %v2347
        %v2349 = vpop.f32.mrf.mxu0
        %2350 = vmatprep.mubr.f32.mxu0 0.0
        %2351 = vmatmul.mubr.f32.gmra.mxu0 %v2249
        %v2352 = vpop.f32.mrf.mxu0
        %v2353 = vadd.f32 0.0, %v2352
        %v2354 = vpop.f32.mrf.mxu0
        %2355 = vdwg.mxu0
        %v2356 = vmul.f32 %v2194, 0.015625
        %v2357 = vmul.f32 %v2195, 0.015625
        %v2358 = vmul.f32 %v2196, 0.015625
        %v2359 = vmul.f32 %v2197, 0.015625
        %v2360 = vmul.f32 %v2198, 0.015625
        %v2361 = vmul.f32 %v2199, 0.015625
        %v2362 = vmul.f32 %v2200, 0.015625
        %v2363 = vmul.f32 %v2201, 0.015625
        %v2364 = vsub.f32 %v2318, %v2356
        %v2365 = vsub.f32 %v2323, %v2357
        %v2366 = vsub.f32 %v2328, %v2358
        %v2367 = vsub.f32 %v2333, %v2359
        %v2368 = vsub.f32 %v2338, %v2360
        %v2369 = vsub.f32 %v2343, %v2361
        %v2370 = vsub.f32 %v2348, %v2362
        %v2371 = vsub.f32 %v2353, %v2363
        %v2372 = vadd.f32 %v2364, %v1160
        %v2373 = vadd.f32 %v2365, %v1160
        %v2374 = vadd.f32 %v2366, %v1160
        %v2375 = vadd.f32 %v2367, %v1160
        %v2376 = vadd.f32 %v2368, %v1160
        %v2377 = vadd.f32 %v2369, %v1160
        %v2378 = vadd.f32 %v2370, %v1160
        %v2379 = vadd.f32 %v2371, %v1160
        %s2380 = scalar_lea.vmem [#allocation4], 128
        %v2381 = vld [vmem:[%s2380] sm:$0xff]
        %v2382 = vld [vmem:[%s2380 + $0x8] sm:$0xff]
        %v2383 = vld [vmem:[%s2380 + $0x10] sm:$0xff]
        %v2384 = vld [vmem:[%s2380 + $0x18] sm:$0xff]
        %v2385 = vld [vmem:[%s2380 + $0x20] sm:$0xff]
        %v2386 = vld [vmem:[%s2380 + $0x28] sm:$0xff]
        %v2387 = vld [vmem:[%s2380 + $0x30] sm:$0xff]
        %v2388 = vld [vmem:[%s2380 + $0x38] sm:$0xff]
        %2389 = vmax.xlane.f32.xlu0 %v2372
        %v2390 = vpop.xlane.xlu0 %2389
        %2391 = vmax.xlane.f32.xlu0 %v2373
        %v2392 = vpop.xlane.xlu0 %2391
        %2393 = vmax.xlane.f32.xlu0 %v2374
        %v2394 = vpop.xlane.xlu0 %2393
        %2395 = vmax.xlane.f32.xlu0 %v2375
        %v2396 = vpop.xlane.xlu0 %2395
        %2397 = vmax.xlane.f32.xlu0 %v2376
        %v2398 = vpop.xlane.xlu0 %2397
        %2399 = vmax.xlane.f32.xlu0 %v2377
        %v2400 = vpop.xlane.xlu0 %2399
        %2401 = vmax.xlane.f32.xlu0 %v2378
        %v2402 = vpop.xlane.xlu0 %2401
        %2403 = vmax.xlane.f32.xlu0 %v2379
        %v2404 = vpop.xlane.xlu0 %2403
        %v2405 = vmax.f32 %v2381, %v2390
        %v2406 = vmax.f32 %v2382, %v2392
        %v2407 = vmax.f32 %v2383, %v2394
        %v2408 = vmax.f32 %v2384, %v2396
        %v2409 = vmax.f32 %v2385, %v2398
        %v2410 = vmax.f32 %v2386, %v2400
        %v2411 = vmax.f32 %v2387, %v2402
        %v2412 = vmax.f32 %v2388, %v2404
        %v2413 = vsub.f32 %v2381, %v2405
        %v2414 = vsub.f32 %v2382, %v2406
        %v2415 = vsub.f32 %v2383, %v2407
        %v2416 = vsub.f32 %v2384, %v2408
        %v2417 = vsub.f32 %v2385, %v2409
        %v2418 = vsub.f32 %v2386, %v2410
        %v2419 = vsub.f32 %v2387, %v2411
        %v2420 = vsub.f32 %v2388, %v2412
        %v2421 = vmul.f32 %v2413, 1.442695
        %v2422 = vpow.pop %v2421
        %v2423 = vmul.f32 %v2414, 1.442695
        %v2424 = vpow.pop %v2423
        %v2425 = vmul.f32 %v2415, 1.442695
        %v2426 = vpow.pop %v2425
        %v2427 = vmul.f32 %v2416, 1.442695
        %v2428 = vpow.pop %v2427
        %v2429 = vmul.f32 %v2417, 1.442695
        %v2430 = vpow.pop %v2429
        %v2431 = vmul.f32 %v2418, 1.442695
        %v2432 = vpow.pop %v2431
        %v2433 = vmul.f32 %v2419, 1.442695
        %v2434 = vpow.pop %v2433
        %v2435 = vmul.f32 %v2420, 1.442695
        %v2436 = vpow.pop %v2435
        %2438 = vset.pattern.permute.xlu0 0
        %2439 = vperm.xlu0 %2438, %v2405
        %v2440 = vpop.permute.xlu0 %2439
        %2443 = vset.pattern.permute.xlu0 0
        %2444 = vperm.xlu0 %2443, %v2406
        %v2445 = vpop.permute.xlu0 %2444
        %2448 = vset.pattern.permute.xlu0 0
        %2449 = vperm.xlu0 %2448, %v2407
        %v2450 = vpop.permute.xlu0 %2449
        %2453 = vset.pattern.permute.xlu0 0
        %2454 = vperm.xlu0 %2453, %v2408
        %v2455 = vpop.permute.xlu0 %2454
        %2458 = vset.pattern.permute.xlu0 0
        %2459 = vperm.xlu0 %2458, %v2409
        %v2460 = vpop.permute.xlu0 %2459
        %2463 = vset.pattern.permute.xlu0 0
        %2464 = vperm.xlu0 %2463, %v2410
        %v2465 = vpop.permute.xlu0 %2464
        %2468 = vset.pattern.permute.xlu0 0
        %2469 = vperm.xlu0 %2468, %v2411
        %v2470 = vpop.permute.xlu0 %2469
        %2473 = vset.pattern.permute.xlu0 0
        %2474 = vperm.xlu0 %2473, %v2412
        %v2475 = vpop.permute.xlu0 %2474
        %v2477 = vsub.f32 %v2372, %v2440
        %v2478 = vsub.f32 %v2373, %v2445
        %v2479 = vsub.f32 %v2374, %v2450
        %v2480 = vsub.f32 %v2375, %v2455
        %v2481 = vsub.f32 %v2376, %v2460
        %v2482 = vsub.f32 %v2377, %v2465
        %v2483 = vsub.f32 %v2378, %v2470
        %v2484 = vsub.f32 %v2379, %v2475
        %v2485 = vmul.f32 %v2477, 1.442695
        %v2486 = vpow.pop %v2485
        %v2487 = vmul.f32 %v2478, 1.442695
        %v2488 = vpow.pop %v2487
        %v2489 = vmul.f32 %v2479, 1.442695
        %v2490 = vpow.pop %v2489
        %v2491 = vmul.f32 %v2480, 1.442695
        %v2492 = vpow.pop %v2491
        %v2493 = vmul.f32 %v2481, 1.442695
        %v2494 = vpow.pop %v2493
        %v2495 = vmul.f32 %v2482, 1.442695
        %v2496 = vpow.pop %v2495
        %v2497 = vmul.f32 %v2483, 1.442695
        %v2498 = vpow.pop %v2497
        %v2499 = vmul.f32 %v2484, 1.442695
        %v2500 = vpow.pop %v2499
        %s2501 = scalar_lea.vmem [#allocation5], 128
        %v2502 = vld [vmem:[%s2501] sm:$0xff]
        %v2503 = vld [vmem:[%s2501 + $0x8] sm:$0xff]
        %v2504 = vld [vmem:[%s2501 + $0x10] sm:$0xff]
        %v2505 = vld [vmem:[%s2501 + $0x18] sm:$0xff]
        %v2506 = vld [vmem:[%s2501 + $0x20] sm:$0xff]
        %v2507 = vld [vmem:[%s2501 + $0x28] sm:$0xff]
        %v2508 = vld [vmem:[%s2501 + $0x30] sm:$0xff]
        %v2509 = vld [vmem:[%s2501 + $0x38] sm:$0xff]
        %v2510 = vmul.f32 %v2422, %v2502
        %v2511 = vmul.f32 %v2424, %v2503
        %v2512 = vmul.f32 %v2426, %v2504
        %v2513 = vmul.f32 %v2428, %v2505
        %v2514 = vmul.f32 %v2430, %v2506
        %v2515 = vmul.f32 %v2432, %v2507
        %v2516 = vmul.f32 %v2434, %v2508
        %v2517 = vmul.f32 %v2436, %v2509
        %2518 = vadd.xlane.f32.xlu0 %v2486
        %v2519 = vpop.xlane.xlu0 %2518
        %2520 = vadd.xlane.f32.xlu0 %v2488
        %v2521 = vpop.xlane.xlu0 %2520
        %2522 = vadd.xlane.f32.xlu0 %v2490
        %v2523 = vpop.xlane.xlu0 %2522
        %2524 = vadd.xlane.f32.xlu0 %v2492
        %v2525 = vpop.xlane.xlu0 %2524
        %2526 = vadd.xlane.f32.xlu0 %v2494
        %v2527 = vpop.xlane.xlu0 %2526
        %2528 = vadd.xlane.f32.xlu0 %v2496
        %v2529 = vpop.xlane.xlu0 %2528
        %2530 = vadd.xlane.f32.xlu0 %v2498
        %v2531 = vpop.xlane.xlu0 %2530
        %2532 = vadd.xlane.f32.xlu0 %v2500
        %v2533 = vpop.xlane.xlu0 %2532
        %v2534 = vadd.f32 %v2510, %v2519
        %v2535 = vadd.f32 %v2511, %v2521
        %v2536 = vadd.f32 %v2512, %v2523
        %v2537 = vadd.f32 %v2513, %v2525
        %v2538 = vadd.f32 %v2514, %v2527
        %v2539 = vadd.f32 %v2515, %v2529
        %v2540 = vadd.f32 %v2516, %v2531
        %v2541 = vadd.f32 %v2517, %v2533
        %2542 = vst.msk [vmem:[%s2501] sm:$0xff] %vm1330, %v2534
        %2543 = vst.msk [vmem:[%s2501 + $0x8] sm:$0xff] %vm1330, %v2535
        %2544 = vst.msk [vmem:[%s2501 + $0x10] sm:$0xff] %vm1330, %v2536
        %2545 = vst.msk [vmem:[%s2501 + $0x18] sm:$0xff] %vm1330, %v2537
        %2546 = vst.msk [vmem:[%s2501 + $0x20] sm:$0xff] %vm1330, %v2538
        %2547 = vst.msk [vmem:[%s2501 + $0x28] sm:$0xff] %vm1330, %v2539
        %2548 = vst.msk [vmem:[%s2501 + $0x30] sm:$0xff] %vm1330, %v2540
        %2549 = vst.msk [vmem:[%s2501 + $0x38] sm:$0xff] %vm1330, %v2541
        %2550 = vst.msk [vmem:[%s2380] sm:$0xff] %vm1330, %v2405
        %2551 = vst.msk [vmem:[%s2380 + $0x8] sm:$0xff] %vm1330, %v2406
        %2552 = vst.msk [vmem:[%s2380 + $0x10] sm:$0xff] %vm1330, %v2407
        %2553 = vst.msk [vmem:[%s2380 + $0x18] sm:$0xff] %vm1330, %v2408
        %2554 = vst.msk [vmem:[%s2380 + $0x20] sm:$0xff] %vm1330, %v2409
        %2555 = vst.msk [vmem:[%s2380 + $0x28] sm:$0xff] %vm1330, %v2410
        %2556 = vst.msk [vmem:[%s2380 + $0x30] sm:$0xff] %vm1330, %v2411
        %2557 = vst.msk [vmem:[%s2380 + $0x38] sm:$0xff] %vm1330, %v2412
        %v2558 = vld [vmem:[%s551] sm:$0xff]
        %v2559 = vld [vmem:[%s551 + $0x8] sm:$0xff]
        %v2560 = vld [vmem:[%s551 + $0x10] sm:$0xff]
        %v2561 = vld [vmem:[%s551 + $0x18] sm:$0xff]
        %v2562 = vld [vmem:[%s551 + $0x20] sm:$0xff]
        %v2563 = vld [vmem:[%s551 + $0x28] sm:$0xff]
        %v2564 = vld [vmem:[%s551 + $0x30] sm:$0xff]
        %v2565 = vld [vmem:[%s551 + $0x38] sm:$0xff]
        %v2566 = vld [vmem:[%s551 + $0x40] sm:$0xff]
        %v2567 = vld [vmem:[%s551 + $0x48] sm:$0xff]
        %v2568 = vld [vmem:[%s551 + $0x50] sm:$0xff]
        %v2569 = vld [vmem:[%s551 + $0x58] sm:$0xff]
        %v2570 = vld [vmem:[%s551 + $0x60] sm:$0xff]
        %v2571 = vld [vmem:[%s551 + $0x68] sm:$0xff]
        %v2572 = vld [vmem:[%s551 + $0x70] sm:$0xff]
        %v2573 = vld [vmem:[%s551 + $0x78] sm:$0xff]
        %2590 = vrot.lane.b32.xlu0 %v2558, 112
        %v2591 = vpop.permute.xlu0 %2590
        %2592 = vrot.lane.b32.xlu0 %v2559, 112
        %v2593 = vpop.permute.xlu0 %2592
        %2594 = vrot.lane.b32.xlu0 %v2560, 112
        %v2595 = vpop.permute.xlu0 %2594
        %2596 = vrot.lane.b32.xlu0 %v2561, 112
        %v2597 = vpop.permute.xlu0 %2596
        %2598 = vrot.lane.b32.xlu0 %v2562, 112
        %v2599 = vpop.permute.xlu0 %2598
        %2600 = vrot.lane.b32.xlu0 %v2563, 112
        %v2601 = vpop.permute.xlu0 %2600
        %2602 = vrot.lane.b32.xlu0 %v2564, 112
        %v2603 = vpop.permute.xlu0 %2602
        %2604 = vrot.lane.b32.xlu0 %v2565, 112
        %v2605 = vpop.permute.xlu0 %2604
        %2606 = vrot.lane.b32.xlu0 %v2566, 112
        %v2607 = vpop.permute.xlu0 %2606
        %2608 = vrot.lane.b32.xlu0 %v2567, 112
        %v2609 = vpop.permute.xlu0 %2608
        %2610 = vrot.lane.b32.xlu0 %v2568, 112
        %v2611 = vpop.permute.xlu0 %2610
        %2612 = vrot.lane.b32.xlu0 %v2569, 112
        %v2613 = vpop.permute.xlu0 %2612
        %2614 = vrot.lane.b32.xlu0 %v2570, 112
        %v2615 = vpop.permute.xlu0 %2614
        %2616 = vrot.lane.b32.xlu0 %v2571, 112
        %v2617 = vpop.permute.xlu0 %2616
        %2618 = vrot.lane.b32.xlu0 %v2572, 112
        %v2619 = vpop.permute.xlu0 %2618
        %2620 = vrot.lane.b32.xlu0 %v2573, 112
        %v2621 = vpop.permute.xlu0 %2620
        %2638 = vmatprep.subr.mxu0 0.0
        %2639 = vmatpush1.msra.mxu0 %v2621
        %2640 = vmatprep.subr.mxu0 0.0
        %2641 = vmatpush1.msra.mxu0 %v2619
        %2642 = vmatprep.subr.mxu0 0.0
        %2643 = vmatpush1.msra.mxu0 %v2617
        %2644 = vmatprep.subr.mxu0 0.0
        %2645 = vmatpush1.msra.mxu0 %v2615
        %2646 = vmatprep.subr.mxu0 0.0
        %2647 = vmatpush1.msra.mxu0 %v2613
        %2648 = vmatprep.subr.mxu0 0.0
        %2649 = vmatpush1.msra.mxu0 %v2611
        %2650 = vmatprep.subr.mxu0 0.0
        %2651 = vmatpush1.msra.mxu0 %v2609
        %2652 = vmatprep.subr.mxu0 0.0
        %2653 = vmatpush1.msra.mxu0 %v2607
        %2654 = vmatprep.subr.mxu0 0.0
        %2655 = vmatpush1.msra.mxu0 %v2605
        %2656 = vmatprep.subr.mxu0 0.0
        %2657 = vmatpush1.msra.mxu0 %v2603
        %2658 = vmatprep.subr.mxu0 0.0
        %2659 = vmatpush1.msra.mxu0 %v2601
        %2660 = vmatprep.subr.mxu0 0.0
        %2661 = vmatpush1.msra.mxu0 %v2599
        %2662 = vmatprep.subr.mxu0 0.0
        %2663 = vmatpush1.msra.mxu0 %v2597
        %2664 = vmatprep.subr.mxu0 0.0
        %2665 = vmatpush1.msra.mxu0 %v2595
        %2666 = vmatprep.subr.mxu0 0.0
        %2667 = vmatpush1.msra.mxu0 %v2593
        %2668 = vmatprep.subr.mxu0 0.0
        %2669 = vmatpush1.msra.mxu0 %v2591
        %2670 = vmatprep.subr.mxu0 0.0
        %2671 = vmatpush2.msra.mxu0 0.0
        %2672 = vmatprep.subr.mxu0 0.0
        %2673 = vmatpush2.msra.mxu0 0.0
        %2674 = vmatprep.subr.mxu0 0.0
        %2675 = vmatpush2.msra.mxu0 0.0
        %2676 = vmatprep.subr.mxu0 0.0
        %2677 = vmatpush2.msra.mxu0 0.0
        %2678 = vmatprep.subr.mxu0 0.0
        %2679 = vmatpush2.msra.mxu0 0.0
        %2680 = vmatprep.subr.mxu0 0.0
        %2681 = vmatpush2.msra.mxu0 0.0
        %2682 = vmatprep.subr.mxu0 0.0
        %2683 = vmatpush2.msra.mxu0 0.0
        %2684 = vmatprep.subr.mxu0 0.0
        %2685 = vmatpush2.msra.mxu0 0.0
        %2686 = vmatprep.subr.mxu0 0.0
        %2687 = vmatpush2.msra.mxu0 0.0
        %2688 = vmatprep.subr.mxu0 0.0
        %2689 = vmatpush2.msra.mxu0 0.0
        %2690 = vmatprep.subr.mxu0 0.0
        %2691 = vmatpush2.msra.mxu0 0.0
        %2692 = vmatprep.subr.mxu0 0.0
        %2693 = vmatpush2.msra.mxu0 0.0
        %2694 = vmatprep.subr.mxu0 0.0
        %2695 = vmatpush2.msra.mxu0 0.0
        %2696 = vmatprep.subr.mxu0 0.0
        %2697 = vmatpush2.msra.mxu0 0.0
        %2698 = vmatprep.subr.mxu0 0.0
        %2699 = vmatpush2.msra.mxu0 0.0
        %2700 = vmatprep.subr.mxu0 0.0
        %2701 = vmatpush2.msra.mxu0 0.0
        %2702 = vmatprep.mubr.f32.mxu0 0.0
        %2703 = vmatmul.mubr.f32.gmra.mxu0 %v2486
        %v2704 = vpop.f32.mrf.mxu0
        %v2705 = vadd.f32 0.0, %v2704
        %v2706 = vpop.f32.mrf.mxu0
        %2707 = vmatprep.mubr.f32.mxu0 0.0
        %2708 = vmatmul.mubr.f32.gmra.mxu0 %v2488
        %v2709 = vpop.f32.mrf.mxu0
        %v2710 = vadd.f32 0.0, %v2709
        %v2711 = vpop.f32.mrf.mxu0
        %2712 = vmatprep.mubr.f32.mxu0 0.0
        %2713 = vmatmul.mubr.f32.gmra.mxu0 %v2490
        %v2714 = vpop.f32.mrf.mxu0
        %v2715 = vadd.f32 0.0, %v2714
        %v2716 = vpop.f32.mrf.mxu0
        %2717 = vmatprep.mubr.f32.mxu0 0.0
        %2718 = vmatmul.mubr.f32.gmra.mxu0 %v2492
        %v2719 = vpop.f32.mrf.mxu0
        %v2720 = vadd.f32 0.0, %v2719
        %v2721 = vpop.f32.mrf.mxu0
        %2722 = vmatprep.mubr.f32.mxu0 0.0
        %2723 = vmatmul.mubr.f32.gmra.mxu0 %v2494
        %v2724 = vpop.f32.mrf.mxu0
        %v2725 = vadd.f32 0.0, %v2724
        %v2726 = vpop.f32.mrf.mxu0
        %2727 = vmatprep.mubr.f32.mxu0 0.0
        %2728 = vmatmul.mubr.f32.gmra.mxu0 %v2496
        %v2729 = vpop.f32.mrf.mxu0
        %v2730 = vadd.f32 0.0, %v2729
        %v2731 = vpop.f32.mrf.mxu0
        %2732 = vmatprep.mubr.f32.mxu0 0.0
        %2733 = vmatmul.mubr.f32.gmra.mxu0 %v2498
        %v2734 = vpop.f32.mrf.mxu0
        %v2735 = vadd.f32 0.0, %v2734
        %v2736 = vpop.f32.mrf.mxu0
        %2737 = vmatprep.mubr.f32.mxu0 0.0
        %2738 = vmatmul.mubr.f32.gmra.mxu0 %v2500
        %v2739 = vpop.f32.mrf.mxu0
        %v2740 = vadd.f32 0.0, %v2739
        %v2741 = vpop.f32.mrf.mxu0
        %2742 = vdwg.mxu0
        %v2743 = vld [vmem:[#allocation3] sm:$0xff]
        %v2744 = vld [vmem:[#allocation3 + $0x8] sm:$0xff]
        %v2745 = vld [vmem:[#allocation3 + $0x10] sm:$0xff]
        %v2746 = vld [vmem:[#allocation3 + $0x18] sm:$0xff]
        %v2747 = vld [vmem:[#allocation3 + $0x20] sm:$0xff]
        %v2748 = vld [vmem:[#allocation3 + $0x28] sm:$0xff]
        %v2749 = vld [vmem:[#allocation3 + $0x30] sm:$0xff]
        %v2750 = vld [vmem:[#allocation3 + $0x38] sm:$0xff]
        %2752 = vset.pattern.permute.xlu0 0
        %2753 = vperm.xlu0 %2752, %v2422
        %v2754 = vpop.permute.xlu0 %2753
        %2757 = vset.pattern.permute.xlu0 0
        %2758 = vperm.xlu0 %2757, %v2424
        %v2759 = vpop.permute.xlu0 %2758
        %2762 = vset.pattern.permute.xlu0 0
        %2763 = vperm.xlu0 %2762, %v2426
        %v2764 = vpop.permute.xlu0 %2763
        %2767 = vset.pattern.permute.xlu0 0
        %2768 = vperm.xlu0 %2767, %v2428
        %v2769 = vpop.permute.xlu0 %2768
        %2772 = vset.pattern.permute.xlu0 0
        %2773 = vperm.xlu0 %2772, %v2430
        %v2774 = vpop.permute.xlu0 %2773
        %2777 = vset.pattern.permute.xlu0 0
        %2778 = vperm.xlu0 %2777, %v2432
        %v2779 = vpop.permute.xlu0 %2778
        %2782 = vset.pattern.permute.xlu0 0
        %2783 = vperm.xlu0 %2782, %v2434
        %v2784 = vpop.permute.xlu0 %2783
        %2787 = vset.pattern.permute.xlu0 0
        %2788 = vperm.xlu0 %2787, %v2436
        %v2789 = vpop.permute.xlu0 %2788
        %v2791 = vmul.f32 %v2754, %v2743
        %v2792 = vmul.f32 %v2759, %v2744
        %v2793 = vmul.f32 %v2764, %v2745
        %v2794 = vmul.f32 %v2769, %v2746
        %v2795 = vmul.f32 %v2774, %v2747
        %v2796 = vmul.f32 %v2779, %v2748
        %v2797 = vmul.f32 %v2784, %v2749
        %v2798 = vmul.f32 %v2789, %v2750
        %2807 = vrot.lane.b32.xlu0 %v2705, 16
        %v2808 = vpop.permute.xlu0 %2807
        %2809 = vrot.lane.b32.xlu0 %v2710, 16
        %v2810 = vpop.permute.xlu0 %2809
        %2811 = vrot.lane.b32.xlu0 %v2715, 16
        %v2812 = vpop.permute.xlu0 %2811
        %2813 = vrot.lane.b32.xlu0 %v2720, 16
        %v2814 = vpop.permute.xlu0 %2813
        %2815 = vrot.lane.b32.xlu0 %v2725, 16
        %v2816 = vpop.permute.xlu0 %2815
        %2817 = vrot.lane.b32.xlu0 %v2730, 16
        %v2818 = vpop.permute.xlu0 %2817
        %2819 = vrot.lane.b32.xlu0 %v2735, 16
        %v2820 = vpop.permute.xlu0 %2819
        %2821 = vrot.lane.b32.xlu0 %v2740, 16
        %v2822 = vpop.permute.xlu0 %2821
        %v2831 = vadd.f32 %v2791, %v2808
        %v2832 = vadd.f32 %v2792, %v2810
        %v2833 = vadd.f32 %v2793, %v2812
        %v2834 = vadd.f32 %v2794, %v2814
        %v2835 = vadd.f32 %v2795, %v2816
        %v2836 = vadd.f32 %v2796, %v2818
        %v2837 = vadd.f32 %v2797, %v2820
        %v2838 = vadd.f32 %v2798, %v2822
        %vm2839 = vcmask 195712
        %2840 = vst.msk [vmem:[#allocation3] sm:$0xff] %vm2839, %v2831
        %2841 = vst.msk [vmem:[#allocation3 + $0x8] sm:$0xff] %vm2839, %v2832
        %2842 = vst.msk [vmem:[#allocation3 + $0x10] sm:$0xff] %vm2839, %v2833
        %2843 = vst.msk [vmem:[#allocation3 + $0x18] sm:$0xff] %vm2839, %v2834
        %2844 = vst.msk [vmem:[#allocation3 + $0x20] sm:$0xff] %vm2839, %v2835
        %2845 = vst.msk [vmem:[#allocation3 + $0x28] sm:$0xff] %vm2839, %v2836
        %2846 = vst.msk [vmem:[#allocation3 + $0x30] sm:$0xff] %vm2839, %v2837
        %2847 = vst.msk [vmem:[#allocation3 + $0x38] sm:$0xff] %vm2839, %v2838
        %v2848 = vld [vmem:[%s983] sm:$0xff]
        %v2849 = vld [vmem:[%s983 + $0x8] sm:$0xff]
        %v2850 = vld [vmem:[%s983 + $0x10] sm:$0xff]
        %v2851 = vld [vmem:[%s983 + $0x18] sm:$0xff]
        %v2852 = vld [vmem:[%s983 + $0x20] sm:$0xff]
        %v2853 = vld [vmem:[%s983 + $0x28] sm:$0xff]
        %v2854 = vld [vmem:[%s983 + $0x30] sm:$0xff]
        %v2855 = vld [vmem:[%s983 + $0x38] sm:$0xff]
        %v2856 = vld [vmem:[#allocation2] sm:$0xff]
        %v2857 = vld [vmem:[#allocation2 + $0x8] sm:$0xff]
        %v2858 = vld [vmem:[#allocation2 + $0x10] sm:$0xff]
        %v2859 = vld [vmem:[#allocation2 + $0x18] sm:$0xff]
        %v2860 = vld [vmem:[#allocation2 + $0x20] sm:$0xff]
        %v2861 = vld [vmem:[#allocation2 + $0x28] sm:$0xff]
        %v2862 = vld [vmem:[#allocation2 + $0x30] sm:$0xff]
        %v2863 = vld [vmem:[#allocation2 + $0x38] sm:$0xff]
        %v2864 = vld [vmem:[%s460 + $0x18] sm:$0xff]
        %2873 = vrot.lane.b32.xlu0 %v2856, 104
        %v2874 = vpop.permute.xlu0 %2873
        %2875 = vrot.lane.b32.xlu0 %v2857, 104
        %v2876 = vpop.permute.xlu0 %2875
        %2877 = vrot.lane.b32.xlu0 %v2858, 104
        %v2878 = vpop.permute.xlu0 %2877
        %2879 = vrot.lane.b32.xlu0 %v2859, 104
        %v2880 = vpop.permute.xlu0 %2879
        %2881 = vrot.lane.b32.xlu0 %v2860, 104
        %v2882 = vpop.permute.xlu0 %2881
        %2883 = vrot.lane.b32.xlu0 %v2861, 104
        %v2884 = vpop.permute.xlu0 %2883
        %2885 = vrot.lane.b32.xlu0 %v2862, 104
        %v2886 = vpop.permute.xlu0 %2885
        %2887 = vrot.lane.b32.xlu0 %v2863, 104
        %v2888 = vpop.permute.xlu0 %2887
        %v2889 = vsel %vm1010, %v2874, 0
        %v2891 = vsel %vm1010, %v2876, 0
        %v2893 = vsel %vm1010, %v2878, 0
        %v2895 = vsel %vm1010, %v2880, 0
        %v2897 = vsel %vm1010, %v2882, 0
        %v2899 = vsel %vm1010, %v2884, 0
        %v2901 = vsel %vm1010, %v2886, 0
        %v2903 = vsel %vm1010, %v2888, 0
        %2905 = vmatprep.subr.mxu0 0.0
        %2906 = vmatpush1.msra.mxu0 0.0
        %2907 = vmatprep.subr.mxu0 0.0
        %2908 = vmatpush1.msra.mxu0 0.0
        %2909 = vmatprep.subr.mxu0 0.0
        %2910 = vmatpush1.msra.mxu0 0.0
        %2911 = vmatprep.subr.mxu0 0.0
        %2912 = vmatpush1.msra.mxu0 0.0
        %2913 = vmatprep.subr.mxu0 0.0
        %2914 = vmatpush1.msra.mxu0 0.0
        %2915 = vmatprep.subr.mxu0 0.0
        %2916 = vmatpush1.msra.mxu0 0.0
        %2917 = vmatprep.subr.mxu0 0.0
        %2918 = vmatpush1.msra.mxu0 0.0
        %2919 = vmatprep.subr.mxu0 0.0
        %2920 = vmatpush1.msra.mxu0 0.0
        %2921 = vmatprep.subr.mxu0 0.0
        %2922 = vmatpush1.msra.mxu0 0.0
        %2923 = vmatprep.subr.mxu0 0.0
        %2924 = vmatpush1.msra.mxu0 0.0
        %2925 = vmatprep.subr.mxu0 0.0
        %2926 = vmatpush1.msra.mxu0 0.0
        %2927 = vmatprep.subr.mxu0 0.0
        %2928 = vmatpush1.msra.mxu0 0.0
        %2929 = vmatprep.subr.mxu0 0.0
        %2930 = vmatpush1.msra.mxu0 0.0
        %2931 = vmatprep.subr.mxu0 0.0
        %2932 = vmatpush1.msra.mxu0 0.0
        %2933 = vmatprep.subr.mxu0 0.0
        %2934 = vmatpush1.msra.mxu0 0.0
        %2935 = vmatprep.subr.mxu0 0.0
        %2936 = vmatpush1.msra.mxu0 %v2864
        %2937 = vmatprep.subr.mxu0 0.0
        %2938 = vmatpush2.msra.mxu0 0.0
        %2939 = vmatprep.subr.mxu0 0.0
        %2940 = vmatpush2.msra.mxu0 0.0
        %2941 = vmatprep.subr.mxu0 0.0
        %2942 = vmatpush2.msra.mxu0 0.0
        %2943 = vmatprep.subr.mxu0 0.0
        %2944 = vmatpush2.msra.mxu0 0.0
        %2945 = vmatprep.subr.mxu0 0.0
        %2946 = vmatpush2.msra.mxu0 0.0
        %2947 = vmatprep.subr.mxu0 0.0
        %2948 = vmatpush2.msra.mxu0 0.0
        %2949 = vmatprep.subr.mxu0 0.0
        %2950 = vmatpush2.msra.mxu0 0.0
        %2951 = vmatprep.subr.mxu0 0.0
        %2952 = vmatpush2.msra.mxu0 0.0
        %2953 = vmatprep.subr.mxu0 0.0
        %2954 = vmatpush2.msra.mxu0 0.0
        %2955 = vmatprep.subr.mxu0 0.0
        %2956 = vmatpush2.msra.mxu0 0.0
        %2957 = vmatprep.subr.mxu0 0.0
        %2958 = vmatpush2.msra.mxu0 0.0
        %2959 = vmatprep.subr.mxu0 0.0
        %2960 = vmatpush2.msra.mxu0 0.0
        %2961 = vmatprep.subr.mxu0 0.0
        %2962 = vmatpush2.msra.mxu0 0.0
        %2963 = vmatprep.subr.mxu0 0.0
        %2964 = vmatpush2.msra.mxu0 0.0
        %2965 = vmatprep.subr.mxu0 0.0
        %2966 = vmatpush2.msra.mxu0 0.0
        %2967 = vmatprep.subr.mxu0 0.0
        %2968 = vmatpush2.msra.mxu0 0.0
        %2969 = vmatprep.mubr.f32.mxu0 0.0
        %2970 = vmatmul.mubr.f32.gmra.mxu0 %v2889
        %v2971 = vpop.f32.mrf.mxu0
        %v2972 = vadd.f32 0.0, %v2971
        %v2973 = vpop.f32.mrf.mxu0
        %2974 = vmatprep.mubr.f32.mxu0 0.0
        %2975 = vmatmul.mubr.f32.gmra.mxu0 %v2891
        %v2976 = vpop.f32.mrf.mxu0
        %v2977 = vadd.f32 0.0, %v2976
        %v2978 = vpop.f32.mrf.mxu0
        %2979 = vmatprep.mubr.f32.mxu0 0.0
        %2980 = vmatmul.mubr.f32.gmra.mxu0 %v2893
        %v2981 = vpop.f32.mrf.mxu0
        %v2982 = vadd.f32 0.0, %v2981
        %v2983 = vpop.f32.mrf.mxu0
        %2984 = vmatprep.mubr.f32.mxu0 0.0
        %2985 = vmatmul.mubr.f32.gmra.mxu0 %v2895
        %v2986 = vpop.f32.mrf.mxu0
        %v2987 = vadd.f32 0.0, %v2986
        %v2988 = vpop.f32.mrf.mxu0
        %2989 = vmatprep.mubr.f32.mxu0 0.0
        %2990 = vmatmul.mubr.f32.gmra.mxu0 %v2897
        %v2991 = vpop.f32.mrf.mxu0
        %v2992 = vadd.f32 0.0, %v2991
        %v2993 = vpop.f32.mrf.mxu0
        %2994 = vmatprep.mubr.f32.mxu0 0.0
        %2995 = vmatmul.mubr.f32.gmra.mxu0 %v2899
        %v2996 = vpop.f32.mrf.mxu0
        %v2997 = vadd.f32 0.0, %v2996
        %v2998 = vpop.f32.mrf.mxu0
        %2999 = vmatprep.mubr.f32.mxu0 0.0
        %3000 = vmatmul.mubr.f32.gmra.mxu0 %v2901
        %v3001 = vpop.f32.mrf.mxu0
        %v3002 = vadd.f32 0.0, %v3001
        %v3003 = vpop.f32.mrf.mxu0
        %3004 = vmatprep.mubr.f32.mxu0 0.0
        %3005 = vmatmul.mubr.f32.gmra.mxu0 %v2903
        %v3006 = vpop.f32.mrf.mxu0
        %v3007 = vadd.f32 0.0, %v3006
        %v3008 = vpop.f32.mrf.mxu0
        %3009 = vdwg.mxu0
        %v3010 = vmul.f32 %v2848, 0.00390625
        %v3011 = vmul.f32 %v2849, 0.00390625
        %v3012 = vmul.f32 %v2850, 0.00390625
        %v3013 = vmul.f32 %v2851, 0.00390625
        %v3014 = vmul.f32 %v2852, 0.00390625
        %v3015 = vmul.f32 %v2853, 0.00390625
        %v3016 = vmul.f32 %v2854, 0.00390625
        %v3017 = vmul.f32 %v2855, 0.00390625
        %v3018 = vsub.f32 %v2972, %v3010
        %v3019 = vsub.f32 %v2977, %v3011
        %v3020 = vsub.f32 %v2982, %v3012
        %v3021 = vsub.f32 %v2987, %v3013
        %v3022 = vsub.f32 %v2992, %v3014
        %v3023 = vsub.f32 %v2997, %v3015
        %v3024 = vsub.f32 %v3002, %v3016
        %v3025 = vsub.f32 %v3007, %v3017
        %v3026 = vadd.f32 %v3018, %v1160
        %v3027 = vadd.f32 %v3019, %v1160
        %v3028 = vadd.f32 %v3020, %v1160
        %v3029 = vadd.f32 %v3021, %v1160
        %v3030 = vadd.f32 %v3022, %v1160
        %v3031 = vadd.f32 %v3023, %v1160
        %v3032 = vadd.f32 %v3024, %v1160
        %v3033 = vadd.f32 %v3025, %v1160
        %s3034 = scalar_lea.vmem [#allocation4], 192
        %v3035 = vld [vmem:[%s3034] sm:$0xff]
        %v3036 = vld [vmem:[%s3034 + $0x8] sm:$0xff]
        %v3037 = vld [vmem:[%s3034 + $0x10] sm:$0xff]
        %v3038 = vld [vmem:[%s3034 + $0x18] sm:$0xff]
        %v3039 = vld [vmem:[%s3034 + $0x20] sm:$0xff]
        %v3040 = vld [vmem:[%s3034 + $0x28] sm:$0xff]
        %v3041 = vld [vmem:[%s3034 + $0x30] sm:$0xff]
        %v3042 = vld [vmem:[%s3034 + $0x38] sm:$0xff]
        %3043 = vmax.xlane.f32.xlu0 %v3026
        %v3044 = vpop.xlane.xlu0 %3043
        %3045 = vmax.xlane.f32.xlu0 %v3027
        %v3046 = vpop.xlane.xlu0 %3045
        %3047 = vmax.xlane.f32.xlu0 %v3028
        %v3048 = vpop.xlane.xlu0 %3047
        %3049 = vmax.xlane.f32.xlu0 %v3029
        %v3050 = vpop.xlane.xlu0 %3049
        %3051 = vmax.xlane.f32.xlu0 %v3030
        %v3052 = vpop.xlane.xlu0 %3051
        %3053 = vmax.xlane.f32.xlu0 %v3031
        %v3054 = vpop.xlane.xlu0 %3053
        %3055 = vmax.xlane.f32.xlu0 %v3032
        %v3056 = vpop.xlane.xlu0 %3055
        %3057 = vmax.xlane.f32.xlu0 %v3033
        %v3058 = vpop.xlane.xlu0 %3057
        %v3059 = vmax.f32 %v3035, %v3044
        %v3060 = vmax.f32 %v3036, %v3046
        %v3061 = vmax.f32 %v3037, %v3048
        %v3062 = vmax.f32 %v3038, %v3050
        %v3063 = vmax.f32 %v3039, %v3052
        %v3064 = vmax.f32 %v3040, %v3054
        %v3065 = vmax.f32 %v3041, %v3056
        %v3066 = vmax.f32 %v3042, %v3058
        %v3067 = vsub.f32 %v3035, %v3059
        %v3068 = vsub.f32 %v3036, %v3060
        %v3069 = vsub.f32 %v3037, %v3061
        %v3070 = vsub.f32 %v3038, %v3062
        %v3071 = vsub.f32 %v3039, %v3063
        %v3072 = vsub.f32 %v3040, %v3064
        %v3073 = vsub.f32 %v3041, %v3065
        %v3074 = vsub.f32 %v3042, %v3066
        %v3075 = vmul.f32 %v3067, 1.442695
        %v3076 = vpow.pop %v3075
        %v3077 = vmul.f32 %v3068, 1.442695
        %v3078 = vpow.pop %v3077
        %v3079 = vmul.f32 %v3069, 1.442695
        %v3080 = vpow.pop %v3079
        %v3081 = vmul.f32 %v3070, 1.442695
        %v3082 = vpow.pop %v3081
        %v3083 = vmul.f32 %v3071, 1.442695
        %v3084 = vpow.pop %v3083
        %v3085 = vmul.f32 %v3072, 1.442695
        %v3086 = vpow.pop %v3085
        %v3087 = vmul.f32 %v3073, 1.442695
        %v3088 = vpow.pop %v3087
        %v3089 = vmul.f32 %v3074, 1.442695
        %v3090 = vpow.pop %v3089
        %3092 = vset.pattern.permute.xlu0 0
        %3093 = vperm.xlu0 %3092, %v3059
        %v3094 = vpop.permute.xlu0 %3093
        %3097 = vset.pattern.permute.xlu0 0
        %3098 = vperm.xlu0 %3097, %v3060
        %v3099 = vpop.permute.xlu0 %3098
        %3102 = vset.pattern.permute.xlu0 0
        %3103 = vperm.xlu0 %3102, %v3061
        %v3104 = vpop.permute.xlu0 %3103
        %3107 = vset.pattern.permute.xlu0 0
        %3108 = vperm.xlu0 %3107, %v3062
        %v3109 = vpop.permute.xlu0 %3108
        %3112 = vset.pattern.permute.xlu0 0
        %3113 = vperm.xlu0 %3112, %v3063
        %v3114 = vpop.permute.xlu0 %3113
        %3117 = vset.pattern.permute.xlu0 0
        %3118 = vperm.xlu0 %3117, %v3064
        %v3119 = vpop.permute.xlu0 %3118
        %3122 = vset.pattern.permute.xlu0 0
        %3123 = vperm.xlu0 %3122, %v3065
        %v3124 = vpop.permute.xlu0 %3123
        %3127 = vset.pattern.permute.xlu0 0
        %3128 = vperm.xlu0 %3127, %v3066
        %v3129 = vpop.permute.xlu0 %3128
        %v3131 = vsub.f32 %v3026, %v3094
        %v3132 = vsub.f32 %v3027, %v3099
        %v3133 = vsub.f32 %v3028, %v3104
        %v3134 = vsub.f32 %v3029, %v3109
        %v3135 = vsub.f32 %v3030, %v3114
        %v3136 = vsub.f32 %v3031, %v3119
        %v3137 = vsub.f32 %v3032, %v3124
        %v3138 = vsub.f32 %v3033, %v3129
        %v3139 = vmul.f32 %v3131, 1.442695
        %v3140 = vpow.pop %v3139
        %v3141 = vmul.f32 %v3132, 1.442695
        %v3142 = vpow.pop %v3141
        %v3143 = vmul.f32 %v3133, 1.442695
        %v3144 = vpow.pop %v3143
        %v3145 = vmul.f32 %v3134, 1.442695
        %v3146 = vpow.pop %v3145
        %v3147 = vmul.f32 %v3135, 1.442695
        %v3148 = vpow.pop %v3147
        %v3149 = vmul.f32 %v3136, 1.442695
        %v3150 = vpow.pop %v3149
        %v3151 = vmul.f32 %v3137, 1.442695
        %v3152 = vpow.pop %v3151
        %v3153 = vmul.f32 %v3138, 1.442695
        %v3154 = vpow.pop %v3153
        %s3155 = scalar_lea.vmem [#allocation5], 192
        %v3156 = vld [vmem:[%s3155] sm:$0xff]
        %v3157 = vld [vmem:[%s3155 + $0x8] sm:$0xff]
        %v3158 = vld [vmem:[%s3155 + $0x10] sm:$0xff]
        %v3159 = vld [vmem:[%s3155 + $0x18] sm:$0xff]
        %v3160 = vld [vmem:[%s3155 + $0x20] sm:$0xff]
        %v3161 = vld [vmem:[%s3155 + $0x28] sm:$0xff]
        %v3162 = vld [vmem:[%s3155 + $0x30] sm:$0xff]
        %v3163 = vld [vmem:[%s3155 + $0x38] sm:$0xff]
        %v3164 = vmul.f32 %v3076, %v3156
        %v3165 = vmul.f32 %v3078, %v3157
        %v3166 = vmul.f32 %v3080, %v3158
        %v3167 = vmul.f32 %v3082, %v3159
        %v3168 = vmul.f32 %v3084, %v3160
        %v3169 = vmul.f32 %v3086, %v3161
        %v3170 = vmul.f32 %v3088, %v3162
        %v3171 = vmul.f32 %v3090, %v3163
        %3172 = vadd.xlane.f32.xlu0 %v3140
        %v3173 = vpop.xlane.xlu0 %3172
        %3174 = vadd.xlane.f32.xlu0 %v3142
        %v3175 = vpop.xlane.xlu0 %3174
        %3176 = vadd.xlane.f32.xlu0 %v3144
        %v3177 = vpop.xlane.xlu0 %3176
        %3178 = vadd.xlane.f32.xlu0 %v3146
        %v3179 = vpop.xlane.xlu0 %3178
        %3180 = vadd.xlane.f32.xlu0 %v3148
        %v3181 = vpop.xlane.xlu0 %3180
        %3182 = vadd.xlane.f32.xlu0 %v3150
        %v3183 = vpop.xlane.xlu0 %3182
        %3184 = vadd.xlane.f32.xlu0 %v3152
        %v3185 = vpop.xlane.xlu0 %3184
        %3186 = vadd.xlane.f32.xlu0 %v3154
        %v3187 = vpop.xlane.xlu0 %3186
        %v3188 = vadd.f32 %v3164, %v3173
        %v3189 = vadd.f32 %v3165, %v3175
        %v3190 = vadd.f32 %v3166, %v3177
        %v3191 = vadd.f32 %v3167, %v3179
        %v3192 = vadd.f32 %v3168, %v3181
        %v3193 = vadd.f32 %v3169, %v3183
        %v3194 = vadd.f32 %v3170, %v3185
        %v3195 = vadd.f32 %v3171, %v3187
        %3196 = vst.msk [vmem:[%s3155] sm:$0xff] %vm1330, %v3188
        %3197 = vst.msk [vmem:[%s3155 + $0x8] sm:$0xff] %vm1330, %v3189
        %3198 = vst.msk [vmem:[%s3155 + $0x10] sm:$0xff] %vm1330, %v3190
        %3199 = vst.msk [vmem:[%s3155 + $0x18] sm:$0xff] %vm1330, %v3191
        %3200 = vst.msk [vmem:[%s3155 + $0x20] sm:$0xff] %vm1330, %v3192
        %3201 = vst.msk [vmem:[%s3155 + $0x28] sm:$0xff] %vm1330, %v3193
        %3202 = vst.msk [vmem:[%s3155 + $0x30] sm:$0xff] %vm1330, %v3194
        %3203 = vst.msk [vmem:[%s3155 + $0x38] sm:$0xff] %vm1330, %v3195
        %3204 = vst.msk [vmem:[%s3034] sm:$0xff] %vm1330, %v3059
        %3205 = vst.msk [vmem:[%s3034 + $0x8] sm:$0xff] %vm1330, %v3060
        %3206 = vst.msk [vmem:[%s3034 + $0x10] sm:$0xff] %vm1330, %v3061
        %3207 = vst.msk [vmem:[%s3034 + $0x18] sm:$0xff] %vm1330, %v3062
        %3208 = vst.msk [vmem:[%s3034 + $0x20] sm:$0xff] %vm1330, %v3063
        %3209 = vst.msk [vmem:[%s3034 + $0x28] sm:$0xff] %vm1330, %v3064
        %3210 = vst.msk [vmem:[%s3034 + $0x30] sm:$0xff] %vm1330, %v3065
        %3211 = vst.msk [vmem:[%s3034 + $0x38] sm:$0xff] %vm1330, %v3066
        %v3212 = vld [vmem:[%s551] sm:$0xff]
        %v3213 = vld [vmem:[%s551 + $0x8] sm:$0xff]
        %v3214 = vld [vmem:[%s551 + $0x10] sm:$0xff]
        %v3215 = vld [vmem:[%s551 + $0x18] sm:$0xff]
        %v3216 = vld [vmem:[%s551 + $0x20] sm:$0xff]
        %v3217 = vld [vmem:[%s551 + $0x28] sm:$0xff]
        %v3218 = vld [vmem:[%s551 + $0x30] sm:$0xff]
        %v3219 = vld [vmem:[%s551 + $0x38] sm:$0xff]
        %v3220 = vld [vmem:[%s551 + $0x40] sm:$0xff]
        %v3221 = vld [vmem:[%s551 + $0x48] sm:$0xff]
        %v3222 = vld [vmem:[%s551 + $0x50] sm:$0xff]
        %v3223 = vld [vmem:[%s551 + $0x58] sm:$0xff]
        %v3224 = vld [vmem:[%s551 + $0x60] sm:$0xff]
        %v3225 = vld [vmem:[%s551 + $0x68] sm:$0xff]
        %v3226 = vld [vmem:[%s551 + $0x70] sm:$0xff]
        %v3227 = vld [vmem:[%s551 + $0x78] sm:$0xff]
        %3244 = vrot.lane.b32.xlu0 %v3212, 104
        %v3245 = vpop.permute.xlu0 %3244
        %3246 = vrot.lane.b32.xlu0 %v3213, 104
        %v3247 = vpop.permute.xlu0 %3246
        %3248 = vrot.lane.b32.xlu0 %v3214, 104
        %v3249 = vpop.permute.xlu0 %3248
        %3250 = vrot.lane.b32.xlu0 %v3215, 104
        %v3251 = vpop.permute.xlu0 %3250
        %3252 = vrot.lane.b32.xlu0 %v3216, 104
        %v3253 = vpop.permute.xlu0 %3252
        %3254 = vrot.lane.b32.xlu0 %v3217, 104
        %v3255 = vpop.permute.xlu0 %3254
        %3256 = vrot.lane.b32.xlu0 %v3218, 104
        %v3257 = vpop.permute.xlu0 %3256
        %3258 = vrot.lane.b32.xlu0 %v3219, 104
        %v3259 = vpop.permute.xlu0 %3258
        %3260 = vrot.lane.b32.xlu0 %v3220, 104
        %v3261 = vpop.permute.xlu0 %3260
        %3262 = vrot.lane.b32.xlu0 %v3221, 104
        %v3263 = vpop.permute.xlu0 %3262
        %3264 = vrot.lane.b32.xlu0 %v3222, 104
        %v3265 = vpop.permute.xlu0 %3264
        %3266 = vrot.lane.b32.xlu0 %v3223, 104
        %v3267 = vpop.permute.xlu0 %3266
        %3268 = vrot.lane.b32.xlu0 %v3224, 104
        %v3269 = vpop.permute.xlu0 %3268
        %3270 = vrot.lane.b32.xlu0 %v3225, 104
        %v3271 = vpop.permute.xlu0 %3270
        %3272 = vrot.lane.b32.xlu0 %v3226, 104
        %v3273 = vpop.permute.xlu0 %3272
        %3274 = vrot.lane.b32.xlu0 %v3227, 104
        %v3275 = vpop.permute.xlu0 %3274
        %3292 = vmatprep.subr.mxu0 0.0
        %3293 = vmatpush1.msra.mxu0 %v3275
        %3294 = vmatprep.subr.mxu0 0.0
        %3295 = vmatpush1.msra.mxu0 %v3273
        %3296 = vmatprep.subr.mxu0 0.0
        %3297 = vmatpush1.msra.mxu0 %v3271
        %3298 = vmatprep.subr.mxu0 0.0
        %3299 = vmatpush1.msra.mxu0 %v3269
        %3300 = vmatprep.subr.mxu0 0.0
        %3301 = vmatpush1.msra.mxu0 %v3267
        %3302 = vmatprep.subr.mxu0 0.0
        %3303 = vmatpush1.msra.mxu0 %v3265
        %3304 = vmatprep.subr.mxu0 0.0
        %3305 = vmatpush1.msra.mxu0 %v3263
        %3306 = vmatprep.subr.mxu0 0.0
        %3307 = vmatpush1.msra.mxu0 %v3261
        %3308 = vmatprep.subr.mxu0 0.0
        %3309 = vmatpush1.msra.mxu0 %v3259
        %3310 = vmatprep.subr.mxu0 0.0
        %3311 = vmatpush1.msra.mxu0 %v3257
        %3312 = vmatprep.subr.mxu0 0.0
        %3313 = vmatpush1.msra.mxu0 %v3255
        %3314 = vmatprep.subr.mxu0 0.0
        %3315 = vmatpush1.msra.mxu0 %v3253
        %3316 = vmatprep.subr.mxu0 0.0
        %3317 = vmatpush1.msra.mxu0 %v3251
        %3318 = vmatprep.subr.mxu0 0.0
        %3319 = vmatpush1.msra.mxu0 %v3249
        %3320 = vmatprep.subr.mxu0 0.0
        %3321 = vmatpush1.msra.mxu0 %v3247
        %3322 = vmatprep.subr.mxu0 0.0
        %3323 = vmatpush1.msra.mxu0 %v3245
        %3324 = vmatprep.subr.mxu0 0.0
        %3325 = vmatpush2.msra.mxu0 0.0
        %3326 = vmatprep.subr.mxu0 0.0
        %3327 = vmatpush2.msra.mxu0 0.0
        %3328 = vmatprep.subr.mxu0 0.0
        %3329 = vmatpush2.msra.mxu0 0.0
        %3330 = vmatprep.subr.mxu0 0.0
        %3331 = vmatpush2.msra.mxu0 0.0
        %3332 = vmatprep.subr.mxu0 0.0
        %3333 = vmatpush2.msra.mxu0 0.0
        %3334 = vmatprep.subr.mxu0 0.0
        %3335 = vmatpush2.msra.mxu0 0.0
        %3336 = vmatprep.subr.mxu0 0.0
        %3337 = vmatpush2.msra.mxu0 0.0
        %3338 = vmatprep.subr.mxu0 0.0
        %3339 = vmatpush2.msra.mxu0 0.0
        %3340 = vmatprep.subr.mxu0 0.0
        %3341 = vmatpush2.msra.mxu0 0.0
        %3342 = vmatprep.subr.mxu0 0.0
        %3343 = vmatpush2.msra.mxu0 0.0
        %3344 = vmatprep.subr.mxu0 0.0
        %3345 = vmatpush2.msra.mxu0 0.0
        %3346 = vmatprep.subr.mxu0 0.0
        %3347 = vmatpush2.msra.mxu0 0.0
        %3348 = vmatprep.subr.mxu0 0.0
        %3349 = vmatpush2.msra.mxu0 0.0
        %3350 = vmatprep.subr.mxu0 0.0
        %3351 = vmatpush2.msra.mxu0 0.0
        %3352 = vmatprep.subr.mxu0 0.0
        %3353 = vmatpush2.msra.mxu0 0.0
        %3354 = vmatprep.subr.mxu0 0.0
        %3355 = vmatpush2.msra.mxu0 0.0
        %3356 = vmatprep.mubr.f32.mxu0 0.0
        %3357 = vmatmul.mubr.f32.gmra.mxu0 %v3140
        %v3358 = vpop.f32.mrf.mxu0
        %v3359 = vadd.f32 0.0, %v3358
        %v3360 = vpop.f32.mrf.mxu0
        %3361 = vmatprep.mubr.f32.mxu0 0.0
        %3362 = vmatmul.mubr.f32.gmra.mxu0 %v3142
        %v3363 = vpop.f32.mrf.mxu0
        %v3364 = vadd.f32 0.0, %v3363
        %v3365 = vpop.f32.mrf.mxu0
        %3366 = vmatprep.mubr.f32.mxu0 0.0
        %3367 = vmatmul.mubr.f32.gmra.mxu0 %v3144
        %v3368 = vpop.f32.mrf.mxu0
        %v3369 = vadd.f32 0.0, %v3368
        %v3370 = vpop.f32.mrf.mxu0
        %3371 = vmatprep.mubr.f32.mxu0 0.0
        %3372 = vmatmul.mubr.f32.gmra.mxu0 %v3146
        %v3373 = vpop.f32.mrf.mxu0
        %v3374 = vadd.f32 0.0, %v3373
        %v3375 = vpop.f32.mrf.mxu0
        %3376 = vmatprep.mubr.f32.mxu0 0.0
        %3377 = vmatmul.mubr.f32.gmra.mxu0 %v3148
        %v3378 = vpop.f32.mrf.mxu0
        %v3379 = vadd.f32 0.0, %v3378
        %v3380 = vpop.f32.mrf.mxu0
        %3381 = vmatprep.mubr.f32.mxu0 0.0
        %3382 = vmatmul.mubr.f32.gmra.mxu0 %v3150
        %v3383 = vpop.f32.mrf.mxu0
        %v3384 = vadd.f32 0.0, %v3383
        %v3385 = vpop.f32.mrf.mxu0
        %3386 = vmatprep.mubr.f32.mxu0 0.0
        %3387 = vmatmul.mubr.f32.gmra.mxu0 %v3152
        %v3388 = vpop.f32.mrf.mxu0
        %v3389 = vadd.f32 0.0, %v3388
        %v3390 = vpop.f32.mrf.mxu0
        %3391 = vmatprep.mubr.f32.mxu0 0.0
        %3392 = vmatmul.mubr.f32.gmra.mxu0 %v3154
        %v3393 = vpop.f32.mrf.mxu0
        %v3394 = vadd.f32 0.0, %v3393
        %v3395 = vpop.f32.mrf.mxu0
        %3396 = vdwg.mxu0
        %v3397 = vld [vmem:[#allocation3] sm:$0xff]
        %v3398 = vld [vmem:[#allocation3 + $0x8] sm:$0xff]
        %v3399 = vld [vmem:[#allocation3 + $0x10] sm:$0xff]
        %v3400 = vld [vmem:[#allocation3 + $0x18] sm:$0xff]
        %v3401 = vld [vmem:[#allocation3 + $0x20] sm:$0xff]
        %v3402 = vld [vmem:[#allocation3 + $0x28] sm:$0xff]
        %v3403 = vld [vmem:[#allocation3 + $0x30] sm:$0xff]
        %v3404 = vld [vmem:[#allocation3 + $0x38] sm:$0xff]
        %3406 = vset.pattern.permute.xlu0 0
        %3407 = vperm.xlu0 %3406, %v3076
        %v3408 = vpop.permute.xlu0 %3407
        %3411 = vset.pattern.permute.xlu0 0
        %3412 = vperm.xlu0 %3411, %v3078
        %v3413 = vpop.permute.xlu0 %3412
        %3416 = vset.pattern.permute.xlu0 0
        %3417 = vperm.xlu0 %3416, %v3080
        %v3418 = vpop.permute.xlu0 %3417
        %3421 = vset.pattern.permute.xlu0 0
        %3422 = vperm.xlu0 %3421, %v3082
        %v3423 = vpop.permute.xlu0 %3422
        %3426 = vset.pattern.permute.xlu0 0
        %3427 = vperm.xlu0 %3426, %v3084
        %v3428 = vpop.permute.xlu0 %3427
        %3431 = vset.pattern.permute.xlu0 0
        %3432 = vperm.xlu0 %3431, %v3086
        %v3433 = vpop.permute.xlu0 %3432
        %3436 = vset.pattern.permute.xlu0 0
        %3437 = vperm.xlu0 %3436, %v3088
        %v3438 = vpop.permute.xlu0 %3437
        %3441 = vset.pattern.permute.xlu0 0
        %3442 = vperm.xlu0 %3441, %v3090
        %v3443 = vpop.permute.xlu0 %3442
        %v3445 = vmul.f32 %v3408, %v3397
        %v3446 = vmul.f32 %v3413, %v3398
        %v3447 = vmul.f32 %v3418, %v3399
        %v3448 = vmul.f32 %v3423, %v3400
        %v3449 = vmul.f32 %v3428, %v3401
        %v3450 = vmul.f32 %v3433, %v3402
        %v3451 = vmul.f32 %v3438, %v3403
        %v3452 = vmul.f32 %v3443, %v3404
        %3461 = vrot.lane.b32.xlu0 %v3359, 24
        %v3462 = vpop.permute.xlu0 %3461
        %3463 = vrot.lane.b32.xlu0 %v3364, 24
        %v3464 = vpop.permute.xlu0 %3463
        %3465 = vrot.lane.b32.xlu0 %v3369, 24
        %v3466 = vpop.permute.xlu0 %3465
        %3467 = vrot.lane.b32.xlu0 %v3374, 24
        %v3468 = vpop.permute.xlu0 %3467
        %3469 = vrot.lane.b32.xlu0 %v3379, 24
        %v3470 = vpop.permute.xlu0 %3469
        %3471 = vrot.lane.b32.xlu0 %v3384, 24
        %v3472 = vpop.permute.xlu0 %3471
        %3473 = vrot.lane.b32.xlu0 %v3389, 24
        %v3474 = vpop.permute.xlu0 %3473
        %3475 = vrot.lane.b32.xlu0 %v3394, 24
        %v3476 = vpop.permute.xlu0 %3475
        %v3485 = vadd.f32 %v3445, %v3462
        %v3486 = vadd.f32 %v3446, %v3464
        %v3487 = vadd.f32 %v3447, %v3466
        %v3488 = vadd.f32 %v3448, %v3468
        %v3489 = vadd.f32 %v3449, %v3470
        %v3490 = vadd.f32 %v3450, %v3472
        %v3491 = vadd.f32 %v3451, %v3474
        %v3492 = vadd.f32 %v3452, %v3476
        %vm3493 = vcmask 261312
        %3494 = vst.msk [vmem:[#allocation3] sm:$0xff] %vm3493, %v3485
        %3495 = vst.msk [vmem:[#allocation3 + $0x8] sm:$0xff] %vm3493, %v3486
        %3496 = vst.msk [vmem:[#allocation3 + $0x10] sm:$0xff] %vm3493, %v3487
        %3497 = vst.msk [vmem:[#allocation3 + $0x18] sm:$0xff] %vm3493, %v3488
        %3498 = vst.msk [vmem:[#allocation3 + $0x20] sm:$0xff] %vm3493, %v3489
        %3499 = vst.msk [vmem:[#allocation3 + $0x28] sm:$0xff] %vm3493, %v3490
        %3500 = vst.msk [vmem:[#allocation3 + $0x30] sm:$0xff] %vm3493, %v3491
        %3501 = vst.msk [vmem:[#allocation3 + $0x38] sm:$0xff] %vm3493, %v3492
        %p3502 = scmp.eq.s32.totalorder %s28, 1
        // Predicated region
        $region103: #{tpu_custom_call.1} parent=93 // pred_check
          %p3503 = pneg %p3502
        $region104: #{tpu_custom_call.1} parent=93 // pred_check_branch
          %3505 = sbr.rel (%p3503) target = $region106
        $region105: #{tpu_custom_call.1} parent=93 // pred_region
          %v3506 = vld [vmem:[#allocation5] sm:$0xff]
          %v3507 = vld [vmem:[#allocation5 + $0x8] sm:$0xff]
          %v3508 = vld [vmem:[#allocation5 + $0x10] sm:$0xff]
          %v3509 = vld [vmem:[#allocation5 + $0x18] sm:$0xff]
          %v3510 = vld [vmem:[#allocation5 + $0x20] sm:$0xff]
          %v3511 = vld [vmem:[#allocation5 + $0x28] sm:$0xff]
          %v3512 = vld [vmem:[#allocation5 + $0x30] sm:$0xff]
          %v3513 = vld [vmem:[#allocation5 + $0x38] sm:$0xff]
          %v3514 = vrcp.pop %v3506
          %v3515 = vrcp.pop %v3507
          %v3516 = vrcp.pop %v3508
          %v3517 = vrcp.pop %v3509
          %v3518 = vrcp.pop %v3510
          %v3519 = vrcp.pop %v3511
          %v3520 = vrcp.pop %v3512
          %v3521 = vrcp.pop %v3513
          %v3522 = vmul.f32 %v3506, %v3514
          %v3523 = vmul.f32 %v3507, %v3515
          %v3524 = vmul.f32 %v3508, %v3516
          %v3525 = vmul.f32 %v3509, %v3517
          %v3526 = vmul.f32 %v3510, %v3518
          %v3527 = vmul.f32 %v3511, %v3519
          %v3528 = vmul.f32 %v3512, %v3520
          %v3529 = vmul.f32 %v3513, %v3521
          %v3530 = vsub.f32 2.0, %v3522
          %v3531 = vsub.f32 2.0, %v3523
          %v3532 = vsub.f32 2.0, %v3524
          %v3533 = vsub.f32 2.0, %v3525
          %v3534 = vsub.f32 2.0, %v3526
          %v3535 = vsub.f32 2.0, %v3527
          %v3536 = vsub.f32 2.0, %v3528
          %v3537 = vsub.f32 2.0, %v3529
          %v3538 = vmul.f32 %v3514, %v3530
          %v3539 = vmul.f32 %v3515, %v3531
          %v3540 = vmul.f32 %v3516, %v3532
          %v3541 = vmul.f32 %v3517, %v3533
          %v3542 = vmul.f32 %v3518, %v3534
          %v3543 = vmul.f32 %v3519, %v3535
          %v3544 = vmul.f32 %v3520, %v3536
          %v3545 = vmul.f32 %v3521, %v3537
          %v3546 = vld [vmem:[#allocation3] sm:$0xff]
          %v3547 = vld [vmem:[#allocation3 + $0x8] sm:$0xff]
          %v3548 = vld [vmem:[#allocation3 + $0x10] sm:$0xff]
          %v3549 = vld [vmem:[#allocation3 + $0x18] sm:$0xff]
          %v3550 = vld [vmem:[#allocation3 + $0x20] sm:$0xff]
          %v3551 = vld [vmem:[#allocation3 + $0x28] sm:$0xff]
          %v3552 = vld [vmem:[#allocation3 + $0x30] sm:$0xff]
          %v3553 = vld [vmem:[#allocation3 + $0x38] sm:$0xff]
          %3555 = vset.pattern.permute.xlu0 0
          %3556 = vperm.xlu0 %3555, %v3538
          %v3557 = vpop.permute.xlu0 %3556
          %3560 = vset.pattern.permute.xlu0 0
          %3561 = vperm.xlu0 %3560, %v3539
          %v3562 = vpop.permute.xlu0 %3561
          %3565 = vset.pattern.permute.xlu0 0
          %3566 = vperm.xlu0 %3565, %v3540
          %v3567 = vpop.permute.xlu0 %3566
          %3570 = vset.pattern.permute.xlu0 0
          %3571 = vperm.xlu0 %3570, %v3541
          %v3572 = vpop.permute.xlu0 %3571
          %3575 = vset.pattern.permute.xlu0 0
          %3576 = vperm.xlu0 %3575, %v3542
          %v3577 = vpop.permute.xlu0 %3576
          %3580 = vset.pattern.permute.xlu0 0
          %3581 = vperm.xlu0 %3580, %v3543
          %v3582 = vpop.permute.xlu0 %3581
          %3585 = vset.pattern.permute.xlu0 0
          %3586 = vperm.xlu0 %3585, %v3544
          %v3587 = vpop.permute.xlu0 %3586
          %3590 = vset.pattern.permute.xlu0 0
          %3591 = vperm.xlu0 %3590, %v3545
          %v3592 = vpop.permute.xlu0 %3591
          %v3594 = vmul.f32 %v3546, %v3557
          %v3595 = vmul.f32 %v3547, %v3562
          %v3596 = vmul.f32 %v3548, %v3567
          %v3597 = vmul.f32 %v3549, %v3572
          %v3598 = vmul.f32 %v3550, %v3577
          %v3599 = vmul.f32 %v3551, %v3582
          %v3600 = vmul.f32 %v3552, %v3587
          %v3601 = vmul.f32 %v3553, %v3592
          %3602 = vst.msk [vmem:[#allocation3] sm:$0xff] %vm1010, %v3594
          %3603 = vst.msk [vmem:[#allocation3 + $0x8] sm:$0xff] %vm1010, %v3595
          %3604 = vst.msk [vmem:[#allocation3 + $0x10] sm:$0xff] %vm1010, %v3596
          %3605 = vst.msk [vmem:[#allocation3 + $0x18] sm:$0xff] %vm1010, %v3597
          %3606 = vst.msk [vmem:[#allocation3 + $0x20] sm:$0xff] %vm1010, %v3598
          %3607 = vst.msk [vmem:[#allocation3 + $0x28] sm:$0xff] %vm1010, %v3599
          %3608 = vst.msk [vmem:[#allocation3 + $0x30] sm:$0xff] %vm1010, %v3600
          %3609 = vst.msk [vmem:[#allocation3 + $0x38] sm:$0xff] %vm1010, %v3601
          %v3610 = vld [vmem:[%s1847] sm:$0xff]
          %v3611 = vld [vmem:[%s1847 + $0x8] sm:$0xff]
          %v3612 = vld [vmem:[%s1847 + $0x10] sm:$0xff]
          %v3613 = vld [vmem:[%s1847 + $0x18] sm:$0xff]
          %v3614 = vld [vmem:[%s1847 + $0x20] sm:$0xff]
          %v3615 = vld [vmem:[%s1847 + $0x28] sm:$0xff]
          %v3616 = vld [vmem:[%s1847 + $0x30] sm:$0xff]
          %v3617 = vld [vmem:[%s1847 + $0x38] sm:$0xff]
          %v3618 = vrcp.pop %v3610
          %v3619 = vrcp.pop %v3611
          %v3620 = vrcp.pop %v3612
          %v3621 = vrcp.pop %v3613
          %v3622 = vrcp.pop %v3614
          %v3623 = vrcp.pop %v3615
          %v3624 = vrcp.pop %v3616
          %v3625 = vrcp.pop %v3617
          %v3626 = vmul.f32 %v3610, %v3618
          %v3627 = vmul.f32 %v3611, %v3619
          %v3628 = vmul.f32 %v3612, %v3620
          %v3629 = vmul.f32 %v3613, %v3621
          %v3630 = vmul.f32 %v3614, %v3622
          %v3631 = vmul.f32 %v3615, %v3623
          %v3632 = vmul.f32 %v3616, %v3624
          %v3633 = vmul.f32 %v3617, %v3625
          %v3634 = vsub.f32 2.0, %v3626
          %v3635 = vsub.f32 2.0, %v3627
          %v3636 = vsub.f32 2.0, %v3628
          %v3637 = vsub.f32 2.0, %v3629
          %v3638 = vsub.f32 2.0, %v3630
          %v3639 = vsub.f32 2.0, %v3631
          %v3640 = vsub.f32 2.0, %v3632
          %v3641 = vsub.f32 2.0, %v3633
          %v3642 = vmul.f32 %v3618, %v3634
          %v3643 = vmul.f32 %v3619, %v3635
          %v3644 = vmul.f32 %v3620, %v3636
          %v3645 = vmul.f32 %v3621, %v3637
          %v3646 = vmul.f32 %v3622, %v3638
          %v3647 = vmul.f32 %v3623, %v3639
          %v3648 = vmul.f32 %v3624, %v3640
          %v3649 = vmul.f32 %v3625, %v3641
          %v3650 = vld [vmem:[#allocation3] sm:$0xff]
          %v3651 = vld [vmem:[#allocation3 + $0x8] sm:$0xff]
          %v3652 = vld [vmem:[#allocation3 + $0x10] sm:$0xff]
          %v3653 = vld [vmem:[#allocation3 + $0x18] sm:$0xff]
          %v3654 = vld [vmem:[#allocation3 + $0x20] sm:$0xff]
          %v3655 = vld [vmem:[#allocation3 + $0x28] sm:$0xff]
          %v3656 = vld [vmem:[#allocation3 + $0x30] sm:$0xff]
          %v3657 = vld [vmem:[#allocation3 + $0x38] sm:$0xff]
          %3659 = vset.pattern.permute.xlu0 0
          %3660 = vperm.xlu0 %3659, %v3642
          %v3661 = vpop.permute.xlu0 %3660
          %3664 = vset.pattern.permute.xlu0 0
          %3665 = vperm.xlu0 %3664, %v3643
          %v3666 = vpop.permute.xlu0 %3665
          %3669 = vset.pattern.permute.xlu0 0
          %3670 = vperm.xlu0 %3669, %v3644
          %v3671 = vpop.permute.xlu0 %3670
          %3674 = vset.pattern.permute.xlu0 0
          %3675 = vperm.xlu0 %3674, %v3645
          %v3676 = vpop.permute.xlu0 %3675
          %3679 = vset.pattern.permute.xlu0 0
          %3680 = vperm.xlu0 %3679, %v3646
          %v3681 = vpop.permute.xlu0 %3680
          %3684 = vset.pattern.permute.xlu0 0
          %3685 = vperm.xlu0 %3684, %v3647
          %v3686 = vpop.permute.xlu0 %3685
          %3689 = vset.pattern.permute.xlu0 0
          %3690 = vperm.xlu0 %3689, %v3648
          %v3691 = vpop.permute.xlu0 %3690
          %3694 = vset.pattern.permute.xlu0 0
          %3695 = vperm.xlu0 %3694, %v3649
          %v3696 = vpop.permute.xlu0 %3695
          %v3698 = vmul.f32 %v3650, %v3661
          %v3699 = vmul.f32 %v3651, %v3666
          %v3700 = vmul.f32 %v3652, %v3671
          %v3701 = vmul.f32 %v3653, %v3676
          %v3702 = vmul.f32 %v3654, %v3681
          %v3703 = vmul.f32 %v3655, %v3686
          %v3704 = vmul.f32 %v3656, %v3691
          %v3705 = vmul.f32 %v3657, %v3696
          %3706 = vst.msk [vmem:[#allocation3] sm:$0xff] %vm2185, %v3698
          %3707 = vst.msk [vmem:[#allocation3 + $0x8] sm:$0xff] %vm2185, %v3699
          %3708 = vst.msk [vmem:[#allocation3 + $0x10] sm:$0xff] %vm2185, %v3700
          %3709 = vst.msk [vmem:[#allocation3 + $0x18] sm:$0xff] %vm2185, %v3701
          %3710 = vst.msk [vmem:[#allocation3 + $0x20] sm:$0xff] %vm2185, %v3702
          %3711 = vst.msk [vmem:[#allocation3 + $0x28] sm:$0xff] %vm2185, %v3703
          %3712 = vst.msk [vmem:[#allocation3 + $0x30] sm:$0xff] %vm2185, %v3704
          %3713 = vst.msk [vmem:[#allocation3 + $0x38] sm:$0xff] %vm2185, %v3705
          %v3714 = vld [vmem:[%s2501] sm:$0xff]
          %v3715 = vld [vmem:[%s2501 + $0x8] sm:$0xff]
          %v3716 = vld [vmem:[%s2501 + $0x10] sm:$0xff]
          %v3717 = vld [vmem:[%s2501 + $0x18] sm:$0xff]
          %v3718 = vld [vmem:[%s2501 + $0x20] sm:$0xff]
          %v3719 = vld [vmem:[%s2501 + $0x28] sm:$0xff]
          %v3720 = vld [vmem:[%s2501 + $0x30] sm:$0xff]
          %v3721 = vld [vmem:[%s2501 + $0x38] sm:$0xff]
          %v3722 = vrcp.pop %v3714
          %v3723 = vrcp.pop %v3715
          %v3724 = vrcp.pop %v3716
          %v3725 = vrcp.pop %v3717
          %v3726 = vrcp.pop %v3718
          %v3727 = vrcp.pop %v3719
          %v3728 = vrcp.pop %v3720
          %v3729 = vrcp.pop %v3721
          %v3730 = vmul.f32 %v3714, %v3722
          %v3731 = vmul.f32 %v3715, %v3723
          %v3732 = vmul.f32 %v3716, %v3724
          %v3733 = vmul.f32 %v3717, %v3725
          %v3734 = vmul.f32 %v3718, %v3726
          %v3735 = vmul.f32 %v3719, %v3727
          %v3736 = vmul.f32 %v3720, %v3728
          %v3737 = vmul.f32 %v3721, %v3729
          %v3738 = vsub.f32 2.0, %v3730
          %v3739 = vsub.f32 2.0, %v3731
          %v3740 = vsub.f32 2.0, %v3732
          %v3741 = vsub.f32 2.0, %v3733
          %v3742 = vsub.f32 2.0, %v3734
          %v3743 = vsub.f32 2.0, %v3735
          %v3744 = vsub.f32 2.0, %v3736
          %v3745 = vsub.f32 2.0, %v3737
          %v3746 = vmul.f32 %v3722, %v3738
          %v3747 = vmul.f32 %v3723, %v3739
          %v3748 = vmul.f32 %v3724, %v3740
          %v3749 = vmul.f32 %v3725, %v3741
          %v3750 = vmul.f32 %v3726, %v3742
          %v3751 = vmul.f32 %v3727, %v3743
          %v3752 = vmul.f32 %v3728, %v3744
          %v3753 = vmul.f32 %v3729, %v3745
          %v3754 = vld [vmem:[#allocation3] sm:$0xff]
          %v3755 = vld [vmem:[#allocation3 + $0x8] sm:$0xff]
          %v3756 = vld [vmem:[#allocation3 + $0x10] sm:$0xff]
          %v3757 = vld [vmem:[#allocation3 + $0x18] sm:$0xff]
          %v3758 = vld [vmem:[#allocation3 + $0x20] sm:$0xff]
          %v3759 = vld [vmem:[#allocation3 + $0x28] sm:$0xff]
          %v3760 = vld [vmem:[#allocation3 + $0x30] sm:$0xff]
          %v3761 = vld [vmem:[#allocation3 + $0x38] sm:$0xff]
          %3763 = vset.pattern.permute.xlu0 0
          %3764 = vperm.xlu0 %3763, %v3746
          %v3765 = vpop.permute.xlu0 %3764
          %3768 = vset.pattern.permute.xlu0 0
          %3769 = vperm.xlu0 %3768, %v3747
          %v3770 = vpop.permute.xlu0 %3769
          %3773 = vset.pattern.permute.xlu0 0
          %3774 = vperm.xlu0 %3773, %v3748
          %v3775 = vpop.permute.xlu0 %3774
          %3778 = vset.pattern.permute.xlu0 0
          %3779 = vperm.xlu0 %3778, %v3749
          %v3780 = vpop.permute.xlu0 %3779
          %3783 = vset.pattern.permute.xlu0 0
          %3784 = vperm.xlu0 %3783, %v3750
          %v3785 = vpop.permute.xlu0 %3784
          %3788 = vset.pattern.permute.xlu0 0
          %3789 = vperm.xlu0 %3788, %v3751
          %v3790 = vpop.permute.xlu0 %3789
          %3793 = vset.pattern.permute.xlu0 0
          %3794 = vperm.xlu0 %3793, %v3752
          %v3795 = vpop.permute.xlu0 %3794
          %3798 = vset.pattern.permute.xlu0 0
          %3799 = vperm.xlu0 %3798, %v3753
          %v3800 = vpop.permute.xlu0 %3799
          %v3802 = vmul.f32 %v3754, %v3765
          %v3803 = vmul.f32 %v3755, %v3770
          %v3804 = vmul.f32 %v3756, %v3775
          %v3805 = vmul.f32 %v3757, %v3780
          %v3806 = vmul.f32 %v3758, %v3785
          %v3807 = vmul.f32 %v3759, %v3790
          %v3808 = vmul.f32 %v3760, %v3795
          %v3809 = vmul.f32 %v3761, %v3800
          %3810 = vst.msk [vmem:[#allocation3] sm:$0xff] %vm2839, %v3802
          %3811 = vst.msk [vmem:[#allocation3 + $0x8] sm:$0xff] %vm2839, %v3803
          %3812 = vst.msk [vmem:[#allocation3 + $0x10] sm:$0xff] %vm2839, %v3804
          %3813 = vst.msk [vmem:[#allocation3 + $0x18] sm:$0xff] %vm2839, %v3805
          %3814 = vst.msk [vmem:[#allocation3 + $0x20] sm:$0xff] %vm2839, %v3806
          %3815 = vst.msk [vmem:[#allocation3 + $0x28] sm:$0xff] %vm2839, %v3807
          %3816 = vst.msk [vmem:[#allocation3 + $0x30] sm:$0xff] %vm2839, %v3808
          %3817 = vst.msk [vmem:[#allocation3 + $0x38] sm:$0xff] %vm2839, %v3809
          %v3818 = vld [vmem:[%s3155] sm:$0xff]
          %v3819 = vld [vmem:[%s3155 + $0x8] sm:$0xff]
          %v3820 = vld [vmem:[%s3155 + $0x10] sm:$0xff]
          %v3821 = vld [vmem:[%s3155 + $0x18] sm:$0xff]
          %v3822 = vld [vmem:[%s3155 + $0x20] sm:$0xff]
          %v3823 = vld [vmem:[%s3155 + $0x28] sm:$0xff]
          %v3824 = vld [vmem:[%s3155 + $0x30] sm:$0xff]
          %v3825 = vld [vmem:[%s3155 + $0x38] sm:$0xff]
          %v3826 = vrcp.pop %v3818
          %v3827 = vrcp.pop %v3819
          %v3828 = vrcp.pop %v3820
          %v3829 = vrcp.pop %v3821
          %v3830 = vrcp.pop %v3822
          %v3831 = vrcp.pop %v3823
          %v3832 = vrcp.pop %v3824
          %v3833 = vrcp.pop %v3825
          %v3834 = vmul.f32 %v3818, %v3826
          %v3835 = vmul.f32 %v3819, %v3827
          %v3836 = vmul.f32 %v3820, %v3828
          %v3837 = vmul.f32 %v3821, %v3829
          %v3838 = vmul.f32 %v3822, %v3830
          %v3839 = vmul.f32 %v3823, %v3831
          %v3840 = vmul.f32 %v3824, %v3832
          %v3841 = vmul.f32 %v3825, %v3833
          %v3842 = vsub.f32 2.0, %v3834
          %v3843 = vsub.f32 2.0, %v3835
          %v3844 = vsub.f32 2.0, %v3836
          %v3845 = vsub.f32 2.0, %v3837
          %v3846 = vsub.f32 2.0, %v3838
          %v3847 = vsub.f32 2.0, %v3839
          %v3848 = vsub.f32 2.0, %v3840
          %v3849 = vsub.f32 2.0, %v3841
          %v3850 = vmul.f32 %v3826, %v3842
          %v3851 = vmul.f32 %v3827, %v3843
          %v3852 = vmul.f32 %v3828, %v3844
          %v3853 = vmul.f32 %v3829, %v3845
          %v3854 = vmul.f32 %v3830, %v3846
          %v3855 = vmul.f32 %v3831, %v3847
          %v3856 = vmul.f32 %v3832, %v3848
          %v3857 = vmul.f32 %v3833, %v3849
          %v3858 = vld [vmem:[#allocation3] sm:$0xff]
          %v3859 = vld [vmem:[#allocation3 + $0x8] sm:$0xff]
          %v3860 = vld [vmem:[#allocation3 + $0x10] sm:$0xff]
          %v3861 = vld [vmem:[#allocation3 + $0x18] sm:$0xff]
          %v3862 = vld [vmem:[#allocation3 + $0x20] sm:$0xff]
          %v3863 = vld [vmem:[#allocation3 + $0x28] sm:$0xff]
          %v3864 = vld [vmem:[#allocation3 + $0x30] sm:$0xff]
          %v3865 = vld [vmem:[#allocation3 + $0x38] sm:$0xff]
          %3867 = vset.pattern.permute.xlu0 0
          %3868 = vperm.xlu0 %3867, %v3850
          %v3869 = vpop.permute.xlu0 %3868
          %3872 = vset.pattern.permute.xlu0 0
          %3873 = vperm.xlu0 %3872, %v3851
          %v3874 = vpop.permute.xlu0 %3873
          %3877 = vset.pattern.permute.xlu0 0
          %3878 = vperm.xlu0 %3877, %v3852
          %v3879 = vpop.permute.xlu0 %3878
          %3882 = vset.pattern.permute.xlu0 0
          %3883 = vperm.xlu0 %3882, %v3853
          %v3884 = vpop.permute.xlu0 %3883
          %3887 = vset.pattern.permute.xlu0 0
          %3888 = vperm.xlu0 %3887, %v3854
          %v3889 = vpop.permute.xlu0 %3888
          %3892 = vset.pattern.permute.xlu0 0
          %3893 = vperm.xlu0 %3892, %v3855
          %v3894 = vpop.permute.xlu0 %3893
          %3897 = vset.pattern.permute.xlu0 0
          %3898 = vperm.xlu0 %3897, %v3856
          %v3899 = vpop.permute.xlu0 %3898
          %3902 = vset.pattern.permute.xlu0 0
          %3903 = vperm.xlu0 %3902, %v3857
          %v3904 = vpop.permute.xlu0 %3903
          %v3906 = vmul.f32 %v3858, %v3869
          %v3907 = vmul.f32 %v3859, %v3874
          %v3908 = vmul.f32 %v3860, %v3879
          %v3909 = vmul.f32 %v3861, %v3884
          %v3910 = vmul.f32 %v3862, %v3889
          %v3911 = vmul.f32 %v3863, %v3894
          %v3912 = vmul.f32 %v3864, %v3899
          %v3913 = vmul.f32 %v3865, %v3904
          %3914 = vst.msk [vmem:[#allocation3] sm:$0xff] %vm3493, %v3906
          %3915 = vst.msk [vmem:[#allocation3 + $0x8] sm:$0xff] %vm3493, %v3907
          %3916 = vst.msk [vmem:[#allocation3 + $0x10] sm:$0xff] %vm3493, %v3908
          %3917 = vst.msk [vmem:[#allocation3 + $0x18] sm:$0xff] %vm3493, %v3909
          %3918 = vst.msk [vmem:[#allocation3 + $0x20] sm:$0xff] %vm3493, %v3910
          %3919 = vst.msk [vmem:[#allocation3 + $0x28] sm:$0xff] %vm3493, %v3911
          %3920 = vst.msk [vmem:[#allocation3 + $0x30] sm:$0xff] %vm3493, %v3912
          %3921 = vst.msk [vmem:[#allocation3 + $0x38] sm:$0xff] %vm3493, %v3913
          %v3922 = vld [vmem:[#allocation3] sm:$0xff]
          %v3923 = vld [vmem:[#allocation3 + $0x8] sm:$0xff]
          %v3924 = vld [vmem:[#allocation3 + $0x10] sm:$0xff]
          %v3925 = vld [vmem:[#allocation3 + $0x18] sm:$0xff]
          %v3926 = vld [vmem:[#allocation3 + $0x20] sm:$0xff]
          %v3927 = vld [vmem:[#allocation3 + $0x28] sm:$0xff]
          %v3928 = vld [vmem:[#allocation3 + $0x30] sm:$0xff]
          %v3929 = vld [vmem:[#allocation3 + $0x38] sm:$0xff]
          %v3930 = vld [vmem:[%s3] sm:$0xff]
          %v3931 = vld [vmem:[%s3 + $0x8] sm:$0xff]
          %v3932 = vld [vmem:[%s3 + $0x10] sm:$0xff]
          %v3933 = vld [vmem:[%s3 + $0x18] sm:$0xff]
          %v3934 = vld [vmem:[%s4] sm:$0x1]
          %v3936 = vlaneseq
          %v3937 = vshrl.u32 %v3936, 7
          %v3938 = vsub.s32 0, %v3937
          %v3939 = vrot.slane %v3934, %v3938
          %vm3941 = vcmask 261120
          %v3943 = vsel %vm3941, %v3922, 0
          %v3946 = vsel %vm3941, %v3923, 0
          %v3949 = vsel %vm3941, %v3924, 0
          %v3952 = vsel %vm3941, %v3925, 0
          %v3955 = vsel %vm3941, %v3926, 0
          %v3958 = vsel %vm3941, %v3927, 0
          %v3961 = vsel %vm3941, %v3928, 0
          %v3964 = vsel %vm3941, %v3929, 0
          %3966 = vmatprep.subr.mxu0 0.0
          %3967 = vmatpush1.msra.mxu0 0.0
          %3968 = vmatprep.subr.mxu0 0.0
          %3969 = vmatpush1.msra.mxu0 0.0
          %3970 = vmatprep.subr.mxu0 0.0
          %3971 = vmatpush1.msra.mxu0 0.0
          %3972 = vmatprep.subr.mxu0 0.0
          %3973 = vmatpush1.msra.mxu0 0.0
          %3974 = vmatprep.subr.mxu0 0.0
          %3975 = vmatpush1.msra.mxu0 0.0
          %3976 = vmatprep.subr.mxu0 0.0
          %3977 = vmatpush1.msra.mxu0 0.0
          %3978 = vmatprep.subr.mxu0 0.0
          %3979 = vmatpush1.msra.mxu0 0.0
          %3980 = vmatprep.subr.mxu0 0.0
          %3981 = vmatpush1.msra.mxu0 0.0
          %3982 = vmatprep.subr.mxu0 0.0
          %3983 = vmatpush1.msra.mxu0 0.0
          %3984 = vmatprep.subr.mxu0 0.0
          %3985 = vmatpush1.msra.mxu0 0.0
          %3986 = vmatprep.subr.mxu0 0.0
          %3987 = vmatpush1.msra.mxu0 0.0
          %3988 = vmatprep.subr.mxu0 0.0
          %3989 = vmatpush1.msra.mxu0 0.0
          %3990 = vmatprep.subr.mxu0 0.0
          %3991 = vmatpush1.msra.mxu0 %v3933
          %3992 = vmatprep.subr.mxu0 0.0
          %3993 = vmatpush1.msra.mxu0 %v3932
          %3994 = vmatprep.subr.mxu0 0.0
          %3995 = vmatpush1.msra.mxu0 %v3931
          %3996 = vmatprep.subr.mxu0 0.0
          %3997 = vmatpush1.msra.mxu0 %v3930
          %3998 = vmatprep.subr.mxu0 0.0
          %3999 = vmatpush2.msra.mxu0 0.0
          %4000 = vmatprep.subr.mxu0 0.0
          %4001 = vmatpush2.msra.mxu0 0.0
          %4002 = vmatprep.subr.mxu0 0.0
          %4003 = vmatpush2.msra.mxu0 0.0
          %4004 = vmatprep.subr.mxu0 0.0
          %4005 = vmatpush2.msra.mxu0 0.0
          %4006 = vmatprep.subr.mxu0 0.0
          %4007 = vmatpush2.msra.mxu0 0.0
          %4008 = vmatprep.subr.mxu0 0.0
          %4009 = vmatpush2.msra.mxu0 0.0
          %4010 = vmatprep.subr.mxu0 0.0
          %4011 = vmatpush2.msra.mxu0 0.0
          %4012 = vmatprep.subr.mxu0 0.0
          %4013 = vmatpush2.msra.mxu0 0.0
          %4014 = vmatprep.subr.mxu0 0.0
          %4015 = vmatpush2.msra.mxu0 0.0
          %4016 = vmatprep.subr.mxu0 0.0
          %4017 = vmatpush2.msra.mxu0 0.0
          %4018 = vmatprep.subr.mxu0 0.0
          %4019 = vmatpush2.msra.mxu0 0.0
          %4020 = vmatprep.subr.mxu0 0.0
          %4021 = vmatpush2.msra.mxu0 0.0
          %4022 = vmatprep.subr.mxu0 0.0
          %4023 = vmatpush2.msra.mxu0 0.0
          %4024 = vmatprep.subr.mxu0 0.0
          %4025 = vmatpush2.msra.mxu0 0.0
          %4026 = vmatprep.subr.mxu0 0.0
          %4027 = vmatpush2.msra.mxu0 0.0
          %4028 = vmatprep.subr.mxu0 0.0
          %4029 = vmatpush2.msra.mxu0 0.0
          %4030 = vmatprep.mubr.f32.mxu0 0.0
          %4031 = vmatmul.mubr.f32.gmra.mxu0 %v3943
          %v4032 = vpop.f32.mrf.mxu0
          %v4033 = vadd.f32 %v3939, %v4032
          %v4034 = vpop.f32.mrf.mxu0
          %4035 = vmatprep.mubr.f32.mxu0 0.0
          %4036 = vmatmul.mubr.f32.gmra.mxu0 %v3946
          %v4037 = vpop.f32.mrf.mxu0
          %v4038 = vadd.f32 %v3939, %v4037
          %v4039 = vpop.f32.mrf.mxu0
          %4040 = vmatprep.mubr.f32.mxu0 0.0
          %4041 = vmatmul.mubr.f32.gmra.mxu0 %v3949
          %v4042 = vpop.f32.mrf.mxu0
          %v4043 = vadd.f32 %v3939, %v4042
          %v4044 = vpop.f32.mrf.mxu0
          %4045 = vmatprep.mubr.f32.mxu0 0.0
          %4046 = vmatmul.mubr.f32.gmra.mxu0 %v3952
          %v4047 = vpop.f32.mrf.mxu0
          %v4048 = vadd.f32 %v3939, %v4047
          %v4049 = vpop.f32.mrf.mxu0
          %4050 = vmatprep.mubr.f32.mxu0 0.0
          %4051 = vmatmul.mubr.f32.gmra.mxu0 %v3955
          %v4052 = vpop.f32.mrf.mxu0
          %v4053 = vadd.f32 %v3939, %v4052
          %v4054 = vpop.f32.mrf.mxu0
          %4055 = vmatprep.mubr.f32.mxu0 0.0
          %4056 = vmatmul.mubr.f32.gmra.mxu0 %v3958
          %v4057 = vpop.f32.mrf.mxu0
          %v4058 = vadd.f32 %v3939, %v4057
          %v4059 = vpop.f32.mrf.mxu0
          %4060 = vmatprep.mubr.f32.mxu0 0.0
          %4061 = vmatmul.mubr.f32.gmra.mxu0 %v3961
          %v4062 = vpop.f32.mrf.mxu0
          %v4063 = vadd.f32 %v3939, %v4062
          %v4064 = vpop.f32.mrf.mxu0
          %4065 = vmatprep.mubr.f32.mxu0 0.0
          %4066 = vmatmul.mubr.f32.gmra.mxu0 %v3964
          %v4067 = vpop.f32.mrf.mxu0
          %v4068 = vadd.f32 %v3939, %v4067
          %v4069 = vpop.f32.mrf.mxu0
          %4070 = vdwg.mxu0
          %4071 = vst.msk [vmem:[%s578] sm:$0xff] %vm3941, %v4033
          %4072 = vst.msk [vmem:[%s578 + $0x8] sm:$0xff] %vm3941, %v4038
          %4073 = vst.msk [vmem:[%s578 + $0x10] sm:$0xff] %vm3941, %v4043
          %4074 = vst.msk [vmem:[%s578 + $0x18] sm:$0xff] %vm3941, %v4048
          %4075 = vst.msk [vmem:[%s578 + $0x20] sm:$0xff] %vm3941, %v4053
          %4076 = vst.msk [vmem:[%s578 + $0x28] sm:$0xff] %vm3941, %v4058
          %4077 = vst.msk [vmem:[%s578 + $0x30] sm:$0xff] %vm3941, %v4063
          %4078 = vst.msk [vmem:[%s578 + $0x38] sm:$0xff] %vm3941, %v4068
        $region106: #{tpu_custom_call.1} parent=93 // pred_fallthru
          _
        %s4079 = smul.u32 8, %s27
        %p4080 = scmp.lt.s32.totalorder %s26, 1
        %s4081 = scalar_select %p4080, %s26, 1
        %p4082 = scmp.lt.s32.totalorder %s4079, 31
        %s4083 = scalar_select %p4082, %s4079, 31
        %s4084 = smul.addr %s4081, 32
        %s4085 = sadd.s32 %s4083, %s4084
        %s4086 = smul.addr %s4085, 8
        %s4087 = scalar_lea.vmem %s10, %s4086
        // Predicated region
        $region107: #{tpu_custom_call.1} parent=93 // pred_check
          %p4088 = pneg %p308
        $region108: #{tpu_custom_call.1} parent=93 // pred_check_branch
          %4090 = sbr.rel (%p4088) target = $region110
        $region109: #{tpu_custom_call.1} parent=93 // pred_region
          %s4091 = smul.u32 8, %s27
        $region110: #{tpu_custom_call.1} parent=93 // pred_fallthru
          _
      $region94: #{tpu_custom_call.1} parent=5 // pred_fallthru
        _
      %p4092 = scmp.le.s32.totalorder 2, %s16
      // Predicated region
      $region111: #{tpu_custom_call.1} parent=5 // pred_check
        %p4093 = pneg %p4092
      $region112: #{tpu_custom_call.1} parent=5 // pred_check_branch
        %4095 = sbr.rel (%p4093) target = $region114
      $region113: #{tpu_custom_call.1} parent=5 // pred_region
        %s4096 = ssub.s32 %s16, 2
        // Predicated region
        $region115: #{tpu_custom_call.1} parent=113 // pred_check
          %p4097 = pneg %p314
        $region116: #{tpu_custom_call.1} parent=113 // pred_check_branch
          %4099 = sbr.rel (%p4097) target = $region118
        $region117: #{tpu_custom_call.1} parent=113 // pred_region
          %s4100 = smul.u32 8, %s30
          %p4101 = scmp.lt.s32.totalorder %s29, 1
          %s4102 = scalar_select %p4101, %s29, 1
          %p4103 = scmp.lt.s32.totalorder %s4100, 31
          %s4104 = scalar_select %p4103, %s4100, 31
          %s4105 = smul.addr %s4102, 32
          %s4106 = sadd.s32 %s4104, %s4105
          %s4107 = smul.addr %s4106, 8
          %s4108 = scalar_lea.vmem %s10, %s4107
        $region118: #{tpu_custom_call.1} parent=113 // pred_fallthru
          _
      $region114: #{tpu_custom_call.1} parent=5 // pred_fallthru
        _
    $region6: #{tpu_custom_call.1} parent=1 // loop_footer
      %s20 = sadd.s32 1, %s16
    $region7: #{tpu_custom_call.1} parent=1 // loop_footer_branch
      %15 = sbr.rel target = $region3
    $region8: #{tpu_custom_call.1} parent=1 // loop_exit
      _

// kernel: tpu_custom_call.1
$region0: #{tpu_custom_call.1}
  #allocation0 [shape = 'u32[]', space=smem, size = 0x4, offset = 0x4, fixed_abs, tag = 'smem constant byte address 0x4 - core index']
  #allocation1 [shape = 'u32[144,128]{1,0:T(1,128)}', space=vmem, size = 0x12000, scoped, tag = 'internal scratch']
  #allocation2 [shape = 'f32[64,32]{1,0:T(8,128)}', space=vmem, size = 0x8000, scoped, tag = 'scratch operand']
  #allocation3 [shape = 'f32[64,32]{1,0:T(8,128)}', space=vmem, size = 0x8000, scoped, tag = 'scratch operand']
  #allocation4 [shape = 'f32[4,64,1]{2,1,0:T(8,128)}', space=vmem, size = 0x20000, scoped, tag = 'scratch operand']
  #allocation5 [shape = 'f32[4,64,1]{2,1,0:T(8,128)}', space=vmem, size = 0x20000, scoped, tag = 'scratch operand']
  #allocation6 [shape = 'f32[2,64,128]{2,1,0:T(8,128)}', space=vmem, size = 0x10000, scoped, tag = 'scratch operand']
  %s0 = inlined_call_operand.vmem [shape: f32[2,256,32], index: 0, kind: input, shape index: {}]
  %s1 = inlined_call_operand.vmem [shape: f32[32,32], index: 1, kind: input, shape index: {}]
  %s2 = inlined_call_operand.vmem [shape: f32[1,32], index: 2, kind: input, shape index: {}]
  %s3 = inlined_call_operand.vmem [shape: f32[32,32], index: 3, kind: input, shape index: {}]
  %s4 = inlined_call_operand.vmem [shape: f32[1,32], index: 4, kind: input, shape index: {}]
  %s5 = inlined_call_operand.vmem [shape: f32[2,32,256], index: 5, kind: input, shape index: {}]
  %s6 = inlined_call_operand.vmem [shape: f32[2,256,32], index: 6, kind: input, shape index: {}]
  %s7 = inlined_call_operand.vmem [shape: f32[256,2], index: 7, kind: input, shape index: {}]
  %s8 = inlined_call_operand.vmem [shape: f32[2,256], index: 8, kind: input, shape index: {}]
  %s9 = inlined_call_operand.vmem [shape: f32[2,1,1,256], index: 9, kind: input, shape index: {}]
  %s10 = inlined_call_operand.vmem [shape: f32[2,256,32], index: 10, kind: output, shape index: {}]
  %s11 = sld [smem:[#allocation0]]
  $region119: #{tpu_custom_call.1} parent=0
    _
  %s13 = ssub.s32 1, %s11
  %s14 = scalar_select 0, %s13, %s11
  $region1: #{tpu_custom_call.1} parent=0
    #allocation7 [shape = 'u8[32768]{0}', space=vmem, size = 0x8000, scoped, tag = 'input window, operand 5']
    loop: start=0, step=1, limit=18
    $region2: #{tpu_custom_call.1} parent=1 // loop_pre_header
      _
    $region3: #{tpu_custom_call.1} parent=1 // loop_header
      %s16 = sphi 0, %s20
      %p17 = scmp.ge.s32.totalorder %s16, 18
      %s23 = sphi 0, %s42
      %s24 = sphi 0, %s38
      %s25 = sphi 0, %s34
      %s26 = sphi 0, %s23
      %s27 = sphi 0, %s24
      %s28 = sphi 0, %s25
      %s29 = sphi 0, %s26
      %s30 = sphi 0, %s27
      %s31 = sphi 0, %s28
      %s47 = sphi 0, %s49
      %s50 = sphi 0, %s47
      %s51 = sphi 0, %s50
      %s67 = sphi 0, %s51
      %s71 = sphi 0, %s71
      %s73 = sphi 0, %s71
      %s74 = sphi 0, %s73
      %s88 = sphi 0, %s74
      %s92 = sphi 0, %s92
      %s94 = sphi 0, %s92
      %s95 = sphi 0, %s94
      %s109 = sphi 0, %s95
      %s113 = sphi 0, %s113
      %s115 = sphi 0, %s113
      %s116 = sphi 0, %s115
      %s130 = sphi 0, %s116
      %s134 = sphi 0, %s134
      %s136 = sphi 0, %s134
      %s137 = sphi 0, %s136
      %s151 = sphi 0, %s137
      %s159 = sphi 0, %s161
      %s162 = sphi 0, %s159
      %s163 = sphi 0, %s162
      %s179 = sphi 0, %s163
      %s187 = sphi 0, %s189
      %s190 = sphi 0, %s187
      %s191 = sphi 0, %s190
      %s207 = sphi 0, %s191
      %s213 = sphi 0, %s215
      %s216 = sphi 0, %s213
      %s217 = sphi 0, %s216
      %s233 = sphi 0, %s217
      %s239 = sphi 0, %s241
      %s242 = sphi 0, %s239
      %s243 = sphi 0, %s242
      %s259 = sphi 0, %s243
      %s267 = sphi 0, %s269
      %s270 = sphi 0, %s267
      %s271 = sphi 0, %s270
      %s287 = sphi 0, %s271
      %s295 = sphi 0, %s297
      %s298 = sphi 0, %s295
      %s299 = sphi 0, %s298
      %s315 = sphi 0, %s299
    $region4: #{tpu_custom_call.1} parent=1 // loop_header_branch
      %19 = sbr.rel (%p17) target = $region8
    $region5: #{tpu_custom_call.1} parent=1 // loop_body
      %s21 = ssub.s32 %s16, 1
      %s22 = ssub.s32 %s16, 2
      %s32 = sadd.s32 1, %s25
      %p33 = scmp.ge.s32.totalorder %s32, 2
      %s34 = scalar_select %p33, 0, %s32
      %s35 = sadd.s32 1, %s24
      %s36 = scalar_select %p33, %s35, %s24
      %p37 = scmp.ge.s32.totalorder %s36, 4
      %s38 = scalar_select %p37, 0, %s36
      %s39 = sadd.s32 1, %s23
      %s40 = scalar_select %p37, %s39, %s23
      %p41 = scmp.ge.s32.totalorder %s40, 2
      %s42 = scalar_select %p41, 0, %s40
      %s43 = ssub.s32 %s23, %s42
      %s44 = ssub.s32 %s24, %s38
      %s45 = sor.u32 %s43, %s44
      %p46 = scmp.eq.s32.totalorder %s45, 0
      %s48 = sadd.s32 %s47, 1
      %s49 = scalar_select %p46, %s47, %s48
      %p52 = pneg %p46
      %p53 = scmp.eq.s32.totalorder %s16, 15
      %p54 = por %p52, %p53
      %p55 = scmp.ne.s32.totalorder %s47, %s50
      %p56 = scmp.eq.s32.totalorder %s16, 0
      %p57 = por %p55, %p56
      %p58 = scmp.ne.s32.totalorder %s47, %s50
      %p59 = scmp.eq.s32.totalorder %s21, 15
      %p60 = por %p58, %p59
      %p61 = scmp.ne.s32.totalorder %s50, %s51
      %p62 = scmp.eq.s32.totalorder %s21, 0
      %p63 = por %p61, %p62
      %p64 = scmp.ne.s32.totalorder %s50, %s51
      %p65 = scmp.eq.s32.totalorder %s22, 15
      %p66 = por %p64, %p65
      %p68 = scmp.ne.s32.totalorder %s51, %s67
      %p69 = scmp.eq.s32.totalorder %s22, 0
      %p70 = por %p68, %p69
      %s72 = sadd.s32 %s71, 1
      %p75 = scmp.eq.s32.totalorder %s16, 15
      %p76 = scmp.ne.s32.totalorder %s71, %s73
      %p77 = scmp.eq.s32.totalorder %s16, 0
      %p78 = por %p76, %p77
      %p79 = scmp.ne.s32.totalorder %s71, %s73
      %p80 = scmp.eq.s32.totalorder %s21, 15
      %p81 = por %p79, %p80
      %p82 = scmp.ne.s32.totalorder %s73, %s74
      %p83 = scmp.eq.s32.totalorder %s21, 0
      %p84 = por %p82, %p83
      %p85 = scmp.ne.s32.totalorder %s73, %s74
      %p86 = scmp.eq.s32.totalorder %s22, 15
      %p87 = por %p85, %p86
      %p89 = scmp.ne.s32.totalorder %s74, %s88
      %p90 = scmp.eq.s32.totalorder %s22, 0
      %p91 = por %p89, %p90
      %s93 = sadd.s32 %s92, 1
      %p96 = scmp.eq.s32.totalorder %s16, 15
      %p97 = scmp.ne.s32.totalorder %s92, %s94
      %p98 = scmp.eq.s32.totalorder %s16, 0
      %p99 = por %p97, %p98
      %p100 = scmp.ne.s32.totalorder %s92, %s94
      %p101 = scmp.eq.s32.totalorder %s21, 15
      %p102 = por %p100, %p101
      %p103 = scmp.ne.s32.totalorder %s94, %s95
      %p104 = scmp.eq.s32.totalorder %s21, 0
      %p105 = por %p103, %p104
      %p106 = scmp.ne.s32.totalorder %s94, %s95
      %p107 = scmp.eq.s32.totalorder %s22, 15
      %p108 = por %p106, %p107
      %p110 = scmp.ne.s32.totalorder %s95, %s109
      %p111 = scmp.eq.s32.totalorder %s22, 0
      %p112 = por %p110, %p111
      %s114 = sadd.s32 %s113, 1
      %p117 = scmp.eq.s32.totalorder %s16, 15
      %p118 = scmp.ne.s32.totalorder %s113, %s115
      %p119 = scmp.eq.s32.totalorder %s16, 0
      %p120 = por %p118, %p119
      %p121 = scmp.ne.s32.totalorder %s113, %s115
      %p122 = scmp.eq.s32.totalorder %s21, 15
      %p123 = por %p121, %p122
      %p124 = scmp.ne.s32.totalorder %s115, %s116
      %p125 = scmp.eq.s32.totalorder %s21, 0
      %p126 = por %p124, %p125
      %p127 = scmp.ne.s32.totalorder %s115, %s116
      %p128 = scmp.eq.s32.totalorder %s22, 15
      %p129 = por %p127, %p128
      %p131 = scmp.ne.s32.totalorder %s116, %s130
      %p132 = scmp.eq.s32.totalorder %s22, 0
      %p133 = por %p131, %p132
      %s135 = sadd.s32 %s134, 1
      %p138 = scmp.eq.s32.totalorder %s16, 15
      %p139 = scmp.ne.s32.totalorder %s134, %s136
      %p140 = scmp.eq.s32.totalorder %s16, 0
      %p141 = por %p139, %p140
      %p142 = scmp.ne.s32.totalorder %s134, %s136
      %p143 = scmp.eq.s32.totalorder %s21, 15
      %p144 = por %p142, %p143
      %p145 = scmp.ne.s32.totalorder %s136, %s137
      %p146 = scmp.eq.s32.totalorder %s21, 0
      %p147 = por %p145, %p146
      %p148 = scmp.ne.s32.totalorder %s136, %s137
      %p149 = scmp.eq.s32.totalorder %s22, 15
      %p150 = por %p148, %p149
      %p152 = scmp.ne.s32.totalorder %s137, %s151
      %p153 = scmp.eq.s32.totalorder %s22, 0
      %p154 = por %p152, %p153
      %s155 = ssub.s32 %s23, %s42
      %s156 = ssub.s32 %s25, %s34
      %s157 = sor.u32 %s155, %s156
      %p158 = scmp.eq.s32.totalorder %s157, 0
      %s160 = sadd.s32 %s159, 1
      %s161 = scalar_select %p158, %s159, %s160
      %p164 = pneg %p158
      %p165 = scmp.eq.s32.totalorder %s16, 15
      %p166 = por %p164, %p165
      %p167 = scmp.ne.s32.totalorder %s159, %s162
      %p168 = scmp.eq.s32.totalorder %s16, 0
      %p169 = por %p167, %p168
      %p170 = scmp.ne.s32.totalorder %s159, %s162
      %p171 = scmp.eq.s32.totalorder %s21, 15
      %p172 = por %p170, %p171
      %p173 = scmp.ne.s32.totalorder %s162, %s163
      %p174 = scmp.eq.s32.totalorder %s21, 0
      %p175 = por %p173, %p174
      %p176 = scmp.ne.s32.totalorder %s162, %s163
      %p177 = scmp.eq.s32.totalorder %s22, 15
      %p178 = por %p176, %p177
      %p180 = scmp.ne.s32.totalorder %s163, %s179
      %p181 = scmp.eq.s32.totalorder %s22, 0
      %p182 = por %p180, %p181
      %s183 = ssub.s32 %s23, %s42
      %s184 = ssub.s32 %s25, %s34
      %s185 = sor.u32 %s183, %s184
      %p186 = scmp.eq.s32.totalorder %s185, 0
      %s188 = sadd.s32 %s187, 1
      %s189 = scalar_select %p186, %s187, %s188
      %p192 = pneg %p186
      %p193 = scmp.eq.s32.totalorder %s16, 15
      %p194 = por %p192, %p193
      %p195 = scmp.ne.s32.totalorder %s187, %s190
      %p196 = scmp.eq.s32.totalorder %s16, 0
      %p197 = por %p195, %p196
      %p198 = scmp.ne.s32.totalorder %s187, %s190
      %p199 = scmp.eq.s32.totalorder %s21, 15
      %p200 = por %p198, %p199
      %p201 = scmp.ne.s32.totalorder %s190, %s191
      %p202 = scmp.eq.s32.totalorder %s21, 0
      %p203 = por %p201, %p202
      %p204 = scmp.ne.s32.totalorder %s190, %s191
      %p205 = scmp.eq.s32.totalorder %s22, 15
      %p206 = por %p204, %p205
      %p208 = scmp.ne.s32.totalorder %s191, %s207
      %p209 = scmp.eq.s32.totalorder %s22, 0
      %p210 = por %p208, %p209
      %s211 = ssub.s32 %s24, %s38
      %p212 = scmp.eq.s32.totalorder %s211, 0
      %s214 = sadd.s32 %s213, 1
      %s215 = scalar_select %p212, %s213, %s214
      %p218 = pneg %p212
      %p219 = scmp.eq.s32.totalorder %s16, 15
      %p220 = por %p218, %p219
      %p221 = scmp.ne.s32.totalorder %s213, %s216
      %p222 = scmp.eq.s32.totalorder %s16, 0
      %p223 = por %p221, %p222
      %p224 = scmp.ne.s32.totalorder %s213, %s216
      %p225 = scmp.eq.s32.totalorder %s21, 15
      %p226 = por %p224, %p225
      %p227 = scmp.ne.s32.totalorder %s216, %s217
      %p228 = scmp.eq.s32.totalorder %s21, 0
      %p229 = por %p227, %p228
      %p230 = scmp.ne.s32.totalorder %s216, %s217
      %p231 = scmp.eq.s32.totalorder %s22, 15
      %p232 = por %p230, %p231
      %p234 = scmp.ne.s32.totalorder %s217, %s233
      %p235 = scmp.eq.s32.totalorder %s22, 0
      %p236 = por %p234, %p235
      %s237 = ssub.s32 %s25, %s34
      %p238 = scmp.eq.s32.totalorder %s237, 0
      %s240 = sadd.s32 %s239, 1
      %s241 = scalar_select %p238, %s239, %s240
      %p244 = pneg %p238
      %p245 = scmp.eq.s32.totalorder %s16, 15
      %p246 = por %p244, %p245
      %p247 = scmp.ne.s32.totalorder %s239, %s242
      %p248 = scmp.eq.s32.totalorder %s16, 0
      %p249 = por %p247, %p248
      %p250 = scmp.ne.s32.totalorder %s239, %s242
      %p251 = scmp.eq.s32.totalorder %s21, 15
      %p252 = por %p250, %p251
      %p253 = scmp.ne.s32.totalorder %s242, %s243
      %p254 = scmp.eq.s32.totalorder %s21, 0
      %p255 = por %p253, %p254
      %p256 = scmp.ne.s32.totalorder %s242, %s243
      %p257 = scmp.eq.s32.totalorder %s22, 15
      %p258 = por %p256, %p257
      %p260 = scmp.ne.s32.totalorder %s243, %s259
      %p261 = scmp.eq.s32.totalorder %s22, 0
      %p262 = por %p260, %p261
      %s263 = ssub.s32 %s23, %s42
      %s264 = ssub.s32 %s25, %s34
      %s265 = sor.u32 %s263, %s264
      %p266 = scmp.eq.s32.totalorder %s265, 0
      %s268 = sadd.s32 %s267, 1
      %s269 = scalar_select %p266, %s267, %s268
      %p272 = pneg %p266
      %p273 = scmp.eq.s32.totalorder %s16, 15
      %p274 = por %p272, %p273
      %p275 = scmp.ne.s32.totalorder %s267, %s270
      %p276 = scmp.eq.s32.totalorder %s16, 0
      %p277 = por %p275, %p276
      %p278 = scmp.ne.s32.totalorder %s267, %s270
      %p279 = scmp.eq.s32.totalorder %s21, 15
      %p280 = por %p278, %p279
      %p281 = scmp.ne.s32.totalorder %s270, %s271
      %p282 = scmp.eq.s32.totalorder %s21, 0
      %p283 = por %p281, %p282
      %p284 = scmp.ne.s32.totalorder %s270, %s271
      %p285 = scmp.eq.s32.totalorder %s22, 15
      %p286 = por %p284, %p285
      %p288 = scmp.ne.s32.totalorder %s271, %s287
      %p289 = scmp.eq.s32.totalorder %s22, 0
      %p290 = por %p288, %p289
      %s291 = ssub.s32 %s23, %s42
      %s292 = ssub.s32 %s24, %s38
      %s293 = sor.u32 %s291, %s292
      %p294 = scmp.eq.s32.totalorder %s293, 0
      %s296 = sadd.s32 %s295, 1
      %s297 = scalar_select %p294, %s295, %s296
      %p300 = pneg %p294
      %p301 = scmp.eq.s32.totalorder %s16, 15
      %p302 = por %p300, %p301
      %p303 = scmp.ne.s32.totalorder %s295, %s298
      %p304 = scmp.eq.s32.totalorder %s16, 0
      %p305 = por %p303, %p304
      %p306 = scmp.ne.s32.totalorder %s295, %s298
      %p307 = scmp.eq.s32.totalorder %s21, 15
      %p308 = por %p306, %p307
      %p309 = scmp.ne.s32.totalorder %s298, %s299
      %p310 = scmp.eq.s32.totalorder %s21, 0
      %p311 = por %p309, %p310
      %p312 = scmp.ne.s32.totalorder %s298, %s299
      %p313 = scmp.eq.s32.totalorder %s22, 15
      %p314 = por %p312, %p313
      %p316 = scmp.ne.s32.totalorder %s299, %s315
      %p317 = scmp.eq.s32.totalorder %s22, 0
      %p318 = por %p316, %p317
      %p319 = scmp.le.s32.totalorder 1, %s16
      %p320 = scmp.lt.s32.totalorder %s16, 17
      %p321 = pnand %p319, %p320
      %p322 = pneg %p321
      // Predicated region
      $region9: #{tpu_custom_call.1} parent=5 // pred_check
        _
      $region10: #{tpu_custom_call.1} parent=5 // pred_check_branch
        %324 = sbr.rel (%p321) target = $region12
      $region11: #{tpu_custom_call.1} parent=5 // pred_region
        %s325 = ssub.s32 %s16, 1
        // Predicated region
        $region13: #{tpu_custom_call.1} parent=11 // pred_check
          %p326 = pneg %p84
        $region14: #{tpu_custom_call.1} parent=11 // pred_check_branch
          %328 = sbr.rel (%p326) target = $region16
        $region15: #{tpu_custom_call.1} parent=11 // pred_region
          _
        $region16: #{tpu_custom_call.1} parent=11 // pred_fallthru
          _
        // Predicated region
        $region17: #{tpu_custom_call.1} parent=11 // pred_check
          %p329 = pneg %p105
        $region18: #{tpu_custom_call.1} parent=11 // pred_check_branch
          %331 = sbr.rel (%p329) target = $region20
        $region19: #{tpu_custom_call.1} parent=11 // pred_region
          _
        $region20: #{tpu_custom_call.1} parent=11 // pred_fallthru
          _
        // Predicated region
        $region21: #{tpu_custom_call.1} parent=11 // pred_check
          %p332 = pneg %p126
        $region22: #{tpu_custom_call.1} parent=11 // pred_check_branch
          %334 = sbr.rel (%p332) target = $region24
        $region23: #{tpu_custom_call.1} parent=11 // pred_region
          _
        $region24: #{tpu_custom_call.1} parent=11 // pred_fallthru
          _
        // Predicated region
        $region25: #{tpu_custom_call.1} parent=11 // pred_check
          %p335 = pneg %p147
        $region26: #{tpu_custom_call.1} parent=11 // pred_check_branch
          %337 = sbr.rel (%p335) target = $region28
        $region27: #{tpu_custom_call.1} parent=11 // pred_region
          _
        $region28: #{tpu_custom_call.1} parent=11 // pred_fallthru
          _
      $region12: #{tpu_custom_call.1} parent=5 // pred_fallthru
        _
      %p338 = scmp.lt.s32.totalorder %s16, 16
      // Predicated region
      $region29: #{tpu_custom_call.1} parent=5 // pred_check
        %p339 = pneg %p338
      $region30: #{tpu_custom_call.1} parent=5 // pred_check_branch
        %341 = sbr.rel (%p339) target = $region32
      $region31: #{tpu_custom_call.1} parent=5 // pred_region
        // Predicated region
        $region33: #{tpu_custom_call.1} parent=31 // pred_check
          %p342 = pneg %p57
        $region34: #{tpu_custom_call.1} parent=31 // pred_check_branch
          %344 = sbr.rel (%p342) target = $region36
        $region35: #{tpu_custom_call.1} parent=31 // pred_region
          %s345 = smul.u32 8, %s24
          %p346 = scmp.lt.s32.totalorder %s23, 1
          %s347 = scalar_select %p346, %s23, 1
          %p348 = scmp.lt.s32.totalorder %s345, 31
          %s349 = scalar_select %p348, %s345, 31
          %s350 = smul.addr %s347, 32
          %s351 = sadd.s32 %s349, %s350
          %s352 = smul.addr %s351, 8
          %s353 = scalar_lea.vmem %s0, %s352
          %s354 = smul.u32 8, %s24
        $region36: #{tpu_custom_call.1} parent=31 // pred_fallthru
          _
        // Predicated region
        $region37: #{tpu_custom_call.1} parent=31 // pred_check
          %p355 = pneg %p169
        $region38: #{tpu_custom_call.1} parent=31 // pred_check_branch
          %357 = sbr.rel (%p355) target = $region40
        $region39: #{tpu_custom_call.1} parent=31 // pred_region
          %s358 = sand.u32 %s159, 1
          %s359 = sand.u32 %s159, 1
          %s360 = smul.addr %s359, 32
          %s361 = scalar_lea.vmem [#allocation7], %s360
          %s362 = smul.addr %s23, 8
          %s363 = sadd.s32 %s25, %s362
          %s364 = smul.addr %s363, 8
          %s365 = scalar_lea.vmem %s5, %s364
          // Predicated region
          $region41: #{tpu_custom_call.1} parent=39 // pred_check
            _
          $region42: #{tpu_custom_call.1} parent=39 // pred_check_branch
            %367 = sbr.rel (0) target = $region44
          $region43: #{tpu_custom_call.1} parent=39 // pred_region
            // Predicated region
            $region45: #{tpu_custom_call.1} parent=43 // pred_check
              _
            $region46: #{tpu_custom_call.1} parent=43 // pred_check_branch
              %369 = sbr.rel (0) target = $region48
            $region47: #{tpu_custom_call.1} parent=43 // pred_region
              // Predicated region
              $region60: #{tpu_custom_call.1} parent=47 // pred_check
                _
              $region61: #{tpu_custom_call.1} parent=47 // pred_check_branch
                %391 = sbr.rel (0) target = $region63
              $region62: #{tpu_custom_call.1} parent=47 // pred_region
                loop: start=0, step=1, limit=1
                $region64: #{tpu_custom_call.1} parent=62 // loop_pre_header
                  _
                $region65: #{tpu_custom_call.1} parent=62 // loop_header
                  %s393 = sphi 0, %s397
                  %p394 = scmp.ge.s32.totalorder %s393, 1
                  %s398 = sphi %s365, %s365
                  %s399 = sphi %s361, %s361
                $region66: #{tpu_custom_call.1} parent=62 // loop_header_branch
                  %396 = sbr.rel (%p394) target = $region70
                $region67: #{tpu_custom_call.1} parent=62 // loop_body
                  %v400 = vld [vmem:[%s398] sm:$0xff]
                  %401 = vst [vmem:[%s399] sm:$0xff] %v400
                  %v402 = vld [vmem:[%s398 + $0x10] sm:$0xff]
                  %403 = vst [vmem:[%s399 + $0x8] sm:$0xff] %v402
                  %v404 = vld [vmem:[%s398 + $0x20] sm:$0xff]
                  %405 = vst [vmem:[%s399 + $0x10] sm:$0xff] %v404
                  %v406 = vld [vmem:[%s398 + $0x30] sm:$0xff]
                  %407 = vst [vmem:[%s399 + $0x18] sm:$0xff] %v406
                $region68: #{tpu_custom_call.1} parent=62 // loop_footer
                  %s397 = sadd.s32 1, %s393
                $region69: #{tpu_custom_call.1} parent=62 // loop_footer_branch
                  %392 = sbr.rel target = $region65
                $region70: #{tpu_custom_call.1} parent=62 // loop_exit
                  _
              $region63: #{tpu_custom_call.1} parent=47 // pred_fallthru
                _
              // Predicated region
              $region71: #{tpu_custom_call.1} parent=47 // pred_check
                _
              $region72: #{tpu_custom_call.1} parent=47 // pred_check_branch
                %409 = sbr.rel target = $region74
              $region73: #{tpu_custom_call.1} parent=47 // pred_region
                _
              $region74: #{tpu_custom_call.1} parent=47 // pred_fallthru
                _
            $region48: #{tpu_custom_call.1} parent=43 // pred_fallthru
              _
            // Predicated region
            $region49: #{tpu_custom_call.1} parent=43 // pred_check
              _
            $region50: #{tpu_custom_call.1} parent=43 // pred_check_branch
              %371 = sbr.rel target = $region52
            $region51: #{tpu_custom_call.1} parent=43 // pred_region
              %s373 = ssub.s32 256, 1
              loop: start=0, step=1, limit=1
              $region53: #{tpu_custom_call.1} parent=51 // loop_pre_header
                _
              $region54: #{tpu_custom_call.1} parent=51 // loop_header
                %s375 = sphi 0, %s379
                %p376 = scmp.ge.s32.totalorder %s375, 1
                %s380 = sphi %s365, %s365
                %s381 = sphi %s361, %s361
              $region55: #{tpu_custom_call.1} parent=51 // loop_header_branch
                %378 = sbr.rel (%p376) target = $region59
              $region56: #{tpu_custom_call.1} parent=51 // loop_body
                %v382 = vld [vmem:[%s380] sm:%s373]
                %383 = vst [vmem:[%s381] sm:%s373] %v382
                %v384 = vld [vmem:[%s380 + $0x10] sm:%s373]
                %385 = vst [vmem:[%s381 + $0x8] sm:%s373] %v384
                %v386 = vld [vmem:[%s380 + $0x20] sm:%s373]
                %387 = vst [vmem:[%s381 + $0x10] sm:%s373] %v386
                %v388 = vld [vmem:[%s380 + $0x30] sm:%s373]
                %389 = vst [vmem:[%s381 + $0x18] sm:%s373] %v388
              $region57: #{tpu_custom_call.1} parent=51 // loop_footer
                %s379 = sadd.s32 1, %s375
              $region58: #{tpu_custom_call.1} parent=51 // loop_footer_branch
                %374 = sbr.rel target = $region54
              $region59: #{tpu_custom_call.1} parent=51 // loop_exit
                _
            $region52: #{tpu_custom_call.1} parent=43 // pred_fallthru
              _
          $region44: #{tpu_custom_call.1} parent=39 // pred_fallthru
            _
          %410 = vnop
        $region40: #{tpu_custom_call.1} parent=31 // pred_fallthru
          _
        // Predicated region
        $region75: #{tpu_custom_call.1} parent=31 // pred_check
          %p411 = pneg %p197
        $region76: #{tpu_custom_call.1} parent=31 // pred_check_branch
          %413 = sbr.rel (%p411) target = $region78
        $region77: #{tpu_custom_call.1} parent=31 // pred_region
          %s414 = smul.u32 16, %s25
          %p415 = scmp.lt.s32.totalorder %s23, 1
          %s416 = scalar_select %p415, %s23, 1
          %p417 = scmp.lt.s32.totalorder %s414, 31
          %s418 = scalar_select %p417, %s414, 31
          %s419 = smul.addr %s416, 32
          %s420 = sadd.s32 %s418, %s419
          %s421 = smul.addr %s420, 8
          %s422 = scalar_lea.vmem %s6, %s421
          %s423 = smul.u32 16, %s25
        $region78: #{tpu_custom_call.1} parent=31 // pred_fallthru
          _
        // Predicated region
        $region79: #{tpu_custom_call.1} parent=31 // pred_check
          %p424 = pneg %p223
        $region80: #{tpu_custom_call.1} parent=31 // pred_check_branch
          %426 = sbr.rel (%p424) target = $region82
        $region81: #{tpu_custom_call.1} parent=31 // pred_region
          %s427 = smul.u32 8, %s24
          %p428 = scmp.lt.s32.totalorder %s427, 31
          %s429 = scalar_select %p428, %s427, 31
          %s430 = smul.addr %s429, 8
          %s431 = scalar_lea.vmem %s7, %s430
          %s432 = smul.u32 8, %s24
        $region82: #{tpu_custom_call.1} parent=31 // pred_fallthru
          _
        // Predicated region
        $region83: #{tpu_custom_call.1} parent=31 // pred_check
          %p433 = pneg %p249
        $region84: #{tpu_custom_call.1} parent=31 // pred_check_branch
          %435 = sbr.rel (%p433) target = $region86
        $region85: #{tpu_custom_call.1} parent=31 // pred_region
          %p436 = scmp.lt.s32.totalorder %s25, 1
          %s437 = scalar_select %p436, %s25, 1
          %s438 = smul.addr %s437, 2
          %s439 = scalar_lea.vmem %s8, %s438
        $region86: #{tpu_custom_call.1} parent=31 // pred_fallthru
          _
        // Predicated region
        $region87: #{tpu_custom_call.1} parent=31 // pred_check
          %p440 = pneg %p277
        $region88: #{tpu_custom_call.1} parent=31 // pred_check_branch
          %442 = sbr.rel (%p440) target = $region90
        $region89: #{tpu_custom_call.1} parent=31 // pred_region
          %p443 = scmp.lt.s32.totalorder %s23, 1
          %s444 = scalar_select %p443, %s23, 1
          %p445 = scmp.lt.s32.totalorder %s25, 1
          %s446 = scalar_select %p445, %s25, 1
          %s447 = smul.addr %s444, 2
          %s448 = sadd.s32 %s446, %s447
          %s449 = scalar_lea.vmem %s9, %s448
        $region90: #{tpu_custom_call.1} parent=31 // pred_fallthru
          _
      $region32: #{tpu_custom_call.1} parent=5 // pred_fallthru
        _
      %p450 = scmp.le.s32.totalorder 1, %s16
      %p451 = scmp.lt.s32.totalorder %s16, 17
      %p452 = pnand %p450, %p451
      %p453 = pneg %p452
      // Predicated region
      $region91: #{tpu_custom_call.1} parent=5 // pred_check
        _
      $region92: #{tpu_custom_call.1} parent=5 // pred_check_branch
        %455 = sbr.rel (%p452) target = $region94
      $region93: #{tpu_custom_call.1} parent=5 // pred_region
        %s456 = ssub.s32 %s16, 1
        %s457 = sand.u32 %s162, 1
        %s458 = sand.u32 %s162, 1
        %s459 = smul.addr %s458, 32
        %s460 = scalar_lea.vmem [#allocation7], %s459
        // Predicated region
        $region95: #{tpu_custom_call.1} parent=93 // pred_check
          %p461 = pneg %p175
        $region96: #{tpu_custom_call.1} parent=93 // pred_check_branch
          %463 = sbr.rel (%p461) target = $region98
        $region97: #{tpu_custom_call.1} parent=93 // pred_region
          _
        $region98: #{tpu_custom_call.1} parent=93 // pred_fallthru
          _
        %s464 = smul.u32 8, %s27
        %p465 = scmp.lt.s32.totalorder %s26, 1
        %s466 = scalar_select %p465, %s26, 1
        %p467 = scmp.lt.s32.totalorder %s464, 31
        %s468 = scalar_select %p467, %s464, 31
        %s469 = smul.addr %s466, 32
        %s470 = sadd.s32 %s468, %s469
        %s471 = smul.addr %s470, 8
        %s472 = scalar_lea.vmem %s0, %s471
        %p473 = pneg %p63
        %p474 = pneg %p60
        %p475 = pneg %p84
        %p476 = pneg %p81
        %p477 = pneg %p105
        %p478 = pneg %p102
        %p479 = pneg %p126
        %p480 = pneg %p123
        %p481 = pneg %p147
        %p482 = pneg %p144
        %s483 = sand.u32 %s162, 1
        %s484 = sand.u32 %s162, 1
        %s485 = smul.addr %s484, 32
        %s486 = scalar_lea.vmem [#allocation7], %s485
        %p487 = pneg %p175
        %p488 = pneg %p172
        %s489 = smul.u32 16, %s28
        %p490 = scmp.lt.s32.totalorder %s26, 1
        %s491 = scalar_select %p490, %s26, 1
        %p492 = scmp.lt.s32.totalorder %s489, 31
        %s493 = scalar_select %p492, %s489, 31
        %s494 = smul.addr %s491, 32
        %s495 = sadd.s32 %s493, %s494
        %s496 = smul.addr %s495, 8
        %s497 = scalar_lea.vmem %s6, %s496
        %p498 = pneg %p203
        %p499 = pneg %p200
        %s500 = smul.u32 8, %s27
        %p501 = scmp.lt.s32.totalorder %s500, 31
        %s502 = scalar_select %p501, %s500, 31
        %s503 = smul.addr %s502, 8
        %s504 = scalar_lea.vmem %s7, %s503
        %p505 = pneg %p229
        %p506 = pneg %p226
        %p507 = scmp.lt.s32.totalorder %s28, 1
        %s508 = scalar_select %p507, %s28, 1
        %s509 = smul.addr %s508, 2
        %s510 = scalar_lea.vmem %s8, %s509
        %p511 = pneg %p255
        %p512 = pneg %p252
        %p513 = scmp.lt.s32.totalorder %s26, 1
        %s514 = scalar_select %p513, %s26, 1
        %p515 = scmp.lt.s32.totalorder %s28, 1
        %s516 = scalar_select %p515, %s28, 1
        %s517 = smul.addr %s514, 2
        %s518 = sadd.s32 %s516, %s517
        %s519 = scalar_lea.vmem %s9, %s518
        %p520 = pneg %p283
        %p521 = pneg %p280
        %p522 = pneg %p311
        %p523 = pneg %p308
        %s524 = smul.u32 8, %s27
        %p525 = scmp.lt.s32.totalorder %s26, 1
        %s526 = scalar_select %p525, %s26, 1
        %p527 = scmp.lt.s32.totalorder %s524, 31
        %s528 = scalar_select %p527, %s524, 31
        %s529 = smul.addr %s526, 32
        %s530 = sadd.s32 %s528, %s529
        %s531 = smul.addr %s530, 8
        %s532 = scalar_lea.vmem %s10, %s531
        %s533 = smul.u32 8, %s27
        %p534 = scmp.lt.s32.totalorder %s26, 1
        %s535 = scalar_select %p534, %s26, 1
        %p536 = scmp.lt.s32.totalorder %s533, 31
        %s537 = scalar_select %p536, %s533, 31
        %s538 = smul.addr %s535, 32
        %s539 = sadd.s32 %s537, %s538
        %s540 = smul.addr %s539, 8
        %s541 = scalar_lea.vmem %s0, %s540
        %s542 = smul.u32 8, %s27
        %s543 = smul.u32 16, %s28
        %p544 = scmp.lt.s32.totalorder %s26, 1
        %s545 = scalar_select %p544, %s26, 1
        %p546 = scmp.lt.s32.totalorder %s543, 31
        %s547 = scalar_select %p546, %s543, 31
        %s548 = smul.addr %s545, 32
        %s549 = sadd.s32 %s547, %s548
        %s550 = smul.addr %s549, 8
        %s551 = scalar_lea.vmem %s6, %s550
        %s552 = smul.u32 16, %s28
        %s553 = smul.u32 8, %s27
        %p554 = scmp.lt.s32.totalorder %s553, 31
        %s555 = scalar_select %p554, %s553, 31
        %s556 = smul.addr %s555, 8
        %s557 = scalar_lea.vmem %s7, %s556
        %s558 = smul.u32 8, %s27
        %p559 = scmp.lt.s32.totalorder %s28, 1
        %s560 = scalar_select %p559, %s28, 1
        %s561 = smul.addr %s560, 2
        %s562 = scalar_lea.vmem %s8, %s561
        %p563 = scmp.lt.s32.totalorder %s26, 1
        %s564 = scalar_select %p563, %s26, 1
        %p565 = scmp.lt.s32.totalorder %s28, 1
        %s566 = scalar_select %p565, %s28, 1
        %s567 = smul.addr %s564, 2
        %s568 = sadd.s32 %s566, %s567
        %s569 = scalar_lea.vmem %s9, %s568
        %s570 = smul.u32 8, %s27
        %p571 = scmp.lt.s32.totalorder %s26, 1
        %s572 = scalar_select %p571, %s26, 1
        %p573 = scmp.lt.s32.totalorder %s570, 31
        %s574 = scalar_select %p573, %s570, 31
        %s575 = smul.addr %s572, 32
        %s576 = sadd.s32 %s574, %s575
        %s577 = smul.addr %s576, 8
        %s578 = scalar_lea.vmem %s10, %s577
        %s579 = smul.u32 8, %s27
        %p580 = scmp.eq.s32.totalorder %s28, 0
        // Predicated region
        $region99: #{tpu_custom_call.1} parent=93 // pred_check
          %p581 = pneg %p580
        $region100: #{tpu_custom_call.1} parent=93 // pred_check_branch
          %583 = sbr.rel (%p581) target = $region102
        $region101: #{tpu_custom_call.1} parent=93 // pred_region
          %v584 = vld [vmem:[%s541] sm:$0xff]
          %v585 = vld [vmem:[%s541 + $0x8] sm:$0xff]
          %v586 = vld [vmem:[%s541 + $0x10] sm:$0xff]
          %v587 = vld [vmem:[%s541 + $0x18] sm:$0xff]
          %v588 = vld [vmem:[%s541 + $0x20] sm:$0xff]
          %v589 = vld [vmem:[%s541 + $0x28] sm:$0xff]
          %v590 = vld [vmem:[%s541 + $0x30] sm:$0xff]
          %v591 = vld [vmem:[%s541 + $0x38] sm:$0xff]
          %v592 = vld [vmem:[%s1] sm:$0xff]
          %v593 = vld [vmem:[%s1 + $0x8] sm:$0xff]
          %v594 = vld [vmem:[%s1 + $0x10] sm:$0xff]
          %v595 = vld [vmem:[%s1 + $0x18] sm:$0xff]
          %v596 = vld [vmem:[%s2] sm:$0x1]
          %v598 = vlaneseq
          %v599 = vshrl.u32 %v598, 7
          %v600 = vsub.s32 0, %v599
          %v601 = vrot.slane %v596, %v600
          %vm603 = vcmask 261120
          %v605 = vsel %vm603, %v584, 0
          %v608 = vsel %vm603, %v585, 0
          %v611 = vsel %vm603, %v586, 0
          %v614 = vsel %vm603, %v587, 0
          %v617 = vsel %vm603, %v588, 0
          %v620 = vsel %vm603, %v589, 0
          %v623 = vsel %vm603, %v590, 0
          %v626 = vsel %vm603, %v591, 0
          %628 = vmatprep.subr.mxu0 0.0
          %629 = vmatpush1.msra.mxu0 0.0
          %630 = vmatprep.subr.mxu0 0.0
          %631 = vmatpush1.msra.mxu0 0.0
          %632 = vmatprep.subr.mxu0 0.0
          %633 = vmatpush1.msra.mxu0 0.0
          %634 = vmatprep.subr.mxu0 0.0
          %635 = vmatpush1.msra.mxu0 0.0
          %636 = vmatprep.subr.mxu0 0.0
          %637 = vmatpush1.msra.mxu0 0.0
          %638 = vmatprep.subr.mxu0 0.0
          %639 = vmatpush1.msra.mxu0 0.0
          %640 = vmatprep.subr.mxu0 0.0
          %641 = vmatpush1.msra.mxu0 0.0
          %642 = vmatprep.subr.mxu0 0.0
          %643 = vmatpush1.msra.mxu0 0.0
          %644 = vmatprep.subr.mxu0 0.0
          %645 = vmatpush1.msra.mxu0 0.0
          %646 = vmatprep.subr.mxu0 0.0
          %647 = vmatpush1.msra.mxu0 0.0
          %648 = vmatprep.subr.mxu0 0.0
          %649 = vmatpush1.msra.mxu0 0.0
          %650 = vmatprep.subr.mxu0 0.0
          %651 = vmatpush1.msra.mxu0 0.0
          %652 = vmatprep.subr.mxu0 0.0
          %653 = vmatpush1.msra.mxu0 %v595
          %654 = vmatprep.subr.mxu0 0.0
          %655 = vmatpush1.msra.mxu0 %v594
          %656 = vmatprep.subr.mxu0 0.0
          %657 = vmatpush1.msra.mxu0 %v593
          %658 = vmatprep.subr.mxu0 0.0
          %659 = vmatpush1.msra.mxu0 %v592
          %660 = vmatprep.subr.mxu0 0.0
          %661 = vmatpush2.msra.mxu0 0.0
          %662 = vmatprep.subr.mxu0 0.0
          %663 = vmatpush2.msra.mxu0 0.0
          %664 = vmatprep.subr.mxu0 0.0
          %665 = vmatpush2.msra.mxu0 0.0
          %666 = vmatprep.subr.mxu0 0.0
          %667 = vmatpush2.msra.mxu0 0.0
          %668 = vmatprep.subr.mxu0 0.0
          %669 = vmatpush2.msra.mxu0 0.0
          %670 = vmatprep.subr.mxu0 0.0
          %671 = vmatpush2.msra.mxu0 0.0
          %672 = vmatprep.subr.mxu0 0.0
          %673 = vmatpush2.msra.mxu0 0.0
          %674 = vmatprep.subr.mxu0 0.0
          %675 = vmatpush2.msra.mxu0 0.0
          %676 = vmatprep.subr.mxu0 0.0
          %677 = vmatpush2.msra.mxu0 0.0
          %678 = vmatprep.subr.mxu0 0.0
          %679 = vmatpush2.msra.mxu0 0.0
          %680 = vmatprep.subr.mxu0 0.0
          %681 = vmatpush2.msra.mxu0 0.0
          %682 = vmatprep.subr.mxu0 0.0
          %683 = vmatpush2.msra.mxu0 0.0
          %684 = vmatprep.subr.mxu0 0.0
          %685 = vmatpush2.msra.mxu0 0.0
          %686 = vmatprep.subr.mxu0 0.0
          %687 = vmatpush2.msra.mxu0 0.0
          %688 = vmatprep.subr.mxu0 0.0
          %689 = vmatpush2.msra.mxu0 0.0
          %690 = vmatprep.subr.mxu0 0.0
          %691 = vmatpush2.msra.mxu0 0.0
          %692 = vmatprep.mubr.f32.mxu0 0.0
          %693 = vmatmul.mubr.f32.gmra.mxu0 %v605
          %v694 = vpop.f32.mrf.mxu0
          %v695 = vadd.f32 %v601, %v694
          %v696 = vpop.f32.mrf.mxu0
          %697 = vmatprep.mubr.f32.mxu0 0.0
          %698 = vmatmul.mubr.f32.gmra.mxu0 %v608
          %v699 = vpop.f32.mrf.mxu0
          %v700 = vadd.f32 %v601, %v699
          %v701 = vpop.f32.mrf.mxu0
          %702 = vmatprep.mubr.f32.mxu0 0.0
          %703 = vmatmul.mubr.f32.gmra.mxu0 %v611
          %v704 = vpop.f32.mrf.mxu0
          %v705 = vadd.f32 %v601, %v704
          %v706 = vpop.f32.mrf.mxu0
          %707 = vmatprep.mubr.f32.mxu0 0.0
          %708 = vmatmul.mubr.f32.gmra.mxu0 %v614
          %v709 = vpop.f32.mrf.mxu0
          %v710 = vadd.f32 %v601, %v709
          %v711 = vpop.f32.mrf.mxu0
          %712 = vmatprep.mubr.f32.mxu0 0.0
          %713 = vmatmul.mubr.f32.gmra.mxu0 %v617
          %v714 = vpop.f32.mrf.mxu0
          %v715 = vadd.f32 %v601, %v714
          %v716 = vpop.f32.mrf.mxu0
          %717 = vmatprep.mubr.f32.mxu0 0.0
          %718 = vmatmul.mubr.f32.gmra.mxu0 %v620
          %v719 = vpop.f32.mrf.mxu0
          %v720 = vadd.f32 %v601, %v719
          %v721 = vpop.f32.mrf.mxu0
          %722 = vmatprep.mubr.f32.mxu0 0.0
          %723 = vmatmul.mubr.f32.gmra.mxu0 %v623
          %v724 = vpop.f32.mrf.mxu0
          %v725 = vadd.f32 %v601, %v724
          %v726 = vpop.f32.mrf.mxu0
          %727 = vmatprep.mubr.f32.mxu0 0.0
          %728 = vmatmul.mubr.f32.gmra.mxu0 %v626
          %v729 = vpop.f32.mrf.mxu0
          %v730 = vadd.f32 %v601, %v729
          %v731 = vpop.f32.mrf.mxu0
          %732 = vdwg.mxu0
          %v733 = vmul.f32 %v695, 0.35355338
          %v734 = vmul.f32 %v700, 0.35355338
          %v735 = vmul.f32 %v705, 0.35355338
          %v736 = vmul.f32 %v710, 0.35355338
          %v737 = vmul.f32 %v715, 0.35355338
          %v738 = vmul.f32 %v720, 0.35355338
          %v739 = vmul.f32 %v725, 0.35355338
          %v740 = vmul.f32 %v730, 0.35355338
          %741 = vst.msk [vmem:[#allocation2] sm:$0xff] %vm603, %v733
          %742 = vst.msk [vmem:[#allocation2 + $0x8] sm:$0xff] %vm603, %v734
          %743 = vst.msk [vmem:[#allocation2 + $0x10] sm:$0xff] %vm603, %v735
          %744 = vst.msk [vmem:[#allocation2 + $0x18] sm:$0xff] %vm603, %v736
          %745 = vst.msk [vmem:[#allocation2 + $0x20] sm:$0xff] %vm603, %v737
          %746 = vst.msk [vmem:[#allocation2 + $0x28] sm:$0xff] %vm603, %v738
          %747 = vst.msk [vmem:[#allocation2 + $0x30] sm:$0xff] %vm603, %v739
          %748 = vst.msk [vmem:[#allocation2 + $0x38] sm:$0xff] %vm603, %v740
          %vm749 = vcmask 7168
          %750 = vst.msk [vmem:[#allocation4] sm:$0xff] %vm749, -1e+30
          %751 = vst.msk [vmem:[#allocation4 + $0x8] sm:$0xff] %vm749, -1e+30
          %752 = vst.msk [vmem:[#allocation4 + $0x10] sm:$0xff] %vm749, -1e+30
          %753 = vst.msk [vmem:[#allocation4 + $0x18] sm:$0xff] %vm749, -1e+30
          %754 = vst.msk [vmem:[#allocation4 + $0x20] sm:$0xff] %vm749, -1e+30
          %755 = vst.msk [vmem:[#allocation4 + $0x28] sm:$0xff] %vm749, -1e+30
          %756 = vst.msk [vmem:[#allocation4 + $0x30] sm:$0xff] %vm749, -1e+30
          %757 = vst.msk [vmem:[#allocation4 + $0x38] sm:$0xff] %vm749, -1e+30
          %758 = vst.msk [vmem:[#allocation4 + $0x40] sm:$0xff] %vm749, -1e+30
          %759 = vst.msk [vmem:[#allocation4 + $0x48] sm:$0xff] %vm749, -1e+30
          %760 = vst.msk [vmem:[#allocation4 + $0x50] sm:$0xff] %vm749, -1e+30
          %761 = vst.msk [vmem:[#allocation4 + $0x58] sm:$0xff] %vm749, -1e+30
          %762 = vst.msk [vmem:[#allocation4 + $0x60] sm:$0xff] %vm749, -1e+30
          %763 = vst.msk [vmem:[#allocation4 + $0x68] sm:$0xff] %vm749, -1e+30
          %764 = vst.msk [vmem:[#allocation4 + $0x70] sm:$0xff] %vm749, -1e+30
          %765 = vst.msk [vmem:[#allocation4 + $0x78] sm:$0xff] %vm749, -1e+30
          %766 = vst.msk [vmem:[#allocation4 + $0x80] sm:$0xff] %vm749, -1e+30
          %767 = vst.msk [vmem:[#allocation4 + $0x88] sm:$0xff] %vm749, -1e+30
          %768 = vst.msk [vmem:[#allocation4 + $0x90] sm:$0xff] %vm749, -1e+30
          %769 = vst.msk [vmem:[#allocation4 + $0x98] sm:$0xff] %vm749, -1e+30
          %770 = vst.msk [vmem:[#allocation4 + $0xa0] sm:$0xff] %vm749, -1e+30
          %771 = vst.msk [vmem:[#allocation4 + $0xa8] sm:$0xff] %vm749, -1e+30
          %772 = vst.msk [vmem:[#allocation4 + $0xb0] sm:$0xff] %vm749, -1e+30
          %773 = vst.msk [vmem:[#allocation4 + $0xb8] sm:$0xff] %vm749, -1e+30
          %774 = vst.msk [vmem:[#allocation4 + $0xc0] sm:$0xff] %vm749, -1e+30
          %775 = vst.msk [vmem:[#allocation4 + $0xc8] sm:$0xff] %vm749, -1e+30
          %776 = vst.msk [vmem:[#allocation4 + $0xd0] sm:$0xff] %vm749, -1e+30
          %777 = vst.msk [vmem:[#allocation4 + $0xd8] sm:$0xff] %vm749, -1e+30
          %778 = vst.msk [vmem:[#allocation4 + $0xe0] sm:$0xff] %vm749, -1e+30
          %779 = vst.msk [vmem:[#allocation4 + $0xe8] sm:$0xff] %vm749, -1e+30
          %780 = vst.msk [vmem:[#allocation4 + $0xf0] sm:$0xff] %vm749, -1e+30
          %781 = vst.msk [vmem:[#allocation4 + $0xf8] sm:$0xff] %vm749, -1e+30
          %782 = vst.msk [vmem:[#allocation5] sm:$0xff] %vm749, 0.0
          %783 = vst.msk [vmem:[#allocation5 + $0x8] sm:$0xff] %vm749, 0.0
          %784 = vst.msk [vmem:[#allocation5 + $0x10] sm:$0xff] %vm749, 0.0
          %785 = vst.msk [vmem:[#allocation5 + $0x18] sm:$0xff] %vm749, 0.0
          %786 = vst.msk [vmem:[#allocation5 + $0x20] sm:$0xff] %vm749, 0.0
          %787 = vst.msk [vmem:[#allocation5 + $0x28] sm:$0xff] %vm749, 0.0
          %788 = vst.msk [vmem:[#allocation5 + $0x30] sm:$0xff] %vm749, 0.0
          %789 = vst.msk [vmem:[#allocation5 + $0x38] sm:$0xff] %vm749, 0.0
          %790 = vst.msk [vmem:[#allocation5 + $0x40] sm:$0xff] %vm749, 0.0
          %791 = vst.msk [vmem:[#allocation5 + $0x48] sm:$0xff] %vm749, 0.0
          %792 = vst.msk [vmem:[#allocation5 + $0x50] sm:$0xff] %vm749, 0.0
          %793 = vst.msk [vmem:[#allocation5 + $0x58] sm:$0xff] %vm749, 0.0
          %794 = vst.msk [vmem:[#allocation5 + $0x60] sm:$0xff] %vm749, 0.0
          %795 = vst.msk [vmem:[#allocation5 + $0x68] sm:$0xff] %vm749, 0.0
          %796 = vst.msk [vmem:[#allocation5 + $0x70] sm:$0xff] %vm749, 0.0
          %797 = vst.msk [vmem:[#allocation5 + $0x78] sm:$0xff] %vm749, 0.0
          %798 = vst.msk [vmem:[#allocation5 + $0x80] sm:$0xff] %vm749, 0.0
          %799 = vst.msk [vmem:[#allocation5 + $0x88] sm:$0xff] %vm749, 0.0
          %800 = vst.msk [vmem:[#allocation5 + $0x90] sm:$0xff] %vm749, 0.0
          %801 = vst.msk [vmem:[#allocation5 + $0x98] sm:$0xff] %vm749, 0.0
          %802 = vst.msk [vmem:[#allocation5 + $0xa0] sm:$0xff] %vm749, 0.0
          %803 = vst.msk [vmem:[#allocation5 + $0xa8] sm:$0xff] %vm749, 0.0
          %804 = vst.msk [vmem:[#allocation5 + $0xb0] sm:$0xff] %vm749, 0.0
          %805 = vst.msk [vmem:[#allocation5 + $0xb8] sm:$0xff] %vm749, 0.0
          %806 = vst.msk [vmem:[#allocation5 + $0xc0] sm:$0xff] %vm749, 0.0
          %807 = vst.msk [vmem:[#allocation5 + $0xc8] sm:$0xff] %vm749, 0.0
          %808 = vst.msk [vmem:[#allocation5 + $0xd0] sm:$0xff] %vm749, 0.0
          %809 = vst.msk [vmem:[#allocation5 + $0xd8] sm:$0xff] %vm749, 0.0
          %810 = vst.msk [vmem:[#allocation5 + $0xe0] sm:$0xff] %vm749, 0.0
          %811 = vst.msk [vmem:[#allocation5 + $0xe8] sm:$0xff] %vm749, 0.0
          %812 = vst.msk [vmem:[#allocation5 + $0xf0] sm:$0xff] %vm749, 0.0
          %813 = vst.msk [vmem:[#allocation5 + $0xf8] sm:$0xff] %vm749, 0.0
          %814 = vst.msk [vmem:[#allocation3] sm:$0xff] %vm603, 0.0
          %815 = vst.msk [vmem:[#allocation3 + $0x8] sm:$0xff] %vm603, 0.0
          %816 = vst.msk [vmem:[#allocation3 + $0x10] sm:$0xff] %vm603, 0.0
          %817 = vst.msk [vmem:[#allocation3 + $0x18] sm:$0xff] %vm603, 0.0
          %818 = vst.msk [vmem:[#allocation3 + $0x20] sm:$0xff] %vm603, 0.0
          %819 = vst.msk [vmem:[#allocation3 + $0x28] sm:$0xff] %vm603, 0.0
          %820 = vst.msk [vmem:[#allocation3 + $0x30] sm:$0xff] %vm603, 0.0
          %821 = vst.msk [vmem:[#allocation3 + $0x38] sm:$0xff] %vm603, 0.0
        $region102: #{tpu_custom_call.1} parent=93 // pred_fallthru
          _
        %v822 = vld [vmem:[%s557] sm:$0xff]
        %v823 = vld [vmem:[%s557 + $0x8] sm:$0xff]
        %v824 = vld [vmem:[%s557 + $0x10] sm:$0xff]
        %v825 = vld [vmem:[%s557 + $0x18] sm:$0xff]
        %v826 = vld [vmem:[%s557 + $0x20] sm:$0xff]
        %v827 = vld [vmem:[%s557 + $0x28] sm:$0xff]
        %v828 = vld [vmem:[%s557 + $0x30] sm:$0xff]
        %v829 = vld [vmem:[%s557 + $0x38] sm:$0xff]
        %v830 = vld [vmem:[%s562] sm:$0x3]
        %832 = vset.pattern.permute.xlu0 0
        %833 = vperm.xlu0 %832, %v822
        %v834 = vpop.permute.xlu0 %833
        %837 = vset.pattern.permute.xlu0 0
        %838 = vperm.xlu0 %837, %v823
        %v839 = vpop.permute.xlu0 %838
        %842 = vset.pattern.permute.xlu0 0
        %843 = vperm.xlu0 %842, %v824
        %v844 = vpop.permute.xlu0 %843
        %847 = vset.pattern.permute.xlu0 0
        %848 = vperm.xlu0 %847, %v825
        %v849 = vpop.permute.xlu0 %848
        %852 = vset.pattern.permute.xlu0 0
        %853 = vperm.xlu0 %852, %v826
        %v854 = vpop.permute.xlu0 %853
        %857 = vset.pattern.permute.xlu0 0
        %858 = vperm.xlu0 %857, %v827
        %v859 = vpop.permute.xlu0 %858
        %862 = vset.pattern.permute.xlu0 0
        %863 = vperm.xlu0 %862, %v828
        %v864 = vpop.permute.xlu0 %863
        %867 = vset.pattern.permute.xlu0 0
        %868 = vperm.xlu0 %867, %v829
        %v869 = vpop.permute.xlu0 %868
        %v871 = vlaneseq
        %v872 = vshrl.u32 %v871, 7
        %v873 = vsub.s32 0, %v872
        %v874 = vrot.slane %v830, %v873
        %v875 = vsub.f32 %v834, %v874
        %v876 = vsub.f32 %v839, %v874
        %v877 = vsub.f32 %v844, %v874
        %v878 = vsub.f32 %v849, %v874
        %v879 = vsub.f32 %v854, %v874
        %v880 = vsub.f32 %v859, %v874
        %v881 = vsub.f32 %v864, %v874
        %v882 = vsub.f32 %v869, %v874
        %v883 = vand.u32 2147483647, %v875
        %v884 = vand.u32 2147483647, %v876
        %v885 = vand.u32 2147483647, %v877
        %v886 = vand.u32 2147483647, %v878
        %v887 = vand.u32 2147483647, %v879
        %v888 = vand.u32 2147483647, %v880
        %v889 = vand.u32 2147483647, %v881
        %v890 = vand.u32 2147483647, %v882
        %891 = vset.pattern.permute.xlu0 1
        %892 = vperm.xlu0 %891, %v822
        %v893 = vpop.permute.xlu0 %892
        %895 = vset.pattern.permute.xlu0 1
        %896 = vperm.xlu0 %895, %v823
        %v897 = vpop.permute.xlu0 %896
        %899 = vset.pattern.permute.xlu0 1
        %900 = vperm.xlu0 %899, %v824
        %v901 = vpop.permute.xlu0 %900
        %903 = vset.pattern.permute.xlu0 1
        %904 = vperm.xlu0 %903, %v825
        %v905 = vpop.permute.xlu0 %904
        %907 = vset.pattern.permute.xlu0 1
        %908 = vperm.xlu0 %907, %v826
        %v909 = vpop.permute.xlu0 %908
        %911 = vset.pattern.permute.xlu0 1
        %912 = vperm.xlu0 %911, %v827
        %v913 = vpop.permute.xlu0 %912
        %915 = vset.pattern.permute.xlu0 1
        %916 = vperm.xlu0 %915, %v828
        %v917 = vpop.permute.xlu0 %916
        %919 = vset.pattern.permute.xlu0 1
        %920 = vperm.xlu0 %919, %v829
        %v921 = vpop.permute.xlu0 %920
        %v923 = vlaneseq
        %v924 = vshrl.u32 %v923, 7
        %v925 = vsub.s32 1, %v924
        %v926 = vrot.slane %v830, %v925
        %v927 = vsub.f32 %v893, %v926
        %v928 = vsub.f32 %v897, %v926
        %v929 = vsub.f32 %v901, %v926
        %v930 = vsub.f32 %v905, %v926
        %v931 = vsub.f32 %v909, %v926
        %v932 = vsub.f32 %v913, %v926
        %v933 = vsub.f32 %v917, %v926
        %v934 = vsub.f32 %v921, %v926
        %v935 = vand.u32 2147483647, %v927
        %v936 = vand.u32 2147483647, %v928
        %v937 = vand.u32 2147483647, %v929
        %v938 = vand.u32 2147483647, %v930
        %v939 = vand.u32 2147483647, %v931
        %v940 = vand.u32 2147483647, %v932
        %v941 = vand.u32 2147483647, %v933
        %v942 = vand.u32 2147483647, %v934
        %v943 = vmul.f32 %v935, 0.5
        %v944 = vmul.f32 %v936, 0.5
        %v945 = vmul.f32 %v937, 0.5
        %v946 = vmul.f32 %v938, 0.5
        %v947 = vmul.f32 %v939, 0.5
        %v948 = vmul.f32 %v940, 0.5
        %v949 = vmul.f32 %v941, 0.5
        %v950 = vmul.f32 %v942, 0.5
        %v951 = vadd.f32 %v883, %v943
        %v952 = vadd.f32 %v884, %v944
        %v953 = vadd.f32 %v885, %v945
        %v954 = vadd.f32 %v886, %v946
        %v955 = vadd.f32 %v887, %v947
        %v956 = vadd.f32 %v888, %v948
        %v957 = vadd.f32 %v889, %v949
        %v958 = vadd.f32 %v890, %v950
        %959 = vst [vmem:[#allocation6] sm:$0xff] %v951
        %960 = vst [vmem:[#allocation6 + $0x8] sm:$0xff] %v952
        %961 = vst [vmem:[#allocation6 + $0x10] sm:$0xff] %v953
        %962 = vst [vmem:[#allocation6 + $0x18] sm:$0xff] %v954
        %963 = vst [vmem:[#allocation6 + $0x20] sm:$0xff] %v955
        %964 = vst [vmem:[#allocation6 + $0x28] sm:$0xff] %v956
        %965 = vst [vmem:[#allocation6 + $0x30] sm:$0xff] %v957
        %966 = vst [vmem:[#allocation6 + $0x38] sm:$0xff] %v958
        %v967 = vmul.f32 %v883, 0.5
        %v968 = vmul.f32 %v884, 0.5
        %v969 = vmul.f32 %v885, 0.5
        %v970 = vmul.f32 %v886, 0.5
        %v971 = vmul.f32 %v887, 0.5
        %v972 = vmul.f32 %v888, 0.5
        %v973 = vmul.f32 %v889, 0.5
        %v974 = vmul.f32 %v890, 0.5
        %v975 = vadd.f32 %v967, %v935
        %v976 = vadd.f32 %v968, %v936
        %v977 = vadd.f32 %v969, %v937
        %v978 = vadd.f32 %v970, %v938
        %v979 = vadd.f32 %v971, %v939
        %v980 = vadd.f32 %v972, %v940
        %v981 = vadd.f32 %v973, %v941
        %v982 = vadd.f32 %v974, %v942
        %s983 = scalar_lea.vmem [#allocation6], 64
        %984 = vst [vmem:[%s983] sm:$0xff] %v975
        %985 = vst [vmem:[%s983 + $0x8] sm:$0xff] %v976
        %986 = vst [vmem:[%s983 + $0x10] sm:$0xff] %v977
        %987 = vst [vmem:[%s983 + $0x18] sm:$0xff] %v978
        %988 = vst [vmem:[%s983 + $0x20] sm:$0xff] %v979
        %989 = vst [vmem:[%s983 + $0x28] sm:$0xff] %v980
        %990 = vst [vmem:[%s983 + $0x30] sm:$0xff] %v981
        %991 = vst [vmem:[%s983 + $0x38] sm:$0xff] %v982
        %v992 = vld [vmem:[%s569] sm:$0x1]
        %v993 = vld [vmem:[#allocation6] sm:$0xff]
        %v994 = vld [vmem:[#allocation6 + $0x8] sm:$0xff]
        %v995 = vld [vmem:[#allocation6 + $0x10] sm:$0xff]
        %v996 = vld [vmem:[#allocation6 + $0x18] sm:$0xff]
        %v997 = vld [vmem:[#allocation6 + $0x20] sm:$0xff]
        %v998 = vld [vmem:[#allocation6 + $0x28] sm:$0xff]
        %v999 = vld [vmem:[#allocation6 + $0x30] sm:$0xff]
        %v1000 = vld [vmem:[#allocation6 + $0x38] sm:$0xff]
        %v1001 = vld [vmem:[#allocation2] sm:$0xff]
        %v1002 = vld [vmem:[#allocation2 + $0x8] sm:$0xff]
        %v1003 = vld [vmem:[#allocation2 + $0x10] sm:$0xff]
        %v1004 = vld [vmem:[#allocation2 + $0x18] sm:$0xff]
        %v1005 = vld [vmem:[#allocation2 + $0x20] sm:$0xff]
        %v1006 = vld [vmem:[#allocation2 + $0x28] sm:$0xff]
        %v1007 = vld [vmem:[#allocation2 + $0x30] sm:$0xff]
        %v1008 = vld [vmem:[#allocation2 + $0x38] sm:$0xff]
        %v1009 = vld [vmem:[%s460] sm:$0xff]
        %vm1010 = vcmask 64512
        %v1012 = vsel %vm1010, %v1001, 0
        %v1015 = vsel %vm1010, %v1002, 0
        %v1018 = vsel %vm1010, %v1003, 0
        %v1021 = vsel %vm1010, %v1004, 0
        %v1024 = vsel %vm1010, %v1005, 0
        %v1027 = vsel %vm1010, %v1006, 0
        %v1030 = vsel %vm1010, %v1007, 0
        %v1033 = vsel %vm1010, %v1008, 0
        %1035 = vmatprep.subr.mxu0 0.0
        %1036 = vmatpush1.msra.mxu0 0.0
        %1037 = vmatprep.subr.mxu0 0.0
        %1038 = vmatpush1.msra.mxu0 0.0
        %1039 = vmatprep.subr.mxu0 0.0
        %1040 = vmatpush1.msra.mxu0 0.0
        %1041 = vmatprep.subr.mxu0 0.0
        %1042 = vmatpush1.msra.mxu0 0.0
        %1043 = vmatprep.subr.mxu0 0.0
        %1044 = vmatpush1.msra.mxu0 0.0
        %1045 = vmatprep.subr.mxu0 0.0
        %1046 = vmatpush1.msra.mxu0 0.0
        %1047 = vmatprep.subr.mxu0 0.0
        %1048 = vmatpush1.msra.mxu0 0.0
        %1049 = vmatprep.subr.mxu0 0.0
        %1050 = vmatpush1.msra.mxu0 0.0
        %1051 = vmatprep.subr.mxu0 0.0
        %1052 = vmatpush1.msra.mxu0 0.0
        %1053 = vmatprep.subr.mxu0 0.0
        %1054 = vmatpush1.msra.mxu0 0.0
        %1055 = vmatprep.subr.mxu0 0.0
        %1056 = vmatpush1.msra.mxu0 0.0
        %1057 = vmatprep.subr.mxu0 0.0
        %1058 = vmatpush1.msra.mxu0 0.0
        %1059 = vmatprep.subr.mxu0 0.0
        %1060 = vmatpush1.msra.mxu0 0.0
        %1061 = vmatprep.subr.mxu0 0.0
        %1062 = vmatpush1.msra.mxu0 0.0
        %1063 = vmatprep.subr.mxu0 0.0
        %1064 = vmatpush1.msra.mxu0 0.0
        %1065 = vmatprep.subr.mxu0 0.0
        %1066 = vmatpush1.msra.mxu0 %v1009
        %1067 = vmatprep.subr.mxu0 0.0
        %1068 = vmatpush2.msra.mxu0 0.0
        %1069 = vmatprep.subr.mxu0 0.0
        %1070 = vmatpush2.msra.mxu0 0.0
        %1071 = vmatprep.subr.mxu0 0.0
        %1072 = vmatpush2.msra.mxu0 0.0
        %1073 = vmatprep.subr.mxu0 0.0
        %1074 = vmatpush2.msra.mxu0 0.0
        %1075 = vmatprep.subr.mxu0 0.0
        %1076 = vmatpush2.msra.mxu0 0.0
        %1077 = vmatprep.subr.mxu0 0.0
        %1078 = vmatpush2.msra.mxu0 0.0
        %1079 = vmatprep.subr.mxu0 0.0
        %1080 = vmatpush2.msra.mxu0 0.0
        %1081 = vmatprep.subr.mxu0 0.0
        %1082 = vmatpush2.msra.mxu0 0.0
        %1083 = vmatprep.subr.mxu0 0.0
        %1084 = vmatpush2.msra.mxu0 0.0
        %1085 = vmatprep.subr.mxu0 0.0
        %1086 = vmatpush2.msra.mxu0 0.0
        %1087 = vmatprep.subr.mxu0 0.0
        %1088 = vmatpush2.msra.mxu0 0.0
        %1089 = vmatprep.subr.mxu0 0.0
        %1090 = vmatpush2.msra.mxu0 0.0
        %1091 = vmatprep.subr.mxu0 0.0
        %1092 = vmatpush2.msra.mxu0 0.0
        %1093 = vmatprep.subr.mxu0 0.0
        %1094 = vmatpush2.msra.mxu0 0.0
        %1095 = vmatprep.subr.mxu0 0.0
        %1096 = vmatpush2.msra.mxu0 0.0
        %1097 = vmatprep.subr.mxu0 0.0
        %1098 = vmatpush2.msra.mxu0 0.0
        %1099 = vmatprep.mubr.f32.mxu0 0.0
        %1100 = vmatmul.mubr.f32.gmra.mxu0 %v1012
        %v1101 = vpop.f32.mrf.mxu0
        %v1102 = vadd.f32 0.0, %v1101
        %v1103 = vpop.f32.mrf.mxu0
        %1104 = vmatprep.mubr.f32.mxu0 0.0
        %1105 = vmatmul.mubr.f32.gmra.mxu0 %v1015
        %v1106 = vpop.f32.mrf.mxu0
        %v1107 = vadd.f32 0.0, %v1106
        %v1108 = vpop.f32.mrf.mxu0
        %1109 = vmatprep.mubr.f32.mxu0 0.0
        %1110 = vmatmul.mubr.f32.gmra.mxu0 %v1018
        %v1111 = vpop.f32.mrf.mxu0
        %v1112 = vadd.f32 0.0, %v1111
        %v1113 = vpop.f32.mrf.mxu0
        %1114 = vmatprep.mubr.f32.mxu0 0.0
        %1115 = vmatmul.mubr.f32.gmra.mxu0 %v1021
        %v1116 = vpop.f32.mrf.mxu0
        %v1117 = vadd.f32 0.0, %v1116
        %v1118 = vpop.f32.mrf.mxu0
        %1119 = vmatprep.mubr.f32.mxu0 0.0
        %1120 = vmatmul.mubr.f32.gmra.mxu0 %v1024
        %v1121 = vpop.f32.mrf.mxu0
        %v1122 = vadd.f32 0.0, %v1121
        %v1123 = vpop.f32.mrf.mxu0
        %1124 = vmatprep.mubr.f32.mxu0 0.0
        %1125 = vmatmul.mubr.f32.gmra.mxu0 %v1027
        %v1126 = vpop.f32.mrf.mxu0
        %v1127 = vadd.f32 0.0, %v1126
        %v1128 = vpop.f32.mrf.mxu0
        %1129 = vmatprep.mubr.f32.mxu0 0.0
        %1130 = vmatmul.mubr.f32.gmra.mxu0 %v1030
        %v1131 = vpop.f32.mrf.mxu0
        %v1132 = vadd.f32 0.0, %v1131
        %v1133 = vpop.f32.mrf.mxu0
        %1134 = vmatprep.mubr.f32.mxu0 0.0
        %1135 = vmatmul.mubr.f32.gmra.mxu0 %v1033
        %v1136 = vpop.f32.mrf.mxu0
        %v1137 = vadd.f32 0.0, %v1136
        %v1138 = vpop.f32.mrf.mxu0
        %1139 = vdwg.mxu0
        %v1140 = vmul.f32 %v993, 0.25
        %v1141 = vmul.f32 %v994, 0.25
        %v1142 = vmul.f32 %v995, 0.25
        %v1143 = vmul.f32 %v996, 0.25
        %v1144 = vmul.f32 %v997, 0.25
        %v1145 = vmul.f32 %v998, 0.25
        %v1146 = vmul.f32 %v999, 0.25
        %v1147 = vmul.f32 %v1000, 0.25
        %v1148 = vsub.f32 %v1102, %v1140
        %v1149 = vsub.f32 %v1107, %v1141
        %v1150 = vsub.f32 %v1112, %v1142
        %v1151 = vsub.f32 %v1117, %v1143
        %v1152 = vsub.f32 %v1122, %v1144
        %v1153 = vsub.f32 %v1127, %v1145
        %v1154 = vsub.f32 %v1132, %v1146
        %v1155 = vsub.f32 %v1137, %v1147
        %v1157 = vlaneseq
        %v1158 = vshrl.u32 %v1157, 7
        %v1159 = vsub.s32 0, %v1158
        %v1160 = vrot.slane %v992, %v1159
        %v1162 = vadd.f32 %v1148, %v1160
        %v1163 = vadd.f32 %v1149, %v1160
        %v1164 = vadd.f32 %v1150, %v1160
        %v1165 = vadd.f32 %v1151, %v1160
        %v1166 = vadd.f32 %v1152, %v1160
        %v1167 = vadd.f32 %v1153, %v1160
        %v1168 = vadd.f32 %v1154, %v1160
        %v1169 = vadd.f32 %v1155, %v1160
        %v1170 = vld [vmem:[#allocation4] sm:$0xff]
        %v1171 = vld [vmem:[#allocation4 + $0x8] sm:$0xff]
        %v1172 = vld [vmem:[#allocation4 + $0x10] sm:$0xff]
        %v1173 = vld [vmem:[#allocation4 + $0x18] sm:$0xff]
        %v1174 = vld [vmem:[#allocation4 + $0x20] sm:$0xff]
        %v1175 = vld [vmem:[#allocation4 + $0x28] sm:$0xff]
        %v1176 = vld [vmem:[#allocation4 + $0x30] sm:$0xff]
        %v1177 = vld [vmem:[#allocation4 + $0x38] sm:$0xff]
        %1178 = vmax.xlane.f32.xlu0 %v1162
        %v1179 = vpop.xlane.xlu0 %1178
        %1180 = vmax.xlane.f32.xlu0 %v1163
        %v1181 = vpop.xlane.xlu0 %1180
        %1182 = vmax.xlane.f32.xlu0 %v1164
        %v1183 = vpop.xlane.xlu0 %1182
        %1184 = vmax.xlane.f32.xlu0 %v1165
        %v1185 = vpop.xlane.xlu0 %1184
        %1186 = vmax.xlane.f32.xlu0 %v1166
        %v1187 = vpop.xlane.xlu0 %1186
        %1188 = vmax.xlane.f32.xlu0 %v1167
        %v1189 = vpop.xlane.xlu0 %1188
        %1190 = vmax.xlane.f32.xlu0 %v1168
        %v1191 = vpop.xlane.xlu0 %1190
        %1192 = vmax.xlane.f32.xlu0 %v1169
        %v1193 = vpop.xlane.xlu0 %1192
        %v1194 = vmax.f32 %v1170, %v1179
        %v1195 = vmax.f32 %v1171, %v1181
        %v1196 = vmax.f32 %v1172, %v1183
        %v1197 = vmax.f32 %v1173, %v1185
        %v1198 = vmax.f32 %v1174, %v1187
        %v1199 = vmax.f32 %v1175, %v1189
        %v1200 = vmax.f32 %v1176, %v1191
        %v1201 = vmax.f32 %v1177, %v1193
        %v1202 = vsub.f32 %v1170, %v1194
        %v1203 = vsub.f32 %v1171, %v1195
        %v1204 = vsub.f32 %v1172, %v1196
        %v1205 = vsub.f32 %v1173, %v1197
        %v1206 = vsub.f32 %v1174, %v1198
        %v1207 = vsub.f32 %v1175, %v1199
        %v1208 = vsub.f32 %v1176, %v1200
        %v1209 = vsub.f32 %v1177, %v1201
        %v1210 = vmul.f32 %v1202, 1.442695
        %v1211 = vpow.pop %v1210
        %v1212 = vmul.f32 %v1203, 1.442695
        %v1213 = vpow.pop %v1212
        %v1214 = vmul.f32 %v1204, 1.442695
        %v1215 = vpow.pop %v1214
        %v1216 = vmul.f32 %v1205, 1.442695
        %v1217 = vpow.pop %v1216
        %v1218 = vmul.f32 %v1206, 1.442695
        %v1219 = vpow.pop %v1218
        %v1220 = vmul.f32 %v1207, 1.442695
        %v1221 = vpow.pop %v1220
        %v1222 = vmul.f32 %v1208, 1.442695
        %v1223 = vpow.pop %v1222
        %v1224 = vmul.f32 %v1209, 1.442695
        %v1225 = vpow.pop %v1224
        %1227 = vset.pattern.permute.xlu0 0
        %1228 = vperm.xlu0 %1227, %v1194
        %v1229 = vpop.permute.xlu0 %1228
        %1232 = vset.pattern.permute.xlu0 0
        %1233 = vperm.xlu0 %1232, %v1195
        %v1234 = vpop.permute.xlu0 %1233
        %1237 = vset.pattern.permute.xlu0 0
        %1238 = vperm.xlu0 %1237, %v1196
        %v1239 = vpop.permute.xlu0 %1238
        %1242 = vset.pattern.permute.xlu0 0
        %1243 = vperm.xlu0 %1242, %v1197
        %v1244 = vpop.permute.xlu0 %1243
        %1247 = vset.pattern.permute.xlu0 0
        %1248 = vperm.xlu0 %1247, %v1198
        %v1249 = vpop.permute.xlu0 %1248
        %1252 = vset.pattern.permute.xlu0 0
        %1253 = vperm.xlu0 %1252, %v1199
        %v1254 = vpop.permute.xlu0 %1253
        %1257 = vset.pattern.permute.xlu0 0
        %1258 = vperm.xlu0 %1257, %v1200
        %v1259 = vpop.permute.xlu0 %1258
        %1262 = vset.pattern.permute.xlu0 0
        %1263 = vperm.xlu0 %1262, %v1201
        %v1264 = vpop.permute.xlu0 %1263
        %v1266 = vsub.f32 %v1162, %v1229
        %v1267 = vsub.f32 %v1163, %v1234
        %v1268 = vsub.f32 %v1164, %v1239
        %v1269 = vsub.f32 %v1165, %v1244
        %v1270 = vsub.f32 %v1166, %v1249
        %v1271 = vsub.f32 %v1167, %v1254
        %v1272 = vsub.f32 %v1168, %v1259
        %v1273 = vsub.f32 %v1169, %v1264
        %v1274 = vmul.f32 %v1266, 1.442695
        %v1275 = vpow.pop %v1274
        %v1276 = vmul.f32 %v1267, 1.442695
        %v1277 = vpow.pop %v1276
        %v1278 = vmul.f32 %v1268, 1.442695
        %v1279 = vpow.pop %v1278
        %v1280 = vmul.f32 %v1269, 1.442695
        %v1281 = vpow.pop %v1280
        %v1282 = vmul.f32 %v1270, 1.442695
        %v1283 = vpow.pop %v1282
        %v1284 = vmul.f32 %v1271, 1.442695
        %v1285 = vpow.pop %v1284
        %v1286 = vmul.f32 %v1272, 1.442695
        %v1287 = vpow.pop %v1286
        %v1288 = vmul.f32 %v1273, 1.442695
        %v1289 = vpow.pop %v1288
        %v1290 = vld [vmem:[#allocation5] sm:$0xff]
        %v1291 = vld [vmem:[#allocation5 + $0x8] sm:$0xff]
        %v1292 = vld [vmem:[#allocation5 + $0x10] sm:$0xff]
        %v1293 = vld [vmem:[#allocation5 + $0x18] sm:$0xff]
        %v1294 = vld [vmem:[#allocation5 + $0x20] sm:$0xff]
        %v1295 = vld [vmem:[#allocation5 + $0x28] sm:$0xff]
        %v1296 = vld [vmem:[#allocation5 + $0x30] sm:$0xff]
        %v1297 = vld [vmem:[#allocation5 + $0x38] sm:$0xff]
        %v1298 = vmul.f32 %v1211, %v1290
        %v1299 = vmul.f32 %v1213, %v1291
        %v1300 = vmul.f32 %v1215, %v1292
        %v1301 = vmul.f32 %v1217, %v1293
        %v1302 = vmul.f32 %v1219, %v1294
        %v1303 = vmul.f32 %v1221, %v1295
        %v1304 = vmul.f32 %v1223, %v1296
        %v1305 = vmul.f32 %v1225, %v1297
        %1306 = vadd.xlane.f32.xlu0 %v1275
        %v1307 = vpop.xlane.xlu0 %1306
        %1308 = vadd.xlane.f32.xlu0 %v1277
        %v1309 = vpop.xlane.xlu0 %1308
        %1310 = vadd.xlane.f32.xlu0 %v1279
        %v1311 = vpop.xlane.xlu0 %1310
        %1312 = vadd.xlane.f32.xlu0 %v1281
        %v1313 = vpop.xlane.xlu0 %1312
        %1314 = vadd.xlane.f32.xlu0 %v1283
        %v1315 = vpop.xlane.xlu0 %1314
        %1316 = vadd.xlane.f32.xlu0 %v1285
        %v1317 = vpop.xlane.xlu0 %1316
        %1318 = vadd.xlane.f32.xlu0 %v1287
        %v1319 = vpop.xlane.xlu0 %1318
        %1320 = vadd.xlane.f32.xlu0 %v1289
        %v1321 = vpop.xlane.xlu0 %1320
        %v1322 = vadd.f32 %v1298, %v1307
        %v1323 = vadd.f32 %v1299, %v1309
        %v1324 = vadd.f32 %v1300, %v1311
        %v1325 = vadd.f32 %v1301, %v1313
        %v1326 = vadd.f32 %v1302, %v1315
        %v1327 = vadd.f32 %v1303, %v1317
        %v1328 = vadd.f32 %v1304, %v1319
        %v1329 = vadd.f32 %v1305, %v1321
        %vm1330 = vcmask 7168
        %1331 = vst.msk [vmem:[#allocation5] sm:$0xff] %vm1330, %v1322
        %1332 = vst.msk [vmem:[#allocation5 + $0x8] sm:$0xff] %vm1330, %v1323
        %1333 = vst.msk [vmem:[#allocation5 + $0x10] sm:$0xff] %vm1330, %v1324
        %1334 = vst.msk [vmem:[#allocation5 + $0x18] sm:$0xff] %vm1330, %v1325
        %1335 = vst.msk [vmem:[#allocation5 + $0x20] sm:$0xff] %vm1330, %v1326
        %1336 = vst.msk [vmem:[#allocation5 + $0x28] sm:$0xff] %vm1330, %v1327
        %1337 = vst.msk [vmem:[#allocation5 + $0x30] sm:$0xff] %vm1330, %v1328
        %1338 = vst.msk [vmem:[#allocation5 + $0x38] sm:$0xff] %vm1330, %v1329
        %1339 = vst.msk [vmem:[#allocation4] sm:$0xff] %vm1330, %v1194
        %1340 = vst.msk [vmem:[#allocation4 + $0x8] sm:$0xff] %vm1330, %v1195
        %1341 = vst.msk [vmem:[#allocation4 + $0x10] sm:$0xff] %vm1330, %v1196
        %1342 = vst.msk [vmem:[#allocation4 + $0x18] sm:$0xff] %vm1330, %v1197
        %1343 = vst.msk [vmem:[#allocation4 + $0x20] sm:$0xff] %vm1330, %v1198
        %1344 = vst.msk [vmem:[#allocation4 + $0x28] sm:$0xff] %vm1330, %v1199
        %1345 = vst.msk [vmem:[#allocation4 + $0x30] sm:$0xff] %vm1330, %v1200
        %1346 = vst.msk [vmem:[#allocation4 + $0x38] sm:$0xff] %vm1330, %v1201
        %v1347 = vld [vmem:[%s551] sm:$0xff]
        %v1348 = vld [vmem:[%s551 + $0x8] sm:$0xff]
        %v1349 = vld [vmem:[%s551 + $0x10] sm:$0xff]
        %v1350 = vld [vmem:[%s551 + $0x18] sm:$0xff]
        %v1351 = vld [vmem:[%s551 + $0x20] sm:$0xff]
        %v1352 = vld [vmem:[%s551 + $0x28] sm:$0xff]
        %v1353 = vld [vmem:[%s551 + $0x30] sm:$0xff]
        %v1354 = vld [vmem:[%s551 + $0x38] sm:$0xff]
        %v1355 = vld [vmem:[%s551 + $0x40] sm:$0xff]
        %v1356 = vld [vmem:[%s551 + $0x48] sm:$0xff]
        %v1357 = vld [vmem:[%s551 + $0x50] sm:$0xff]
        %v1358 = vld [vmem:[%s551 + $0x58] sm:$0xff]
        %v1359 = vld [vmem:[%s551 + $0x60] sm:$0xff]
        %v1360 = vld [vmem:[%s551 + $0x68] sm:$0xff]
        %v1361 = vld [vmem:[%s551 + $0x70] sm:$0xff]
        %v1362 = vld [vmem:[%s551 + $0x78] sm:$0xff]
        %1363 = vmatprep.subr.mxu0 0.0
        %1364 = vmatpush1.msra.mxu0 %v1362
        %1365 = vmatprep.subr.mxu0 0.0
        %1366 = vmatpush1.msra.mxu0 %v1361
        %1367 = vmatprep.subr.mxu0 0.0
        %1368 = vmatpush1.msra.mxu0 %v1360
        %1369 = vmatprep.subr.mxu0 0.0
        %1370 = vmatpush1.msra.mxu0 %v1359
        %1371 = vmatprep.subr.mxu0 0.0
        %1372 = vmatpush1.msra.mxu0 %v1358
        %1373 = vmatprep.subr.mxu0 0.0
        %1374 = vmatpush1.msra.mxu0 %v1357
        %1375 = vmatprep.subr.mxu0 0.0
        %1376 = vmatpush1.msra.mxu0 %v1356
        %1377 = vmatprep.subr.mxu0 0.0
        %1378 = vmatpush1.msra.mxu0 %v1355
        %1379 = vmatprep.subr.mxu0 0.0
        %1380 = vmatpush1.msra.mxu0 %v1354
        %1381 = vmatprep.subr.mxu0 0.0
        %1382 = vmatpush1.msra.mxu0 %v1353
        %1383 = vmatprep.subr.mxu0 0.0
        %1384 = vmatpush1.msra.mxu0 %v1352
        %1385 = vmatprep.subr.mxu0 0.0
        %1386 = vmatpush1.msra.mxu0 %v1351
        %1387 = vmatprep.subr.mxu0 0.0
        %1388 = vmatpush1.msra.mxu0 %v1350
        %1389 = vmatprep.subr.mxu0 0.0
        %1390 = vmatpush1.msra.mxu0 %v1349
        %1391 = vmatprep.subr.mxu0 0.0
        %1392 = vmatpush1.msra.mxu0 %v1348
        %1393 = vmatprep.subr.mxu0 0.0
        %1394 = vmatpush1.msra.mxu0 %v1347
        %1395 = vmatprep.subr.mxu0 0.0
        %1396 = vmatpush2.msra.mxu0 0.0
        %1397 = vmatprep.subr.mxu0 0.0
        %1398 = vmatpush2.msra.mxu0 0.0
        %1399 = vmatprep.subr.mxu0 0.0
        %1400 = vmatpush2.msra.mxu0 0.0
        %1401 = vmatprep.subr.mxu0 0.0
        %1402 = vmatpush2.msra.mxu0 0.0
        %1403 = vmatprep.subr.mxu0 0.0
        %1404 = vmatpush2.msra.mxu0 0.0
        %1405 = vmatprep.subr.mxu0 0.0
        %1406 = vmatpush2.msra.mxu0 0.0
        %1407 = vmatprep.subr.mxu0 0.0
        %1408 = vmatpush2.msra.mxu0 0.0
        %1409 = vmatprep.subr.mxu0 0.0
        %1410 = vmatpush2.msra.mxu0 0.0
        %1411 = vmatprep.subr.mxu0 0.0
        %1412 = vmatpush2.msra.mxu0 0.0
        %1413 = vmatprep.subr.mxu0 0.0
        %1414 = vmatpush2.msra.mxu0 0.0
        %1415 = vmatprep.subr.mxu0 0.0
        %1416 = vmatpush2.msra.mxu0 0.0
        %1417 = vmatprep.subr.mxu0 0.0
        %1418 = vmatpush2.msra.mxu0 0.0
        %1419 = vmatprep.subr.mxu0 0.0
        %1420 = vmatpush2.msra.mxu0 0.0
        %1421 = vmatprep.subr.mxu0 0.0
        %1422 = vmatpush2.msra.mxu0 0.0
        %1423 = vmatprep.subr.mxu0 0.0
        %1424 = vmatpush2.msra.mxu0 0.0
        %1425 = vmatprep.subr.mxu0 0.0
        %1426 = vmatpush2.msra.mxu0 0.0
        %1427 = vmatprep.mubr.f32.mxu0 0.0
        %1428 = vmatmul.mubr.f32.gmra.mxu0 %v1275
        %v1429 = vpop.f32.mrf.mxu0
        %v1430 = vadd.f32 0.0, %v1429
        %v1431 = vpop.f32.mrf.mxu0
        %1432 = vmatprep.mubr.f32.mxu0 0.0
        %1433 = vmatmul.mubr.f32.gmra.mxu0 %v1277
        %v1434 = vpop.f32.mrf.mxu0
        %v1435 = vadd.f32 0.0, %v1434
        %v1436 = vpop.f32.mrf.mxu0
        %1437 = vmatprep.mubr.f32.mxu0 0.0
        %1438 = vmatmul.mubr.f32.gmra.mxu0 %v1279
        %v1439 = vpop.f32.mrf.mxu0
        %v1440 = vadd.f32 0.0, %v1439
        %v1441 = vpop.f32.mrf.mxu0
        %1442 = vmatprep.mubr.f32.mxu0 0.0
        %1443 = vmatmul.mubr.f32.gmra.mxu0 %v1281
        %v1444 = vpop.f32.mrf.mxu0
        %v1445 = vadd.f32 0.0, %v1444
        %v1446 = vpop.f32.mrf.mxu0
        %1447 = vmatprep.mubr.f32.mxu0 0.0
        %1448 = vmatmul.mubr.f32.gmra.mxu0 %v1283
        %v1449 = vpop.f32.mrf.mxu0
        %v1450 = vadd.f32 0.0, %v1449
        %v1451 = vpop.f32.mrf.mxu0
        %1452 = vmatprep.mubr.f32.mxu0 0.0
        %1453 = vmatmul.mubr.f32.gmra.mxu0 %v1285
        %v1454 = vpop.f32.mrf.mxu0
        %v1455 = vadd.f32 0.0, %v1454
        %v1456 = vpop.f32.mrf.mxu0
        %1457 = vmatprep.mubr.f32.mxu0 0.0
        %1458 = vmatmul.mubr.f32.gmra.mxu0 %v1287
        %v1459 = vpop.f32.mrf.mxu0
        %v1460 = vadd.f32 0.0, %v1459
        %v1461 = vpop.f32.mrf.mxu0
        %1462 = vmatprep.mubr.f32.mxu0 0.0
        %1463 = vmatmul.mubr.f32.gmra.mxu0 %v1289
        %v1464 = vpop.f32.mrf.mxu0
        %v1465 = vadd.f32 0.0, %v1464
        %v1466 = vpop.f32.mrf.mxu0
        %1467 = vdwg.mxu0
        %v1468 = vld [vmem:[#allocation3] sm:$0xff]
        %v1469 = vld [vmem:[#allocation3 + $0x8] sm:$0xff]
        %v1470 = vld [vmem:[#allocation3 + $0x10] sm:$0xff]
        %v1471 = vld [vmem:[#allocation3 + $0x18] sm:$0xff]
        %v1472 = vld [vmem:[#allocation3 + $0x20] sm:$0xff]
        %v1473 = vld [vmem:[#allocation3 + $0x28] sm:$0xff]
        %v1474 = vld [vmem:[#allocation3 + $0x30] sm:$0xff]
        %v1475 = vld [vmem:[#allocation3 + $0x38] sm:$0xff]
        %1477 = vset.pattern.permute.xlu0 0
        %1478 = vperm.xlu0 %1477, %v1211
        %v1479 = vpop.permute.xlu0 %1478
        %1482 = vset.pattern.permute.xlu0 0
        %1483 = vperm.xlu0 %1482, %v1213
        %v1484 = vpop.permute.xlu0 %1483
        %1487 = vset.pattern.permute.xlu0 0
        %1488 = vperm.xlu0 %1487, %v1215
        %v1489 = vpop.permute.xlu0 %1488
        %1492 = vset.pattern.permute.xlu0 0
        %1493 = vperm.xlu0 %1492, %v1217
        %v1494 = vpop.permute.xlu0 %1493
        %1497 = vset.pattern.permute.xlu0 0
        %1498 = vperm.xlu0 %1497, %v1219
        %v1499 = vpop.permute.xlu0 %1498
        %1502 = vset.pattern.permute.xlu0 0
        %1503 = vperm.xlu0 %1502, %v1221
        %v1504 = vpop.permute.xlu0 %1503
        %1507 = vset.pattern.permute.xlu0 0
        %1508 = vperm.xlu0 %1507, %v1223
        %v1509 = vpop.permute.xlu0 %1508
        %1512 = vset.pattern.permute.xlu0 0
        %1513 = vperm.xlu0 %1512, %v1225
        %v1514 = vpop.permute.xlu0 %1513
        %v1516 = vmul.f32 %v1479, %v1468
        %v1517 = vmul.f32 %v1484, %v1469
        %v1518 = vmul.f32 %v1489, %v1470
        %v1519 = vmul.f32 %v1494, %v1471
        %v1520 = vmul.f32 %v1499, %v1472
        %v1521 = vmul.f32 %v1504, %v1473
        %v1522 = vmul.f32 %v1509, %v1474
        %v1523 = vmul.f32 %v1514, %v1475
        %v1524 = vadd.f32 %v1516, %v1430
        %v1525 = vadd.f32 %v1517, %v1435
        %v1526 = vadd.f32 %v1518, %v1440
        %v1527 = vadd.f32 %v1519, %v1445
        %v1528 = vadd.f32 %v1520, %v1450
        %v1529 = vadd.f32 %v1521, %v1455
        %v1530 = vadd.f32 %v1522, %v1460
        %v1531 = vadd.f32 %v1523, %v1465
        %1532 = vst.msk [vmem:[#allocation3] sm:$0xff] %vm1010, %v1524
        %1533 = vst.msk [vmem:[#allocation3 + $0x8] sm:$0xff] %vm1010, %v1525
        %1534 = vst.msk [vmem:[#allocation3 + $0x10] sm:$0xff] %vm1010, %v1526
        %1535 = vst.msk [vmem:[#allocation3 + $0x18] sm:$0xff] %vm1010, %v1527
        %1536 = vst.msk [vmem:[#allocation3 + $0x20] sm:$0xff] %vm1010, %v1528
        %1537 = vst.msk [vmem:[#allocation3 + $0x28] sm:$0xff] %vm1010, %v1529
        %1538 = vst.msk [vmem:[#allocation3 + $0x30] sm:$0xff] %vm1010, %v1530
        %1539 = vst.msk [vmem:[#allocation3 + $0x38] sm:$0xff] %vm1010, %v1531
        %v1540 = vld [vmem:[#allocation6] sm:$0xff]
        %v1541 = vld [vmem:[#allocation6 + $0x8] sm:$0xff]
        %v1542 = vld [vmem:[#allocation6 + $0x10] sm:$0xff]
        %v1543 = vld [vmem:[#allocation6 + $0x18] sm:$0xff]
        %v1544 = vld [vmem:[#allocation6 + $0x20] sm:$0xff]
        %v1545 = vld [vmem:[#allocation6 + $0x28] sm:$0xff]
        %v1546 = vld [vmem:[#allocation6 + $0x30] sm:$0xff]
        %v1547 = vld [vmem:[#allocation6 + $0x38] sm:$0xff]
        %v1548 = vld [vmem:[#allocation2] sm:$0xff]
        %v1549 = vld [vmem:[#allocation2 + $0x8] sm:$0xff]
        %v1550 = vld [vmem:[#allocation2 + $0x10] sm:$0xff]
        %v1551 = vld [vmem:[#allocation2 + $0x18] sm:$0xff]
        %v1552 = vld [vmem:[#allocation2 + $0x20] sm:$0xff]
        %v1553 = vld [vmem:[#allocation2 + $0x28] sm:$0xff]
        %v1554 = vld [vmem:[#allocation2 + $0x30] sm:$0xff]
        %v1555 = vld [vmem:[#allocation2 + $0x38] sm:$0xff]
        %v1556 = vld [vmem:[%s460 + $0x8] sm:$0xff]
        %1565 = vrot.lane.b32.xlu0 %v1548, 120
        %v1566 = vpop.permute.xlu0 %1565
        %1567 = vrot.lane.b32.xlu0 %v1549, 120
        %v1568 = vpop.permute.xlu0 %1567
        %1569 = vrot.lane.b32.xlu0 %v1550, 120
        %v1570 = vpop.permute.xlu0 %1569
        %1571 = vrot.lane.b32.xlu0 %v1551, 120
        %v1572 = vpop.permute.xlu0 %1571
        %1573 = vrot.lane.b32.xlu0 %v1552, 120
        %v1574 = vpop.permute.xlu0 %1573
        %1575 = vrot.lane.b32.xlu0 %v1553, 120
        %v1576 = vpop.permute.xlu0 %1575
        %1577 = vrot.lane.b32.xlu0 %v1554, 120
        %v1578 = vpop.permute.xlu0 %1577
        %1579 = vrot.lane.b32.xlu0 %v1555, 120
        %v1580 = vpop.permute.xlu0 %1579
        %v1581 = vsel %vm1010, %v1566, 0
        %v1583 = vsel %vm1010, %v1568, 0
        %v1585 = vsel %vm1010, %v1570, 0
        %v1587 = vsel %vm1010, %v1572, 0
        %v1589 = vsel %vm1010, %v1574, 0
        %v1591 = vsel %vm1010, %v1576, 0
        %v1593 = vsel %vm1010, %v1578, 0
        %v1595 = vsel %vm1010, %v1580, 0
        %1597 = vmatprep.subr.mxu0 0.0
        %1598 = vmatpush1.msra.mxu0 0.0
        %1599 = vmatprep.subr.mxu0 0.0
        %1600 = vmatpush1.msra.mxu0 0.0
        %1601 = vmatprep.subr.mxu0 0.0
        %1602 = vmatpush1.msra.mxu0 0.0
        %1603 = vmatprep.subr.mxu0 0.0
        %1604 = vmatpush1.msra.mxu0 0.0
        %1605 = vmatprep.subr.mxu0 0.0
        %1606 = vmatpush1.msra.mxu0 0.0
        %1607 = vmatprep.subr.mxu0 0.0
        %1608 = vmatpush1.msra.mxu0 0.0
        %1609 = vmatprep.subr.mxu0 0.0
        %1610 = vmatpush1.msra.mxu0 0.0
        %1611 = vmatprep.subr.mxu0 0.0
        %1612 = vmatpush1.msra.mxu0 0.0
        %1613 = vmatprep.subr.mxu0 0.0
        %1614 = vmatpush1.msra.mxu0 0.0
        %1615 = vmatprep.subr.mxu0 0.0
        %1616 = vmatpush1.msra.mxu0 0.0
        %1617 = vmatprep.subr.mxu0 0.0
        %1618 = vmatpush1.msra.mxu0 0.0
        %1619 = vmatprep.subr.mxu0 0.0
        %1620 = vmatpush1.msra.mxu0 0.0
        %1621 = vmatprep.subr.mxu0 0.0
        %1622 = vmatpush1.msra.mxu0 0.0
        %1623 = vmatprep.subr.mxu0 0.0
        %1624 = vmatpush1.msra.mxu0 0.0
        %1625 = vmatprep.subr.mxu0 0.0
        %1626 = vmatpush1.msra.mxu0 0.0
        %1627 = vmatprep.subr.mxu0 0.0
        %1628 = vmatpush1.msra.mxu0 %v1556
        %1629 = vmatprep.subr.mxu0 0.0
        %1630 = vmatpush2.msra.mxu0 0.0
        %1631 = vmatprep.subr.mxu0 0.0
        %1632 = vmatpush2.msra.mxu0 0.0
        %1633 = vmatprep.subr.mxu0 0.0
        %1634 = vmatpush2.msra.mxu0 0.0
        %1635 = vmatprep.subr.mxu0 0.0
        %1636 = vmatpush2.msra.mxu0 0.0
        %1637 = vmatprep.subr.mxu0 0.0
        %1638 = vmatpush2.msra.mxu0 0.0
        %1639 = vmatprep.subr.mxu0 0.0
        %1640 = vmatpush2.msra.mxu0 0.0
        %1641 = vmatprep.subr.mxu0 0.0
        %1642 = vmatpush2.msra.mxu0 0.0
        %1643 = vmatprep.subr.mxu0 0.0
        %1644 = vmatpush2.msra.mxu0 0.0
        %1645 = vmatprep.subr.mxu0 0.0
        %1646 = vmatpush2.msra.mxu0 0.0
        %1647 = vmatprep.subr.mxu0 0.0
        %1648 = vmatpush2.msra.mxu0 0.0
        %1649 = vmatprep.subr.mxu0 0.0
        %1650 = vmatpush2.msra.mxu0 0.0
        %1651 = vmatprep.subr.mxu0 0.0
        %1652 = vmatpush2.msra.mxu0 0.0
        %1653 = vmatprep.subr.mxu0 0.0
        %1654 = vmatpush2.msra.mxu0 0.0
        %1655 = vmatprep.subr.mxu0 0.0
        %1656 = vmatpush2.msra.mxu0 0.0
        %1657 = vmatprep.subr.mxu0 0.0
        %1658 = vmatpush2.msra.mxu0 0.0
        %1659 = vmatprep.subr.mxu0 0.0
        %1660 = vmatpush2.msra.mxu0 0.0
        %1661 = vmatprep.mubr.f32.mxu0 0.0
        %1662 = vmatmul.mubr.f32.gmra.mxu0 %v1581
        %v1663 = vpop.f32.mrf.mxu0
        %v1664 = vadd.f32 0.0, %v1663
        %v1665 = vpop.f32.mrf.mxu0
        %1666 = vmatprep.mubr.f32.mxu0 0.0
        %1667 = vmatmul.mubr.f32.gmra.mxu0 %v1583
        %v1668 = vpop.f32.mrf.mxu0
        %v1669 = vadd.f32 0.0, %v1668
        %v1670 = vpop.f32.mrf.mxu0
        %1671 = vmatprep.mubr.f32.mxu0 0.0
        %1672 = vmatmul.mubr.f32.gmra.mxu0 %v1585
        %v1673 = vpop.f32.mrf.mxu0
        %v1674 = vadd.f32 0.0, %v1673
        %v1675 = vpop.f32.mrf.mxu0
        %1676 = vmatprep.mubr.f32.mxu0 0.0
        %1677 = vmatmul.mubr.f32.gmra.mxu0 %v1587
        %v1678 = vpop.f32.mrf.mxu0
        %v1679 = vadd.f32 0.0, %v1678
        %v1680 = vpop.f32.mrf.mxu0
        %1681 = vmatprep.mubr.f32.mxu0 0.0
        %1682 = vmatmul.mubr.f32.gmra.mxu0 %v1589
        %v1683 = vpop.f32.mrf.mxu0
        %v1684 = vadd.f32 0.0, %v1683
        %v1685 = vpop.f32.mrf.mxu0
        %1686 = vmatprep.mubr.f32.mxu0 0.0
        %1687 = vmatmul.mubr.f32.gmra.mxu0 %v1591
        %v1688 = vpop.f32.mrf.mxu0
        %v1689 = vadd.f32 0.0, %v1688
        %v1690 = vpop.f32.mrf.mxu0
        %1691 = vmatprep.mubr.f32.mxu0 0.0
        %1692 = vmatmul.mubr.f32.gmra.mxu0 %v1593
        %v1693 = vpop.f32.mrf.mxu0
        %v1694 = vadd.f32 0.0, %v1693
        %v1695 = vpop.f32.mrf.mxu0
        %1696 = vmatprep.mubr.f32.mxu0 0.0
        %1697 = vmatmul.mubr.f32.gmra.mxu0 %v1595
        %v1698 = vpop.f32.mrf.mxu0
        %v1699 = vadd.f32 0.0, %v1698
        %v1700 = vpop.f32.mrf.mxu0
        %1701 = vdwg.mxu0
        %v1702 = vmul.f32 %v1540, 0.0625
        %v1703 = vmul.f32 %v1541, 0.0625
        %v1704 = vmul.f32 %v1542, 0.0625
        %v1705 = vmul.f32 %v1543, 0.0625
        %v1706 = vmul.f32 %v1544, 0.0625
        %v1707 = vmul.f32 %v1545, 0.0625
        %v1708 = vmul.f32 %v1546, 0.0625
        %v1709 = vmul.f32 %v1547, 0.0625
        %v1710 = vsub.f32 %v1664, %v1702
        %v1711 = vsub.f32 %v1669, %v1703
        %v1712 = vsub.f32 %v1674, %v1704
        %v1713 = vsub.f32 %v1679, %v1705
        %v1714 = vsub.f32 %v1684, %v1706
        %v1715 = vsub.f32 %v1689, %v1707
        %v1716 = vsub.f32 %v1694, %v1708
        %v1717 = vsub.f32 %v1699, %v1709
        %v1718 = vadd.f32 %v1710, %v1160
        %v1719 = vadd.f32 %v1711, %v1160
        %v1720 = vadd.f32 %v1712, %v1160
        %v1721 = vadd.f32 %v1713, %v1160
        %v1722 = vadd.f32 %v1714, %v1160
        %v1723 = vadd.f32 %v1715, %v1160
        %v1724 = vadd.f32 %v1716, %v1160
        %v1725 = vadd.f32 %v1717, %v1160
        %s1726 = scalar_lea.vmem [#allocation4], 64
        %v1727 = vld [vmem:[%s1726] sm:$0xff]
        %v1728 = vld [vmem:[%s1726 + $0x8] sm:$0xff]
        %v1729 = vld [vmem:[%s1726 + $0x10] sm:$0xff]
        %v1730 = vld [vmem:[%s1726 + $0x18] sm:$0xff]
        %v1731 = vld [vmem:[%s1726 + $0x20] sm:$0xff]
        %v1732 = vld [vmem:[%s1726 + $0x28] sm:$0xff]
        %v1733 = vld [vmem:[%s1726 + $0x30] sm:$0xff]
        %v1734 = vld [vmem:[%s1726 + $0x38] sm:$0xff]
        %1735 = vmax.xlane.f32.xlu0 %v1718
        %v1736 = vpop.xlane.xlu0 %1735
        %1737 = vmax.xlane.f32.xlu0 %v1719
        %v1738 = vpop.xlane.xlu0 %1737
        %1739 = vmax.xlane.f32.xlu0 %v1720
        %v1740 = vpop.xlane.xlu0 %1739
        %1741 = vmax.xlane.f32.xlu0 %v1721
        %v1742 = vpop.xlane.xlu0 %1741
        %1743 = vmax.xlane.f32.xlu0 %v1722
        %v1744 = vpop.xlane.xlu0 %1743
        %1745 = vmax.xlane.f32.xlu0 %v1723
        %v1746 = vpop.xlane.xlu0 %1745
        %1747 = vmax.xlane.f32.xlu0 %v1724
        %v1748 = vpop.xlane.xlu0 %1747
        %1749 = vmax.xlane.f32.xlu0 %v1725
        %v1750 = vpop.xlane.xlu0 %1749
        %v1751 = vmax.f32 %v1727, %v1736
        %v1752 = vmax.f32 %v1728, %v1738
        %v1753 = vmax.f32 %v1729, %v1740
        %v1754 = vmax.f32 %v1730, %v1742
        %v1755 = vmax.f32 %v1731, %v1744
        %v1756 = vmax.f32 %v1732, %v1746
        %v1757 = vmax.f32 %v1733, %v1748
        %v1758 = vmax.f32 %v1734, %v1750
        %v1759 = vsub.f32 %v1727, %v1751
        %v1760 = vsub.f32 %v1728, %v1752
        %v1761 = vsub.f32 %v1729, %v1753
        %v1762 = vsub.f32 %v1730, %v1754
        %v1763 = vsub.f32 %v1731, %v1755
        %v1764 = vsub.f32 %v1732, %v1756
        %v1765 = vsub.f32 %v1733, %v1757
        %v1766 = vsub.f32 %v1734, %v1758
        %v1767 = vmul.f32 %v1759, 1.442695
        %v1768 = vpow.pop %v1767
        %v1769 = vmul.f32 %v1760, 1.442695
        %v1770 = vpow.pop %v1769
        %v1771 = vmul.f32 %v1761, 1.442695
        %v1772 = vpow.pop %v1771
        %v1773 = vmul.f32 %v1762, 1.442695
        %v1774 = vpow.pop %v1773
        %v1775 = vmul.f32 %v1763, 1.442695
        %v1776 = vpow.pop %v1775
        %v1777 = vmul.f32 %v1764, 1.442695
        %v1778 = vpow.pop %v1777
        %v1779 = vmul.f32 %v1765, 1.442695
        %v1780 = vpow.pop %v1779
        %v1781 = vmul.f32 %v1766, 1.442695
        %v1782 = vpow.pop %v1781
        %1784 = vset.pattern.permute.xlu0 0
        %1785 = vperm.xlu0 %1784, %v1751
        %v1786 = vpop.permute.xlu0 %1785
        %1789 = vset.pattern.permute.xlu0 0
        %1790 = vperm.xlu0 %1789, %v1752
        %v1791 = vpop.permute.xlu0 %1790
        %1794 = vset.pattern.permute.xlu0 0
        %1795 = vperm.xlu0 %1794, %v1753
        %v1796 = vpop.permute.xlu0 %1795
        %1799 = vset.pattern.permute.xlu0 0
        %1800 = vperm.xlu0 %1799, %v1754
        %v1801 = vpop.permute.xlu0 %1800
        %1804 = vset.pattern.permute.xlu0 0
        %1805 = vperm.xlu0 %1804, %v1755
        %v1806 = vpop.permute.xlu0 %1805
        %1809 = vset.pattern.permute.xlu0 0
        %1810 = vperm.xlu0 %1809, %v1756
        %v1811 = vpop.permute.xlu0 %1810
        %1814 = vset.pattern.permute.xlu0 0
        %1815 = vperm.xlu0 %1814, %v1757
        %v1816 = vpop.permute.xlu0 %1815
        %1819 = vset.pattern.permute.xlu0 0
        %1820 = vperm.xlu0 %1819, %v1758
        %v1821 = vpop.permute.xlu0 %1820
        %v1823 = vsub.f32 %v1718, %v1786
        %v1824 = vsub.f32 %v1719, %v1791
        %v1825 = vsub.f32 %v1720, %v1796
        %v1826 = vsub.f32 %v1721, %v1801
        %v1827 = vsub.f32 %v1722, %v1806
        %v1828 = vsub.f32 %v1723, %v1811
        %v1829 = vsub.f32 %v1724, %v1816
        %v1830 = vsub.f32 %v1725, %v1821
        %v1831 = vmul.f32 %v1823, 1.442695
        %v1832 = vpow.pop %v1831
        %v1833 = vmul.f32 %v1824, 1.442695
        %v1834 = vpow.pop %v1833
        %v1835 = vmul.f32 %v1825, 1.442695
        %v1836 = vpow.pop %v1835
        %v1837 = vmul.f32 %v1826, 1.442695
        %v1838 = vpow.pop %v1837
        %v1839 = vmul.f32 %v1827, 1.442695
        %v1840 = vpow.pop %v1839
        %v1841 = vmul.f32 %v1828, 1.442695
        %v1842 = vpow.pop %v1841
        %v1843 = vmul.f32 %v1829, 1.442695
        %v1844 = vpow.pop %v1843
        %v1845 = vmul.f32 %v1830, 1.442695
        %v1846 = vpow.pop %v1845
        %s1847 = scalar_lea.vmem [#allocation5], 64
        %v1848 = vld [vmem:[%s1847] sm:$0xff]
        %v1849 = vld [vmem:[%s1847 + $0x8] sm:$0xff]
        %v1850 = vld [vmem:[%s1847 + $0x10] sm:$0xff]
        %v1851 = vld [vmem:[%s1847 + $0x18] sm:$0xff]
        %v1852 = vld [vmem:[%s1847 + $0x20] sm:$0xff]
        %v1853 = vld [vmem:[%s1847 + $0x28] sm:$0xff]
        %v1854 = vld [vmem:[%s1847 + $0x30] sm:$0xff]
        %v1855 = vld [vmem:[%s1847 + $0x38] sm:$0xff]
        %v1856 = vmul.f32 %v1768, %v1848
        %v1857 = vmul.f32 %v1770, %v1849
        %v1858 = vmul.f32 %v1772, %v1850
        %v1859 = vmul.f32 %v1774, %v1851
        %v1860 = vmul.f32 %v1776, %v1852
        %v1861 = vmul.f32 %v1778, %v1853
        %v1862 = vmul.f32 %v1780, %v1854
        %v1863 = vmul.f32 %v1782, %v1855
        %1864 = vadd.xlane.f32.xlu0 %v1832
        %v1865 = vpop.xlane.xlu0 %1864
        %1866 = vadd.xlane.f32.xlu0 %v1834
        %v1867 = vpop.xlane.xlu0 %1866
        %1868 = vadd.xlane.f32.xlu0 %v1836
        %v1869 = vpop.xlane.xlu0 %1868
        %1870 = vadd.xlane.f32.xlu0 %v1838
        %v1871 = vpop.xlane.xlu0 %1870
        %1872 = vadd.xlane.f32.xlu0 %v1840
        %v1873 = vpop.xlane.xlu0 %1872
        %1874 = vadd.xlane.f32.xlu0 %v1842
        %v1875 = vpop.xlane.xlu0 %1874
        %1876 = vadd.xlane.f32.xlu0 %v1844
        %v1877 = vpop.xlane.xlu0 %1876
        %1878 = vadd.xlane.f32.xlu0 %v1846
        %v1879 = vpop.xlane.xlu0 %1878
        %v1880 = vadd.f32 %v1856, %v1865
        %v1881 = vadd.f32 %v1857, %v1867
        %v1882 = vadd.f32 %v1858, %v1869
        %v1883 = vadd.f32 %v1859, %v1871
        %v1884 = vadd.f32 %v1860, %v1873
        %v1885 = vadd.f32 %v1861, %v1875
        %v1886 = vadd.f32 %v1862, %v1877
        %v1887 = vadd.f32 %v1863, %v1879
        %1888 = vst.msk [vmem:[%s1847] sm:$0xff] %vm1330, %v1880
        %1889 = vst.msk [vmem:[%s1847 + $0x8] sm:$0xff] %vm1330, %v1881
        %1890 = vst.msk [vmem:[%s1847 + $0x10] sm:$0xff] %vm1330, %v1882
        %1891 = vst.msk [vmem:[%s1847 + $0x18] sm:$0xff] %vm1330, %v1883
        %1892 = vst.msk [vmem:[%s1847 + $0x20] sm:$0xff] %vm1330, %v1884
        %1893 = vst.msk [vmem:[%s1847 + $0x28] sm:$0xff] %vm1330, %v1885
        %1894 = vst.msk [vmem:[%s1847 + $0x30] sm:$0xff] %vm1330, %v1886
        %1895 = vst.msk [vmem:[%s1847 + $0x38] sm:$0xff] %vm1330, %v1887
        %1896 = vst.msk [vmem:[%s1726] sm:$0xff] %vm1330, %v1751
        %1897 = vst.msk [vmem:[%s1726 + $0x8] sm:$0xff] %vm1330, %v1752
        %1898 = vst.msk [vmem:[%s1726 + $0x10] sm:$0xff] %vm1330, %v1753
        %1899 = vst.msk [vmem:[%s1726 + $0x18] sm:$0xff] %vm1330, %v1754
        %1900 = vst.msk [vmem:[%s1726 + $0x20] sm:$0xff] %vm1330, %v1755
        %1901 = vst.msk [vmem:[%s1726 + $0x28] sm:$0xff] %vm1330, %v1756
        %1902 = vst.msk [vmem:[%s1726 + $0x30] sm:$0xff] %vm1330, %v1757
        %1903 = vst.msk [vmem:[%s1726 + $0x38] sm:$0xff] %vm1330, %v1758
        %v1904 = vld [vmem:[%s551] sm:$0xff]
        %v1905 = vld [vmem:[%s551 + $0x8] sm:$0xff]
        %v1906 = vld [vmem:[%s551 + $0x10] sm:$0xff]
        %v1907 = vld [vmem:[%s551 + $0x18] sm:$0xff]
        %v1908 = vld [vmem:[%s551 + $0x20] sm:$0xff]
        %v1909 = vld [vmem:[%s551 + $0x28] sm:$0xff]
        %v1910 = vld [vmem:[%s551 + $0x30] sm:$0xff]
        %v1911 = vld [vmem:[%s551 + $0x38] sm:$0xff]
        %v1912 = vld [vmem:[%s551 + $0x40] sm:$0xff]
        %v1913 = vld [vmem:[%s551 + $0x48] sm:$0xff]
        %v1914 = vld [vmem:[%s551 + $0x50] sm:$0xff]
        %v1915 = vld [vmem:[%s551 + $0x58] sm:$0xff]
        %v1916 = vld [vmem:[%s551 + $0x60] sm:$0xff]
        %v1917 = vld [vmem:[%s551 + $0x68] sm:$0xff]
        %v1918 = vld [vmem:[%s551 + $0x70] sm:$0xff]
        %v1919 = vld [vmem:[%s551 + $0x78] sm:$0xff]
        %1936 = vrot.lane.b32.xlu0 %v1904, 120
        %v1937 = vpop.permute.xlu0 %1936
        %1938 = vrot.lane.b32.xlu0 %v1905, 120
        %v1939 = vpop.permute.xlu0 %1938
        %1940 = vrot.lane.b32.xlu0 %v1906, 120
        %v1941 = vpop.permute.xlu0 %1940
        %1942 = vrot.lane.b32.xlu0 %v1907, 120
        %v1943 = vpop.permute.xlu0 %1942
        %1944 = vrot.lane.b32.xlu0 %v1908, 120
        %v1945 = vpop.permute.xlu0 %1944
        %1946 = vrot.lane.b32.xlu0 %v1909, 120
        %v1947 = vpop.permute.xlu0 %1946
        %1948 = vrot.lane.b32.xlu0 %v1910, 120
        %v1949 = vpop.permute.xlu0 %1948
        %1950 = vrot.lane.b32.xlu0 %v1911, 120
        %v1951 = vpop.permute.xlu0 %1950
        %1952 = vrot.lane.b32.xlu0 %v1912, 120
        %v1953 = vpop.permute.xlu0 %1952
        %1954 = vrot.lane.b32.xlu0 %v1913, 120
        %v1955 = vpop.permute.xlu0 %1954
        %1956 = vrot.lane.b32.xlu0 %v1914, 120
        %v1957 = vpop.permute.xlu0 %1956
        %1958 = vrot.lane.b32.xlu0 %v1915, 120
        %v1959 = vpop.permute.xlu0 %1958
        %1960 = vrot.lane.b32.xlu0 %v1916, 120
        %v1961 = vpop.permute.xlu0 %1960
        %1962 = vrot.lane.b32.xlu0 %v1917, 120
        %v1963 = vpop.permute.xlu0 %1962
        %1964 = vrot.lane.b32.xlu0 %v1918, 120
        %v1965 = vpop.permute.xlu0 %1964
        %1966 = vrot.lane.b32.xlu0 %v1919, 120
        %v1967 = vpop.permute.xlu0 %1966
        %1984 = vmatprep.subr.mxu0 0.0
        %1985 = vmatpush1.msra.mxu0 %v1967
        %1986 = vmatprep.subr.mxu0 0.0
        %1987 = vmatpush1.msra.mxu0 %v1965
        %1988 = vmatprep.subr.mxu0 0.0
        %1989 = vmatpush1.msra.mxu0 %v1963
        %1990 = vmatprep.subr.mxu0 0.0
        %1991 = vmatpush1.msra.mxu0 %v1961
        %1992 = vmatprep.subr.mxu0 0.0
        %1993 = vmatpush1.msra.mxu0 %v1959
        %1994 = vmatprep.subr.mxu0 0.0
        %1995 = vmatpush1.msra.mxu0 %v1957
        %1996 = vmatprep.subr.mxu0 0.0
        %1997 = vmatpush1.msra.mxu0 %v1955
        %1998 = vmatprep.subr.mxu0 0.0
        %1999 = vmatpush1.msra.mxu0 %v1953
        %2000 = vmatprep.subr.mxu0 0.0
        %2001 = vmatpush1.msra.mxu0 %v1951
        %2002 = vmatprep.subr.mxu0 0.0
        %2003 = vmatpush1.msra.mxu0 %v1949
        %2004 = vmatprep.subr.mxu0 0.0
        %2005 = vmatpush1.msra.mxu0 %v1947
        %2006 = vmatprep.subr.mxu0 0.0
        %2007 = vmatpush1.msra.mxu0 %v1945
        %2008 = vmatprep.subr.mxu0 0.0
        %2009 = vmatpush1.msra.mxu0 %v1943
        %2010 = vmatprep.subr.mxu0 0.0
        %2011 = vmatpush1.msra.mxu0 %v1941
        %2012 = vmatprep.subr.mxu0 0.0
        %2013 = vmatpush1.msra.mxu0 %v1939
        %2014 = vmatprep.subr.mxu0 0.0
        %2015 = vmatpush1.msra.mxu0 %v1937
        %2016 = vmatprep.subr.mxu0 0.0
        %2017 = vmatpush2.msra.mxu0 0.0
        %2018 = vmatprep.subr.mxu0 0.0
        %2019 = vmatpush2.msra.mxu0 0.0
        %2020 = vmatprep.subr.mxu0 0.0
        %2021 = vmatpush2.msra.mxu0 0.0
        %2022 = vmatprep.subr.mxu0 0.0
        %2023 = vmatpush2.msra.mxu0 0.0
        %2024 = vmatprep.subr.mxu0 0.0
        %2025 = vmatpush2.msra.mxu0 0.0
        %2026 = vmatprep.subr.mxu0 0.0
        %2027 = vmatpush2.msra.mxu0 0.0
        %2028 = vmatprep.subr.mxu0 0.0
        %2029 = vmatpush2.msra.mxu0 0.0
        %2030 = vmatprep.subr.mxu0 0.0
        %2031 = vmatpush2.msra.mxu0 0.0
        %2032 = vmatprep.subr.mxu0 0.0
        %2033 = vmatpush2.msra.mxu0 0.0
        %2034 = vmatprep.subr.mxu0 0.0
        %2035 = vmatpush2.msra.mxu0 0.0
        %2036 = vmatprep.subr.mxu0 0.0
        %2037 = vmatpush2.msra.mxu0 0.0
        %2038 = vmatprep.subr.mxu0 0.0
        %2039 = vmatpush2.msra.mxu0 0.0
        %2040 = vmatprep.subr.mxu0 0.0
        %2041 = vmatpush2.msra.mxu0 0.0
        %2042 = vmatprep.subr.mxu0 0.0
        %2043 = vmatpush2.msra.mxu0 0.0
        %2044 = vmatprep.subr.mxu0 0.0
        %2045 = vmatpush2.msra.mxu0 0.0
        %2046 = vmatprep.subr.mxu0 0.0
        %2047 = vmatpush2.msra.mxu0 0.0
        %2048 = vmatprep.mubr.f32.mxu0 0.0
        %2049 = vmatmul.mubr.f32.gmra.mxu0 %v1832
        %v2050 = vpop.f32.mrf.mxu0
        %v2051 = vadd.f32 0.0, %v2050
        %v2052 = vpop.f32.mrf.mxu0
        %2053 = vmatprep.mubr.f32.mxu0 0.0
        %2054 = vmatmul.mubr.f32.gmra.mxu0 %v1834
        %v2055 = vpop.f32.mrf.mxu0
        %v2056 = vadd.f32 0.0, %v2055
        %v2057 = vpop.f32.mrf.mxu0
        %2058 = vmatprep.mubr.f32.mxu0 0.0
        %2059 = vmatmul.mubr.f32.gmra.mxu0 %v1836
        %v2060 = vpop.f32.mrf.mxu0
        %v2061 = vadd.f32 0.0, %v2060
        %v2062 = vpop.f32.mrf.mxu0
        %2063 = vmatprep.mubr.f32.mxu0 0.0
        %2064 = vmatmul.mubr.f32.gmra.mxu0 %v1838
        %v2065 = vpop.f32.mrf.mxu0
        %v2066 = vadd.f32 0.0, %v2065
        %v2067 = vpop.f32.mrf.mxu0
        %2068 = vmatprep.mubr.f32.mxu0 0.0
        %2069 = vmatmul.mubr.f32.gmra.mxu0 %v1840
        %v2070 = vpop.f32.mrf.mxu0
        %v2071 = vadd.f32 0.0, %v2070
        %v2072 = vpop.f32.mrf.mxu0
        %2073 = vmatprep.mubr.f32.mxu0 0.0
        %2074 = vmatmul.mubr.f32.gmra.mxu0 %v1842
        %v2075 = vpop.f32.mrf.mxu0
        %v2076 = vadd.f32 0.0, %v2075
        %v2077 = vpop.f32.mrf.mxu0
        %2078 = vmatprep.mubr.f32.mxu0 0.0
        %2079 = vmatmul.mubr.f32.gmra.mxu0 %v1844
        %v2080 = vpop.f32.mrf.mxu0
        %v2081 = vadd.f32 0.0, %v2080
        %v2082 = vpop.f32.mrf.mxu0
        %2083 = vmatprep.mubr.f32.mxu0 0.0
        %2084 = vmatmul.mubr.f32.gmra.mxu0 %v1846
        %v2085 = vpop.f32.mrf.mxu0
        %v2086 = vadd.f32 0.0, %v2085
        %v2087 = vpop.f32.mrf.mxu0
        %2088 = vdwg.mxu0
        %v2089 = vld [vmem:[#allocation3] sm:$0xff]
        %v2090 = vld [vmem:[#allocation3 + $0x8] sm:$0xff]
        %v2091 = vld [vmem:[#allocation3 + $0x10] sm:$0xff]
        %v2092 = vld [vmem:[#allocation3 + $0x18] sm:$0xff]
        %v2093 = vld [vmem:[#allocation3 + $0x20] sm:$0xff]
        %v2094 = vld [vmem:[#allocation3 + $0x28] sm:$0xff]
        %v2095 = vld [vmem:[#allocation3 + $0x30] sm:$0xff]
        %v2096 = vld [vmem:[#allocation3 + $0x38] sm:$0xff]
        %2098 = vset.pattern.permute.xlu0 0
        %2099 = vperm.xlu0 %2098, %v1768
        %v2100 = vpop.permute.xlu0 %2099
        %2103 = vset.pattern.permute.xlu0 0
        %2104 = vperm.xlu0 %2103, %v1770
        %v2105 = vpop.permute.xlu0 %2104
        %2108 = vset.pattern.permute.xlu0 0
        %2109 = vperm.xlu0 %2108, %v1772
        %v2110 = vpop.permute.xlu0 %2109
        %2113 = vset.pattern.permute.xlu0 0
        %2114 = vperm.xlu0 %2113, %v1774
        %v2115 = vpop.permute.xlu0 %2114
        %2118 = vset.pattern.permute.xlu0 0
        %2119 = vperm.xlu0 %2118, %v1776
        %v2120 = vpop.permute.xlu0 %2119
        %2123 = vset.pattern.permute.xlu0 0
        %2124 = vperm.xlu0 %2123, %v1778
        %v2125 = vpop.permute.xlu0 %2124
        %2128 = vset.pattern.permute.xlu0 0
        %2129 = vperm.xlu0 %2128, %v1780
        %v2130 = vpop.permute.xlu0 %2129
        %2133 = vset.pattern.permute.xlu0 0
        %2134 = vperm.xlu0 %2133, %v1782
        %v2135 = vpop.permute.xlu0 %2134
        %v2137 = vmul.f32 %v2100, %v2089
        %v2138 = vmul.f32 %v2105, %v2090
        %v2139 = vmul.f32 %v2110, %v2091
        %v2140 = vmul.f32 %v2115, %v2092
        %v2141 = vmul.f32 %v2120, %v2093
        %v2142 = vmul.f32 %v2125, %v2094
        %v2143 = vmul.f32 %v2130, %v2095
        %v2144 = vmul.f32 %v2135, %v2096
        %2153 = vrot.lane.b32.xlu0 %v2051, 8
        %v2154 = vpop.permute.xlu0 %2153
        %2155 = vrot.lane.b32.xlu0 %v2056, 8
        %v2156 = vpop.permute.xlu0 %2155
        %2157 = vrot.lane.b32.xlu0 %v2061, 8
        %v2158 = vpop.permute.xlu0 %2157
        %2159 = vrot.lane.b32.xlu0 %v2066, 8
        %v2160 = vpop.permute.xlu0 %2159
        %2161 = vrot.lane.b32.xlu0 %v2071, 8
        %v2162 = vpop.permute.xlu0 %2161
        %2163 = vrot.lane.b32.xlu0 %v2076, 8
        %v2164 = vpop.permute.xlu0 %2163
        %2165 = vrot.lane.b32.xlu0 %v2081, 8
        %v2166 = vpop.permute.xlu0 %2165
        %2167 = vrot.lane.b32.xlu0 %v2086, 8
        %v2168 = vpop.permute.xlu0 %2167
        %v2177 = vadd.f32 %v2137, %v2154
        %v2178 = vadd.f32 %v2138, %v2156
        %v2179 = vadd.f32 %v2139, %v2158
        %v2180 = vadd.f32 %v2140, %v2160
        %v2181 = vadd.f32 %v2141, %v2162
        %v2182 = vadd.f32 %v2142, %v2164
        %v2183 = vadd.f32 %v2143, %v2166
        %v2184 = vadd.f32 %v2144, %v2168
        %vm2185 = vcmask 130112
        %2186 = vst.msk [vmem:[#allocation3] sm:$0xff] %vm2185, %v2177
        %2187 = vst.msk [vmem:[#allocation3 + $0x8] sm:$0xff] %vm2185, %v2178
        %2188 = vst.msk [vmem:[#allocation3 + $0x10] sm:$0xff] %vm2185, %v2179
        %2189 = vst.msk [vmem:[#allocation3 + $0x18] sm:$0xff] %vm2185, %v2180
        %2190 = vst.msk [vmem:[#allocation3 + $0x20] sm:$0xff] %vm2185, %v2181
        %2191 = vst.msk [vmem:[#allocation3 + $0x28] sm:$0xff] %vm2185, %v2182
        %2192 = vst.msk [vmem:[#allocation3 + $0x30] sm:$0xff] %vm2185, %v2183
        %2193 = vst.msk [vmem:[#allocation3 + $0x38] sm:$0xff] %vm2185, %v2184
        %v2194 = vld [vmem:[%s983] sm:$0xff]
        %v2195 = vld [vmem:[%s983 + $0x8] sm:$0xff]
        %v2196 = vld [vmem:[%s983 + $0x10] sm:$0xff]
        %v2197 = vld [vmem:[%s983 + $0x18] sm:$0xff]
        %v2198 = vld [vmem:[%s983 + $0x20] sm:$0xff]
        %v2199 = vld [vmem:[%s983 + $0x28] sm:$0xff]
        %v2200 = vld [vmem:[%s983 + $0x30] sm:$0xff]
        %v2201 = vld [vmem:[%s983 + $0x38] sm:$0xff]
        %v2202 = vld [vmem:[#allocation2] sm:$0xff]
        %v2203 = vld [vmem:[#allocation2 + $0x8] sm:$0xff]
        %v2204 = vld [vmem:[#allocation2 + $0x10] sm:$0xff]
        %v2205 = vld [vmem:[#allocation2 + $0x18] sm:$0xff]
        %v2206 = vld [vmem:[#allocation2 + $0x20] sm:$0xff]
        %v2207 = vld [vmem:[#allocation2 + $0x28] sm:$0xff]
        %v2208 = vld [vmem:[#allocation2 + $0x30] sm:$0xff]
        %v2209 = vld [vmem:[#allocation2 + $0x38] sm:$0xff]
        %v2210 = vld [vmem:[%s460 + $0x10] sm:$0xff]
        %2219 = vrot.lane.b32.xlu0 %v2202, 112
        %v2220 = vpop.permute.xlu0 %2219
        %2221 = vrot.lane.b32.xlu0 %v2203, 112
        %v2222 = vpop.permute.xlu0 %2221
        %2223 = vrot.lane.b32.xlu0 %v2204, 112
        %v2224 = vpop.permute.xlu0 %2223
        %2225 = vrot.lane.b32.xlu0 %v2205, 112
        %v2226 = vpop.permute.xlu0 %2225
        %2227 = vrot.lane.b32.xlu0 %v2206, 112
        %v2228 = vpop.permute.xlu0 %2227
        %2229 = vrot.lane.b32.xlu0 %v2207, 112
        %v2230 = vpop.permute.xlu0 %2229
        %2231 = vrot.lane.b32.xlu0 %v2208, 112
        %v2232 = vpop.permute.xlu0 %2231
        %2233 = vrot.lane.b32.xlu0 %v2209, 112
        %v2234 = vpop.permute.xlu0 %2233
        %v2235 = vsel %vm1010, %v2220, 0
        %v2237 = vsel %vm1010, %v2222, 0
        %v2239 = vsel %vm1010, %v2224, 0
        %v2241 = vsel %vm1010, %v2226, 0
        %v2243 = vsel %vm1010, %v2228, 0
        %v2245 = vsel %vm1010, %v2230, 0
        %v2247 = vsel %vm1010, %v2232, 0
        %v2249 = vsel %vm1010, %v2234, 0
        %2251 = vmatprep.subr.mxu0 0.0
        %2252 = vmatpush1.msra.mxu0 0.0
        %2253 = vmatprep.subr.mxu0 0.0
        %2254 = vmatpush1.msra.mxu0 0.0
        %2255 = vmatprep.subr.mxu0 0.0
        %2256 = vmatpush1.msra.mxu0 0.0
        %2257 = vmatprep.subr.mxu0 0.0
        %2258 = vmatpush1.msra.mxu0 0.0
        %2259 = vmatprep.subr.mxu0 0.0
        %2260 = vmatpush1.msra.mxu0 0.0
        %2261 = vmatprep.subr.mxu0 0.0
        %2262 = vmatpush1.msra.mxu0 0.0
        %2263 = vmatprep.subr.mxu0 0.0
        %2264 = vmatpush1.msra.mxu0 0.0
        %2265 = vmatprep.subr.mxu0 0.0
        %2266 = vmatpush1.msra.mxu0 0.0
        %2267 = vmatprep.subr.mxu0 0.0
        %2268 = vmatpush1.msra.mxu0 0.0
        %2269 = vmatprep.subr.mxu0 0.0
        %2270 = vmatpush1.msra.mxu0 0.0
        %2271 = vmatprep.subr.mxu0 0.0
        %2272 = vmatpush1.msra.mxu0 0.0
        %2273 = vmatprep.subr.mxu0 0.0
        %2274 = vmatpush1.msra.mxu0 0.0
        %2275 = vmatprep.subr.mxu0 0.0
        %2276 = vmatpush1.msra.mxu0 0.0
        %2277 = vmatprep.subr.mxu0 0.0
        %2278 = vmatpush1.msra.mxu0 0.0
        %2279 = vmatprep.subr.mxu0 0.0
        %2280 = vmatpush1.msra.mxu0 0.0
        %2281 = vmatprep.subr.mxu0 0.0
        %2282 = vmatpush1.msra.mxu0 %v2210
        %2283 = vmatprep.subr.mxu0 0.0
        %2284 = vmatpush2.msra.mxu0 0.0
        %2285 = vmatprep.subr.mxu0 0.0
        %2286 = vmatpush2.msra.mxu0 0.0
        %2287 = vmatprep.subr.mxu0 0.0
        %2288 = vmatpush2.msra.mxu0 0.0
        %2289 = vmatprep.subr.mxu0 0.0
        %2290 = vmatpush2.msra.mxu0 0.0
        %2291 = vmatprep.subr.mxu0 0.0
        %2292 = vmatpush2.msra.mxu0 0.0
        %2293 = vmatprep.subr.mxu0 0.0
        %2294 = vmatpush2.msra.mxu0 0.0
        %2295 = vmatprep.subr.mxu0 0.0
        %2296 = vmatpush2.msra.mxu0 0.0
        %2297 = vmatprep.subr.mxu0 0.0
        %2298 = vmatpush2.msra.mxu0 0.0
        %2299 = vmatprep.subr.mxu0 0.0
        %2300 = vmatpush2.msra.mxu0 0.0
        %2301 = vmatprep.subr.mxu0 0.0
        %2302 = vmatpush2.msra.mxu0 0.0
        %2303 = vmatprep.subr.mxu0 0.0
        %2304 = vmatpush2.msra.mxu0 0.0
        %2305 = vmatprep.subr.mxu0 0.0
        %2306 = vmatpush2.msra.mxu0 0.0
        %2307 = vmatprep.subr.mxu0 0.0
        %2308 = vmatpush2.msra.mxu0 0.0
        %2309 = vmatprep.subr.mxu0 0.0
        %2310 = vmatpush2.msra.mxu0 0.0
        %2311 = vmatprep.subr.mxu0 0.0
        %2312 = vmatpush2.msra.mxu0 0.0
        %2313 = vmatprep.subr.mxu0 0.0
        %2314 = vmatpush2.msra.mxu0 0.0
        %2315 = vmatprep.mubr.f32.mxu0 0.0
        %2316 = vmatmul.mubr.f32.gmra.mxu0 %v2235
        %v2317 = vpop.f32.mrf.mxu0
        %v2318 = vadd.f32 0.0, %v2317
        %v2319 = vpop.f32.mrf.mxu0
        %2320 = vmatprep.mubr.f32.mxu0 0.0
        %2321 = vmatmul.mubr.f32.gmra.mxu0 %v2237
        %v2322 = vpop.f32.mrf.mxu0
        %v2323 = vadd.f32 0.0, %v2322
        %v2324 = vpop.f32.mrf.mxu0
        %2325 = vmatprep.mubr.f32.mxu0 0.0
        %2326 = vmatmul.mubr.f32.gmra.mxu0 %v2239
        %v2327 = vpop.f32.mrf.mxu0
        %v2328 = vadd.f32 0.0, %v2327
        %v2329 = vpop.f32.mrf.mxu0
        %2330 = vmatprep.mubr.f32.mxu0 0.0
        %2331 = vmatmul.mubr.f32.gmra.mxu0 %v2241
        %v2332 = vpop.f32.mrf.mxu0
        %v2333 = vadd.f32 0.0, %v2332
        %v2334 = vpop.f32.mrf.mxu0
        %2335 = vmatprep.mubr.f32.mxu0 0.0
        %2336 = vmatmul.mubr.f32.gmra.mxu0 %v2243
        %v2337 = vpop.f32.mrf.mxu0
        %v2338 = vadd.f32 0.0, %v2337
        %v2339 = vpop.f32.mrf.mxu0
        %2340 = vmatprep.mubr.f32.mxu0 0.0
        %2341 = vmatmul.mubr.f32.gmra.mxu0 %v2245
        %v2342 = vpop.f32.mrf.mxu0
        %v2343 = vadd.f32 0.0, %v2342
        %v2344 = vpop.f32.mrf.mxu0
        %2345 = vmatprep.mubr.f32.mxu0 0.0
        %2346 = vmatmul.mubr.f32.gmra.mxu0 %v2247
        %v2347 = vpop.f32.mrf.mxu0
        %v2348 = vadd.f32 0.0, %v2347
        %v2349 = vpop.f32.mrf.mxu0
        %2350 = vmatprep.mubr.f32.mxu0 0.0
        %2351 = vmatmul.mubr.f32.gmra.mxu0 %v2249
        %v2352 = vpop.f32.mrf.mxu0
        %v2353 = vadd.f32 0.0, %v2352
        %v2354 = vpop.f32.mrf.mxu0
        %2355 = vdwg.mxu0
        %v2356 = vmul.f32 %v2194, 0.015625
        %v2357 = vmul.f32 %v2195, 0.015625
        %v2358 = vmul.f32 %v2196, 0.015625
        %v2359 = vmul.f32 %v2197, 0.015625
        %v2360 = vmul.f32 %v2198, 0.015625
        %v2361 = vmul.f32 %v2199, 0.015625
        %v2362 = vmul.f32 %v2200, 0.015625
        %v2363 = vmul.f32 %v2201, 0.015625
        %v2364 = vsub.f32 %v2318, %v2356
        %v2365 = vsub.f32 %v2323, %v2357
        %v2366 = vsub.f32 %v2328, %v2358
        %v2367 = vsub.f32 %v2333, %v2359
        %v2368 = vsub.f32 %v2338, %v2360
        %v2369 = vsub.f32 %v2343, %v2361
        %v2370 = vsub.f32 %v2348, %v2362
        %v2371 = vsub.f32 %v2353, %v2363
        %v2372 = vadd.f32 %v2364, %v1160
        %v2373 = vadd.f32 %v2365, %v1160
        %v2374 = vadd.f32 %v2366, %v1160
        %v2375 = vadd.f32 %v2367, %v1160
        %v2376 = vadd.f32 %v2368, %v1160
        %v2377 = vadd.f32 %v2369, %v1160
        %v2378 = vadd.f32 %v2370, %v1160
        %v2379 = vadd.f32 %v2371, %v1160
        %s2380 = scalar_lea.vmem [#allocation4], 128
        %v2381 = vld [vmem:[%s2380] sm:$0xff]
        %v2382 = vld [vmem:[%s2380 + $0x8] sm:$0xff]
        %v2383 = vld [vmem:[%s2380 + $0x10] sm:$0xff]
        %v2384 = vld [vmem:[%s2380 + $0x18] sm:$0xff]
        %v2385 = vld [vmem:[%s2380 + $0x20] sm:$0xff]
        %v2386 = vld [vmem:[%s2380 + $0x28] sm:$0xff]
        %v2387 = vld [vmem:[%s2380 + $0x30] sm:$0xff]
        %v2388 = vld [vmem:[%s2380 + $0x38] sm:$0xff]
        %2389 = vmax.xlane.f32.xlu0 %v2372
        %v2390 = vpop.xlane.xlu0 %2389
        %2391 = vmax.xlane.f32.xlu0 %v2373
        %v2392 = vpop.xlane.xlu0 %2391
        %2393 = vmax.xlane.f32.xlu0 %v2374
        %v2394 = vpop.xlane.xlu0 %2393
        %2395 = vmax.xlane.f32.xlu0 %v2375
        %v2396 = vpop.xlane.xlu0 %2395
        %2397 = vmax.xlane.f32.xlu0 %v2376
        %v2398 = vpop.xlane.xlu0 %2397
        %2399 = vmax.xlane.f32.xlu0 %v2377
        %v2400 = vpop.xlane.xlu0 %2399
        %2401 = vmax.xlane.f32.xlu0 %v2378
        %v2402 = vpop.xlane.xlu0 %2401
        %2403 = vmax.xlane.f32.xlu0 %v2379
        %v2404 = vpop.xlane.xlu0 %2403
        %v2405 = vmax.f32 %v2381, %v2390
        %v2406 = vmax.f32 %v2382, %v2392
        %v2407 = vmax.f32 %v2383, %v2394
        %v2408 = vmax.f32 %v2384, %v2396
        %v2409 = vmax.f32 %v2385, %v2398
        %v2410 = vmax.f32 %v2386, %v2400
        %v2411 = vmax.f32 %v2387, %v2402
        %v2412 = vmax.f32 %v2388, %v2404
        %v2413 = vsub.f32 %v2381, %v2405
        %v2414 = vsub.f32 %v2382, %v2406
        %v2415 = vsub.f32 %v2383, %v2407
        %v2416 = vsub.f32 %v2384, %v2408
        %v2417 = vsub.f32 %v2385, %v2409
        %v2418 = vsub.f32 %v2386, %v2410
        %v2419 = vsub.f32 %v2387, %v2411
        %v2420 = vsub.f32 %v2388, %v2412
        %v2421 = vmul.f32 %v2413, 1.442695
        %v2422 = vpow.pop %v2421
        %v2423 = vmul.f32 %v2414, 1.442695
        %v2424 = vpow.pop %v2423
        %v2425 = vmul.f32 %v2415, 1.442695
        %v2426 = vpow.pop %v2425
        %v2427 = vmul.f32 %v2416, 1.442695
        %v2428 = vpow.pop %v2427
        %v2429 = vmul.f32 %v2417, 1.442695
        %v2430 = vpow.pop %v2429
        %v2431 = vmul.f32 %v2418, 1.442695
        %v2432 = vpow.pop %v2431
        %v2433 = vmul.f32 %v2419, 1.442695
        %v2434 = vpow.pop %v2433
        %v2435 = vmul.f32 %v2420, 1.442695
        %v2436 = vpow.pop %v2435
        %2438 = vset.pattern.permute.xlu0 0
        %2439 = vperm.xlu0 %2438, %v2405
        %v2440 = vpop.permute.xlu0 %2439
        %2443 = vset.pattern.permute.xlu0 0
        %2444 = vperm.xlu0 %2443, %v2406
        %v2445 = vpop.permute.xlu0 %2444
        %2448 = vset.pattern.permute.xlu0 0
        %2449 = vperm.xlu0 %2448, %v2407
        %v2450 = vpop.permute.xlu0 %2449
        %2453 = vset.pattern.permute.xlu0 0
        %2454 = vperm.xlu0 %2453, %v2408
        %v2455 = vpop.permute.xlu0 %2454
        %2458 = vset.pattern.permute.xlu0 0
        %2459 = vperm.xlu0 %2458, %v2409
        %v2460 = vpop.permute.xlu0 %2459
        %2463 = vset.pattern.permute.xlu0 0
        %2464 = vperm.xlu0 %2463, %v2410
        %v2465 = vpop.permute.xlu0 %2464
        %2468 = vset.pattern.permute.xlu0 0
        %2469 = vperm.xlu0 %2468, %v2411
        %v2470 = vpop.permute.xlu0 %2469
        %2473 = vset.pattern.permute.xlu0 0
        %2474 = vperm.xlu0 %2473, %v2412
        %v2475 = vpop.permute.xlu0 %2474
        %v2477 = vsub.f32 %v2372, %v2440
        %v2478 = vsub.f32 %v2373, %v2445
        %v2479 = vsub.f32 %v2374, %v2450
        %v2480 = vsub.f32 %v2375, %v2455
        %v2481 = vsub.f32 %v2376, %v2460
        %v2482 = vsub.f32 %v2377, %v2465
        %v2483 = vsub.f32 %v2378, %v2470
        %v2484 = vsub.f32 %v2379, %v2475
        %v2485 = vmul.f32 %v2477, 1.442695
        %v2486 = vpow.pop %v2485
        %v2487 = vmul.f32 %v2478, 1.442695
        %v2488 = vpow.pop %v2487
        %v2489 = vmul.f32 %v2479, 1.442695
        %v2490 = vpow.pop %v2489
        %v2491 = vmul.f32 %v2480, 1.442695
        %v2492 = vpow.pop %v2491
        %v2493 = vmul.f32 %v2481, 1.442695
        %v2494 = vpow.pop %v2493
        %v2495 = vmul.f32 %v2482, 1.442695
        %v2496 = vpow.pop %v2495
        %v2497 = vmul.f32 %v2483, 1.442695
        %v2498 = vpow.pop %v2497
        %v2499 = vmul.f32 %v2484, 1.442695
        %v2500 = vpow.pop %v2499
        %s2501 = scalar_lea.vmem [#allocation5], 128
        %v2502 = vld [vmem:[%s2501] sm:$0xff]
        %v2503 = vld [vmem:[%s2501 + $0x8] sm:$0xff]
        %v2504 = vld [vmem:[%s2501 + $0x10] sm:$0xff]
        %v2505 = vld [vmem:[%s2501 + $0x18] sm:$0xff]
        %v2506 = vld [vmem:[%s2501 + $0x20] sm:$0xff]
        %v2507 = vld [vmem:[%s2501 + $0x28] sm:$0xff]
        %v2508 = vld [vmem:[%s2501 + $0x30] sm:$0xff]
        %v2509 = vld [vmem:[%s2501 + $0x38] sm:$0xff]
        %v2510 = vmul.f32 %v2422, %v2502
        %v2511 = vmul.f32 %v2424, %v2503
        %v2512 = vmul.f32 %v2426, %v2504
        %v2513 = vmul.f32 %v2428, %v2505
        %v2514 = vmul.f32 %v2430, %v2506
        %v2515 = vmul.f32 %v2432, %v2507
        %v2516 = vmul.f32 %v2434, %v2508
        %v2517 = vmul.f32 %v2436, %v2509
        %2518 = vadd.xlane.f32.xlu0 %v2486
        %v2519 = vpop.xlane.xlu0 %2518
        %2520 = vadd.xlane.f32.xlu0 %v2488
        %v2521 = vpop.xlane.xlu0 %2520
        %2522 = vadd.xlane.f32.xlu0 %v2490
        %v2523 = vpop.xlane.xlu0 %2522
        %2524 = vadd.xlane.f32.xlu0 %v2492
        %v2525 = vpop.xlane.xlu0 %2524
        %2526 = vadd.xlane.f32.xlu0 %v2494
        %v2527 = vpop.xlane.xlu0 %2526
        %2528 = vadd.xlane.f32.xlu0 %v2496
        %v2529 = vpop.xlane.xlu0 %2528
        %2530 = vadd.xlane.f32.xlu0 %v2498
        %v2531 = vpop.xlane.xlu0 %2530
        %2532 = vadd.xlane.f32.xlu0 %v2500
        %v2533 = vpop.xlane.xlu0 %2532
        %v2534 = vadd.f32 %v2510, %v2519
        %v2535 = vadd.f32 %v2511, %v2521
        %v2536 = vadd.f32 %v2512, %v2523
        %v2537 = vadd.f32 %v2513, %v2525
        %v2538 = vadd.f32 %v2514, %v2527
        %v2539 = vadd.f32 %v2515, %v2529
        %v2540 = vadd.f32 %v2516, %v2531
        %v2541 = vadd.f32 %v2517, %v2533
        %2542 = vst.msk [vmem:[%s2501] sm:$0xff] %vm1330, %v2534
        %2543 = vst.msk [vmem:[%s2501 + $0x8] sm:$0xff] %vm1330, %v2535
        %2544 = vst.msk [vmem:[%s2501 + $0x10] sm:$0xff] %vm1330, %v2536
        %2545 = vst.msk [vmem:[%s2501 + $0x18] sm:$0xff] %vm1330, %v2537
        %2546 = vst.msk [vmem:[%s2501 + $0x20] sm:$0xff] %vm1330, %v2538
        %2547 = vst.msk [vmem:[%s2501 + $0x28] sm:$0xff] %vm1330, %v2539
        %2548 = vst.msk [vmem:[%s2501 + $0x30] sm:$0xff] %vm1330, %v2540
        %2549 = vst.msk [vmem:[%s2501 + $0x38] sm:$0xff] %vm1330, %v2541
        %2550 = vst.msk [vmem:[%s2380] sm:$0xff] %vm1330, %v2405
        %2551 = vst.msk [vmem:[%s2380 + $0x8] sm:$0xff] %vm1330, %v2406
        %2552 = vst.msk [vmem:[%s2380 + $0x10] sm:$0xff] %vm1330, %v2407
        %2553 = vst.msk [vmem:[%s2380 + $0x18] sm:$0xff] %vm1330, %v2408
        %2554 = vst.msk [vmem:[%s2380 + $0x20] sm:$0xff] %vm1330, %v2409
        %2555 = vst.msk [vmem:[%s2380 + $0x28] sm:$0xff] %vm1330, %v2410
        %2556 = vst.msk [vmem:[%s2380 + $0x30] sm:$0xff] %vm1330, %v2411
        %2557 = vst.msk [vmem:[%s2380 + $0x38] sm:$0xff] %vm1330, %v2412
        %v2558 = vld [vmem:[%s551] sm:$0xff]
        %v2559 = vld [vmem:[%s551 + $0x8] sm:$0xff]
        %v2560 = vld [vmem:[%s551 + $0x10] sm:$0xff]
        %v2561 = vld [vmem:[%s551 + $0x18] sm:$0xff]
        %v2562 = vld [vmem:[%s551 + $0x20] sm:$0xff]
        %v2563 = vld [vmem:[%s551 + $0x28] sm:$0xff]
        %v2564 = vld [vmem:[%s551 + $0x30] sm:$0xff]
        %v2565 = vld [vmem:[%s551 + $0x38] sm:$0xff]
        %v2566 = vld [vmem:[%s551 + $0x40] sm:$0xff]
        %v2567 = vld [vmem:[%s551 + $0x48] sm:$0xff]
        %v2568 = vld [vmem:[%s551 + $0x50] sm:$0xff]
        %v2569 = vld [vmem:[%s551 + $0x58] sm:$0xff]
        %v2570 = vld [vmem:[%s551 + $0x60] sm:$0xff]
        %v2571 = vld [vmem:[%s551 + $0x68] sm:$0xff]
        %v2572 = vld [vmem:[%s551 + $0x70] sm:$0xff]
        %v2573 = vld [vmem:[%s551 + $0x78] sm:$0xff]
        %2590 = vrot.lane.b32.xlu0 %v2558, 112
        %v2591 = vpop.permute.xlu0 %2590
        %2592 = vrot.lane.b32.xlu0 %v2559, 112
        %v2593 = vpop.permute.xlu0 %2592
        %2594 = vrot.lane.b32.xlu0 %v2560, 112
        %v2595 = vpop.permute.xlu0 %2594
        %2596 = vrot.lane.b32.xlu0 %v2561, 112
        %v2597 = vpop.permute.xlu0 %2596
        %2598 = vrot.lane.b32.xlu0 %v2562, 112
        %v2599 = vpop.permute.xlu0 %2598
        %2600 = vrot.lane.b32.xlu0 %v2563, 112
        %v2601 = vpop.permute.xlu0 %2600
        %2602 = vrot.lane.b32.xlu0 %v2564, 112
        %v2603 = vpop.permute.xlu0 %2602
        %2604 = vrot.lane.b32.xlu0 %v2565, 112
        %v2605 = vpop.permute.xlu0 %2604
        %2606 = vrot.lane.b32.xlu0 %v2566, 112
        %v2607 = vpop.permute.xlu0 %2606
        %2608 = vrot.lane.b32.xlu0 %v2567, 112
        %v2609 = vpop.permute.xlu0 %2608
        %2610 = vrot.lane.b32.xlu0 %v2568, 112
        %v2611 = vpop.permute.xlu0 %2610
        %2612 = vrot.lane.b32.xlu0 %v2569, 112
        %v2613 = vpop.permute.xlu0 %2612
        %2614 = vrot.lane.b32.xlu0 %v2570, 112
        %v2615 = vpop.permute.xlu0 %2614
        %2616 = vrot.lane.b32.xlu0 %v2571, 112
        %v2617 = vpop.permute.xlu0 %2616
        %2618 = vrot.lane.b32.xlu0 %v2572, 112
        %v2619 = vpop.permute.xlu0 %2618
        %2620 = vrot.lane.b32.xlu0 %v2573, 112
        %v2621 = vpop.permute.xlu0 %2620
        %2638 = vmatprep.subr.mxu0 0.0
        %2639 = vmatpush1.msra.mxu0 %v2621
        %2640 = vmatprep.subr.mxu0 0.0
        %2641 = vmatpush1.msra.mxu0 %v2619
        %2642 = vmatprep.subr.mxu0 0.0
        %2643 = vmatpush1.msra.mxu0 %v2617
        %2644 = vmatprep.subr.mxu0 0.0
        %2645 = vmatpush1.msra.mxu0 %v2615
        %2646 = vmatprep.subr.mxu0 0.0
        %2647 = vmatpush1.msra.mxu0 %v2613
        %2648 = vmatprep.subr.mxu0 0.0
        %2649 = vmatpush1.msra.mxu0 %v2611
        %2650 = vmatprep.subr.mxu0 0.0
        %2651 = vmatpush1.msra.mxu0 %v2609
        %2652 = vmatprep.subr.mxu0 0.0
        %2653 = vmatpush1.msra.mxu0 %v2607
        %2654 = vmatprep.subr.mxu0 0.0
        %2655 = vmatpush1.msra.mxu0 %v2605
        %2656 = vmatprep.subr.mxu0 0.0
        %2657 = vmatpush1.msra.mxu0 %v2603
        %2658 = vmatprep.subr.mxu0 0.0
        %2659 = vmatpush1.msra.mxu0 %v2601
        %2660 = vmatprep.subr.mxu0 0.0
        %2661 = vmatpush1.msra.mxu0 %v2599
        %2662 = vmatprep.subr.mxu0 0.0
        %2663 = vmatpush1.msra.mxu0 %v2597
        %2664 = vmatprep.subr.mxu0 0.0
        %2665 = vmatpush1.msra.mxu0 %v2595
        %2666 = vmatprep.subr.mxu0 0.0
        %2667 = vmatpush1.msra.mxu0 %v2593
        %2668 = vmatprep.subr.mxu0 0.0
        %2669 = vmatpush1.msra.mxu0 %v2591
        %2670 = vmatprep.subr.mxu0 0.0
        %2671 = vmatpush2.msra.mxu0 0.0
        %2672 = vmatprep.subr.mxu0 0.0
        %2673 = vmatpush2.msra.mxu0 0.0
        %2674 = vmatprep.subr.mxu0 0.0
        %2675 = vmatpush2.msra.mxu0 0.0
        %2676 = vmatprep.subr.mxu0 0.0
        %2677 = vmatpush2.msra.mxu0 0.0
        %2678 = vmatprep.subr.mxu0 0.0
        %2679 = vmatpush2.msra.mxu0 0.0
        %2680 = vmatprep.subr.mxu0 0.0
        %2681 = vmatpush2.msra.mxu0 0.0
        %2682 = vmatprep.subr.mxu0 0.0
        %2683 = vmatpush2.msra.mxu0 0.0
        %2684 = vmatprep.subr.mxu0 0.0
        %2685 = vmatpush2.msra.mxu0 0.0
        %2686 = vmatprep.subr.mxu0 0.0
        %2687 = vmatpush2.msra.mxu0 0.0
        %2688 = vmatprep.subr.mxu0 0.0
        %2689 = vmatpush2.msra.mxu0 0.0
        %2690 = vmatprep.subr.mxu0 0.0
        %2691 = vmatpush2.msra.mxu0 0.0
        %2692 = vmatprep.subr.mxu0 0.0
        %2693 = vmatpush2.msra.mxu0 0.0
        %2694 = vmatprep.subr.mxu0 0.0
        %2695 = vmatpush2.msra.mxu0 0.0
        %2696 = vmatprep.subr.mxu0 0.0
        %2697 = vmatpush2.msra.mxu0 0.0
        %2698 = vmatprep.subr.mxu0 0.0
        %2699 = vmatpush2.msra.mxu0 0.0
        %2700 = vmatprep.subr.mxu0 0.0
        %2701 = vmatpush2.msra.mxu0 0.0
        %2702 = vmatprep.mubr.f32.mxu0 0.0
        %2703 = vmatmul.mubr.f32.gmra.mxu0 %v2486
        %v2704 = vpop.f32.mrf.mxu0
        %v2705 = vadd.f32 0.0, %v2704
        %v2706 = vpop.f32.mrf.mxu0
        %2707 = vmatprep.mubr.f32.mxu0 0.0
        %2708 = vmatmul.mubr.f32.gmra.mxu0 %v2488
        %v2709 = vpop.f32.mrf.mxu0
        %v2710 = vadd.f32 0.0, %v2709
        %v2711 = vpop.f32.mrf.mxu0
        %2712 = vmatprep.mubr.f32.mxu0 0.0
        %2713 = vmatmul.mubr.f32.gmra.mxu0 %v2490
        %v2714 = vpop.f32.mrf.mxu0
        %v2715 = vadd.f32 0.0, %v2714
        %v2716 = vpop.f32.mrf.mxu0
        %2717 = vmatprep.mubr.f32.mxu0 0.0
        %2718 = vmatmul.mubr.f32.gmra.mxu0 %v2492
        %v2719 = vpop.f32.mrf.mxu0
        %v2720 = vadd.f32 0.0, %v2719
        %v2721 = vpop.f32.mrf.mxu0
        %2722 = vmatprep.mubr.f32.mxu0 0.0
        %2723 = vmatmul.mubr.f32.gmra.mxu0 %v2494
        %v2724 = vpop.f32.mrf.mxu0
        %v2725 = vadd.f32 0.0, %v2724
        %v2726 = vpop.f32.mrf.mxu0
        %2727 = vmatprep.mubr.f32.mxu0 0.0
        %2728 = vmatmul.mubr.f32.gmra.mxu0 %v2496
        %v2729 = vpop.f32.mrf.mxu0
        %v2730 = vadd.f32 0.0, %v2729
        %v2731 = vpop.f32.mrf.mxu0
        %2732 = vmatprep.mubr.f32.mxu0 0.0
        %2733 = vmatmul.mubr.f32.gmra.mxu0 %v2498
        %v2734 = vpop.f32.mrf.mxu0
        %v2735 = vadd.f32 0.0, %v2734
        %v2736 = vpop.f32.mrf.mxu0
        %2737 = vmatprep.mubr.f32.mxu0 0.0
        %2738 = vmatmul.mubr.f32.gmra.mxu0 %v2500
        %v2739 = vpop.f32.mrf.mxu0
        %v2740 = vadd.f32 0.0, %v2739
        %v2741 = vpop.f32.mrf.mxu0
        %2742 = vdwg.mxu0
        %v2743 = vld [vmem:[#allocation3] sm:$0xff]
        %v2744 = vld [vmem:[#allocation3 + $0x8] sm:$0xff]
        %v2745 = vld [vmem:[#allocation3 + $0x10] sm:$0xff]
        %v2746 = vld [vmem:[#allocation3 + $0x18] sm:$0xff]
        %v2747 = vld [vmem:[#allocation3 + $0x20] sm:$0xff]
        %v2748 = vld [vmem:[#allocation3 + $0x28] sm:$0xff]
        %v2749 = vld [vmem:[#allocation3 + $0x30] sm:$0xff]
        %v2750 = vld [vmem:[#allocation3 + $0x38] sm:$0xff]
        %2752 = vset.pattern.permute.xlu0 0
        %2753 = vperm.xlu0 %2752, %v2422
        %v2754 = vpop.permute.xlu0 %2753
        %2757 = vset.pattern.permute.xlu0 0
        %2758 = vperm.xlu0 %2757, %v2424
        %v2759 = vpop.permute.xlu0 %2758
        %2762 = vset.pattern.permute.xlu0 0
        %2763 = vperm.xlu0 %2762, %v2426
        %v2764 = vpop.permute.xlu0 %2763
        %2767 = vset.pattern.permute.xlu0 0
        %2768 = vperm.xlu0 %2767, %v2428
        %v2769 = vpop.permute.xlu0 %2768
        %2772 = vset.pattern.permute.xlu0 0
        %2773 = vperm.xlu0 %2772, %v2430
        %v2774 = vpop.permute.xlu0 %2773
        %2777 = vset.pattern.permute.xlu0 0
        %2778 = vperm.xlu0 %2777, %v2432
        %v2779 = vpop.permute.xlu0 %2778
        %2782 = vset.pattern.permute.xlu0 0
        %2783 = vperm.xlu0 %2782, %v2434
        %v2784 = vpop.permute.xlu0 %2783
        %2787 = vset.pattern.permute.xlu0 0
        %2788 = vperm.xlu0 %2787, %v2436
        %v2789 = vpop.permute.xlu0 %2788
        %v2791 = vmul.f32 %v2754, %v2743
        %v2792 = vmul.f32 %v2759, %v2744
        %v2793 = vmul.f32 %v2764, %v2745
        %v2794 = vmul.f32 %v2769, %v2746
        %v2795 = vmul.f32 %v2774, %v2747
        %v2796 = vmul.f32 %v2779, %v2748
        %v2797 = vmul.f32 %v2784, %v2749
        %v2798 = vmul.f32 %v2789, %v2750
        %2807 = vrot.lane.b32.xlu0 %v2705, 16
        %v2808 = vpop.permute.xlu0 %2807
        %2809 = vrot.lane.b32.xlu0 %v2710, 16
        %v2810 = vpop.permute.xlu0 %2809
        %2811 = vrot.lane.b32.xlu0 %v2715, 16
        %v2812 = vpop.permute.xlu0 %2811
        %2813 = vrot.lane.b32.xlu0 %v2720, 16
        %v2814 = vpop.permute.xlu0 %2813
        %2815 = vrot.lane.b32.xlu0 %v2725, 16
        %v2816 = vpop.permute.xlu0 %2815
        %2817 = vrot.lane.b32.xlu0 %v2730, 16
        %v2818 = vpop.permute.xlu0 %2817
        %2819 = vrot.lane.b32.xlu0 %v2735, 16
        %v2820 = vpop.permute.xlu0 %2819
        %2821 = vrot.lane.b32.xlu0 %v2740, 16
        %v2822 = vpop.permute.xlu0 %2821
        %v2831 = vadd.f32 %v2791, %v2808
        %v2832 = vadd.f32 %v2792, %v2810
        %v2833 = vadd.f32 %v2793, %v2812
        %v2834 = vadd.f32 %v2794, %v2814
        %v2835 = vadd.f32 %v2795, %v2816
        %v2836 = vadd.f32 %v2796, %v2818
        %v2837 = vadd.f32 %v2797, %v2820
        %v2838 = vadd.f32 %v2798, %v2822
        %vm2839 = vcmask 195712
        %2840 = vst.msk [vmem:[#allocation3] sm:$0xff] %vm2839, %v2831
        %2841 = vst.msk [vmem:[#allocation3 + $0x8] sm:$0xff] %vm2839, %v2832
        %2842 = vst.msk [vmem:[#allocation3 + $0x10] sm:$0xff] %vm2839, %v2833
        %2843 = vst.msk [vmem:[#allocation3 + $0x18] sm:$0xff] %vm2839, %v2834
        %2844 = vst.msk [vmem:[#allocation3 + $0x20] sm:$0xff] %vm2839, %v2835
        %2845 = vst.msk [vmem:[#allocation3 + $0x28] sm:$0xff] %vm2839, %v2836
        %2846 = vst.msk [vmem:[#allocation3 + $0x30] sm:$0xff] %vm2839, %v2837
        %2847 = vst.msk [vmem:[#allocation3 + $0x38] sm:$0xff] %vm2839, %v2838
        %v2848 = vld [vmem:[%s983] sm:$0xff]
        %v2849 = vld [vmem:[%s983 + $0x8] sm:$0xff]
        %v2850 = vld [vmem:[%s983 + $0x10] sm:$0xff]
        %v2851 = vld [vmem:[%s983 + $0x18] sm:$0xff]
        %v2852 = vld [vmem:[%s983 + $0x20] sm:$0xff]
        %v2853 = vld [vmem:[%s983 + $0x28] sm:$0xff]
        %v2854 = vld [vmem:[%s983 + $0x30] sm:$0xff]
        %v2855 = vld [vmem:[%s983 + $0x38] sm:$0xff]
        %v2856 = vld [vmem:[#allocation2] sm:$0xff]
        %v2857 = vld [vmem:[#allocation2 + $0x8] sm:$0xff]
        %v2858 = vld [vmem:[#allocation2 + $0x10] sm:$0xff]
        %v2859 = vld [vmem:[#allocation2 + $0x18] sm:$0xff]
        %v2860 = vld [vmem:[#allocation2 + $0x20] sm:$0xff]
        %v2861 = vld [vmem:[#allocation2 + $0x28] sm:$0xff]
        %v2862 = vld [vmem:[#allocation2 + $0x30] sm:$0xff]
        %v2863 = vld [vmem:[#allocation2 + $0x38] sm:$0xff]
        %v2864 = vld [vmem:[%s460 + $0x18] sm:$0xff]
        %2873 = vrot.lane.b32.xlu0 %v2856, 104
        %v2874 = vpop.permute.xlu0 %2873
        %2875 = vrot.lane.b32.xlu0 %v2857, 104
        %v2876 = vpop.permute.xlu0 %2875
        %2877 = vrot.lane.b32.xlu0 %v2858, 104
        %v2878 = vpop.permute.xlu0 %2877
        %2879 = vrot.lane.b32.xlu0 %v2859, 104
        %v2880 = vpop.permute.xlu0 %2879
        %2881 = vrot.lane.b32.xlu0 %v2860, 104
        %v2882 = vpop.permute.xlu0 %2881
        %2883 = vrot.lane.b32.xlu0 %v2861, 104
        %v2884 = vpop.permute.xlu0 %2883
        %2885 = vrot.lane.b32.xlu0 %v2862, 104
        %v2886 = vpop.permute.xlu0 %2885
        %2887 = vrot.lane.b32.xlu0 %v2863, 104
        %v2888 = vpop.permute.xlu0 %2887
        %v2889 = vsel %vm1010, %v2874, 0
        %v2891 = vsel %vm1010, %v2876, 0
        %v2893 = vsel %vm1010, %v2878, 0
        %v2895 = vsel %vm1010, %v2880, 0
        %v2897 = vsel %vm1010, %v2882, 0
        %v2899 = vsel %vm1010, %v2884, 0
        %v2901 = vsel %vm1010, %v2886, 0
        %v2903 = vsel %vm1010, %v2888, 0
        %2905 = vmatprep.subr.mxu0 0.0
        %2906 = vmatpush1.msra.mxu0 0.0
        %2907 = vmatprep.subr.mxu0 0.0
        %2908 = vmatpush1.msra.mxu0 0.0
        %2909 = vmatprep.subr.mxu0 0.0
        %2910 = vmatpush1.msra.mxu0 0.0
        %2911 = vmatprep.subr.mxu0 0.0
        %2912 = vmatpush1.msra.mxu0 0.0
        %2913 = vmatprep.subr.mxu0 0.0
        %2914 = vmatpush1.msra.mxu0 0.0
        %2915 = vmatprep.subr.mxu0 0.0
        %2916 = vmatpush1.msra.mxu0 0.0
        %2917 = vmatprep.subr.mxu0 0.0
        %2918 = vmatpush1.msra.mxu0 0.0
        %2919 = vmatprep.subr.mxu0 0.0
        %2920 = vmatpush1.msra.mxu0 0.0
        %2921 = vmatprep.subr.mxu0 0.0
        %2922 = vmatpush1.msra.mxu0 0.0
        %2923 = vmatprep.subr.mxu0 0.0
        %2924 = vmatpush1.msra.mxu0 0.0
        %2925 = vmatprep.subr.mxu0 0.0
        %2926 = vmatpush1.msra.mxu0 0.0
        %2927 = vmatprep.subr.mxu0 0.0
        %2928 = vmatpush1.msra.mxu0 0.0
        %2929 = vmatprep.subr.mxu0 0.0
        %2930 = vmatpush1.msra.mxu0 0.0
        %2931 = vmatprep.subr.mxu0 0.0
        %2932 = vmatpush1.msra.mxu0 0.0
        %2933 = vmatprep.subr.mxu0 0.0
        %2934 = vmatpush1.msra.mxu0 0.0
        %2935 = vmatprep.subr.mxu0 0.0
        %2936 = vmatpush1.msra.mxu0 %v2864
        %2937 = vmatprep.subr.mxu0 0.0
        %2938 = vmatpush2.msra.mxu0 0.0
        %2939 = vmatprep.subr.mxu0 0.0
        %2940 = vmatpush2.msra.mxu0 0.0
        %2941 = vmatprep.subr.mxu0 0.0
        %2942 = vmatpush2.msra.mxu0 0.0
        %2943 = vmatprep.subr.mxu0 0.0
        %2944 = vmatpush2.msra.mxu0 0.0
        %2945 = vmatprep.subr.mxu0 0.0
        %2946 = vmatpush2.msra.mxu0 0.0
        %2947 = vmatprep.subr.mxu0 0.0
        %2948 = vmatpush2.msra.mxu0 0.0
        %2949 = vmatprep.subr.mxu0 0.0
        %2950 = vmatpush2.msra.mxu0 0.0
        %2951 = vmatprep.subr.mxu0 0.0
        %2952 = vmatpush2.msra.mxu0 0.0
        %2953 = vmatprep.subr.mxu0 0.0
        %2954 = vmatpush2.msra.mxu0 0.0
        %2955 = vmatprep.subr.mxu0 0.0
        %2956 = vmatpush2.msra.mxu0 0.0
        %2957 = vmatprep.subr.mxu0 0.0
        %2958 = vmatpush2.msra.mxu0 0.0
        %2959 = vmatprep.subr.mxu0 0.0
        %2960 = vmatpush2.msra.mxu0 0.0
        %2961 = vmatprep.subr.mxu0 0.0
        %2962 = vmatpush2.msra.mxu0 0.0
        %2963 = vmatprep.subr.mxu0 0.0
        %2964 = vmatpush2.msra.mxu0 0.0
        %2965 = vmatprep.subr.mxu0 0.0
        %2966 = vmatpush2.msra.mxu0 0.0
        %2967 = vmatprep.subr.mxu0 0.0
        %2968 = vmatpush2.msra.mxu0 0.0
        %2969 = vmatprep.mubr.f32.mxu0 0.0
        %2970 = vmatmul.mubr.f32.gmra.mxu0 %v2889
        %v2971 = vpop.f32.mrf.mxu0
        %v2972 = vadd.f32 0.0, %v2971
        %v2973 = vpop.f32.mrf.mxu0
        %2974 = vmatprep.mubr.f32.mxu0 0.0
        %2975 = vmatmul.mubr.f32.gmra.mxu0 %v2891
        %v2976 = vpop.f32.mrf.mxu0
        %v2977 = vadd.f32 0.0, %v2976
        %v2978 = vpop.f32.mrf.mxu0
        %2979 = vmatprep.mubr.f32.mxu0 0.0
        %2980 = vmatmul.mubr.f32.gmra.mxu0 %v2893
        %v2981 = vpop.f32.mrf.mxu0
        %v2982 = vadd.f32 0.0, %v2981
        %v2983 = vpop.f32.mrf.mxu0
        %2984 = vmatprep.mubr.f32.mxu0 0.0
        %2985 = vmatmul.mubr.f32.gmra.mxu0 %v2895
        %v2986 = vpop.f32.mrf.mxu0
        %v2987 = vadd.f32 0.0, %v2986
        %v2988 = vpop.f32.mrf.mxu0
        %2989 = vmatprep.mubr.f32.mxu0 0.0
        %2990 = vmatmul.mubr.f32.gmra.mxu0 %v2897
        %v2991 = vpop.f32.mrf.mxu0
        %v2992 = vadd.f32 0.0, %v2991
        %v2993 = vpop.f32.mrf.mxu0
        %2994 = vmatprep.mubr.f32.mxu0 0.0
        %2995 = vmatmul.mubr.f32.gmra.mxu0 %v2899
        %v2996 = vpop.f32.mrf.mxu0
        %v2997 = vadd.f32 0.0, %v2996
        %v2998 = vpop.f32.mrf.mxu0
        %2999 = vmatprep.mubr.f32.mxu0 0.0
        %3000 = vmatmul.mubr.f32.gmra.mxu0 %v2901
        %v3001 = vpop.f32.mrf.mxu0
        %v3002 = vadd.f32 0.0, %v3001
        %v3003 = vpop.f32.mrf.mxu0
        %3004 = vmatprep.mubr.f32.mxu0 0.0
        %3005 = vmatmul.mubr.f32.gmra.mxu0 %v2903
        %v3006 = vpop.f32.mrf.mxu0
        %v3007 = vadd.f32 0.0, %v3006
        %v3008 = vpop.f32.mrf.mxu0
        %3009 = vdwg.mxu0
        %v3010 = vmul.f32 %v2848, 0.00390625
        %v3011 = vmul.f32 %v2849, 0.00390625
        %v3012 = vmul.f32 %v2850, 0.00390625
        %v3013 = vmul.f32 %v2851, 0.00390625
        %v3014 = vmul.f32 %v2852, 0.00390625
        %v3015 = vmul.f32 %v2853, 0.00390625
        %v3016 = vmul.f32 %v2854, 0.00390625
        %v3017 = vmul.f32 %v2855, 0.00390625
        %v3018 = vsub.f32 %v2972, %v3010
        %v3019 = vsub.f32 %v2977, %v3011
        %v3020 = vsub.f32 %v2982, %v3012
        %v3021 = vsub.f32 %v2987, %v3013
        %v3022 = vsub.f32 %v2992, %v3014
        %v3023 = vsub.f32 %v2997, %v3015
        %v3024 = vsub.f32 %v3002, %v3016
        %v3025 = vsub.f32 %v3007, %v3017
        %v3026 = vadd.f32 %v3018, %v1160
        %v3027 = vadd.f32 %v3019, %v1160
        %v3028 = vadd.f32 %v3020, %v1160
        %v3029 = vadd.f32 %v3021, %v1160
        %v3030 = vadd.f32 %v3022, %v1160
        %v3031 = vadd.f32 %v3023, %v1160
        %v3032 = vadd.f32 %v3024, %v1160
        %v3033 = vadd.f32 %v3025, %v1160
        %s3034 = scalar_lea.vmem [#allocation4], 192
        %v3035 = vld [vmem:[%s3034] sm:$0xff]
        %v3036 = vld [vmem:[%s3034 + $0x8] sm:$0xff]
        %v3037 = vld [vmem:[%s3034 + $0x10] sm:$0xff]
        %v3038 = vld [vmem:[%s3034 + $0x18] sm:$0xff]
        %v3039 = vld [vmem:[%s3034 + $0x20] sm:$0xff]
        %v3040 = vld [vmem:[%s3034 + $0x28] sm:$0xff]
        %v3041 = vld [vmem:[%s3034 + $0x30] sm:$0xff]
        %v3042 = vld [vmem:[%s3034 + $0x38] sm:$0xff]
        %3043 = vmax.xlane.f32.xlu0 %v3026
        %v3044 = vpop.xlane.xlu0 %3043
        %3045 = vmax.xlane.f32.xlu0 %v3027
        %v3046 = vpop.xlane.xlu0 %3045
        %3047 = vmax.xlane.f32.xlu0 %v3028
        %v3048 = vpop.xlane.xlu0 %3047
        %3049 = vmax.xlane.f32.xlu0 %v3029
        %v3050 = vpop.xlane.xlu0 %3049
        %3051 = vmax.xlane.f32.xlu0 %v3030
        %v3052 = vpop.xlane.xlu0 %3051
        %3053 = vmax.xlane.f32.xlu0 %v3031
        %v3054 = vpop.xlane.xlu0 %3053
        %3055 = vmax.xlane.f32.xlu0 %v3032
        %v3056 = vpop.xlane.xlu0 %3055
        %3057 = vmax.xlane.f32.xlu0 %v3033
        %v3058 = vpop.xlane.xlu0 %3057
        %v3059 = vmax.f32 %v3035, %v3044
        %v3060 = vmax.f32 %v3036, %v3046
        %v3061 = vmax.f32 %v3037, %v3048
        %v3062 = vmax.f32 %v3038, %v3050
        %v3063 = vmax.f32 %v3039, %v3052
        %v3064 = vmax.f32 %v3040, %v3054
        %v3065 = vmax.f32 %v3041, %v3056
        %v3066 = vmax.f32 %v3042, %v3058
        %v3067 = vsub.f32 %v3035, %v3059
        %v3068 = vsub.f32 %v3036, %v3060
        %v3069 = vsub.f32 %v3037, %v3061
        %v3070 = vsub.f32 %v3038, %v3062
        %v3071 = vsub.f32 %v3039, %v3063
        %v3072 = vsub.f32 %v3040, %v3064
        %v3073 = vsub.f32 %v3041, %v3065
        %v3074 = vsub.f32 %v3042, %v3066
        %v3075 = vmul.f32 %v3067, 1.442695
        %v3076 = vpow.pop %v3075
        %v3077 = vmul.f32 %v3068, 1.442695
        %v3078 = vpow.pop %v3077
        %v3079 = vmul.f32 %v3069, 1.442695
        %v3080 = vpow.pop %v3079
        %v3081 = vmul.f32 %v3070, 1.442695
        %v3082 = vpow.pop %v3081
        %v3083 = vmul.f32 %v3071, 1.442695
        %v3084 = vpow.pop %v3083
        %v3085 = vmul.f32 %v3072, 1.442695
        %v3086 = vpow.pop %v3085
        %v3087 = vmul.f32 %v3073, 1.442695
        %v3088 = vpow.pop %v3087
        %v3089 = vmul.f32 %v3074, 1.442695
        %v3090 = vpow.pop %v3089
        %3092 = vset.pattern.permute.xlu0 0
        %3093 = vperm.xlu0 %3092, %v3059
        %v3094 = vpop.permute.xlu0 %3093
        %3097 = vset.pattern.permute.xlu0 0
        %3098 = vperm.xlu0 %3097, %v3060
        %v3099 = vpop.permute.xlu0 %3098
        %3102 = vset.pattern.permute.xlu0 0
        %3103 = vperm.xlu0 %3102, %v3061
        %v3104 = vpop.permute.xlu0 %3103
        %3107 = vset.pattern.permute.xlu0 0
        %3108 = vperm.xlu0 %3107, %v3062
        %v3109 = vpop.permute.xlu0 %3108
        %3112 = vset.pattern.permute.xlu0 0
        %3113 = vperm.xlu0 %3112, %v3063
        %v3114 = vpop.permute.xlu0 %3113
        %3117 = vset.pattern.permute.xlu0 0
        %3118 = vperm.xlu0 %3117, %v3064
        %v3119 = vpop.permute.xlu0 %3118
        %3122 = vset.pattern.permute.xlu0 0
        %3123 = vperm.xlu0 %3122, %v3065
        %v3124 = vpop.permute.xlu0 %3123
        %3127 = vset.pattern.permute.xlu0 0
        %3128 = vperm.xlu0 %3127, %v3066
        %v3129 = vpop.permute.xlu0 %3128
        %v3131 = vsub.f32 %v3026, %v3094
        %v3132 = vsub.f32 %v3027, %v3099
        %v3133 = vsub.f32 %v3028, %v3104
        %v3134 = vsub.f32 %v3029, %v3109
        %v3135 = vsub.f32 %v3030, %v3114
        %v3136 = vsub.f32 %v3031, %v3119
        %v3137 = vsub.f32 %v3032, %v3124
        %v3138 = vsub.f32 %v3033, %v3129
        %v3139 = vmul.f32 %v3131, 1.442695
        %v3140 = vpow.pop %v3139
        %v3141 = vmul.f32 %v3132, 1.442695
        %v3142 = vpow.pop %v3141
        %v3143 = vmul.f32 %v3133, 1.442695
        %v3144 = vpow.pop %v3143
        %v3145 = vmul.f32 %v3134, 1.442695
        %v3146 = vpow.pop %v3145
        %v3147 = vmul.f32 %v3135, 1.442695
        %v3148 = vpow.pop %v3147
        %v3149 = vmul.f32 %v3136, 1.442695
        %v3150 = vpow.pop %v3149
        %v3151 = vmul.f32 %v3137, 1.442695
        %v3152 = vpow.pop %v3151
        %v3153 = vmul.f32 %v3138, 1.442695
        %v3154 = vpow.pop %v3153
        %s3155 = scalar_lea.vmem [#allocation5], 192
        %v3156 = vld [vmem:[%s3155] sm:$0xff]
        %v3157 = vld [vmem:[%s3155 + $0x8] sm:$0xff]
        %v3158 = vld [vmem:[%s3155 + $0x10] sm:$0xff]
        %v3159 = vld [vmem:[%s3155 + $0x18] sm:$0xff]
        %v3160 = vld [vmem:[%s3155 + $0x20] sm:$0xff]
        %v3161 = vld [vmem:[%s3155 + $0x28] sm:$0xff]
        %v3162 = vld [vmem:[%s3155 + $0x30] sm:$0xff]
        %v3163 = vld [vmem:[%s3155 + $0x38] sm:$0xff]
        %v3164 = vmul.f32 %v3076, %v3156
        %v3165 = vmul.f32 %v3078, %v3157
        %v3166 = vmul.f32 %v3080, %v3158
        %v3167 = vmul.f32 %v3082, %v3159
        %v3168 = vmul.f32 %v3084, %v3160
        %v3169 = vmul.f32 %v3086, %v3161
        %v3170 = vmul.f32 %v3088, %v3162
        %v3171 = vmul.f32 %v3090, %v3163
        %3172 = vadd.xlane.f32.xlu0 %v3140
        %v3173 = vpop.xlane.xlu0 %3172
        %3174 = vadd.xlane.f32.xlu0 %v3142
        %v3175 = vpop.xlane.xlu0 %3174
        %3176 = vadd.xlane.f32.xlu0 %v3144
        %v3177 = vpop.xlane.xlu0 %3176
        %3178 = vadd.xlane.f32.xlu0 %v3146
        %v3179 = vpop.xlane.xlu0 %3178
        %3180 = vadd.xlane.f32.xlu0 %v3148
        %v3181 = vpop.xlane.xlu0 %3180
        %3182 = vadd.xlane.f32.xlu0 %v3150
        %v3183 = vpop.xlane.xlu0 %3182
        %3184 = vadd.xlane.f32.xlu0 %v3152
        %v3185 = vpop.xlane.xlu0 %3184
        %3186 = vadd.xlane.f32.xlu0 %v3154
        %v3187 = vpop.xlane.xlu0 %3186
        %v3188 = vadd.f32 %v3164, %v3173
        %v3189 = vadd.f32 %v3165, %v3175
        %v3190 = vadd.f32 %v3166, %v3177
        %v3191 = vadd.f32 %v3167, %v3179
        %v3192 = vadd.f32 %v3168, %v3181
        %v3193 = vadd.f32 %v3169, %v3183
        %v3194 = vadd.f32 %v3170, %v3185
        %v3195 = vadd.f32 %v3171, %v3187
        %3196 = vst.msk [vmem:[%s3155] sm:$0xff] %vm1330, %v3188
        %3197 = vst.msk [vmem:[%s3155 + $0x8] sm:$0xff] %vm1330, %v3189
        %3198 = vst.msk [vmem:[%s3155 + $0x10] sm:$0xff] %vm1330, %v3190
        %3199 = vst.msk [vmem:[%s3155 + $0x18] sm:$0xff] %vm1330, %v3191
        %3200 = vst.msk [vmem:[%s3155 + $0x20] sm:$0xff] %vm1330, %v3192
        %3201 = vst.msk [vmem:[%s3155 + $0x28] sm:$0xff] %vm1330, %v3193
        %3202 = vst.msk [vmem:[%s3155 + $0x30] sm:$0xff] %vm1330, %v3194
        %3203 = vst.msk [vmem:[%s3155 + $0x38] sm:$0xff] %vm1330, %v3195
        %3204 = vst.msk [vmem:[%s3034] sm:$0xff] %vm1330, %v3059
        %3205 = vst.msk [vmem:[%s3034 + $0x8] sm:$0xff] %vm1330, %v3060
        %3206 = vst.msk [vmem:[%s3034 + $0x10] sm:$0xff] %vm1330, %v3061
        %3207 = vst.msk [vmem:[%s3034 + $0x18] sm:$0xff] %vm1330, %v3062
        %3208 = vst.msk [vmem:[%s3034 + $0x20] sm:$0xff] %vm1330, %v3063
        %3209 = vst.msk [vmem:[%s3034 + $0x28] sm:$0xff] %vm1330, %v3064
        %3210 = vst.msk [vmem:[%s3034 + $0x30] sm:$0xff] %vm1330, %v3065
        %3211 = vst.msk [vmem:[%s3034 + $0x38] sm:$0xff] %vm1330, %v3066
        %v3212 = vld [vmem:[%s551] sm:$0xff]
        %v3213 = vld [vmem:[%s551 + $0x8] sm:$0xff]
        %v3214 = vld [vmem:[%s551 + $0x10] sm:$0xff]
        %v3215 = vld [vmem:[%s551 + $0x18] sm:$0xff]
        %v3216 = vld [vmem:[%s551 + $0x20] sm:$0xff]
        %v3217 = vld [vmem:[%s551 + $0x28] sm:$0xff]
        %v3218 = vld [vmem:[%s551 + $0x30] sm:$0xff]
        %v3219 = vld [vmem:[%s551 + $0x38] sm:$0xff]
        %v3220 = vld [vmem:[%s551 + $0x40] sm:$0xff]
        %v3221 = vld [vmem:[%s551 + $0x48] sm:$0xff]
        %v3222 = vld [vmem:[%s551 + $0x50] sm:$0xff]
        %v3223 = vld [vmem:[%s551 + $0x58] sm:$0xff]
        %v3224 = vld [vmem:[%s551 + $0x60] sm:$0xff]
        %v3225 = vld [vmem:[%s551 + $0x68] sm:$0xff]
        %v3226 = vld [vmem:[%s551 + $0x70] sm:$0xff]
        %v3227 = vld [vmem:[%s551 + $0x78] sm:$0xff]
        %3244 = vrot.lane.b32.xlu0 %v3212, 104
        %v3245 = vpop.permute.xlu0 %3244
        %3246 = vrot.lane.b32.xlu0 %v3213, 104
        %v3247 = vpop.permute.xlu0 %3246
        %3248 = vrot.lane.b32.xlu0 %v3214, 104
        %v3249 = vpop.permute.xlu0 %3248
        %3250 = vrot.lane.b32.xlu0 %v3215, 104
        %v3251 = vpop.permute.xlu0 %3250
        %3252 = vrot.lane.b32.xlu0 %v3216, 104
        %v3253 = vpop.permute.xlu0 %3252
        %3254 = vrot.lane.b32.xlu0 %v3217, 104
        %v3255 = vpop.permute.xlu0 %3254
        %3256 = vrot.lane.b32.xlu0 %v3218, 104
        %v3257 = vpop.permute.xlu0 %3256
        %3258 = vrot.lane.b32.xlu0 %v3219, 104
        %v3259 = vpop.permute.xlu0 %3258
        %3260 = vrot.lane.b32.xlu0 %v3220, 104
        %v3261 = vpop.permute.xlu0 %3260
        %3262 = vrot.lane.b32.xlu0 %v3221, 104
        %v3263 = vpop.permute.xlu0 %3262
        %3264 = vrot.lane.b32.xlu0 %v3222, 104
        %v3265 = vpop.permute.xlu0 %3264
        %3266 = vrot.lane.b32.xlu0 %v3223, 104
        %v3267 = vpop.permute.xlu0 %3266
        %3268 = vrot.lane.b32.xlu0 %v3224, 104
        %v3269 = vpop.permute.xlu0 %3268
        %3270 = vrot.lane.b32.xlu0 %v3225, 104
        %v3271 = vpop.permute.xlu0 %3270
        %3272 = vrot.lane.b32.xlu0 %v3226, 104
        %v3273 = vpop.permute.xlu0 %3272
        %3274 = vrot.lane.b32.xlu0 %v3227, 104
        %v3275 = vpop.permute.xlu0 %3274
        %3292 = vmatprep.subr.mxu0 0.0
        %3293 = vmatpush1.msra.mxu0 %v3275
        %3294 = vmatprep.subr.mxu0 0.0
        %3295 = vmatpush1.msra.mxu0 %v3273
        %3296 = vmatprep.subr.mxu0 0.0
        %3297 = vmatpush1.msra.mxu0 %v3271
        %3298 = vmatprep.subr.mxu0 0.0
        %3299 = vmatpush1.msra.mxu0 %v3269
        %3300 = vmatprep.subr.mxu0 0.0
        %3301 = vmatpush1.msra.mxu0 %v3267
        %3302 = vmatprep.subr.mxu0 0.0
        %3303 = vmatpush1.msra.mxu0 %v3265
        %3304 = vmatprep.subr.mxu0 0.0
        %3305 = vmatpush1.msra.mxu0 %v3263
        %3306 = vmatprep.subr.mxu0 0.0
        %3307 = vmatpush1.msra.mxu0 %v3261
        %3308 = vmatprep.subr.mxu0 0.0
        %3309 = vmatpush1.msra.mxu0 %v3259
        %3310 = vmatprep.subr.mxu0 0.0
        %3311 = vmatpush1.msra.mxu0 %v3257
        %3312 = vmatprep.subr.mxu0 0.0
        %3313 = vmatpush1.msra.mxu0 %v3255
        %3314 = vmatprep.subr.mxu0 0.0
        %3315 = vmatpush1.msra.mxu0 %v3253
        %3316 = vmatprep.subr.mxu0 0.0
        %3317 = vmatpush1.msra.mxu0 %v3251
        %3318 = vmatprep.subr.mxu0 0.0
        %3319 = vmatpush1.msra.mxu0 %v3249
        %3320 = vmatprep.subr.mxu0 0.0
        %3321 = vmatpush1.msra.mxu0 %v3247
        %3322 = vmatprep.subr.mxu0 0.0
        %3323 = vmatpush1.msra.mxu0 %v3245
        %3324 = vmatprep.subr.mxu0 0.0
        %3325 = vmatpush2.msra.mxu0 0.0
        %3326 = vmatprep.subr.mxu0 0.0
        %3327 = vmatpush2.msra.mxu0 0.0
        %3328 = vmatprep.subr.mxu0 0.0
        %3329 = vmatpush2.msra.mxu0 0.0
        %3330 = vmatprep.subr.mxu0 0.0
        %3331 = vmatpush2.msra.mxu0 0.0
        %3332 = vmatprep.subr.mxu0 0.0
        %3333 = vmatpush2.msra.mxu0 0.0
        %3334 = vmatprep.subr.mxu0 0.0
        %3335 = vmatpush2.msra.mxu0 0.0
        %3336 = vmatprep.subr.mxu0 0.0
        %3337 = vmatpush2.msra.mxu0 0.0
        %3338 = vmatprep.subr.mxu0 0.0
        %3339 = vmatpush2.msra.mxu0 0.0
        %3340 = vmatprep.subr.mxu0 0.0
        %3341 = vmatpush2.msra.mxu0 0.0
        %3342 = vmatprep.subr.mxu0 0.0
        %3343 = vmatpush2.msra.mxu0 0.0
        %3344 = vmatprep.subr.mxu0 0.0
        %3345 = vmatpush2.msra.mxu0 0.0
        %3346 = vmatprep.subr.mxu0 0.0
        %3347 = vmatpush2.msra.mxu0 0.0
        %3348 = vmatprep.subr.mxu0 0.0
        %3349 = vmatpush2.msra.mxu0 0.0
        %3350 = vmatprep.subr.mxu0 0.0
        %3351 = vmatpush2.msra.mxu0 0.0
        %3352 = vmatprep.subr.mxu0 0.0
        %3353 = vmatpush2.msra.mxu0 0.0
        %3354 = vmatprep.subr.mxu0 0.0
        %3355 = vmatpush2.msra.mxu0 0.0
        %3356 = vmatprep.mubr.f32.mxu0 0.0
        %3357 = vmatmul.mubr.f32.gmra.mxu0 %v3140
        %v3358 = vpop.f32.mrf.mxu0
        %v3359 = vadd.f32 0.0, %v3358
        %v3360 = vpop.f32.mrf.mxu0
        %3361 = vmatprep.mubr.f32.mxu0 0.0
        %3362 = vmatmul.mubr.f32.gmra.mxu0 %v3142
        %v3363 = vpop.f32.mrf.mxu0
        %v3364 = vadd.f32 0.0, %v3363
        %v3365 = vpop.f32.mrf.mxu0
        %3366 = vmatprep.mubr.f32.mxu0 0.0
        %3367 = vmatmul.mubr.f32.gmra.mxu0 %v3144
        %v3368 = vpop.f32.mrf.mxu0
        %v3369 = vadd.f32 0.0, %v3368
        %v3370 = vpop.f32.mrf.mxu0
        %3371 = vmatprep.mubr.f32.mxu0 0.0
        %3372 = vmatmul.mubr.f32.gmra.mxu0 %v3146
        %v3373 = vpop.f32.mrf.mxu0
        %v3374 = vadd.f32 0.0, %v3373
        %v3375 = vpop.f32.mrf.mxu0
        %3376 = vmatprep.mubr.f32.mxu0 0.0
        %3377 = vmatmul.mubr.f32.gmra.mxu0 %v3148
        %v3378 = vpop.f32.mrf.mxu0
        %v3379 = vadd.f32 0.0, %v3378
        %v3380 = vpop.f32.mrf.mxu0
        %3381 = vmatprep.mubr.f32.mxu0 0.0
        %3382 = vmatmul.mubr.f32.gmra.mxu0 %v3150
        %v3383 = vpop.f32.mrf.mxu0
        %v3384 = vadd.f32 0.0, %v3383
        %v3385 = vpop.f32.mrf.mxu0
        %3386 = vmatprep.mubr.f32.mxu0 0.0
        %3387 = vmatmul.mubr.f32.gmra.mxu0 %v3152
        %v3388 = vpop.f32.mrf.mxu0
        %v3389 = vadd.f32 0.0, %v3388
        %v3390 = vpop.f32.mrf.mxu0
        %3391 = vmatprep.mubr.f32.mxu0 0.0
        %3392 = vmatmul.mubr.f32.gmra.mxu0 %v3154
        %v3393 = vpop.f32.mrf.mxu0
        %v3394 = vadd.f32 0.0, %v3393
        %v3395 = vpop.f32.mrf.mxu0
        %3396 = vdwg.mxu0
        %v3397 = vld [vmem:[#allocation3] sm:$0xff]
        %v3398 = vld [vmem:[#allocation3 + $0x8] sm:$0xff]
        %v3399 = vld [vmem:[#allocation3 + $0x10] sm:$0xff]
        %v3400 = vld [vmem:[#allocation3 + $0x18] sm:$0xff]
        %v3401 = vld [vmem:[#allocation3 + $0x20] sm:$0xff]
        %v3402 = vld [vmem:[#allocation3 + $0x28] sm:$0xff]
        %v3403 = vld [vmem:[#allocation3 + $0x30] sm:$0xff]
        %v3404 = vld [vmem:[#allocation3 + $0x38] sm:$0xff]
        %3406 = vset.pattern.permute.xlu0 0
        %3407 = vperm.xlu0 %3406, %v3076
        %v3408 = vpop.permute.xlu0 %3407
        %3411 = vset.pattern.permute.xlu0 0
        %3412 = vperm.xlu0 %3411, %v3078
        %v3413 = vpop.permute.xlu0 %3412
        %3416 = vset.pattern.permute.xlu0 0
        %3417 = vperm.xlu0 %3416, %v3080
        %v3418 = vpop.permute.xlu0 %3417
        %3421 = vset.pattern.permute.xlu0 0
        %3422 = vperm.xlu0 %3421, %v3082
        %v3423 = vpop.permute.xlu0 %3422
        %3426 = vset.pattern.permute.xlu0 0
        %3427 = vperm.xlu0 %3426, %v3084
        %v3428 = vpop.permute.xlu0 %3427
        %3431 = vset.pattern.permute.xlu0 0
        %3432 = vperm.xlu0 %3431, %v3086
        %v3433 = vpop.permute.xlu0 %3432
        %3436 = vset.pattern.permute.xlu0 0
        %3437 = vperm.xlu0 %3436, %v3088
        %v3438 = vpop.permute.xlu0 %3437
        %3441 = vset.pattern.permute.xlu0 0
        %3442 = vperm.xlu0 %3441, %v3090
        %v3443 = vpop.permute.xlu0 %3442
        %v3445 = vmul.f32 %v3408, %v3397
        %v3446 = vmul.f32 %v3413, %v3398
        %v3447 = vmul.f32 %v3418, %v3399
        %v3448 = vmul.f32 %v3423, %v3400
        %v3449 = vmul.f32 %v3428, %v3401
        %v3450 = vmul.f32 %v3433, %v3402
        %v3451 = vmul.f32 %v3438, %v3403
        %v3452 = vmul.f32 %v3443, %v3404
        %3461 = vrot.lane.b32.xlu0 %v3359, 24
        %v3462 = vpop.permute.xlu0 %3461
        %3463 = vrot.lane.b32.xlu0 %v3364, 24
        %v3464 = vpop.permute.xlu0 %3463
        %3465 = vrot.lane.b32.xlu0 %v3369, 24
        %v3466 = vpop.permute.xlu0 %3465
        %3467 = vrot.lane.b32.xlu0 %v3374, 24
        %v3468 = vpop.permute.xlu0 %3467
        %3469 = vrot.lane.b32.xlu0 %v3379, 24
        %v3470 = vpop.permute.xlu0 %3469
        %3471 = vrot.lane.b32.xlu0 %v3384, 24
        %v3472 = vpop.permute.xlu0 %3471
        %3473 = vrot.lane.b32.xlu0 %v3389, 24
        %v3474 = vpop.permute.xlu0 %3473
        %3475 = vrot.lane.b32.xlu0 %v3394, 24
        %v3476 = vpop.permute.xlu0 %3475
        %v3485 = vadd.f32 %v3445, %v3462
        %v3486 = vadd.f32 %v3446, %v3464
        %v3487 = vadd.f32 %v3447, %v3466
        %v3488 = vadd.f32 %v3448, %v3468
        %v3489 = vadd.f32 %v3449, %v3470
        %v3490 = vadd.f32 %v3450, %v3472
        %v3491 = vadd.f32 %v3451, %v3474
        %v3492 = vadd.f32 %v3452, %v3476
        %vm3493 = vcmask 261312
        %3494 = vst.msk [vmem:[#allocation3] sm:$0xff] %vm3493, %v3485
        %3495 = vst.msk [vmem:[#allocation3 + $0x8] sm:$0xff] %vm3493, %v3486
        %3496 = vst.msk [vmem:[#allocation3 + $0x10] sm:$0xff] %vm3493, %v3487
        %3497 = vst.msk [vmem:[#allocation3 + $0x18] sm:$0xff] %vm3493, %v3488
        %3498 = vst.msk [vmem:[#allocation3 + $0x20] sm:$0xff] %vm3493, %v3489
        %3499 = vst.msk [vmem:[#allocation3 + $0x28] sm:$0xff] %vm3493, %v3490
        %3500 = vst.msk [vmem:[#allocation3 + $0x30] sm:$0xff] %vm3493, %v3491
        %3501 = vst.msk [vmem:[#allocation3 + $0x38] sm:$0xff] %vm3493, %v3492
        %p3502 = scmp.eq.s32.totalorder %s28, 1
        // Predicated region
        $region103: #{tpu_custom_call.1} parent=93 // pred_check
          %p3503 = pneg %p3502
        $region104: #{tpu_custom_call.1} parent=93 // pred_check_branch
          %3505 = sbr.rel (%p3503) target = $region106
        $region105: #{tpu_custom_call.1} parent=93 // pred_region
          %v3506 = vld [vmem:[#allocation5] sm:$0xff]
          %v3507 = vld [vmem:[#allocation5 + $0x8] sm:$0xff]
          %v3508 = vld [vmem:[#allocation5 + $0x10] sm:$0xff]
          %v3509 = vld [vmem:[#allocation5 + $0x18] sm:$0xff]
          %v3510 = vld [vmem:[#allocation5 + $0x20] sm:$0xff]
          %v3511 = vld [vmem:[#allocation5 + $0x28] sm:$0xff]
          %v3512 = vld [vmem:[#allocation5 + $0x30] sm:$0xff]
          %v3513 = vld [vmem:[#allocation5 + $0x38] sm:$0xff]
          %v3514 = vrcp.pop %v3506
          %v3515 = vrcp.pop %v3507
          %v3516 = vrcp.pop %v3508
          %v3517 = vrcp.pop %v3509
          %v3518 = vrcp.pop %v3510
          %v3519 = vrcp.pop %v3511
          %v3520 = vrcp.pop %v3512
          %v3521 = vrcp.pop %v3513
          %v3522 = vmul.f32 %v3506, %v3514
          %v3523 = vmul.f32 %v3507, %v3515
          %v3524 = vmul.f32 %v3508, %v3516
          %v3525 = vmul.f32 %v3509, %v3517
          %v3526 = vmul.f32 %v3510, %v3518
          %v3527 = vmul.f32 %v3511, %v3519
          %v3528 = vmul.f32 %v3512, %v3520
          %v3529 = vmul.f32 %v3513, %v3521
          %v3530 = vsub.f32 2.0, %v3522
          %v3531 = vsub.f32 2.0, %v3523
          %v3532 = vsub.f32 2.0, %v3524
          %v3533 = vsub.f32 2.0, %v3525
          %v3534 = vsub.f32 2.0, %v3526
          %v3535 = vsub.f32 2.0, %v3527
          %v3536 = vsub.f32 2.0, %v3528
          %v3537 = vsub.f32 2.0, %v3529
          %v3538 = vmul.f32 %v3514, %v3530
          %v3539 = vmul.f32 %v3515, %v3531
          %v3540 = vmul.f32 %v3516, %v3532
          %v3541 = vmul.f32 %v3517, %v3533
          %v3542 = vmul.f32 %v3518, %v3534
          %v3543 = vmul.f32 %v3519, %v3535
          %v3544 = vmul.f32 %v3520, %v3536
          %v3545 = vmul.f32 %v3521, %v3537
          %v3546 = vld [vmem:[#allocation3] sm:$0xff]
          %v3547 = vld [vmem:[#allocation3 + $0x8] sm:$0xff]
          %v3548 = vld [vmem:[#allocation3 + $0x10] sm:$0xff]
          %v3549 = vld [vmem:[#allocation3 + $0x18] sm:$0xff]
          %v3550 = vld [vmem:[#allocation3 + $0x20] sm:$0xff]
          %v3551 = vld [vmem:[#allocation3 + $0x28] sm:$0xff]
          %v3552 = vld [vmem:[#allocation3 + $0x30] sm:$0xff]
          %v3553 = vld [vmem:[#allocation3 + $0x38] sm:$0xff]
          %3555 = vset.pattern.permute.xlu0 0
          %3556 = vperm.xlu0 %3555, %v3538
          %v3557 = vpop.permute.xlu0 %3556
          %3560 = vset.pattern.permute.xlu0 0
          %3561 = vperm.xlu0 %3560, %v3539
          %v3562 = vpop.permute.xlu0 %3561
          %3565 = vset.pattern.permute.xlu0 0
          %3566 = vperm.xlu0 %3565, %v3540
          %v3567 = vpop.permute.xlu0 %3566
          %3570 = vset.pattern.permute.xlu0 0
          %3571 = vperm.xlu0 %3570, %v3541
          %v3572 = vpop.permute.xlu0 %3571
          %3575 = vset.pattern.permute.xlu0 0
          %3576 = vperm.xlu0 %3575, %v3542
          %v3577 = vpop.permute.xlu0 %3576
          %3580 = vset.pattern.permute.xlu0 0
          %3581 = vperm.xlu0 %3580, %v3543
          %v3582 = vpop.permute.xlu0 %3581
          %3585 = vset.pattern.permute.xlu0 0
          %3586 = vperm.xlu0 %3585, %v3544
          %v3587 = vpop.permute.xlu0 %3586
          %3590 = vset.pattern.permute.xlu0 0
          %3591 = vperm.xlu0 %3590, %v3545
          %v3592 = vpop.permute.xlu0 %3591
          %v3594 = vmul.f32 %v3546, %v3557
          %v3595 = vmul.f32 %v3547, %v3562
          %v3596 = vmul.f32 %v3548, %v3567
          %v3597 = vmul.f32 %v3549, %v3572
          %v3598 = vmul.f32 %v3550, %v3577
          %v3599 = vmul.f32 %v3551, %v3582
          %v3600 = vmul.f32 %v3552, %v3587
          %v3601 = vmul.f32 %v3553, %v3592
          %3602 = vst.msk [vmem:[#allocation3] sm:$0xff] %vm1010, %v3594
          %3603 = vst.msk [vmem:[#allocation3 + $0x8] sm:$0xff] %vm1010, %v3595
          %3604 = vst.msk [vmem:[#allocation3 + $0x10] sm:$0xff] %vm1010, %v3596
          %3605 = vst.msk [vmem:[#allocation3 + $0x18] sm:$0xff] %vm1010, %v3597
          %3606 = vst.msk [vmem:[#allocation3 + $0x20] sm:$0xff] %vm1010, %v3598
          %3607 = vst.msk [vmem:[#allocation3 + $0x28] sm:$0xff] %vm1010, %v3599
          %3608 = vst.msk [vmem:[#allocation3 + $0x30] sm:$0xff] %vm1010, %v3600
          %3609 = vst.msk [vmem:[#allocation3 + $0x38] sm:$0xff] %vm1010, %v3601
          %v3610 = vld [vmem:[%s1847] sm:$0xff]
          %v3611 = vld [vmem:[%s1847 + $0x8] sm:$0xff]
          %v3612 = vld [vmem:[%s1847 + $0x10] sm:$0xff]
          %v3613 = vld [vmem:[%s1847 + $0x18] sm:$0xff]
          %v3614 = vld [vmem:[%s1847 + $0x20] sm:$0xff]
          %v3615 = vld [vmem:[%s1847 + $0x28] sm:$0xff]
          %v3616 = vld [vmem:[%s1847 + $0x30] sm:$0xff]
          %v3617 = vld [vmem:[%s1847 + $0x38] sm:$0xff]
          %v3618 = vrcp.pop %v3610
          %v3619 = vrcp.pop %v3611
          %v3620 = vrcp.pop %v3612
          %v3621 = vrcp.pop %v3613
          %v3622 = vrcp.pop %v3614
          %v3623 = vrcp.pop %v3615
          %v3624 = vrcp.pop %v3616
          %v3625 = vrcp.pop %v3617
          %v3626 = vmul.f32 %v3610, %v3618
          %v3627 = vmul.f32 %v3611, %v3619
          %v3628 = vmul.f32 %v3612, %v3620
          %v3629 = vmul.f32 %v3613, %v3621
          %v3630 = vmul.f32 %v3614, %v3622
          %v3631 = vmul.f32 %v3615, %v3623
          %v3632 = vmul.f32 %v3616, %v3624
          %v3633 = vmul.f32 %v3617, %v3625
          %v3634 = vsub.f32 2.0, %v3626
          %v3635 = vsub.f32 2.0, %v3627
          %v3636 = vsub.f32 2.0, %v3628
          %v3637 = vsub.f32 2.0, %v3629
          %v3638 = vsub.f32 2.0, %v3630
          %v3639 = vsub.f32 2.0, %v3631
          %v3640 = vsub.f32 2.0, %v3632
          %v3641 = vsub.f32 2.0, %v3633
          %v3642 = vmul.f32 %v3618, %v3634
          %v3643 = vmul.f32 %v3619, %v3635
          %v3644 = vmul.f32 %v3620, %v3636
          %v3645 = vmul.f32 %v3621, %v3637
          %v3646 = vmul.f32 %v3622, %v3638
          %v3647 = vmul.f32 %v3623, %v3639
          %v3648 = vmul.f32 %v3624, %v3640
          %v3649 = vmul.f32 %v3625, %v3641
          %v3650 = vld [vmem:[#allocation3] sm:$0xff]
          %v3651 = vld [vmem:[#allocation3 + $0x8] sm:$0xff]
          %v3652 = vld [vmem:[#allocation3 + $0x10] sm:$0xff]
          %v3653 = vld [vmem:[#allocation3 + $0x18] sm:$0xff]
          %v3654 = vld [vmem:[#allocation3 + $0x20] sm:$0xff]
          %v3655 = vld [vmem:[#allocation3 + $0x28] sm:$0xff]
          %v3656 = vld [vmem:[#allocation3 + $0x30] sm:$0xff]
          %v3657 = vld [vmem:[#allocation3 + $0x38] sm:$0xff]
          %3659 = vset.pattern.permute.xlu0 0
          %3660 = vperm.xlu0 %3659, %v3642
          %v3661 = vpop.permute.xlu0 %3660
          %3664 = vset.pattern.permute.xlu0 0
          %3665 = vperm.xlu0 %3664, %v3643
          %v3666 = vpop.permute.xlu0 %3665
          %3669 = vset.pattern.permute.xlu0 0
          %3670 = vperm.xlu0 %3669, %v3644
          %v3671 = vpop.permute.xlu0 %3670
          %3674 = vset.pattern.permute.xlu0 0
          %3675 = vperm.xlu0 %3674, %v3645
          %v3676 = vpop.permute.xlu0 %3675
          %3679 = vset.pattern.permute.xlu0 0
          %3680 = vperm.xlu0 %3679, %v3646
          %v3681 = vpop.permute.xlu0 %3680
          %3684 = vset.pattern.permute.xlu0 0
          %3685 = vperm.xlu0 %3684, %v3647
          %v3686 = vpop.permute.xlu0 %3685
          %3689 = vset.pattern.permute.xlu0 0
          %3690 = vperm.xlu0 %3689, %v3648
          %v3691 = vpop.permute.xlu0 %3690
          %3694 = vset.pattern.permute.xlu0 0
          %3695 = vperm.xlu0 %3694, %v3649
          %v3696 = vpop.permute.xlu0 %3695
          %v3698 = vmul.f32 %v3650, %v3661
          %v3699 = vmul.f32 %v3651, %v3666
          %v3700 = vmul.f32 %v3652, %v3671
          %v3701 = vmul.f32 %v3653, %v3676
          %v3702 = vmul.f32 %v3654, %v3681
          %v3703 = vmul.f32 %v3655, %v3686
          %v3704 = vmul.f32 %v3656, %v3691
          %v3705 = vmul.f32 %v3657, %v3696
          %3706 = vst.msk [vmem:[#allocation3] sm:$0xff] %vm2185, %v3698
          %3707 = vst.msk [vmem:[#allocation3 + $0x8] sm:$0xff] %vm2185, %v3699
          %3708 = vst.msk [vmem:[#allocation3 + $0x10] sm:$0xff] %vm2185, %v3700
          %3709 = vst.msk [vmem:[#allocation3 + $0x18] sm:$0xff] %vm2185, %v3701
          %3710 = vst.msk [vmem:[#allocation3 + $0x20] sm:$0xff] %vm2185, %v3702
          %3711 = vst.msk [vmem:[#allocation3 + $0x28] sm:$0xff] %vm2185, %v3703
          %3712 = vst.msk [vmem:[#allocation3 + $0x30] sm:$0xff] %vm2185, %v3704
          %3713 = vst.msk [vmem:[#allocation3 + $0x38] sm:$0xff] %vm2185, %v3705
          %v3714 = vld [vmem:[%s2501] sm:$0xff]
          %v3715 = vld [vmem:[%s2501 + $0x8] sm:$0xff]
          %v3716 = vld [vmem:[%s2501 + $0x10] sm:$0xff]
          %v3717 = vld [vmem:[%s2501 + $0x18] sm:$0xff]
          %v3718 = vld [vmem:[%s2501 + $0x20] sm:$0xff]
          %v3719 = vld [vmem:[%s2501 + $0x28] sm:$0xff]
          %v3720 = vld [vmem:[%s2501 + $0x30] sm:$0xff]
          %v3721 = vld [vmem:[%s2501 + $0x38] sm:$0xff]
          %v3722 = vrcp.pop %v3714
          %v3723 = vrcp.pop %v3715
          %v3724 = vrcp.pop %v3716
          %v3725 = vrcp.pop %v3717
          %v3726 = vrcp.pop %v3718
          %v3727 = vrcp.pop %v3719
          %v3728 = vrcp.pop %v3720
          %v3729 = vrcp.pop %v3721
          %v3730 = vmul.f32 %v3714, %v3722
          %v3731 = vmul.f32 %v3715, %v3723
          %v3732 = vmul.f32 %v3716, %v3724
          %v3733 = vmul.f32 %v3717, %v3725
          %v3734 = vmul.f32 %v3718, %v3726
          %v3735 = vmul.f32 %v3719, %v3727
          %v3736 = vmul.f32 %v3720, %v3728
          %v3737 = vmul.f32 %v3721, %v3729
          %v3738 = vsub.f32 2.0, %v3730
          %v3739 = vsub.f32 2.0, %v3731
          %v3740 = vsub.f32 2.0, %v3732
          %v3741 = vsub.f32 2.0, %v3733
          %v3742 = vsub.f32 2.0, %v3734
          %v3743 = vsub.f32 2.0, %v3735
          %v3744 = vsub.f32 2.0, %v3736
          %v3745 = vsub.f32 2.0, %v3737
          %v3746 = vmul.f32 %v3722, %v3738
          %v3747 = vmul.f32 %v3723, %v3739
          %v3748 = vmul.f32 %v3724, %v3740
          %v3749 = vmul.f32 %v3725, %v3741
          %v3750 = vmul.f32 %v3726, %v3742
          %v3751 = vmul.f32 %v3727, %v3743
          %v3752 = vmul.f32 %v3728, %v3744
          %v3753 = vmul.f32 %v3729, %v3745
          %v3754 = vld [vmem:[#allocation3] sm:$0xff]
          %v3755 = vld [vmem:[#allocation3 + $0x8] sm:$0xff]
          %v3756 = vld [vmem:[#allocation3 + $0x10] sm:$0xff]
          %v3757 = vld [vmem:[#allocation3 + $0x18] sm:$0xff]
          %v3758 = vld [vmem:[#allocation3 + $0x20] sm:$0xff]
          %v3759 = vld [vmem:[#allocation3 + $0x28] sm:$0xff]
          %v3760 = vld [vmem:[#allocation3 + $0x30] sm:$0xff]
          %v3761 = vld [vmem:[#allocation3 + $0x38] sm:$0xff]
          %3763 = vset.pattern.permute.xlu0 0
          %3764 = vperm.xlu0 %3763, %v3746
          %v3765 = vpop.permute.xlu0 %3764
          %3768 = vset.pattern.permute.xlu0 0
          %3769 = vperm.xlu0 %3768, %v3747
          %v3770 = vpop.permute.xlu0 %3769
          %3773 = vset.pattern.permute.xlu0 0
          %3774 = vperm.xlu0 %3773, %v3748
          %v3775 = vpop.permute.xlu0 %3774
          %3778 = vset.pattern.permute.xlu0 0
          %3779 = vperm.xlu0 %3778, %v3749
          %v3780 = vpop.permute.xlu0 %3779
          %3783 = vset.pattern.permute.xlu0 0
          %3784 = vperm.xlu0 %3783, %v3750
          %v3785 = vpop.permute.xlu0 %3784
          %3788 = vset.pattern.permute.xlu0 0
          %3789 = vperm.xlu0 %3788, %v3751
          %v3790 = vpop.permute.xlu0 %3789
          %3793 = vset.pattern.permute.xlu0 0
          %3794 = vperm.xlu0 %3793, %v3752
          %v3795 = vpop.permute.xlu0 %3794
          %3798 = vset.pattern.permute.xlu0 0
          %3799 = vperm.xlu0 %3798, %v3753
          %v3800 = vpop.permute.xlu0 %3799
          %v3802 = vmul.f32 %v3754, %v3765
          %v3803 = vmul.f32 %v3755, %v3770
          %v3804 = vmul.f32 %v3756, %v3775
          %v3805 = vmul.f32 %v3757, %v3780
          %v3806 = vmul.f32 %v3758, %v3785
          %v3807 = vmul.f32 %v3759, %v3790
          %v3808 = vmul.f32 %v3760, %v3795
          %v3809 = vmul.f32 %v3761, %v3800
          %3810 = vst.msk [vmem:[#allocation3] sm:$0xff] %vm2839, %v3802
          %3811 = vst.msk [vmem:[#allocation3 + $0x8] sm:$0xff] %vm2839, %v3803
          %3812 = vst.msk [vmem:[#allocation3 + $0x10] sm:$0xff] %vm2839, %v3804
          %3813 = vst.msk [vmem:[#allocation3 + $0x18] sm:$0xff] %vm2839, %v3805
          %3814 = vst.msk [vmem:[#allocation3 + $0x20] sm:$0xff] %vm2839, %v3806
          %3815 = vst.msk [vmem:[#allocation3 + $0x28] sm:$0xff] %vm2839, %v3807
          %3816 = vst.msk [vmem:[#allocation3 + $0x30] sm:$0xff] %vm2839, %v3808
          %3817 = vst.msk [vmem:[#allocation3 + $0x38] sm:$0xff] %vm2839, %v3809
          %v3818 = vld [vmem:[%s3155] sm:$0xff]
          %v3819 = vld [vmem:[%s3155 + $0x8] sm:$0xff]
          %v3820 = vld [vmem:[%s3155 + $0x10] sm:$0xff]
          %v3821 = vld [vmem:[%s3155 + $0x18] sm:$0xff]
          %v3822 = vld [vmem:[%s3155 + $0x20] sm:$0xff]
          %v3823 = vld [vmem:[%s3155 + $0x28] sm:$0xff]
          %v3824 = vld [vmem:[%s3155 + $0x30] sm:$0xff]
          %v3825 = vld [vmem:[%s3155 + $0x38] sm:$0xff]
          %v3826 = vrcp.pop %v3818
          %v3827 = vrcp.pop %v3819
          %v3828 = vrcp.pop %v3820
          %v3829 = vrcp.pop %v3821
          %v3830 = vrcp.pop %v3822
          %v3831 = vrcp.pop %v3823
          %v3832 = vrcp.pop %v3824
          %v3833 = vrcp.pop %v3825
          %v3834 = vmul.f32 %v3818, %v3826
          %v3835 = vmul.f32 %v3819, %v3827
          %v3836 = vmul.f32 %v3820, %v3828
          %v3837 = vmul.f32 %v3821, %v3829
          %v3838 = vmul.f32 %v3822, %v3830
          %v3839 = vmul.f32 %v3823, %v3831
          %v3840 = vmul.f32 %v3824, %v3832
          %v3841 = vmul.f32 %v3825, %v3833
          %v3842 = vsub.f32 2.0, %v3834
          %v3843 = vsub.f32 2.0, %v3835
          %v3844 = vsub.f32 2.0, %v3836
          %v3845 = vsub.f32 2.0, %v3837
          %v3846 = vsub.f32 2.0, %v3838
          %v3847 = vsub.f32 2.0, %v3839
          %v3848 = vsub.f32 2.0, %v3840
          %v3849 = vsub.f32 2.0, %v3841
          %v3850 = vmul.f32 %v3826, %v3842
          %v3851 = vmul.f32 %v3827, %v3843
          %v3852 = vmul.f32 %v3828, %v3844
          %v3853 = vmul.f32 %v3829, %v3845
          %v3854 = vmul.f32 %v3830, %v3846
          %v3855 = vmul.f32 %v3831, %v3847
          %v3856 = vmul.f32 %v3832, %v3848
          %v3857 = vmul.f32 %v3833, %v3849
          %v3858 = vld [vmem:[#allocation3] sm:$0xff]
          %v3859 = vld [vmem:[#allocation3 + $0x8] sm:$0xff]
          %v3860 = vld [vmem:[#allocation3 + $0x10] sm:$0xff]
          %v3861 = vld [vmem:[#allocation3 + $0x18] sm:$0xff]
          %v3862 = vld [vmem:[#allocation3 + $0x20] sm:$0xff]
          %v3863 = vld [vmem:[#allocation3 + $0x28] sm:$0xff]
          %v3864 = vld [vmem:[#allocation3 + $0x30] sm:$0xff]
          %v3865 = vld [vmem:[#allocation3 + $0x38] sm:$0xff]
          %3867 = vset.pattern.permute.xlu0 0
          %3868 = vperm.xlu0 %3867, %v3850
          %v3869 = vpop.permute.xlu0 %3868
          %3872 = vset.pattern.permute.xlu0 0
          %3873 = vperm.xlu0 %3872, %v3851
          %v3874 = vpop.permute.xlu0 %3873
          %3877 = vset.pattern.permute.xlu0 0
          %3878 = vperm.xlu0 %3877, %v3852
          %v3879 = vpop.permute.xlu0 %3878
          %3882 = vset.pattern.permute.xlu0 0
          %3883 = vperm.xlu0 %3882, %v3853
          %v3884 = vpop.permute.xlu0 %3883
          %3887 = vset.pattern.permute.xlu0 0
          %3888 = vperm.xlu0 %3887, %v3854
          %v3889 = vpop.permute.xlu0 %3888
          %3892 = vset.pattern.permute.xlu0 0
          %3893 = vperm.xlu0 %3892, %v3855
          %v3894 = vpop.permute.xlu0 %3893
          %3897 = vset.pattern.permute.xlu0 0
          %3898 = vperm.xlu0 %3897, %v3856
          %v3899 = vpop.permute.xlu0 %3898
          %3902 = vset.pattern.permute.xlu0 0
          %3903 = vperm.xlu0 %3902, %v3857
          %v3904 = vpop.permute.xlu0 %3903
          %v3906 = vmul.f32 %v3858, %v3869
          %v3907 = vmul.f32 %v3859, %v3874
          %v3908 = vmul.f32 %v3860, %v3879
          %v3909 = vmul.f32 %v3861, %v3884
          %v3910 = vmul.f32 %v3862, %v3889
          %v3911 = vmul.f32 %v3863, %v3894
          %v3912 = vmul.f32 %v3864, %v3899
          %v3913 = vmul.f32 %v3865, %v3904
          %3914 = vst.msk [vmem:[#allocation3] sm:$0xff] %vm3493, %v3906
          %3915 = vst.msk [vmem:[#allocation3 + $0x8] sm:$0xff] %vm3493, %v3907
          %3916 = vst.msk [vmem:[#allocation3 + $0x10] sm:$0xff] %vm3493, %v3908
          %3917 = vst.msk [vmem:[#allocation3 + $0x18] sm:$0xff] %vm3493, %v3909
          %3918 = vst.msk [vmem:[#allocation3 + $0x20] sm:$0xff] %vm3493, %v3910
          %3919 = vst.msk [vmem:[#allocation3 + $0x28] sm:$0xff] %vm3493, %v3911
          %3920 = vst.msk [vmem:[#allocation3 + $0x30] sm:$0xff] %vm3493, %v3912
          %3921 = vst.msk [vmem:[#allocation3 + $0x38] sm:$0xff] %vm3493, %v3913
          %v3922 = vld [vmem:[#allocation3] sm:$0xff]
          %v3923 = vld [vmem:[#allocation3 + $0x8] sm:$0xff]
          %v3924 = vld [vmem:[#allocation3 + $0x10] sm:$0xff]
          %v3925 = vld [vmem:[#allocation3 + $0x18] sm:$0xff]
          %v3926 = vld [vmem:[#allocation3 + $0x20] sm:$0xff]
          %v3927 = vld [vmem:[#allocation3 + $0x28] sm:$0xff]
          %v3928 = vld [vmem:[#allocation3 + $0x30] sm:$0xff]
          %v3929 = vld [vmem:[#allocation3 + $0x38] sm:$0xff]
          %v3930 = vld [vmem:[%s3] sm:$0xff]
          %v3931 = vld [vmem:[%s3 + $0x8] sm:$0xff]
          %v3932 = vld [vmem:[%s3 + $0x10] sm:$0xff]
          %v3933 = vld [vmem:[%s3 + $0x18] sm:$0xff]
          %v3934 = vld [vmem:[%s4] sm:$0x1]
          %v3936 = vlaneseq
          %v3937 = vshrl.u32 %v3936, 7
          %v3938 = vsub.s32 0, %v3937
          %v3939 = vrot.slane %v3934, %v3938
          %vm3941 = vcmask 261120
          %v3943 = vsel %vm3941, %v3922, 0
          %v3946 = vsel %vm3941, %v3923, 0
          %v3949 = vsel %vm3941, %v3924, 0
          %v3952 = vsel %vm3941, %v3925, 0
          %v3955 = vsel %vm3941, %v3926, 0
          %v3958 = vsel %vm3941, %v3927, 0
          %v3961 = vsel %vm3941, %v3928, 0
          %v3964 = vsel %vm3941, %v3929, 0
          %3966 = vmatprep.subr.mxu0 0.0
          %3967 = vmatpush1.msra.mxu0 0.0
          %3968 = vmatprep.subr.mxu0 0.0
          %3969 = vmatpush1.msra.mxu0 0.0
          %3970 = vmatprep.subr.mxu0 0.0
          %3971 = vmatpush1.msra.mxu0 0.0
          %3972 = vmatprep.subr.mxu0 0.0
          %3973 = vmatpush1.msra.mxu0 0.0
          %3974 = vmatprep.subr.mxu0 0.0
          %3975 = vmatpush1.msra.mxu0 0.0
          %3976 = vmatprep.subr.mxu0 0.0
          %3977 = vmatpush1.msra.mxu0 0.0
          %3978 = vmatprep.subr.mxu0 0.0
          %3979 = vmatpush1.msra.mxu0 0.0
          %3980 = vmatprep.subr.mxu0 0.0
          %3981 = vmatpush1.msra.mxu0 0.0
          %3982 = vmatprep.subr.mxu0 0.0
          %3983 = vmatpush1.msra.mxu0 0.0
          %3984 = vmatprep.subr.mxu0 0.0
          %3985 = vmatpush1.msra.mxu0 0.0
          %3986 = vmatprep.subr.mxu0 0.0
          %3987 = vmatpush1.msra.mxu0 0.0
          %3988 = vmatprep.subr.mxu0 0.0
          %3989 = vmatpush1.msra.mxu0 0.0
          %3990 = vmatprep.subr.mxu0 0.0
          %3991 = vmatpush1.msra.mxu0 %v3933
          %3992 = vmatprep.subr.mxu0 0.0
          %3993 = vmatpush1.msra.mxu0 %v3932
          %3994 = vmatprep.subr.mxu0 0.0
          %3995 = vmatpush1.msra.mxu0 %v3931
          %3996 = vmatprep.subr.mxu0 0.0
          %3997 = vmatpush1.msra.mxu0 %v3930
          %3998 = vmatprep.subr.mxu0 0.0
          %3999 = vmatpush2.msra.mxu0 0.0
          %4000 = vmatprep.subr.mxu0 0.0
          %4001 = vmatpush2.msra.mxu0 0.0
          %4002 = vmatprep.subr.mxu0 0.0
          %4003 = vmatpush2.msra.mxu0 0.0
          %4004 = vmatprep.subr.mxu0 0.0
          %4005 = vmatpush2.msra.mxu0 0.0
          %4006 = vmatprep.subr.mxu0 0.0
          %4007 = vmatpush2.msra.mxu0 0.0
          %4008 = vmatprep.subr.mxu0 0.0
          %4009 = vmatpush2.msra.mxu0 0.0
          %4010 = vmatprep.subr.mxu0 0.0
          %4011 = vmatpush2.msra.mxu0 0.0
          %4012 = vmatprep.subr.mxu0 0.0
          %4013 = vmatpush2.msra.mxu0 0.0
          %4014 = vmatprep.subr.mxu0 0.0
          %4015 = vmatpush2.msra.mxu0 0.0
          %4016 = vmatprep.subr.mxu0 0.0
          %4017 = vmatpush2.msra.mxu0 0.0
          %4018 = vmatprep.subr.mxu0 0.0
          %4019 = vmatpush2.msra.mxu0 0.0
          %4020 = vmatprep.subr.mxu0 0.0
          %4021 = vmatpush2.msra.mxu0 0.0
          %4022 = vmatprep.subr.mxu0 0.0
          %4023 = vmatpush2.msra.mxu0 0.0
          %4024 = vmatprep.subr.mxu0 0.0
          %4025 = vmatpush2.msra.mxu0 0.0
          %4026 = vmatprep.subr.mxu0 0.0
          %4027 = vmatpush2.msra.mxu0 0.0
          %4028 = vmatprep.subr.mxu0 0.0
          %4029 = vmatpush2.msra.mxu0 0.0
          %4030 = vmatprep.mubr.f32.mxu0 0.0
          %4031 = vmatmul.mubr.f32.gmra.mxu0 %v3943
          %v4032 = vpop.f32.mrf.mxu0
          %v4033 = vadd.f32 %v3939, %v4032
          %v4034 = vpop.f32.mrf.mxu0
          %4035 = vmatprep.mubr.f32.mxu0 0.0
          %4036 = vmatmul.mubr.f32.gmra.mxu0 %v3946
          %v4037 = vpop.f32.mrf.mxu0
          %v4038 = vadd.f32 %v3939, %v4037
          %v4039 = vpop.f32.mrf.mxu0
          %4040 = vmatprep.mubr.f32.mxu0 0.0
          %4041 = vmatmul.mubr.f32.gmra.mxu0 %v3949
          %v4042 = vpop.f32.mrf.mxu0
          %v4043 = vadd.f32 %v3939, %v4042
          %v4044 = vpop.f32.mrf.mxu0
          %4045 = vmatprep.mubr.f32.mxu0 0.0
          %4046 = vmatmul.mubr.f32.gmra.mxu0 %v3952
          %v4047 = vpop.f32.mrf.mxu0
          %v4048 = vadd.f32 %v3939, %v4047
          %v4049 = vpop.f32.mrf.mxu0
          %4050 = vmatprep.mubr.f32.mxu0 0.0
          %4051 = vmatmul.mubr.f32.gmra.mxu0 %v3955
          %v4052 = vpop.f32.mrf.mxu0
          %v4053 = vadd.f32 %v3939, %v4052
          %v4054 = vpop.f32.mrf.mxu0
          %4055 = vmatprep.mubr.f32.mxu0 0.0
          %4056 = vmatmul.mubr.f32.gmra.mxu0 %v3958
          %v4057 = vpop.f32.mrf.mxu0
          %v4058 = vadd.f32 %v3939, %v4057
          %v4059 = vpop.f32.mrf.mxu0
          %4060 = vmatprep.mubr.f32.mxu0 0.0
          %4061 = vmatmul.mubr.f32.gmra.mxu0 %v3961
          %v4062 = vpop.f32.mrf.mxu0
          %v4063 = vadd.f32 %v3939, %v4062
          %v4064 = vpop.f32.mrf.mxu0
          %4065 = vmatprep.mubr.f32.mxu0 0.0
          %4066 = vmatmul.mubr.f32.gmra.mxu0 %v3964
          %v4067 = vpop.f32.mrf.mxu0
          %v4068 = vadd.f32 %v3939, %v4067
          %v4069 = vpop.f32.mrf.mxu0
          %4070 = vdwg.mxu0
          %4071 = vst.msk [vmem:[%s578] sm:$0xff] %vm3941, %v4033
          %4072 = vst.msk [vmem:[%s578 + $0x8] sm:$0xff] %vm3941, %v4038
          %4073 = vst.msk [vmem:[%s578 + $0x10] sm:$0xff] %vm3941, %v4043
          %4074 = vst.msk [vmem:[%s578 + $0x18] sm:$0xff] %vm3941, %v4048
          %4075 = vst.msk [vmem:[%s578 + $0x20] sm:$0xff] %vm3941, %v4053
          %4076 = vst.msk [vmem:[%s578 + $0x28] sm:$0xff] %vm3941, %v4058
          %4077 = vst.msk [vmem:[%s578 + $0x30] sm:$0xff] %vm3941, %v4063
          %4078 = vst.msk [vmem:[%s578 + $0x38] sm:$0xff] %vm3941, %v4068
        $region106: #{tpu_custom_call.1} parent=93 // pred_fallthru
          _
        %s4079 = smul.u32 8, %s27
        %p4080 = scmp.lt.s32.totalorder %s26, 1
        %s4081 = scalar_select %p4080, %s26, 1
        %p4082 = scmp.lt.s32.totalorder %s4079, 31
        %s4083 = scalar_select %p4082, %s4079, 31
        %s4084 = smul.addr %s4081, 32
        %s4085 = sadd.s32 %s4083, %s4084
        %s4086 = smul.addr %s4085, 8
        %s4087 = scalar_lea.vmem %s10, %s4086
        // Predicated region
        $region107: #{tpu_custom_call.1} parent=93 // pred_check
          %p4088 = pneg %p308
        $region108: #{tpu_custom_call.1} parent=93 // pred_check_branch
          %4090 = sbr.rel (%p4088) target = $region110
        $region109: #{tpu_custom_call.1} parent=93 // pred_region
          %s4091 = smul.u32 8, %s27
        $region110: #{tpu_custom_call.1} parent=93 // pred_fallthru
          _
      $region94: #{tpu_custom_call.1} parent=5 // pred_fallthru
        _
      %p4092 = scmp.le.s32.totalorder 2, %s16
      // Predicated region
      $region111: #{tpu_custom_call.1} parent=5 // pred_check
        %p4093 = pneg %p4092
      $region112: #{tpu_custom_call.1} parent=5 // pred_check_branch
        %4095 = sbr.rel (%p4093) target = $region114
      $region113: #{tpu_custom_call.1} parent=5 // pred_region
        %s4096 = ssub.s32 %s16, 2
        // Predicated region
        $region115: #{tpu_custom_call.1} parent=113 // pred_check
          %p4097 = pneg %p314
        $region116: #{tpu_custom_call.1} parent=113 // pred_check_branch
          %4099 = sbr.rel (%p4097) target = $region118
        $region117: #{tpu_custom_call.1} parent=113 // pred_region
          %s4100 = smul.u32 8, %s30
          %p4101 = scmp.lt.s32.totalorder %s29, 1
          %s4102 = scalar_select %p4101, %s29, 1
          %p4103 = scmp.lt.s32.totalorder %s4100, 31
          %s4104 = scalar_select %p4103, %s4100, 31
          %s4105 = smul.addr %s4102, 32
          %s4106 = sadd.s32 %s4104, %s4105
          %s4107 = smul.addr %s4106, 8
          %s4108 = scalar_lea.vmem %s10, %s4107
        $region118: #{tpu_custom_call.1} parent=113 // pred_fallthru
          _
      $region114: #{tpu_custom_call.1} parent=5 // pred_fallthru
        _
    $region6: #{tpu_custom_call.1} parent=1 // loop_footer
      %s20 = sadd.s32 1, %s16
    $region7: #{tpu_custom_call.1} parent=1 // loop_footer_branch
      %15 = sbr.rel target = $region3
    $region8: #{tpu_custom_call.1} parent=1 // loop_exit
      _

</llo_original>
